<compile_context>
chip_gen: v7x
topology: tpu7x:2x2x1
jax: 0.10.0
libtpu: 0.0.40
codegen_flags: <defaults>
</compile_context>

<pallas_src>
import jax
import jax.numpy as jnp
from jax.experimental import pallas as pl
from jax.experimental.pallas import tpu as pltpu


# ----------------------------------------------------------------------------
# LSTM cell helper: one fused [x, h] @ [Wih; Whh] matmul + gates.
# ----------------------------------------------------------------------------
def _lstm_step(cat, w_ref, b_ref, c, H):
    g = (jnp.dot(cat, w_ref[...], preferred_element_type=jnp.float32)
         + b_ref[...])                               # (BP, 4H)
    i = jax.nn.sigmoid(g[:, 0 * H:1 * H])
    f = jax.nn.sigmoid(g[:, 1 * H:2 * H])
    u = jnp.tanh(g[:, 2 * H:3 * H])
    o = jax.nn.sigmoid(g[:, 3 * H:4 * H])
    c_new = f * c + i * u
    h_new = o * jnp.tanh(c_new)
    return h_new, c_new


# ----------------------------------------------------------------------------
# Single fused kernel: encoder + BD, decoder LSTM, attention + output head.
# ----------------------------------------------------------------------------
def _fused_kernel(enc_emb_ref, dec_emb_ref,                 # (S,BP,E), (T,BP,E)
                  w1_ref, b1_ref,                           # (E+H,4H), (1,4H)
                  wbd_ref, bbd_ref, vbd_ref,                # (E+H,M), (1,M), (1,M)
                  w2_ref, b2_ref,                           # (2H,4H), (1,4H)
                  wdec_ref, bdec_ref,                       # (E+H,4H), (1,4H)
                  wcd_ref, wcc_ref, bc_ref,                 # (H,H), (H,H), (1,H)
                  wf_ref, bf_ref,                           # (H,VP), (1,VP)
                  out_ref,                                  # (BP*T, VP)
                  mask_ref,                                 # (1, S)
                  dh_ref, dc_ref,                           # (BP, H) decoder final
                  enc_scr, dec_scr):                        # (BP,S,H), (BP,T,H)
    S = enc_emb_ref.shape[0]
    T = dec_emb_ref.shape[0]
    BP = enc_emb_ref.shape[1]
    H = wcd_ref.shape[0]
    f32 = jnp.float32

    # ------------------ Encoder recurrence (fully unrolled) ------------------
    h1 = jnp.zeros((BP, H), f32)
    c1 = jnp.zeros((BP, H), f32)
    h2 = jnp.zeros((BP, H), f32)
    c2 = jnp.zeros((BP, H), f32)
    mask = jnp.zeros((1, S), f32)
    col = jax.lax.broadcasted_iota(jnp.int32, (1, S), 1)

    for i in range(S):
        x = enc_emb_ref[i]                                  # (BP, E)
        cat1 = jnp.concatenate([x, h1], axis=-1)            # (BP, E+H)

        # BoundaryDetector (eval BinaryGate, thr 0.5):
        # sigmoid(z @ vs) > 0.5  <=>  z @ vs > 0; width-1 projection done as a
        # VPU multiply + lane reduce instead of a wasted MXU push.
        z = (jnp.dot(cat1, wbd_ref[...], preferred_element_type=f32)
             + bbd_ref[...])                                # (BP, M)
        s_logit = jnp.sum(z * vbd_ref[...], axis=-1, keepdims=True)
        s = (s_logit > 0.0).astype(f32)                     # (BP, 1)

        # lstm1 cell (lstm1_drop = identity in eval)
        h1n, c1n = _lstm_step(cat1, w1_ref, b1_ref, c1, H)

        # boundary branch gated on batch element 0 (ref: `if s.data[0,0]==1`)
        fire = s[0:1, 0:1]                                  # (1, 1)
        took = fire > 0.5

        # lstm2 cell (always computed; committed only when boundary fires)
        x2 = h1n * s
        cat2 = jnp.concatenate([x2, h2], axis=-1)           # (BP, 2H)
        h2c, c2c = _lstm_step(cat2, w2_ref, b2_ref, c2, H)
        h2 = jnp.where(took, h2c, h2)
        c2 = jnp.where(took, c2c, c2)
        enc_scr[:, i, :] = jnp.where(took, h2c, jnp.zeros_like(h2c))

        # boundary mask at position i (static-index select, no scatter)
        mask = jnp.where(col == i, fire, mask)

        # post-boundary per-example reset of lstm1 state
        h1 = h1n * (1.0 - s)
        c1 = c1n * (1.0 - s)

    mask_ref[...] = mask

    # ------------------ Decoder nn.LSTM recurrence (unrolled) ----------------
    h = h2
    c = c2
    for t in range(T):
        x = dec_emb_ref[t]                                  # (BP, E)
        cat = jnp.concatenate([x, h], axis=-1)              # (BP, E+H)
        h, c = _lstm_step(cat, wdec_ref, bdec_ref, c, H)    # self.drop = identity
        dec_scr[:, t, :] = h
    dh_ref[...] = h
    dc_ref[...] = c

    # ------------------ Attention + concat/tanh + fc + log_softmax -----------
    dec_b = dec_scr[...]                                    # (BP, T, H)
    enc_b = enc_scr[...]                                    # (BP, S, H)

    # softmax(D @ E^T) over encoder positions, masked to fired boundaries.
    scores = jnp.einsum('bqd,bkd->bqk', dec_b, enc_b,
                        preferred_element_type=f32)         # (BP, T, S)
    scores = scores + (mask - 1.0) * 1e30
    scores = scores - jnp.max(scores, axis=-1, keepdims=True)
    e = jnp.exp(scores)
    attn = e * pl.reciprocal(jnp.sum(e, axis=-1, keepdims=True), approx=True)
    ctx = jnp.einsum('bqk,bkd->bqd', attn, enc_b,
                     preferred_element_type=f32)            # (BP, T, H)

    # concat Linear(2H -> H) split into decoder/context halves, flat matmuls.
    dec_flat = dec_b.reshape(BP * T, H)
    ctx_flat = ctx.reshape(BP * T, H)
    pre = jnp.tanh(
        jnp.dot(dec_flat, wcd_ref[...], preferred_element_type=f32)
        + jnp.dot(ctx_flat, wcc_ref[...], preferred_element_type=f32)
        + bc_ref[...])                                      # (BP*T, H)

    # fc + log_softmax (padded logits carry -1e30 bias -> exp underflows to 0)
    logits = (jnp.dot(pre, wf_ref[...], preferred_element_type=f32)
              + bf_ref[...])                                # (BP*T, VP)
    m = jnp.max(logits, axis=-1, keepdims=True)
    lse = m + jnp.log(jnp.sum(jnp.exp(logits - m), axis=-1, keepdims=True))
    out_ref[...] = logits - lse                             # lane-dense store


def _run_fused(enc_emb_t, dec_emb_t, w1, b1, wbd, bbd, vbd, w2, b2,
               wdec, bdec, wcd, wcc, bc, wf_pad, bf_pad):
    S, BP, _ = enc_emb_t.shape
    T = dec_emb_t.shape[0]
    H = wcd.shape[0]
    VP = wf_pad.shape[-1]
    return pl.pallas_call(
        _fused_kernel,
        out_shape=(
            jax.ShapeDtypeStruct((BP * T, VP), jnp.float32),   # log-probs (padded)
            jax.ShapeDtypeStruct((1, S), jnp.float32),         # boundary mask
            jax.ShapeDtypeStruct((BP, H), jnp.float32),        # decoder final h
            jax.ShapeDtypeStruct((BP, H), jnp.float32),        # decoder final c
        ),
        scratch_shapes=[
            pltpu.VMEM((BP, S, H), jnp.float32),               # lstm2 outputs
            pltpu.VMEM((BP, T, H), jnp.float32),               # decoder outputs
        ],
    )(enc_emb_t, dec_emb_t, w1, b1, wbd, bbd, vbd, w2, b2, wdec, bdec,
      wcd, wcc, bc, wf_pad, bf_pad)


# ----------------------------------------------------------------------------
# Parameters (deterministic init; shapes from the module's __init__)
# ----------------------------------------------------------------------------
def init_params(key, enc_vocab, dec_vocab, E, H, M):
    ks = jax.random.split(key, 20)

    def uni(k, shape, scale):
        return jax.random.uniform(k, shape, jnp.float32, -scale, scale)

    sH = 1.0 / (H ** 0.5)
    s2H = 1.0 / ((2.0 * H) ** 0.5)

    p = {}
    # encoder Embedder (extra categorical features empty -> feat_size == E)
    p["enc_emb"] = uni(ks[0], (enc_vocab, E), 0.1)
    # encoder lstm1 (mLSTMCell, E -> H)
    p["l1_wih"] = uni(ks[1], (4 * H, E), sH)
    p["l1_whh"] = uni(ks[2], (4 * H, H), sH)
    p["l1_b"] = uni(ks[3], (4 * H,), sH) + uni(ks[4], (4 * H,), sH)
    # BoundaryDetector (biased positive so boundaries fire deterministically)
    p["bd_wsi"] = uni(ks[5], (M, E), 0.01)
    p["bd_wsh"] = uni(ks[6], (M, H), 0.01)
    p["bd_bias"] = 0.5 * jnp.ones((M,), jnp.float32)
    p["bd_vs"] = 0.1 * jnp.ones((1, M), jnp.float32)
    # encoder lstm2 (H -> H)
    p["l2_wih"] = uni(ks[7], (4 * H, H), sH)
    p["l2_whh"] = uni(ks[8], (4 * H, H), sH)
    p["l2_b"] = uni(ks[9], (4 * H,), sH) + uni(ks[10], (4 * H,), sH)
    # decoder embedding + decoder nn.LSTM (E -> H, 1 layer)
    p["dec_emb"] = uni(ks[11], (dec_vocab, E), 0.1)
    p["d_wih"] = uni(ks[12], (4 * H, E), sH)
    p["d_whh"] = uni(ks[13], (4 * H, H), sH)
    p["d_b"] = uni(ks[14], (4 * H,), sH) + uni(ks[15], (4 * H,), sH)
    # concat Linear(2H -> H) and fc Linear(H -> dec_vocab)
    p["concat_w"] = uni(ks[16], (H, 2 * H), s2H)
    p["concat_b"] = uni(ks[17], (H,), s2H)
    p["fc_w"] = uni(ks[18], (dec_vocab, H), sH)
    p["fc_b"] = uni(ks[19], (dec_vocab,), sH)
    return p


# ----------------------------------------------------------------------------
# Model forward: one jitted program, ONE pallas_call.
# ----------------------------------------------------------------------------
@jax.jit
def boundary_encoder_decoder_forward(params, encoder_inputs, decoder_inputs):
    B = encoder_inputs.shape[0]
    T = decoder_inputs.shape[1]
    H = params["l1_whh"].shape[1]
    V = params["fc_w"].shape[0]
    VP = ((V + 127) // 128) * 128          # lane-dense fc output width
    BP = ((B + 7) // 8) * 8                # sublane-dense padded batch
    BP = max(BP, 8)

    # ---- weight prep (runs once inside the jitted program) ----
    # stacked [Wih; Whh] so each cell does a single [x,h] @ W matmul
    w1 = jnp.concatenate([params["l1_wih"].T, params["l1_whh"].T], axis=0)   # (E+H,4H)
    b1 = params["l1_b"].reshape(1, -1)
    wbd = jnp.concatenate([params["bd_wsi"].T, params["bd_wsh"].T], axis=0)  # (E+H,M)
    bbd = params["bd_bias"].reshape(1, -1)
    vbd = params["bd_vs"]                                                    # (1, M)
    w2 = jnp.concatenate([params["l2_wih"].T, params["l2_whh"].T], axis=0)   # (2H,4H)
    b2 = params["l2_b"].reshape(1, -1)
    wdec = jnp.concatenate([params["d_wih"].T, params["d_whh"].T], axis=0)   # (E+H,4H)
    bdec = params["d_b"].reshape(1, -1)
    wcd = params["concat_w"][:, :H].T           # acts on decoder_outputs
    wcc = params["concat_w"][:, H:].T           # acts on contexts
    bc = params["concat_b"].reshape(1, -1)
    wf_pad = jnp.pad(params["fc_w"].T, ((0, 0), (0, VP - V)))
    bf_pad = jnp.pad(params["fc_b"].reshape(1, -1), ((0, 0), (0, VP - V)),
                     constant_values=-1e30)

    # ---- embedding lookups (XLA gather), time-major, batch padded to BP ----
    enc_emb = params["enc_emb"][encoder_inputs]                     # (B, S, E)
    dec_emb = params["dec_emb"][decoder_inputs]                     # (B, T, E)
    enc_emb_t = jnp.transpose(
        jnp.pad(enc_emb, ((0, BP - B), (0, 0), (0, 0))), (1, 0, 2))  # (S, BP, E)
    dec_emb_t = jnp.transpose(
        jnp.pad(dec_emb, ((0, BP - B), (0, 0), (0, 0))), (1, 0, 2))  # (T, BP, E)

    # ---- single fused kernel ----
    out_pad, bd_mask, dh, dc = _run_fused(
        enc_emb_t, dec_emb_t, w1, b1, wbd, bbd, vbd, w2, b2,
        wdec, bdec, wcd, wcc, bc, wf_pad, bf_pad)

    outputs = out_pad.reshape(BP, T, VP)[:B, :, :V]
    last_hidden = (dh[None, :B, :], dc[None, :B, :])
    # bd_mask[0, i] == 1 marks the boundary positions (device-side replacement
    # for the reference's host-built states_positions list).
    return outputs, last_hidden, bd_mask


# ----------------------------------------------------------------------------
if __name__ == "__main__":
    B = 2
    S_ENC = 8
    T_DEC = 8
    EMBED = 32
    HIDDEN = 32
    BD_MID = 16
    ENC_VOCAB = 50
    DEC_VOCAB = 40

    key = jax.random.PRNGKey(0)
    k_par, k_enc, k_dec = jax.random.split(key, 3)

    params = init_params(k_par, ENC_VOCAB, DEC_VOCAB, EMBED, HIDDEN, BD_MID)

    encoder_inputs = jax.random.randint(k_enc, (B, S_ENC), 0, ENC_VOCAB,
                                        dtype=jnp.int32)
    decoder_inputs = jax.random.randint(k_dec, (B, T_DEC), 0, DEC_VOCAB,
                                        dtype=jnp.int32)

    outputs, last_hidden, bd_mask = boundary_encoder_decoder_forward(
        params, encoder_inputs, decoder_inputs)

    jax.block_until_ready(outputs)
    jax.block_until_ready(last_hidden)

    assert outputs.shape == (B, T_DEC, DEC_VOCAB)
    assert last_hidden[0].shape == (1, B, HIDDEN)
    assert last_hidden[1].shape == (1, B, HIDDEN)
    assert bd_mask.shape == (1, S_ENC)
    assert bool(jnp.all(jnp.isfinite(outputs)))
    # log_softmax rows must (approximately) sum to 1 in probability space
    assert bool(jnp.allclose(jnp.sum(jnp.exp(outputs), axis=-1), 1.0, atol=1e-4))

    print("KERNEL_OK")
</pallas_src>

<mosaic_0001>
module attributes {stable_mosaic.version = 11 : i64} {
  func.func @_fused_kernel(%arg0: memref<8x8x32xf32, #tpu.memory_space<vmem>>, %arg1: memref<8x8x32xf32, #tpu.memory_space<vmem>>, %arg2: memref<64x128xf32, #tpu.memory_space<vmem>>, %arg3: memref<1x128xf32, #tpu.memory_space<vmem>>, %arg4: memref<64x16xf32, #tpu.memory_space<vmem>>, %arg5: memref<1x16xf32, #tpu.memory_space<vmem>>, %arg6: memref<1x16xf32, #tpu.memory_space<vmem>>, %arg7: memref<64x128xf32, #tpu.memory_space<vmem>>, %arg8: memref<1x128xf32, #tpu.memory_space<vmem>>, %arg9: memref<64x128xf32, #tpu.memory_space<vmem>>, %arg10: memref<1x128xf32, #tpu.memory_space<vmem>>, %arg11: memref<32x32xf32, #tpu.memory_space<vmem>>, %arg12: memref<32x32xf32, #tpu.memory_space<vmem>>, %arg13: memref<1x32xf32, #tpu.memory_space<vmem>>, %arg14: memref<32x128xf32, #tpu.memory_space<vmem>>, %arg15: memref<1x128xf32, #tpu.memory_space<vmem>>, %arg16: memref<64x128xf32, #tpu.memory_space<vmem>>, %arg17: memref<1x8xf32, #tpu.memory_space<vmem>>, %arg18: memref<8x32xf32, #tpu.memory_space<vmem>>, %arg19: memref<8x32xf32, #tpu.memory_space<vmem>>, %arg20: memref<8x8x32xf32, #tpu.memory_space<vmem>>, %arg21: memref<8x8x32xf32, #tpu.memory_space<vmem>>) attributes {dimension_semantics = [], scalar_prefetch = 0 : i64, scratch_operands = 2 : i64, tpu.core_type = #tpu.core_type<tc>} {
    %cst = arith.constant 0.000000e+00 : f32
    %0 = vector.broadcast %cst : f32 to vector<8x32xf32>
    %cst_0 = arith.constant 0.000000e+00 : f32
    %1 = vector.broadcast %cst_0 : f32 to vector<8x32xf32>
    %cst_1 = arith.constant 0.000000e+00 : f32
    %2 = vector.broadcast %cst_1 : f32 to vector<8x32xf32>
    %cst_2 = arith.constant 0.000000e+00 : f32
    %3 = vector.broadcast %cst_2 : f32 to vector<8x32xf32>
    %cst_3 = arith.constant 0.000000e+00 : f32
    %4 = vector.broadcast %cst_3 : f32 to vector<1x8xf32>
    %5 = tpu.iota {dimensions = array<i32: 1>} : vector<1x8xi32>
    %c0 = arith.constant 0 : index
    %c0_4 = arith.constant 0 : index
    %c0_5 = arith.constant 0 : index
    %6 = vector.load %arg0[%c0, %c0_4, %c0_5] : memref<8x8x32xf32, #tpu.memory_space<vmem>>, vector<1x8x32xf32>
    %7 = vector.shape_cast %6 : vector<1x8x32xf32> to vector<8x32xf32>
    %8 = tpu.concatenate %7, %0 in 1 : vector<8x32xf32>, vector<8x32xf32> -> vector<8x64xf32>
    %c0_6 = arith.constant 0 : index
    %c0_7 = arith.constant 0 : index
    %9 = vector.load %arg4[%c0_6, %c0_7] : memref<64x16xf32, #tpu.memory_space<vmem>>, vector<64x16xf32>
    %cst_8 = arith.constant dense<0.000000e+00> : vector<8x16xf32>
    %10 = tpu.matmul %8, %9, %cst_8 {dimension_numbers = #tpu.dot_dimension_numbers<[1], [0], [0], [1], [0, 0, 1, 1], [], []>} : vector<8x64xf32>, vector<64x16xf32>, vector<8x16xf32> -> vector<8x16xf32>
    %c0_9 = arith.constant 0 : index
    %c0_10 = arith.constant 0 : index
    %11 = vector.load %arg5[%c0_9, %c0_10] : memref<1x16xf32, #tpu.memory_space<vmem>>, vector<1x16xf32>
    %12 = vector.broadcast %11 : vector<1x16xf32> to vector<8x16xf32>
    %13 = arith.addf %10, %12 : vector<8x16xf32>
    %c0_11 = arith.constant 0 : index
    %c0_12 = arith.constant 0 : index
    %14 = vector.load %arg6[%c0_11, %c0_12] : memref<1x16xf32, #tpu.memory_space<vmem>>, vector<1x16xf32>
    %15 = vector.broadcast %14 : vector<1x16xf32> to vector<8x16xf32>
    %16 = arith.mulf %13, %15 : vector<8x16xf32>
    %cst_13 = arith.constant dense<0.000000e+00> : vector<8xf32>
    %17 = vector.multi_reduction <add>, %16, %cst_13 [1] : vector<8x16xf32> to vector<8xf32>
    %18 = vector.shape_cast %17 : vector<8xf32> to vector<8x1xf32>
    %cst_14 = arith.constant 0.000000e+00 : f32
    %19 = vector.broadcast %cst_14 : f32 to vector<8x1xf32>
    %20 = arith.cmpf ogt, %18, %19 : vector<8x1xf32>
    %21 = arith.extui %20 : vector<8x1xi1> to vector<8x1xi32>
    %22 = arith.sitofp %21 : vector<8x1xi32> to vector<8x1xf32>
    %c0_15 = arith.constant 0 : index
    %c0_16 = arith.constant 0 : index
    %23 = vector.load %arg2[%c0_15, %c0_16] : memref<64x128xf32, #tpu.memory_space<vmem>>, vector<64x128xf32>
    %cst_17 = arith.constant dense<0.000000e+00> : vector<8x128xf32>
    %24 = tpu.matmul %8, %23, %cst_17 {dimension_numbers = #tpu.dot_dimension_numbers<[1], [0], [0], [1], [0, 0, 1, 1], [], []>} : vector<8x64xf32>, vector<64x128xf32>, vector<8x128xf32> -> vector<8x128xf32>
    %c0_18 = arith.constant 0 : index
    %c0_19 = arith.constant 0 : index
    %25 = vector.load %arg3[%c0_18, %c0_19] : memref<1x128xf32, #tpu.memory_space<vmem>>, vector<1x128xf32>
    %26 = vector.broadcast %25 : vector<1x128xf32> to vector<8x128xf32>
    %27 = arith.addf %24, %26 : vector<8x128xf32>
    %28 = vector.extract_strided_slice %27 {offsets = [0, 0], sizes = [8, 32], strides = [1, 1]} : vector<8x128xf32> to vector<8x32xf32>
    %29 = arith.negf %28 : vector<8x32xf32>
    %30 = math.exp %29 : vector<8x32xf32>
    %cst_20 = arith.constant 1.000000e+00 : f32
    %31 = vector.broadcast %cst_20 : f32 to vector<8x32xf32>
    %32 = arith.addf %31, %30 : vector<8x32xf32>
    %33 = arith.divf %31, %32 : vector<8x32xf32>
    %34 = vector.extract_strided_slice %27 {offsets = [0, 32], sizes = [8, 32], strides = [1, 1]} : vector<8x128xf32> to vector<8x32xf32>
    %35 = arith.negf %34 : vector<8x32xf32>
    %36 = math.exp %35 : vector<8x32xf32>
    %cst_21 = arith.constant 1.000000e+00 : f32
    %37 = vector.broadcast %cst_21 : f32 to vector<8x32xf32>
    %38 = arith.addf %37, %36 : vector<8x32xf32>
    %39 = arith.divf %37, %38 : vector<8x32xf32>
    %40 = vector.extract_strided_slice %27 {offsets = [0, 64], sizes = [8, 32], strides = [1, 1]} : vector<8x128xf32> to vector<8x32xf32>
    %41 = math.tanh %40 : vector<8x32xf32>
    %42 = vector.extract_strided_slice %27 {offsets = [0, 96], sizes = [8, 32], strides = [1, 1]} : vector<8x128xf32> to vector<8x32xf32>
    %43 = arith.negf %42 : vector<8x32xf32>
    %44 = math.exp %43 : vector<8x32xf32>
    %cst_22 = arith.constant 1.000000e+00 : f32
    %45 = vector.broadcast %cst_22 : f32 to vector<8x32xf32>
    %46 = arith.addf %45, %44 : vector<8x32xf32>
    %47 = arith.divf %45, %46 : vector<8x32xf32>
    %48 = arith.mulf %39, %1 : vector<8x32xf32>
    %49 = arith.mulf %33, %41 : vector<8x32xf32>
    %50 = arith.addf %48, %49 : vector<8x32xf32>
    %51 = math.tanh %50 : vector<8x32xf32>
    %52 = arith.mulf %47, %51 : vector<8x32xf32>
    %53 = vector.extract_strided_slice %22 {offsets = [0, 0], sizes = [1, 1], strides = [1, 1]} : vector<8x1xf32> to vector<1x1xf32>
    %cst_23 = arith.constant 5.000000e-01 : f32
    %54 = vector.broadcast %cst_23 : f32 to vector<1x1xf32>
    %55 = arith.cmpf ogt, %53, %54 : vector<1x1xf32>
    %56 = vector.broadcast %22 : vector<8x1xf32> to vector<8x32xf32>
    %57 = arith.mulf %52, %56 : vector<8x32xf32>
    %58 = tpu.concatenate %57, %2 in 1 : vector<8x32xf32>, vector<8x32xf32> -> vector<8x64xf32>
    %c0_24 = arith.constant 0 : index
    %c0_25 = arith.constant 0 : index
    %59 = vector.load %arg7[%c0_24, %c0_25] : memref<64x128xf32, #tpu.memory_space<vmem>>, vector<64x128xf32>
    %cst_26 = arith.constant dense<0.000000e+00> : vector<8x128xf32>
    %60 = tpu.matmul %58, %59, %cst_26 {dimension_numbers = #tpu.dot_dimension_numbers<[1], [0], [0], [1], [0, 0, 1, 1], [], []>} : vector<8x64xf32>, vector<64x128xf32>, vector<8x128xf32> -> vector<8x128xf32>
    %c0_27 = arith.constant 0 : index
    %c0_28 = arith.constant 0 : index
    %61 = vector.load %arg8[%c0_27, %c0_28] : memref<1x128xf32, #tpu.memory_space<vmem>>, vector<1x128xf32>
    %62 = vector.broadcast %61 : vector<1x128xf32> to vector<8x128xf32>
    %63 = arith.addf %60, %62 : vector<8x128xf32>
    %64 = vector.extract_strided_slice %63 {offsets = [0, 0], sizes = [8, 32], strides = [1, 1]} : vector<8x128xf32> to vector<8x32xf32>
    %65 = arith.negf %64 : vector<8x32xf32>
    %66 = math.exp %65 : vector<8x32xf32>
    %cst_29 = arith.constant 1.000000e+00 : f32
    %67 = vector.broadcast %cst_29 : f32 to vector<8x32xf32>
    %68 = arith.addf %67, %66 : vector<8x32xf32>
    %69 = arith.divf %67, %68 : vector<8x32xf32>
    %70 = vector.extract_strided_slice %63 {offsets = [0, 32], sizes = [8, 32], strides = [1, 1]} : vector<8x128xf32> to vector<8x32xf32>
    %71 = arith.negf %70 : vector<8x32xf32>
    %72 = math.exp %71 : vector<8x32xf32>
    %cst_30 = arith.constant 1.000000e+00 : f32
    %73 = vector.broadcast %cst_30 : f32 to vector<8x32xf32>
    %74 = arith.addf %73, %72 : vector<8x32xf32>
    %75 = arith.divf %73, %74 : vector<8x32xf32>
    %76 = vector.extract_strided_slice %63 {offsets = [0, 64], sizes = [8, 32], strides = [1, 1]} : vector<8x128xf32> to vector<8x32xf32>
    %77 = math.tanh %76 : vector<8x32xf32>
    %78 = vector.extract_strided_slice %63 {offsets = [0, 96], sizes = [8, 32], strides = [1, 1]} : vector<8x128xf32> to vector<8x32xf32>
    %79 = arith.negf %78 : vector<8x32xf32>
    %80 = math.exp %79 : vector<8x32xf32>
    %cst_31 = arith.constant 1.000000e+00 : f32
    %81 = vector.broadcast %cst_31 : f32 to vector<8x32xf32>
    %82 = arith.addf %81, %80 : vector<8x32xf32>
    %83 = arith.divf %81, %82 : vector<8x32xf32>
    %84 = arith.mulf %75, %3 : vector<8x32xf32>
    %85 = arith.mulf %69, %77 : vector<8x32xf32>
    %86 = arith.addf %84, %85 : vector<8x32xf32>
    %87 = math.tanh %86 : vector<8x32xf32>
    %88 = arith.mulf %83, %87 : vector<8x32xf32>
    %89 = vector.shape_cast %55 : vector<1x1xi1> to vector<1x1xi1>
    %90 = vector.broadcast %89 : vector<1x1xi1> to vector<8x32xi1>
    %91 = arith.select %90, %88, %2 : vector<8x32xi1>, vector<8x32xf32>
    %92 = vector.shape_cast %55 : vector<1x1xi1> to vector<1x1xi1>
    %93 = vector.broadcast %92 : vector<1x1xi1> to vector<8x32xi1>
    %94 = arith.select %93, %86, %3 : vector<8x32xi1>, vector<8x32xf32>
    %cst_32 = arith.constant 0.000000e+00 : f32
    %95 = vector.broadcast %cst_32 : f32 to vector<8x32xf32>
    %96 = vector.shape_cast %55 : vector<1x1xi1> to vector<1x1xi1>
    %97 = vector.broadcast %96 : vector<1x1xi1> to vector<8x32xi1>
    %98 = arith.select %97, %88, %95 : vector<8x32xi1>, vector<8x32xf32>
    %c0_33 = arith.constant 0 : index
    %c0_34 = arith.constant 0 : index
    %c0_35 = arith.constant 0 : index
    %99 = vector.load %arg20[%c0_33, %c0_34, %c0_35] : memref<8x8x32xf32, #tpu.memory_space<vmem>>, vector<8x1x32xf32>
    %100 = vector.shape_cast %99 : vector<8x1x32xf32> to vector<8x32xf32>
    %101 = vector.shape_cast %98 : vector<8x32xf32> to vector<8x1x32xf32>
    tpu.vector_store %arg20[%c0_33, %c0_34, %c0_35], %101 {strides = array<i32>} : memref<8x8x32xf32, #tpu.memory_space<vmem>>, vector<8x1x32xf32>,
    %c0_i32 = arith.constant 0 : i32
    %102 = vector.broadcast %c0_i32 : i32 to vector<1x8xi32>
    %103 = arith.cmpi eq, %5, %102 : vector<1x8xi32>
    %104 = vector.shape_cast %53 : vector<1x1xf32> to vector<1x1xf32>
    %105 = vector.broadcast %104 : vector<1x1xf32> to vector<1x8xf32>
    %106 = arith.select %103, %105, %4 : vector<1x8xi1>, vector<1x8xf32>
    %cst_36 = arith.constant 1.000000e+00 : f32
    %107 = vector.broadcast %cst_36 : f32 to vector<8x1xf32>
    %108 = arith.subf %107, %22 : vector<8x1xf32>
    %109 = vector.broadcast %108 : vector<8x1xf32> to vector<8x32xf32>
    %110 = arith.mulf %52, %109 : vector<8x32xf32>
    %cst_37 = arith.constant 1.000000e+00 : f32
    %111 = vector.broadcast %cst_37 : f32 to vector<8x1xf32>
    %112 = arith.subf %111, %22 : vector<8x1xf32>
    %113 = vector.broadcast %112 : vector<8x1xf32> to vector<8x32xf32>
    %114 = arith.mulf %50, %113 : vector<8x32xf32>
    %c1 = arith.constant 1 : index
    %c0_38 = arith.constant 0 : index
    %c0_39 = arith.constant 0 : index
    %115 = vector.load %arg0[%c1, %c0_38, %c0_39] : memref<8x8x32xf32, #tpu.memory_space<vmem>>, vector<1x8x32xf32>
    %116 = vector.shape_cast %115 : vector<1x8x32xf32> to vector<8x32xf32>
    %117 = tpu.concatenate %116, %110 in 1 : vector<8x32xf32>, vector<8x32xf32> -> vector<8x64xf32>
    %c0_40 = arith.constant 0 : index
    %c0_41 = arith.constant 0 : index
    %118 = vector.load %arg4[%c0_40, %c0_41] : memref<64x16xf32, #tpu.memory_space<vmem>>, vector<64x16xf32>
    %cst_42 = arith.constant dense<0.000000e+00> : vector<8x16xf32>
    %119 = tpu.matmul %117, %118, %cst_42 {dimension_numbers = #tpu.dot_dimension_numbers<[1], [0], [0], [1], [0, 0, 1, 1], [], []>} : vector<8x64xf32>, vector<64x16xf32>, vector<8x16xf32> -> vector<8x16xf32>
    %c0_43 = arith.constant 0 : index
    %c0_44 = arith.constant 0 : index
    %120 = vector.load %arg5[%c0_43, %c0_44] : memref<1x16xf32, #tpu.memory_space<vmem>>, vector<1x16xf32>
    %121 = vector.broadcast %120 : vector<1x16xf32> to vector<8x16xf32>
    %122 = arith.addf %119, %121 : vector<8x16xf32>
    %c0_45 = arith.constant 0 : index
    %c0_46 = arith.constant 0 : index
    %123 = vector.load %arg6[%c0_45, %c0_46] : memref<1x16xf32, #tpu.memory_space<vmem>>, vector<1x16xf32>
    %124 = vector.broadcast %123 : vector<1x16xf32> to vector<8x16xf32>
    %125 = arith.mulf %122, %124 : vector<8x16xf32>
    %cst_47 = arith.constant dense<0.000000e+00> : vector<8xf32>
    %126 = vector.multi_reduction <add>, %125, %cst_47 [1] : vector<8x16xf32> to vector<8xf32>
    %127 = vector.shape_cast %126 : vector<8xf32> to vector<8x1xf32>
    %cst_48 = arith.constant 0.000000e+00 : f32
    %128 = vector.broadcast %cst_48 : f32 to vector<8x1xf32>
    %129 = arith.cmpf ogt, %127, %128 : vector<8x1xf32>
    %130 = arith.extui %129 : vector<8x1xi1> to vector<8x1xi32>
    %131 = arith.sitofp %130 : vector<8x1xi32> to vector<8x1xf32>
    %c0_49 = arith.constant 0 : index
    %c0_50 = arith.constant 0 : index
    %132 = vector.load %arg2[%c0_49, %c0_50] : memref<64x128xf32, #tpu.memory_space<vmem>>, vector<64x128xf32>
    %cst_51 = arith.constant dense<0.000000e+00> : vector<8x128xf32>
    %133 = tpu.matmul %117, %132, %cst_51 {dimension_numbers = #tpu.dot_dimension_numbers<[1], [0], [0], [1], [0, 0, 1, 1], [], []>} : vector<8x64xf32>, vector<64x128xf32>, vector<8x128xf32> -> vector<8x128xf32>
    %c0_52 = arith.constant 0 : index
    %c0_53 = arith.constant 0 : index
    %134 = vector.load %arg3[%c0_52, %c0_53] : memref<1x128xf32, #tpu.memory_space<vmem>>, vector<1x128xf32>
    %135 = vector.broadcast %134 : vector<1x128xf32> to vector<8x128xf32>
    %136 = arith.addf %133, %135 : vector<8x128xf32>
    %137 = vector.extract_strided_slice %136 {offsets = [0, 0], sizes = [8, 32], strides = [1, 1]} : vector<8x128xf32> to vector<8x32xf32>
    %138 = arith.negf %137 : vector<8x32xf32>
    %139 = math.exp %138 : vector<8x32xf32>
    %cst_54 = arith.constant 1.000000e+00 : f32
    %140 = vector.broadcast %cst_54 : f32 to vector<8x32xf32>
    %141 = arith.addf %140, %139 : vector<8x32xf32>
    %142 = arith.divf %140, %141 : vector<8x32xf32>
    %143 = vector.extract_strided_slice %136 {offsets = [0, 32], sizes = [8, 32], strides = [1, 1]} : vector<8x128xf32> to vector<8x32xf32>
    %144 = arith.negf %143 : vector<8x32xf32>
    %145 = math.exp %144 : vector<8x32xf32>
    %cst_55 = arith.constant 1.000000e+00 : f32
    %146 = vector.broadcast %cst_55 : f32 to vector<8x32xf32>
    %147 = arith.addf %146, %145 : vector<8x32xf32>
    %148 = arith.divf %146, %147 : vector<8x32xf32>
    %149 = vector.extract_strided_slice %136 {offsets = [0, 64], sizes = [8, 32], strides = [1, 1]} : vector<8x128xf32> to vector<8x32xf32>
    %150 = math.tanh %149 : vector<8x32xf32>
    %151 = vector.extract_strided_slice %136 {offsets = [0, 96], sizes = [8, 32], strides = [1, 1]} : vector<8x128xf32> to vector<8x32xf32>
    %152 = arith.negf %151 : vector<8x32xf32>
    %153 = math.exp %152 : vector<8x32xf32>
    %cst_56 = arith.constant 1.000000e+00 : f32
    %154 = vector.broadcast %cst_56 : f32 to vector<8x32xf32>
    %155 = arith.addf %154, %153 : vector<8x32xf32>
    %156 = arith.divf %154, %155 : vector<8x32xf32>
    %157 = arith.mulf %148, %114 : vector<8x32xf32>
    %158 = arith.mulf %142, %150 : vector<8x32xf32>
    %159 = arith.addf %157, %158 : vector<8x32xf32>
    %160 = math.tanh %159 : vector<8x32xf32>
    %161 = arith.mulf %156, %160 : vector<8x32xf32>
    %162 = vector.extract_strided_slice %131 {offsets = [0, 0], sizes = [1, 1], strides = [1, 1]} : vector<8x1xf32> to vector<1x1xf32>
    %cst_57 = arith.constant 5.000000e-01 : f32
    %163 = vector.broadcast %cst_57 : f32 to vector<1x1xf32>
    %164 = arith.cmpf ogt, %162, %163 : vector<1x1xf32>
    %165 = vector.broadcast %131 : vector<8x1xf32> to vector<8x32xf32>
    %166 = arith.mulf %161, %165 : vector<8x32xf32>
    %167 = tpu.concatenate %166, %91 in 1 : vector<8x32xf32>, vector<8x32xf32> -> vector<8x64xf32>
    %c0_58 = arith.constant 0 : index
    %c0_59 = arith.constant 0 : index
    %168 = vector.load %arg7[%c0_58, %c0_59] : memref<64x128xf32, #tpu.memory_space<vmem>>, vector<64x128xf32>
    %cst_60 = arith.constant dense<0.000000e+00> : vector<8x128xf32>
    %169 = tpu.matmul %167, %168, %cst_60 {dimension_numbers = #tpu.dot_dimension_numbers<[1], [0], [0], [1], [0, 0, 1, 1], [], []>} : vector<8x64xf32>, vector<64x128xf32>, vector<8x128xf32> -> vector<8x128xf32>
    %c0_61 = arith.constant 0 : index
    %c0_62 = arith.constant 0 : index
    %170 = vector.load %arg8[%c0_61, %c0_62] : memref<1x128xf32, #tpu.memory_space<vmem>>, vector<1x128xf32>
    %171 = vector.broadcast %170 : vector<1x128xf32> to vector<8x128xf32>
    %172 = arith.addf %169, %171 : vector<8x128xf32>
    %173 = vector.extract_strided_slice %172 {offsets = [0, 0], sizes = [8, 32], strides = [1, 1]} : vector<8x128xf32> to vector<8x32xf32>
    %174 = arith.negf %173 : vector<8x32xf32>
    %175 = math.exp %174 : vector<8x32xf32>
    %cst_63 = arith.constant 1.000000e+00 : f32
    %176 = vector.broadcast %cst_63 : f32 to vector<8x32xf32>
    %177 = arith.addf %176, %175 : vector<8x32xf32>
    %178 = arith.divf %176, %177 : vector<8x32xf32>
    %179 = vector.extract_strided_slice %172 {offsets = [0, 32], sizes = [8, 32], strides = [1, 1]} : vector<8x128xf32> to vector<8x32xf32>
    %180 = arith.negf %179 : vector<8x32xf32>
    %181 = math.exp %180 : vector<8x32xf32>
    %cst_64 = arith.constant 1.000000e+00 : f32
    %182 = vector.broadcast %cst_64 : f32 to vector<8x32xf32>
    %183 = arith.addf %182, %181 : vector<8x32xf32>
    %184 = arith.divf %182, %183 : vector<8x32xf32>
    %185 = vector.extract_strided_slice %172 {offsets = [0, 64], sizes = [8, 32], strides = [1, 1]} : vector<8x128xf32> to vector<8x32xf32>
    %186 = math.tanh %185 : vector<8x32xf32>
    %187 = vector.extract_strided_slice %172 {offsets = [0, 96], sizes = [8, 32], strides = [1, 1]} : vector<8x128xf32> to vector<8x32xf32>
    %188 = arith.negf %187 : vector<8x32xf32>
    %189 = math.exp %188 : vector<8x32xf32>
    %cst_65 = arith.constant 1.000000e+00 : f32
    %190 = vector.broadcast %cst_65 : f32 to vector<8x32xf32>
    %191 = arith.addf %190, %189 : vector<8x32xf32>
    %192 = arith.divf %190, %191 : vector<8x32xf32>
    %193 = arith.mulf %184, %94 : vector<8x32xf32>
    %194 = arith.mulf %178, %186 : vector<8x32xf32>
    %195 = arith.addf %193, %194 : vector<8x32xf32>
    %196 = math.tanh %195 : vector<8x32xf32>
    %197 = arith.mulf %192, %196 : vector<8x32xf32>
    %198 = vector.shape_cast %164 : vector<1x1xi1> to vector<1x1xi1>
    %199 = vector.broadcast %198 : vector<1x1xi1> to vector<8x32xi1>
    %200 = arith.select %199, %197, %91 : vector<8x32xi1>, vector<8x32xf32>
    %201 = vector.shape_cast %164 : vector<1x1xi1> to vector<1x1xi1>
    %202 = vector.broadcast %201 : vector<1x1xi1> to vector<8x32xi1>
    %203 = arith.select %202, %195, %94 : vector<8x32xi1>, vector<8x32xf32>
    %cst_66 = arith.constant 0.000000e+00 : f32
    %204 = vector.broadcast %cst_66 : f32 to vector<8x32xf32>
    %205 = vector.shape_cast %164 : vector<1x1xi1> to vector<1x1xi1>
    %206 = vector.broadcast %205 : vector<1x1xi1> to vector<8x32xi1>
    %207 = arith.select %206, %197, %204 : vector<8x32xi1>, vector<8x32xf32>
    %c0_67 = arith.constant 0 : index
    %c1_68 = arith.constant 1 : index
    %c0_69 = arith.constant 0 : index
    %208 = vector.load %arg20[%c0_67, %c1_68, %c0_69] : memref<8x8x32xf32, #tpu.memory_space<vmem>>, vector<8x1x32xf32>
    %209 = vector.shape_cast %208 : vector<8x1x32xf32> to vector<8x32xf32>
    %210 = vector.shape_cast %207 : vector<8x32xf32> to vector<8x1x32xf32>
    tpu.vector_store %arg20[%c0_67, %c1_68, %c0_69], %210 {strides = array<i32>} : memref<8x8x32xf32, #tpu.memory_space<vmem>>, vector<8x1x32xf32>,
    %c1_i32 = arith.constant 1 : i32
    %211 = vector.broadcast %c1_i32 : i32 to vector<1x8xi32>
    %212 = arith.cmpi eq, %5, %211 : vector<1x8xi32>
    %213 = vector.shape_cast %162 : vector<1x1xf32> to vector<1x1xf32>
    %214 = vector.broadcast %213 : vector<1x1xf32> to vector<1x8xf32>
    %215 = arith.select %212, %214, %106 : vector<1x8xi1>, vector<1x8xf32>
    %cst_70 = arith.constant 1.000000e+00 : f32
    %216 = vector.broadcast %cst_70 : f32 to vector<8x1xf32>
    %217 = arith.subf %216, %131 : vector<8x1xf32>
    %218 = vector.broadcast %217 : vector<8x1xf32> to vector<8x32xf32>
    %219 = arith.mulf %161, %218 : vector<8x32xf32>
    %cst_71 = arith.constant 1.000000e+00 : f32
    %220 = vector.broadcast %cst_71 : f32 to vector<8x1xf32>
    %221 = arith.subf %220, %131 : vector<8x1xf32>
    %222 = vector.broadcast %221 : vector<8x1xf32> to vector<8x32xf32>
    %223 = arith.mulf %159, %222 : vector<8x32xf32>
    %c2 = arith.constant 2 : index
    %c0_72 = arith.constant 0 : index
    %c0_73 = arith.constant 0 : index
    %224 = vector.load %arg0[%c2, %c0_72, %c0_73] : memref<8x8x32xf32, #tpu.memory_space<vmem>>, vector<1x8x32xf32>
    %225 = vector.shape_cast %224 : vector<1x8x32xf32> to vector<8x32xf32>
    %226 = tpu.concatenate %225, %219 in 1 : vector<8x32xf32>, vector<8x32xf32> -> vector<8x64xf32>
    %c0_74 = arith.constant 0 : index
    %c0_75 = arith.constant 0 : index
    %227 = vector.load %arg4[%c0_74, %c0_75] : memref<64x16xf32, #tpu.memory_space<vmem>>, vector<64x16xf32>
    %cst_76 = arith.constant dense<0.000000e+00> : vector<8x16xf32>
    %228 = tpu.matmul %226, %227, %cst_76 {dimension_numbers = #tpu.dot_dimension_numbers<[1], [0], [0], [1], [0, 0, 1, 1], [], []>} : vector<8x64xf32>, vector<64x16xf32>, vector<8x16xf32> -> vector<8x16xf32>
    %c0_77 = arith.constant 0 : index
    %c0_78 = arith.constant 0 : index
    %229 = vector.load %arg5[%c0_77, %c0_78] : memref<1x16xf32, #tpu.memory_space<vmem>>, vector<1x16xf32>
    %230 = vector.broadcast %229 : vector<1x16xf32> to vector<8x16xf32>
    %231 = arith.addf %228, %230 : vector<8x16xf32>
    %c0_79 = arith.constant 0 : index
    %c0_80 = arith.constant 0 : index
    %232 = vector.load %arg6[%c0_79, %c0_80] : memref<1x16xf32, #tpu.memory_space<vmem>>, vector<1x16xf32>
    %233 = vector.broadcast %232 : vector<1x16xf32> to vector<8x16xf32>
    %234 = arith.mulf %231, %233 : vector<8x16xf32>
    %cst_81 = arith.constant dense<0.000000e+00> : vector<8xf32>
    %235 = vector.multi_reduction <add>, %234, %cst_81 [1] : vector<8x16xf32> to vector<8xf32>
    %236 = vector.shape_cast %235 : vector<8xf32> to vector<8x1xf32>
    %cst_82 = arith.constant 0.000000e+00 : f32
    %237 = vector.broadcast %cst_82 : f32 to vector<8x1xf32>
    %238 = arith.cmpf ogt, %236, %237 : vector<8x1xf32>
    %239 = arith.extui %238 : vector<8x1xi1> to vector<8x1xi32>
    %240 = arith.sitofp %239 : vector<8x1xi32> to vector<8x1xf32>
    %c0_83 = arith.constant 0 : index
    %c0_84 = arith.constant 0 : index
    %241 = vector.load %arg2[%c0_83, %c0_84] : memref<64x128xf32, #tpu.memory_space<vmem>>, vector<64x128xf32>
    %cst_85 = arith.constant dense<0.000000e+00> : vector<8x128xf32>
    %242 = tpu.matmul %226, %241, %cst_85 {dimension_numbers = #tpu.dot_dimension_numbers<[1], [0], [0], [1], [0, 0, 1, 1], [], []>} : vector<8x64xf32>, vector<64x128xf32>, vector<8x128xf32> -> vector<8x128xf32>
    %c0_86 = arith.constant 0 : index
    %c0_87 = arith.constant 0 : index
    %243 = vector.load %arg3[%c0_86, %c0_87] : memref<1x128xf32, #tpu.memory_space<vmem>>, vector<1x128xf32>
    %244 = vector.broadcast %243 : vector<1x128xf32> to vector<8x128xf32>
    %245 = arith.addf %242, %244 : vector<8x128xf32>
    %246 = vector.extract_strided_slice %245 {offsets = [0, 0], sizes = [8, 32], strides = [1, 1]} : vector<8x128xf32> to vector<8x32xf32>
    %247 = arith.negf %246 : vector<8x32xf32>
    %248 = math.exp %247 : vector<8x32xf32>
    %cst_88 = arith.constant 1.000000e+00 : f32
    %249 = vector.broadcast %cst_88 : f32 to vector<8x32xf32>
    %250 = arith.addf %249, %248 : vector<8x32xf32>
    %251 = arith.divf %249, %250 : vector<8x32xf32>
    %252 = vector.extract_strided_slice %245 {offsets = [0, 32], sizes = [8, 32], strides = [1, 1]} : vector<8x128xf32> to vector<8x32xf32>
    %253 = arith.negf %252 : vector<8x32xf32>
    %254 = math.exp %253 : vector<8x32xf32>
    %cst_89 = arith.constant 1.000000e+00 : f32
    %255 = vector.broadcast %cst_89 : f32 to vector<8x32xf32>
    %256 = arith.addf %255, %254 : vector<8x32xf32>
    %257 = arith.divf %255, %256 : vector<8x32xf32>
    %258 = vector.extract_strided_slice %245 {offsets = [0, 64], sizes = [8, 32], strides = [1, 1]} : vector<8x128xf32> to vector<8x32xf32>
    %259 = math.tanh %258 : vector<8x32xf32>
    %260 = vector.extract_strided_slice %245 {offsets = [0, 96], sizes = [8, 32], strides = [1, 1]} : vector<8x128xf32> to vector<8x32xf32>
    %261 = arith.negf %260 : vector<8x32xf32>
    %262 = math.exp %261 : vector<8x32xf32>
    %cst_90 = arith.constant 1.000000e+00 : f32
    %263 = vector.broadcast %cst_90 : f32 to vector<8x32xf32>
    %264 = arith.addf %263, %262 : vector<8x32xf32>
    %265 = arith.divf %263, %264 : vector<8x32xf32>
    %266 = arith.mulf %257, %223 : vector<8x32xf32>
    %267 = arith.mulf %251, %259 : vector<8x32xf32>
    %268 = arith.addf %266, %267 : vector<8x32xf32>
    %269 = math.tanh %268 : vector<8x32xf32>
    %270 = arith.mulf %265, %269 : vector<8x32xf32>
    %271 = vector.extract_strided_slice %240 {offsets = [0, 0], sizes = [1, 1], strides = [1, 1]} : vector<8x1xf32> to vector<1x1xf32>
    %cst_91 = arith.constant 5.000000e-01 : f32
    %272 = vector.broadcast %cst_91 : f32 to vector<1x1xf32>
    %273 = arith.cmpf ogt, %271, %272 : vector<1x1xf32>
    %274 = vector.broadcast %240 : vector<8x1xf32> to vector<8x32xf32>
    %275 = arith.mulf %270, %274 : vector<8x32xf32>
    %276 = tpu.concatenate %275, %200 in 1 : vector<8x32xf32>, vector<8x32xf32> -> vector<8x64xf32>
    %c0_92 = arith.constant 0 : index
    %c0_93 = arith.constant 0 : index
    %277 = vector.load %arg7[%c0_92, %c0_93] : memref<64x128xf32, #tpu.memory_space<vmem>>, vector<64x128xf32>
    %cst_94 = arith.constant dense<0.000000e+00> : vector<8x128xf32>
    %278 = tpu.matmul %276, %277, %cst_94 {dimension_numbers = #tpu.dot_dimension_numbers<[1], [0], [0], [1], [0, 0, 1, 1], [], []>} : vector<8x64xf32>, vector<64x128xf32>, vector<8x128xf32> -> vector<8x128xf32>
    %c0_95 = arith.constant 0 : index
    %c0_96 = arith.constant 0 : index
    %279 = vector.load %arg8[%c0_95, %c0_96] : memref<1x128xf32, #tpu.memory_space<vmem>>, vector<1x128xf32>
    %280 = vector.broadcast %279 : vector<1x128xf32> to vector<8x128xf32>
    %281 = arith.addf %278, %280 : vector<8x128xf32>
    %282 = vector.extract_strided_slice %281 {offsets = [0, 0], sizes = [8, 32], strides = [1, 1]} : vector<8x128xf32> to vector<8x32xf32>
    %283 = arith.negf %282 : vector<8x32xf32>
    %284 = math.exp %283 : vector<8x32xf32>
    %cst_97 = arith.constant 1.000000e+00 : f32
    %285 = vector.broadcast %cst_97 : f32 to vector<8x32xf32>
    %286 = arith.addf %285, %284 : vector<8x32xf32>
    %287 = arith.divf %285, %286 : vector<8x32xf32>
    %288 = vector.extract_strided_slice %281 {offsets = [0, 32], sizes = [8, 32], strides = [1, 1]} : vector<8x128xf32> to vector<8x32xf32>
    %289 = arith.negf %288 : vector<8x32xf32>
    %290 = math.exp %289 : vector<8x32xf32>
    %cst_98 = arith.constant 1.000000e+00 : f32
    %291 = vector.broadcast %cst_98 : f32 to vector<8x32xf32>
    %292 = arith.addf %291, %290 : vector<8x32xf32>
    %293 = arith.divf %291, %292 : vector<8x32xf32>
    %294 = vector.extract_strided_slice %281 {offsets = [0, 64], sizes = [8, 32], strides = [1, 1]} : vector<8x128xf32> to vector<8x32xf32>
    %295 = math.tanh %294 : vector<8x32xf32>
    %296 = vector.extract_strided_slice %281 {offsets = [0, 96], sizes = [8, 32], strides = [1, 1]} : vector<8x128xf32> to vector<8x32xf32>
    %297 = arith.negf %296 : vector<8x32xf32>
    %298 = math.exp %297 : vector<8x32xf32>
    %cst_99 = arith.constant 1.000000e+00 : f32
    %299 = vector.broadcast %cst_99 : f32 to vector<8x32xf32>
    %300 = arith.addf %299, %298 : vector<8x32xf32>
    %301 = arith.divf %299, %300 : vector<8x32xf32>
    %302 = arith.mulf %293, %203 : vector<8x32xf32>
    %303 = arith.mulf %287, %295 : vector<8x32xf32>
    %304 = arith.addf %302, %303 : vector<8x32xf32>
    %305 = math.tanh %304 : vector<8x32xf32>
    %306 = arith.mulf %301, %305 : vector<8x32xf32>
    %307 = vector.shape_cast %273 : vector<1x1xi1> to vector<1x1xi1>
    %308 = vector.broadcast %307 : vector<1x1xi1> to vector<8x32xi1>
    %309 = arith.select %308, %306, %200 : vector<8x32xi1>, vector<8x32xf32>
    %310 = vector.shape_cast %273 : vector<1x1xi1> to vector<1x1xi1>
    %311 = vector.broadcast %310 : vector<1x1xi1> to vector<8x32xi1>
    %312 = arith.select %311, %304, %203 : vector<8x32xi1>, vector<8x32xf32>
    %cst_100 = arith.constant 0.000000e+00 : f32
    %313 = vector.broadcast %cst_100 : f32 to vector<8x32xf32>
    %314 = vector.shape_cast %273 : vector<1x1xi1> to vector<1x1xi1>
    %315 = vector.broadcast %314 : vector<1x1xi1> to vector<8x32xi1>
    %316 = arith.select %315, %306, %313 : vector<8x32xi1>, vector<8x32xf32>
    %c0_101 = arith.constant 0 : index
    %c2_102 = arith.constant 2 : index
    %c0_103 = arith.constant 0 : index
    %317 = vector.load %arg20[%c0_101, %c2_102, %c0_103] : memref<8x8x32xf32, #tpu.memory_space<vmem>>, vector<8x1x32xf32>
    %318 = vector.shape_cast %317 : vector<8x1x32xf32> to vector<8x32xf32>
    %319 = vector.shape_cast %316 : vector<8x32xf32> to vector<8x1x32xf32>
    tpu.vector_store %arg20[%c0_101, %c2_102, %c0_103], %319 {strides = array<i32>} : memref<8x8x32xf32, #tpu.memory_space<vmem>>, vector<8x1x32xf32>,
    %c2_i32 = arith.constant 2 : i32
    %320 = vector.broadcast %c2_i32 : i32 to vector<1x8xi32>
    %321 = arith.cmpi eq, %5, %320 : vector<1x8xi32>
    %322 = vector.shape_cast %271 : vector<1x1xf32> to vector<1x1xf32>
    %323 = vector.broadcast %322 : vector<1x1xf32> to vector<1x8xf32>
    %324 = arith.select %321, %323, %215 : vector<1x8xi1>, vector<1x8xf32>
    %cst_104 = arith.constant 1.000000e+00 : f32
    %325 = vector.broadcast %cst_104 : f32 to vector<8x1xf32>
    %326 = arith.subf %325, %240 : vector<8x1xf32>
    %327 = vector.broadcast %326 : vector<8x1xf32> to vector<8x32xf32>
    %328 = arith.mulf %270, %327 : vector<8x32xf32>
    %cst_105 = arith.constant 1.000000e+00 : f32
    %329 = vector.broadcast %cst_105 : f32 to vector<8x1xf32>
    %330 = arith.subf %329, %240 : vector<8x1xf32>
    %331 = vector.broadcast %330 : vector<8x1xf32> to vector<8x32xf32>
    %332 = arith.mulf %268, %331 : vector<8x32xf32>
    %c3 = arith.constant 3 : index
    %c0_106 = arith.constant 0 : index
    %c0_107 = arith.constant 0 : index
    %333 = vector.load %arg0[%c3, %c0_106, %c0_107] : memref<8x8x32xf32, #tpu.memory_space<vmem>>, vector<1x8x32xf32>
    %334 = vector.shape_cast %333 : vector<1x8x32xf32> to vector<8x32xf32>
    %335 = tpu.concatenate %334, %328 in 1 : vector<8x32xf32>, vector<8x32xf32> -> vector<8x64xf32>
    %c0_108 = arith.constant 0 : index
    %c0_109 = arith.constant 0 : index
    %336 = vector.load %arg4[%c0_108, %c0_109] : memref<64x16xf32, #tpu.memory_space<vmem>>, vector<64x16xf32>
    %cst_110 = arith.constant dense<0.000000e+00> : vector<8x16xf32>
    %337 = tpu.matmul %335, %336, %cst_110 {dimension_numbers = #tpu.dot_dimension_numbers<[1], [0], [0], [1], [0, 0, 1, 1], [], []>} : vector<8x64xf32>, vector<64x16xf32>, vector<8x16xf32> -> vector<8x16xf32>
    %c0_111 = arith.constant 0 : index
    %c0_112 = arith.constant 0 : index
    %338 = vector.load %arg5[%c0_111, %c0_112] : memref<1x16xf32, #tpu.memory_space<vmem>>, vector<1x16xf32>
    %339 = vector.broadcast %338 : vector<1x16xf32> to vector<8x16xf32>
    %340 = arith.addf %337, %339 : vector<8x16xf32>
    %c0_113 = arith.constant 0 : index
    %c0_114 = arith.constant 0 : index
    %341 = vector.load %arg6[%c0_113, %c0_114] : memref<1x16xf32, #tpu.memory_space<vmem>>, vector<1x16xf32>
    %342 = vector.broadcast %341 : vector<1x16xf32> to vector<8x16xf32>
    %343 = arith.mulf %340, %342 : vector<8x16xf32>
    %cst_115 = arith.constant dense<0.000000e+00> : vector<8xf32>
    %344 = vector.multi_reduction <add>, %343, %cst_115 [1] : vector<8x16xf32> to vector<8xf32>
    %345 = vector.shape_cast %344 : vector<8xf32> to vector<8x1xf32>
    %cst_116 = arith.constant 0.000000e+00 : f32
    %346 = vector.broadcast %cst_116 : f32 to vector<8x1xf32>
    %347 = arith.cmpf ogt, %345, %346 : vector<8x1xf32>
    %348 = arith.extui %347 : vector<8x1xi1> to vector<8x1xi32>
    %349 = arith.sitofp %348 : vector<8x1xi32> to vector<8x1xf32>
    %c0_117 = arith.constant 0 : index
    %c0_118 = arith.constant 0 : index
    %350 = vector.load %arg2[%c0_117, %c0_118] : memref<64x128xf32, #tpu.memory_space<vmem>>, vector<64x128xf32>
    %cst_119 = arith.constant dense<0.000000e+00> : vector<8x128xf32>
    %351 = tpu.matmul %335, %350, %cst_119 {dimension_numbers = #tpu.dot_dimension_numbers<[1], [0], [0], [1], [0, 0, 1, 1], [], []>} : vector<8x64xf32>, vector<64x128xf32>, vector<8x128xf32> -> vector<8x128xf32>
    %c0_120 = arith.constant 0 : index
    %c0_121 = arith.constant 0 : index
    %352 = vector.load %arg3[%c0_120, %c0_121] : memref<1x128xf32, #tpu.memory_space<vmem>>, vector<1x128xf32>
    %353 = vector.broadcast %352 : vector<1x128xf32> to vector<8x128xf32>
    %354 = arith.addf %351, %353 : vector<8x128xf32>
    %355 = vector.extract_strided_slice %354 {offsets = [0, 0], sizes = [8, 32], strides = [1, 1]} : vector<8x128xf32> to vector<8x32xf32>
    %356 = arith.negf %355 : vector<8x32xf32>
    %357 = math.exp %356 : vector<8x32xf32>
    %cst_122 = arith.constant 1.000000e+00 : f32
    %358 = vector.broadcast %cst_122 : f32 to vector<8x32xf32>
    %359 = arith.addf %358, %357 : vector<8x32xf32>
    %360 = arith.divf %358, %359 : vector<8x32xf32>
    %361 = vector.extract_strided_slice %354 {offsets = [0, 32], sizes = [8, 32], strides = [1, 1]} : vector<8x128xf32> to vector<8x32xf32>
    %362 = arith.negf %361 : vector<8x32xf32>
    %363 = math.exp %362 : vector<8x32xf32>
    %cst_123 = arith.constant 1.000000e+00 : f32
    %364 = vector.broadcast %cst_123 : f32 to vector<8x32xf32>
    %365 = arith.addf %364, %363 : vector<8x32xf32>
    %366 = arith.divf %364, %365 : vector<8x32xf32>
    %367 = vector.extract_strided_slice %354 {offsets = [0, 64], sizes = [8, 32], strides = [1, 1]} : vector<8x128xf32> to vector<8x32xf32>
    %368 = math.tanh %367 : vector<8x32xf32>
    %369 = vector.extract_strided_slice %354 {offsets = [0, 96], sizes = [8, 32], strides = [1, 1]} : vector<8x128xf32> to vector<8x32xf32>
    %370 = arith.negf %369 : vector<8x32xf32>
    %371 = math.exp %370 : vector<8x32xf32>
    %cst_124 = arith.constant 1.000000e+00 : f32
    %372 = vector.broadcast %cst_124 : f32 to vector<8x32xf32>
    %373 = arith.addf %372, %371 : vector<8x32xf32>
    %374 = arith.divf %372, %373 : vector<8x32xf32>
    %375 = arith.mulf %366, %332 : vector<8x32xf32>
    %376 = arith.mulf %360, %368 : vector<8x32xf32>
    %377 = arith.addf %375, %376 : vector<8x32xf32>
    %378 = math.tanh %377 : vector<8x32xf32>
    %379 = arith.mulf %374, %378 : vector<8x32xf32>
    %380 = vector.extract_strided_slice %349 {offsets = [0, 0], sizes = [1, 1], strides = [1, 1]} : vector<8x1xf32> to vector<1x1xf32>
    %cst_125 = arith.constant 5.000000e-01 : f32
    %381 = vector.broadcast %cst_125 : f32 to vector<1x1xf32>
    %382 = arith.cmpf ogt, %380, %381 : vector<1x1xf32>
    %383 = vector.broadcast %349 : vector<8x1xf32> to vector<8x32xf32>
    %384 = arith.mulf %379, %383 : vector<8x32xf32>
    %385 = tpu.concatenate %384, %309 in 1 : vector<8x32xf32>, vector<8x32xf32> -> vector<8x64xf32>
    %c0_126 = arith.constant 0 : index
    %c0_127 = arith.constant 0 : index
    %386 = vector.load %arg7[%c0_126, %c0_127] : memref<64x128xf32, #tpu.memory_space<vmem>>, vector<64x128xf32>
    %cst_128 = arith.constant dense<0.000000e+00> : vector<8x128xf32>
    %387 = tpu.matmul %385, %386, %cst_128 {dimension_numbers = #tpu.dot_dimension_numbers<[1], [0], [0], [1], [0, 0, 1, 1], [], []>} : vector<8x64xf32>, vector<64x128xf32>, vector<8x128xf32> -> vector<8x128xf32>
    %c0_129 = arith.constant 0 : index
    %c0_130 = arith.constant 0 : index
    %388 = vector.load %arg8[%c0_129, %c0_130] : memref<1x128xf32, #tpu.memory_space<vmem>>, vector<1x128xf32>
    %389 = vector.broadcast %388 : vector<1x128xf32> to vector<8x128xf32>
    %390 = arith.addf %387, %389 : vector<8x128xf32>
    %391 = vector.extract_strided_slice %390 {offsets = [0, 0], sizes = [8, 32], strides = [1, 1]} : vector<8x128xf32> to vector<8x32xf32>
    %392 = arith.negf %391 : vector<8x32xf32>
    %393 = math.exp %392 : vector<8x32xf32>
    %cst_131 = arith.constant 1.000000e+00 : f32
    %394 = vector.broadcast %cst_131 : f32 to vector<8x32xf32>
    %395 = arith.addf %394, %393 : vector<8x32xf32>
    %396 = arith.divf %394, %395 : vector<8x32xf32>
    %397 = vector.extract_strided_slice %390 {offsets = [0, 32], sizes = [8, 32], strides = [1, 1]} : vector<8x128xf32> to vector<8x32xf32>
    %398 = arith.negf %397 : vector<8x32xf32>
    %399 = math.exp %398 : vector<8x32xf32>
    %cst_132 = arith.constant 1.000000e+00 : f32
    %400 = vector.broadcast %cst_132 : f32 to vector<8x32xf32>
    %401 = arith.addf %400, %399 : vector<8x32xf32>
    %402 = arith.divf %400, %401 : vector<8x32xf32>
    %403 = vector.extract_strided_slice %390 {offsets = [0, 64], sizes = [8, 32], strides = [1, 1]} : vector<8x128xf32> to vector<8x32xf32>
    %404 = math.tanh %403 : vector<8x32xf32>
    %405 = vector.extract_strided_slice %390 {offsets = [0, 96], sizes = [8, 32], strides = [1, 1]} : vector<8x128xf32> to vector<8x32xf32>
    %406 = arith.negf %405 : vector<8x32xf32>
    %407 = math.exp %406 : vector<8x32xf32>
    %cst_133 = arith.constant 1.000000e+00 : f32
    %408 = vector.broadcast %cst_133 : f32 to vector<8x32xf32>
    %409 = arith.addf %408, %407 : vector<8x32xf32>
    %410 = arith.divf %408, %409 : vector<8x32xf32>
    %411 = arith.mulf %402, %312 : vector<8x32xf32>
    %412 = arith.mulf %396, %404 : vector<8x32xf32>
    %413 = arith.addf %411, %412 : vector<8x32xf32>
    %414 = math.tanh %413 : vector<8x32xf32>
    %415 = arith.mulf %410, %414 : vector<8x32xf32>
    %416 = vector.shape_cast %382 : vector<1x1xi1> to vector<1x1xi1>
    %417 = vector.broadcast %416 : vector<1x1xi1> to vector<8x32xi1>
    %418 = arith.select %417, %415, %309 : vector<8x32xi1>, vector<8x32xf32>
    %419 = vector.shape_cast %382 : vector<1x1xi1> to vector<1x1xi1>
    %420 = vector.broadcast %419 : vector<1x1xi1> to vector<8x32xi1>
    %421 = arith.select %420, %413, %312 : vector<8x32xi1>, vector<8x32xf32>
    %cst_134 = arith.constant 0.000000e+00 : f32
    %422 = vector.broadcast %cst_134 : f32 to vector<8x32xf32>
    %423 = vector.shape_cast %382 : vector<1x1xi1> to vector<1x1xi1>
    %424 = vector.broadcast %423 : vector<1x1xi1> to vector<8x32xi1>
    %425 = arith.select %424, %415, %422 : vector<8x32xi1>, vector<8x32xf32>
    %c0_135 = arith.constant 0 : index
    %c3_136 = arith.constant 3 : index
    %c0_137 = arith.constant 0 : index
    %426 = vector.load %arg20[%c0_135, %c3_136, %c0_137] : memref<8x8x32xf32, #tpu.memory_space<vmem>>, vector<8x1x32xf32>
    %427 = vector.shape_cast %426 : vector<8x1x32xf32> to vector<8x32xf32>
    %428 = vector.shape_cast %425 : vector<8x32xf32> to vector<8x1x32xf32>
    tpu.vector_store %arg20[%c0_135, %c3_136, %c0_137], %428 {strides = array<i32>} : memref<8x8x32xf32, #tpu.memory_space<vmem>>, vector<8x1x32xf32>,
    %c3_i32 = arith.constant 3 : i32
    %429 = vector.broadcast %c3_i32 : i32 to vector<1x8xi32>
    %430 = arith.cmpi eq, %5, %429 : vector<1x8xi32>
    %431 = vector.shape_cast %380 : vector<1x1xf32> to vector<1x1xf32>
    %432 = vector.broadcast %431 : vector<1x1xf32> to vector<1x8xf32>
    %433 = arith.select %430, %432, %324 : vector<1x8xi1>, vector<1x8xf32>
    %cst_138 = arith.constant 1.000000e+00 : f32
    %434 = vector.broadcast %cst_138 : f32 to vector<8x1xf32>
    %435 = arith.subf %434, %349 : vector<8x1xf32>
    %436 = vector.broadcast %435 : vector<8x1xf32> to vector<8x32xf32>
    %437 = arith.mulf %379, %436 : vector<8x32xf32>
    %cst_139 = arith.constant 1.000000e+00 : f32
    %438 = vector.broadcast %cst_139 : f32 to vector<8x1xf32>
    %439 = arith.subf %438, %349 : vector<8x1xf32>
    %440 = vector.broadcast %439 : vector<8x1xf32> to vector<8x32xf32>
    %441 = arith.mulf %377, %440 : vector<8x32xf32>
    %c4 = arith.constant 4 : index
    %c0_140 = arith.constant 0 : index
    %c0_141 = arith.constant 0 : index
    %442 = vector.load %arg0[%c4, %c0_140, %c0_141] : memref<8x8x32xf32, #tpu.memory_space<vmem>>, vector<1x8x32xf32>
    %443 = vector.shape_cast %442 : vector<1x8x32xf32> to vector<8x32xf32>
    %444 = tpu.concatenate %443, %437 in 1 : vector<8x32xf32>, vector<8x32xf32> -> vector<8x64xf32>
    %c0_142 = arith.constant 0 : index
    %c0_143 = arith.constant 0 : index
    %445 = vector.load %arg4[%c0_142, %c0_143] : memref<64x16xf32, #tpu.memory_space<vmem>>, vector<64x16xf32>
    %cst_144 = arith.constant dense<0.000000e+00> : vector<8x16xf32>
    %446 = tpu.matmul %444, %445, %cst_144 {dimension_numbers = #tpu.dot_dimension_numbers<[1], [0], [0], [1], [0, 0, 1, 1], [], []>} : vector<8x64xf32>, vector<64x16xf32>, vector<8x16xf32> -> vector<8x16xf32>
    %c0_145 = arith.constant 0 : index
    %c0_146 = arith.constant 0 : index
    %447 = vector.load %arg5[%c0_145, %c0_146] : memref<1x16xf32, #tpu.memory_space<vmem>>, vector<1x16xf32>
    %448 = vector.broadcast %447 : vector<1x16xf32> to vector<8x16xf32>
    %449 = arith.addf %446, %448 : vector<8x16xf32>
    %c0_147 = arith.constant 0 : index
    %c0_148 = arith.constant 0 : index
    %450 = vector.load %arg6[%c0_147, %c0_148] : memref<1x16xf32, #tpu.memory_space<vmem>>, vector<1x16xf32>
    %451 = vector.broadcast %450 : vector<1x16xf32> to vector<8x16xf32>
    %452 = arith.mulf %449, %451 : vector<8x16xf32>
    %cst_149 = arith.constant dense<0.000000e+00> : vector<8xf32>
    %453 = vector.multi_reduction <add>, %452, %cst_149 [1] : vector<8x16xf32> to vector<8xf32>
    %454 = vector.shape_cast %453 : vector<8xf32> to vector<8x1xf32>
    %cst_150 = arith.constant 0.000000e+00 : f32
    %455 = vector.broadcast %cst_150 : f32 to vector<8x1xf32>
    %456 = arith.cmpf ogt, %454, %455 : vector<8x1xf32>
    %457 = arith.extui %456 : vector<8x1xi1> to vector<8x1xi32>
    %458 = arith.sitofp %457 : vector<8x1xi32> to vector<8x1xf32>
    %c0_151 = arith.constant 0 : index
    %c0_152 = arith.constant 0 : index
    %459 = vector.load %arg2[%c0_151, %c0_152] : memref<64x128xf32, #tpu.memory_space<vmem>>, vector<64x128xf32>
    %cst_153 = arith.constant dense<0.000000e+00> : vector<8x128xf32>
    %460 = tpu.matmul %444, %459, %cst_153 {dimension_numbers = #tpu.dot_dimension_numbers<[1], [0], [0], [1], [0, 0, 1, 1], [], []>} : vector<8x64xf32>, vector<64x128xf32>, vector<8x128xf32> -> vector<8x128xf32>
    %c0_154 = arith.constant 0 : index
    %c0_155 = arith.constant 0 : index
    %461 = vector.load %arg3[%c0_154, %c0_155] : memref<1x128xf32, #tpu.memory_space<vmem>>, vector<1x128xf32>
    %462 = vector.broadcast %461 : vector<1x128xf32> to vector<8x128xf32>
    %463 = arith.addf %460, %462 : vector<8x128xf32>
    %464 = vector.extract_strided_slice %463 {offsets = [0, 0], sizes = [8, 32], strides = [1, 1]} : vector<8x128xf32> to vector<8x32xf32>
    %465 = arith.negf %464 : vector<8x32xf32>
    %466 = math.exp %465 : vector<8x32xf32>
    %cst_156 = arith.constant 1.000000e+00 : f32
    %467 = vector.broadcast %cst_156 : f32 to vector<8x32xf32>
    %468 = arith.addf %467, %466 : vector<8x32xf32>
    %469 = arith.divf %467, %468 : vector<8x32xf32>
    %470 = vector.extract_strided_slice %463 {offsets = [0, 32], sizes = [8, 32], strides = [1, 1]} : vector<8x128xf32> to vector<8x32xf32>
    %471 = arith.negf %470 : vector<8x32xf32>
    %472 = math.exp %471 : vector<8x32xf32>
    %cst_157 = arith.constant 1.000000e+00 : f32
    %473 = vector.broadcast %cst_157 : f32 to vector<8x32xf32>
    %474 = arith.addf %473, %472 : vector<8x32xf32>
    %475 = arith.divf %473, %474 : vector<8x32xf32>
    %476 = vector.extract_strided_slice %463 {offsets = [0, 64], sizes = [8, 32], strides = [1, 1]} : vector<8x128xf32> to vector<8x32xf32>
    %477 = math.tanh %476 : vector<8x32xf32>
    %478 = vector.extract_strided_slice %463 {offsets = [0, 96], sizes = [8, 32], strides = [1, 1]} : vector<8x128xf32> to vector<8x32xf32>
    %479 = arith.negf %478 : vector<8x32xf32>
    %480 = math.exp %479 : vector<8x32xf32>
    %cst_158 = arith.constant 1.000000e+00 : f32
    %481 = vector.broadcast %cst_158 : f32 to vector<8x32xf32>
    %482 = arith.addf %481, %480 : vector<8x32xf32>
    %483 = arith.divf %481, %482 : vector<8x32xf32>
    %484 = arith.mulf %475, %441 : vector<8x32xf32>
    %485 = arith.mulf %469, %477 : vector<8x32xf32>
    %486 = arith.addf %484, %485 : vector<8x32xf32>
    %487 = math.tanh %486 : vector<8x32xf32>
    %488 = arith.mulf %483, %487 : vector<8x32xf32>
    %489 = vector.extract_strided_slice %458 {offsets = [0, 0], sizes = [1, 1], strides = [1, 1]} : vector<8x1xf32> to vector<1x1xf32>
    %cst_159 = arith.constant 5.000000e-01 : f32
    %490 = vector.broadcast %cst_159 : f32 to vector<1x1xf32>
    %491 = arith.cmpf ogt, %489, %490 : vector<1x1xf32>
    %492 = vector.broadcast %458 : vector<8x1xf32> to vector<8x32xf32>
    %493 = arith.mulf %488, %492 : vector<8x32xf32>
    %494 = tpu.concatenate %493, %418 in 1 : vector<8x32xf32>, vector<8x32xf32> -> vector<8x64xf32>
    %c0_160 = arith.constant 0 : index
    %c0_161 = arith.constant 0 : index
    %495 = vector.load %arg7[%c0_160, %c0_161] : memref<64x128xf32, #tpu.memory_space<vmem>>, vector<64x128xf32>
    %cst_162 = arith.constant dense<0.000000e+00> : vector<8x128xf32>
    %496 = tpu.matmul %494, %495, %cst_162 {dimension_numbers = #tpu.dot_dimension_numbers<[1], [0], [0], [1], [0, 0, 1, 1], [], []>} : vector<8x64xf32>, vector<64x128xf32>, vector<8x128xf32> -> vector<8x128xf32>
    %c0_163 = arith.constant 0 : index
    %c0_164 = arith.constant 0 : index
    %497 = vector.load %arg8[%c0_163, %c0_164] : memref<1x128xf32, #tpu.memory_space<vmem>>, vector<1x128xf32>
    %498 = vector.broadcast %497 : vector<1x128xf32> to vector<8x128xf32>
    %499 = arith.addf %496, %498 : vector<8x128xf32>
    %500 = vector.extract_strided_slice %499 {offsets = [0, 0], sizes = [8, 32], strides = [1, 1]} : vector<8x128xf32> to vector<8x32xf32>
    %501 = arith.negf %500 : vector<8x32xf32>
    %502 = math.exp %501 : vector<8x32xf32>
    %cst_165 = arith.constant 1.000000e+00 : f32
    %503 = vector.broadcast %cst_165 : f32 to vector<8x32xf32>
    %504 = arith.addf %503, %502 : vector<8x32xf32>
    %505 = arith.divf %503, %504 : vector<8x32xf32>
    %506 = vector.extract_strided_slice %499 {offsets = [0, 32], sizes = [8, 32], strides = [1, 1]} : vector<8x128xf32> to vector<8x32xf32>
    %507 = arith.negf %506 : vector<8x32xf32>
    %508 = math.exp %507 : vector<8x32xf32>
    %cst_166 = arith.constant 1.000000e+00 : f32
    %509 = vector.broadcast %cst_166 : f32 to vector<8x32xf32>
    %510 = arith.addf %509, %508 : vector<8x32xf32>
    %511 = arith.divf %509, %510 : vector<8x32xf32>
    %512 = vector.extract_strided_slice %499 {offsets = [0, 64], sizes = [8, 32], strides = [1, 1]} : vector<8x128xf32> to vector<8x32xf32>
    %513 = math.tanh %512 : vector<8x32xf32>
    %514 = vector.extract_strided_slice %499 {offsets = [0, 96], sizes = [8, 32], strides = [1, 1]} : vector<8x128xf32> to vector<8x32xf32>
    %515 = arith.negf %514 : vector<8x32xf32>
    %516 = math.exp %515 : vector<8x32xf32>
    %cst_167 = arith.constant 1.000000e+00 : f32
    %517 = vector.broadcast %cst_167 : f32 to vector<8x32xf32>
    %518 = arith.addf %517, %516 : vector<8x32xf32>
    %519 = arith.divf %517, %518 : vector<8x32xf32>
    %520 = arith.mulf %511, %421 : vector<8x32xf32>
    %521 = arith.mulf %505, %513 : vector<8x32xf32>
    %522 = arith.addf %520, %521 : vector<8x32xf32>
    %523 = math.tanh %522 : vector<8x32xf32>
    %524 = arith.mulf %519, %523 : vector<8x32xf32>
    %525 = vector.shape_cast %491 : vector<1x1xi1> to vector<1x1xi1>
    %526 = vector.broadcast %525 : vector<1x1xi1> to vector<8x32xi1>
    %527 = arith.select %526, %524, %418 : vector<8x32xi1>, vector<8x32xf32>
    %528 = vector.shape_cast %491 : vector<1x1xi1> to vector<1x1xi1>
    %529 = vector.broadcast %528 : vector<1x1xi1> to vector<8x32xi1>
    %530 = arith.select %529, %522, %421 : vector<8x32xi1>, vector<8x32xf32>
    %cst_168 = arith.constant 0.000000e+00 : f32
    %531 = vector.broadcast %cst_168 : f32 to vector<8x32xf32>
    %532 = vector.shape_cast %491 : vector<1x1xi1> to vector<1x1xi1>
    %533 = vector.broadcast %532 : vector<1x1xi1> to vector<8x32xi1>
    %534 = arith.select %533, %524, %531 : vector<8x32xi1>, vector<8x32xf32>
    %c0_169 = arith.constant 0 : index
    %c4_170 = arith.constant 4 : index
    %c0_171 = arith.constant 0 : index
    %535 = vector.load %arg20[%c0_169, %c4_170, %c0_171] : memref<8x8x32xf32, #tpu.memory_space<vmem>>, vector<8x1x32xf32>
    %536 = vector.shape_cast %535 : vector<8x1x32xf32> to vector<8x32xf32>
    %537 = vector.shape_cast %534 : vector<8x32xf32> to vector<8x1x32xf32>
    tpu.vector_store %arg20[%c0_169, %c4_170, %c0_171], %537 {strides = array<i32>} : memref<8x8x32xf32, #tpu.memory_space<vmem>>, vector<8x1x32xf32>,
    %c4_i32 = arith.constant 4 : i32
    %538 = vector.broadcast %c4_i32 : i32 to vector<1x8xi32>
    %539 = arith.cmpi eq, %5, %538 : vector<1x8xi32>
    %540 = vector.shape_cast %489 : vector<1x1xf32> to vector<1x1xf32>
    %541 = vector.broadcast %540 : vector<1x1xf32> to vector<1x8xf32>
    %542 = arith.select %539, %541, %433 : vector<1x8xi1>, vector<1x8xf32>
    %cst_172 = arith.constant 1.000000e+00 : f32
    %543 = vector.broadcast %cst_172 : f32 to vector<8x1xf32>
    %544 = arith.subf %543, %458 : vector<8x1xf32>
    %545 = vector.broadcast %544 : vector<8x1xf32> to vector<8x32xf32>
    %546 = arith.mulf %488, %545 : vector<8x32xf32>
    %cst_173 = arith.constant 1.000000e+00 : f32
    %547 = vector.broadcast %cst_173 : f32 to vector<8x1xf32>
    %548 = arith.subf %547, %458 : vector<8x1xf32>
    %549 = vector.broadcast %548 : vector<8x1xf32> to vector<8x32xf32>
    %550 = arith.mulf %486, %549 : vector<8x32xf32>
    %c5 = arith.constant 5 : index
    %c0_174 = arith.constant 0 : index
    %c0_175 = arith.constant 0 : index
    %551 = vector.load %arg0[%c5, %c0_174, %c0_175] : memref<8x8x32xf32, #tpu.memory_space<vmem>>, vector<1x8x32xf32>
    %552 = vector.shape_cast %551 : vector<1x8x32xf32> to vector<8x32xf32>
    %553 = tpu.concatenate %552, %546 in 1 : vector<8x32xf32>, vector<8x32xf32> -> vector<8x64xf32>
    %c0_176 = arith.constant 0 : index
    %c0_177 = arith.constant 0 : index
    %554 = vector.load %arg4[%c0_176, %c0_177] : memref<64x16xf32, #tpu.memory_space<vmem>>, vector<64x16xf32>
    %cst_178 = arith.constant dense<0.000000e+00> : vector<8x16xf32>
    %555 = tpu.matmul %553, %554, %cst_178 {dimension_numbers = #tpu.dot_dimension_numbers<[1], [0], [0], [1], [0, 0, 1, 1], [], []>} : vector<8x64xf32>, vector<64x16xf32>, vector<8x16xf32> -> vector<8x16xf32>
    %c0_179 = arith.constant 0 : index
    %c0_180 = arith.constant 0 : index
    %556 = vector.load %arg5[%c0_179, %c0_180] : memref<1x16xf32, #tpu.memory_space<vmem>>, vector<1x16xf32>
    %557 = vector.broadcast %556 : vector<1x16xf32> to vector<8x16xf32>
    %558 = arith.addf %555, %557 : vector<8x16xf32>
    %c0_181 = arith.constant 0 : index
    %c0_182 = arith.constant 0 : index
    %559 = vector.load %arg6[%c0_181, %c0_182] : memref<1x16xf32, #tpu.memory_space<vmem>>, vector<1x16xf32>
    %560 = vector.broadcast %559 : vector<1x16xf32> to vector<8x16xf32>
    %561 = arith.mulf %558, %560 : vector<8x16xf32>
    %cst_183 = arith.constant dense<0.000000e+00> : vector<8xf32>
    %562 = vector.multi_reduction <add>, %561, %cst_183 [1] : vector<8x16xf32> to vector<8xf32>
    %563 = vector.shape_cast %562 : vector<8xf32> to vector<8x1xf32>
    %cst_184 = arith.constant 0.000000e+00 : f32
    %564 = vector.broadcast %cst_184 : f32 to vector<8x1xf32>
    %565 = arith.cmpf ogt, %563, %564 : vector<8x1xf32>
    %566 = arith.extui %565 : vector<8x1xi1> to vector<8x1xi32>
    %567 = arith.sitofp %566 : vector<8x1xi32> to vector<8x1xf32>
    %c0_185 = arith.constant 0 : index
    %c0_186 = arith.constant 0 : index
    %568 = vector.load %arg2[%c0_185, %c0_186] : memref<64x128xf32, #tpu.memory_space<vmem>>, vector<64x128xf32>
    %cst_187 = arith.constant dense<0.000000e+00> : vector<8x128xf32>
    %569 = tpu.matmul %553, %568, %cst_187 {dimension_numbers = #tpu.dot_dimension_numbers<[1], [0], [0], [1], [0, 0, 1, 1], [], []>} : vector<8x64xf32>, vector<64x128xf32>, vector<8x128xf32> -> vector<8x128xf32>
    %c0_188 = arith.constant 0 : index
    %c0_189 = arith.constant 0 : index
    %570 = vector.load %arg3[%c0_188, %c0_189] : memref<1x128xf32, #tpu.memory_space<vmem>>, vector<1x128xf32>
    %571 = vector.broadcast %570 : vector<1x128xf32> to vector<8x128xf32>
    %572 = arith.addf %569, %571 : vector<8x128xf32>
    %573 = vector.extract_strided_slice %572 {offsets = [0, 0], sizes = [8, 32], strides = [1, 1]} : vector<8x128xf32> to vector<8x32xf32>
    %574 = arith.negf %573 : vector<8x32xf32>
    %575 = math.exp %574 : vector<8x32xf32>
    %cst_190 = arith.constant 1.000000e+00 : f32
    %576 = vector.broadcast %cst_190 : f32 to vector<8x32xf32>
    %577 = arith.addf %576, %575 : vector<8x32xf32>
    %578 = arith.divf %576, %577 : vector<8x32xf32>
    %579 = vector.extract_strided_slice %572 {offsets = [0, 32], sizes = [8, 32], strides = [1, 1]} : vector<8x128xf32> to vector<8x32xf32>
    %580 = arith.negf %579 : vector<8x32xf32>
    %581 = math.exp %580 : vector<8x32xf32>
    %cst_191 = arith.constant 1.000000e+00 : f32
    %582 = vector.broadcast %cst_191 : f32 to vector<8x32xf32>
    %583 = arith.addf %582, %581 : vector<8x32xf32>
    %584 = arith.divf %582, %583 : vector<8x32xf32>
    %585 = vector.extract_strided_slice %572 {offsets = [0, 64], sizes = [8, 32], strides = [1, 1]} : vector<8x128xf32> to vector<8x32xf32>
    %586 = math.tanh %585 : vector<8x32xf32>
    %587 = vector.extract_strided_slice %572 {offsets = [0, 96], sizes = [8, 32], strides = [1, 1]} : vector<8x128xf32> to vector<8x32xf32>
    %588 = arith.negf %587 : vector<8x32xf32>
    %589 = math.exp %588 : vector<8x32xf32>
    %cst_192 = arith.constant 1.000000e+00 : f32
    %590 = vector.broadcast %cst_192 : f32 to vector<8x32xf32>
    %591 = arith.addf %590, %589 : vector<8x32xf32>
    %592 = arith.divf %590, %591 : vector<8x32xf32>
    %593 = arith.mulf %584, %550 : vector<8x32xf32>
    %594 = arith.mulf %578, %586 : vector<8x32xf32>
    %595 = arith.addf %593, %594 : vector<8x32xf32>
    %596 = math.tanh %595 : vector<8x32xf32>
    %597 = arith.mulf %592, %596 : vector<8x32xf32>
    %598 = vector.extract_strided_slice %567 {offsets = [0, 0], sizes = [1, 1], strides = [1, 1]} : vector<8x1xf32> to vector<1x1xf32>
    %cst_193 = arith.constant 5.000000e-01 : f32
    %599 = vector.broadcast %cst_193 : f32 to vector<1x1xf32>
    %600 = arith.cmpf ogt, %598, %599 : vector<1x1xf32>
    %601 = vector.broadcast %567 : vector<8x1xf32> to vector<8x32xf32>
    %602 = arith.mulf %597, %601 : vector<8x32xf32>
    %603 = tpu.concatenate %602, %527 in 1 : vector<8x32xf32>, vector<8x32xf32> -> vector<8x64xf32>
    %c0_194 = arith.constant 0 : index
    %c0_195 = arith.constant 0 : index
    %604 = vector.load %arg7[%c0_194, %c0_195] : memref<64x128xf32, #tpu.memory_space<vmem>>, vector<64x128xf32>
    %cst_196 = arith.constant dense<0.000000e+00> : vector<8x128xf32>
    %605 = tpu.matmul %603, %604, %cst_196 {dimension_numbers = #tpu.dot_dimension_numbers<[1], [0], [0], [1], [0, 0, 1, 1], [], []>} : vector<8x64xf32>, vector<64x128xf32>, vector<8x128xf32> -> vector<8x128xf32>
    %c0_197 = arith.constant 0 : index
    %c0_198 = arith.constant 0 : index
    %606 = vector.load %arg8[%c0_197, %c0_198] : memref<1x128xf32, #tpu.memory_space<vmem>>, vector<1x128xf32>
    %607 = vector.broadcast %606 : vector<1x128xf32> to vector<8x128xf32>
    %608 = arith.addf %605, %607 : vector<8x128xf32>
    %609 = vector.extract_strided_slice %608 {offsets = [0, 0], sizes = [8, 32], strides = [1, 1]} : vector<8x128xf32> to vector<8x32xf32>
    %610 = arith.negf %609 : vector<8x32xf32>
    %611 = math.exp %610 : vector<8x32xf32>
    %cst_199 = arith.constant 1.000000e+00 : f32
    %612 = vector.broadcast %cst_199 : f32 to vector<8x32xf32>
    %613 = arith.addf %612, %611 : vector<8x32xf32>
    %614 = arith.divf %612, %613 : vector<8x32xf32>
    %615 = vector.extract_strided_slice %608 {offsets = [0, 32], sizes = [8, 32], strides = [1, 1]} : vector<8x128xf32> to vector<8x32xf32>
    %616 = arith.negf %615 : vector<8x32xf32>
    %617 = math.exp %616 : vector<8x32xf32>
    %cst_200 = arith.constant 1.000000e+00 : f32
    %618 = vector.broadcast %cst_200 : f32 to vector<8x32xf32>
    %619 = arith.addf %618, %617 : vector<8x32xf32>
    %620 = arith.divf %618, %619 : vector<8x32xf32>
    %621 = vector.extract_strided_slice %608 {offsets = [0, 64], sizes = [8, 32], strides = [1, 1]} : vector<8x128xf32> to vector<8x32xf32>
    %622 = math.tanh %621 : vector<8x32xf32>
    %623 = vector.extract_strided_slice %608 {offsets = [0, 96], sizes = [8, 32], strides = [1, 1]} : vector<8x128xf32> to vector<8x32xf32>
    %624 = arith.negf %623 : vector<8x32xf32>
    %625 = math.exp %624 : vector<8x32xf32>
    %cst_201 = arith.constant 1.000000e+00 : f32
    %626 = vector.broadcast %cst_201 : f32 to vector<8x32xf32>
    %627 = arith.addf %626, %625 : vector<8x32xf32>
    %628 = arith.divf %626, %627 : vector<8x32xf32>
    %629 = arith.mulf %620, %530 : vector<8x32xf32>
    %630 = arith.mulf %614, %622 : vector<8x32xf32>
    %631 = arith.addf %629, %630 : vector<8x32xf32>
    %632 = math.tanh %631 : vector<8x32xf32>
    %633 = arith.mulf %628, %632 : vector<8x32xf32>
    %634 = vector.shape_cast %600 : vector<1x1xi1> to vector<1x1xi1>
    %635 = vector.broadcast %634 : vector<1x1xi1> to vector<8x32xi1>
    %636 = arith.select %635, %633, %527 : vector<8x32xi1>, vector<8x32xf32>
    %637 = vector.shape_cast %600 : vector<1x1xi1> to vector<1x1xi1>
    %638 = vector.broadcast %637 : vector<1x1xi1> to vector<8x32xi1>
    %639 = arith.select %638, %631, %530 : vector<8x32xi1>, vector<8x32xf32>
    %cst_202 = arith.constant 0.000000e+00 : f32
    %640 = vector.broadcast %cst_202 : f32 to vector<8x32xf32>
    %641 = vector.shape_cast %600 : vector<1x1xi1> to vector<1x1xi1>
    %642 = vector.broadcast %641 : vector<1x1xi1> to vector<8x32xi1>
    %643 = arith.select %642, %633, %640 : vector<8x32xi1>, vector<8x32xf32>
    %c0_203 = arith.constant 0 : index
    %c5_204 = arith.constant 5 : index
    %c0_205 = arith.constant 0 : index
    %644 = vector.load %arg20[%c0_203, %c5_204, %c0_205] : memref<8x8x32xf32, #tpu.memory_space<vmem>>, vector<8x1x32xf32>
    %645 = vector.shape_cast %644 : vector<8x1x32xf32> to vector<8x32xf32>
    %646 = vector.shape_cast %643 : vector<8x32xf32> to vector<8x1x32xf32>
    tpu.vector_store %arg20[%c0_203, %c5_204, %c0_205], %646 {strides = array<i32>} : memref<8x8x32xf32, #tpu.memory_space<vmem>>, vector<8x1x32xf32>,
    %c5_i32 = arith.constant 5 : i32
    %647 = vector.broadcast %c5_i32 : i32 to vector<1x8xi32>
    %648 = arith.cmpi eq, %5, %647 : vector<1x8xi32>
    %649 = vector.shape_cast %598 : vector<1x1xf32> to vector<1x1xf32>
    %650 = vector.broadcast %649 : vector<1x1xf32> to vector<1x8xf32>
    %651 = arith.select %648, %650, %542 : vector<1x8xi1>, vector<1x8xf32>
    %cst_206 = arith.constant 1.000000e+00 : f32
    %652 = vector.broadcast %cst_206 : f32 to vector<8x1xf32>
    %653 = arith.subf %652, %567 : vector<8x1xf32>
    %654 = vector.broadcast %653 : vector<8x1xf32> to vector<8x32xf32>
    %655 = arith.mulf %597, %654 : vector<8x32xf32>
    %cst_207 = arith.constant 1.000000e+00 : f32
    %656 = vector.broadcast %cst_207 : f32 to vector<8x1xf32>
    %657 = arith.subf %656, %567 : vector<8x1xf32>
    %658 = vector.broadcast %657 : vector<8x1xf32> to vector<8x32xf32>
    %659 = arith.mulf %595, %658 : vector<8x32xf32>
    %c6 = arith.constant 6 : index
    %c0_208 = arith.constant 0 : index
    %c0_209 = arith.constant 0 : index
    %660 = vector.load %arg0[%c6, %c0_208, %c0_209] : memref<8x8x32xf32, #tpu.memory_space<vmem>>, vector<1x8x32xf32>
    %661 = vector.shape_cast %660 : vector<1x8x32xf32> to vector<8x32xf32>
    %662 = tpu.concatenate %661, %655 in 1 : vector<8x32xf32>, vector<8x32xf32> -> vector<8x64xf32>
    %c0_210 = arith.constant 0 : index
    %c0_211 = arith.constant 0 : index
    %663 = vector.load %arg4[%c0_210, %c0_211] : memref<64x16xf32, #tpu.memory_space<vmem>>, vector<64x16xf32>
    %cst_212 = arith.constant dense<0.000000e+00> : vector<8x16xf32>
    %664 = tpu.matmul %662, %663, %cst_212 {dimension_numbers = #tpu.dot_dimension_numbers<[1], [0], [0], [1], [0, 0, 1, 1], [], []>} : vector<8x64xf32>, vector<64x16xf32>, vector<8x16xf32> -> vector<8x16xf32>
    %c0_213 = arith.constant 0 : index
    %c0_214 = arith.constant 0 : index
    %665 = vector.load %arg5[%c0_213, %c0_214] : memref<1x16xf32, #tpu.memory_space<vmem>>, vector<1x16xf32>
    %666 = vector.broadcast %665 : vector<1x16xf32> to vector<8x16xf32>
    %667 = arith.addf %664, %666 : vector<8x16xf32>
    %c0_215 = arith.constant 0 : index
    %c0_216 = arith.constant 0 : index
    %668 = vector.load %arg6[%c0_215, %c0_216] : memref<1x16xf32, #tpu.memory_space<vmem>>, vector<1x16xf32>
    %669 = vector.broadcast %668 : vector<1x16xf32> to vector<8x16xf32>
    %670 = arith.mulf %667, %669 : vector<8x16xf32>
    %cst_217 = arith.constant dense<0.000000e+00> : vector<8xf32>
    %671 = vector.multi_reduction <add>, %670, %cst_217 [1] : vector<8x16xf32> to vector<8xf32>
    %672 = vector.shape_cast %671 : vector<8xf32> to vector<8x1xf32>
    %cst_218 = arith.constant 0.000000e+00 : f32
    %673 = vector.broadcast %cst_218 : f32 to vector<8x1xf32>
    %674 = arith.cmpf ogt, %672, %673 : vector<8x1xf32>
    %675 = arith.extui %674 : vector<8x1xi1> to vector<8x1xi32>
    %676 = arith.sitofp %675 : vector<8x1xi32> to vector<8x1xf32>
    %c0_219 = arith.constant 0 : index
    %c0_220 = arith.constant 0 : index
    %677 = vector.load %arg2[%c0_219, %c0_220] : memref<64x128xf32, #tpu.memory_space<vmem>>, vector<64x128xf32>
    %cst_221 = arith.constant dense<0.000000e+00> : vector<8x128xf32>
    %678 = tpu.matmul %662, %677, %cst_221 {dimension_numbers = #tpu.dot_dimension_numbers<[1], [0], [0], [1], [0, 0, 1, 1], [], []>} : vector<8x64xf32>, vector<64x128xf32>, vector<8x128xf32> -> vector<8x128xf32>
    %c0_222 = arith.constant 0 : index
    %c0_223 = arith.constant 0 : index
    %679 = vector.load %arg3[%c0_222, %c0_223] : memref<1x128xf32, #tpu.memory_space<vmem>>, vector<1x128xf32>
    %680 = vector.broadcast %679 : vector<1x128xf32> to vector<8x128xf32>
    %681 = arith.addf %678, %680 : vector<8x128xf32>
    %682 = vector.extract_strided_slice %681 {offsets = [0, 0], sizes = [8, 32], strides = [1, 1]} : vector<8x128xf32> to vector<8x32xf32>
    %683 = arith.negf %682 : vector<8x32xf32>
    %684 = math.exp %683 : vector<8x32xf32>
    %cst_224 = arith.constant 1.000000e+00 : f32
    %685 = vector.broadcast %cst_224 : f32 to vector<8x32xf32>
    %686 = arith.addf %685, %684 : vector<8x32xf32>
    %687 = arith.divf %685, %686 : vector<8x32xf32>
    %688 = vector.extract_strided_slice %681 {offsets = [0, 32], sizes = [8, 32], strides = [1, 1]} : vector<8x128xf32> to vector<8x32xf32>
    %689 = arith.negf %688 : vector<8x32xf32>
    %690 = math.exp %689 : vector<8x32xf32>
    %cst_225 = arith.constant 1.000000e+00 : f32
    %691 = vector.broadcast %cst_225 : f32 to vector<8x32xf32>
    %692 = arith.addf %691, %690 : vector<8x32xf32>
    %693 = arith.divf %691, %692 : vector<8x32xf32>
    %694 = vector.extract_strided_slice %681 {offsets = [0, 64], sizes = [8, 32], strides = [1, 1]} : vector<8x128xf32> to vector<8x32xf32>
    %695 = math.tanh %694 : vector<8x32xf32>
    %696 = vector.extract_strided_slice %681 {offsets = [0, 96], sizes = [8, 32], strides = [1, 1]} : vector<8x128xf32> to vector<8x32xf32>
    %697 = arith.negf %696 : vector<8x32xf32>
    %698 = math.exp %697 : vector<8x32xf32>
    %cst_226 = arith.constant 1.000000e+00 : f32
    %699 = vector.broadcast %cst_226 : f32 to vector<8x32xf32>
    %700 = arith.addf %699, %698 : vector<8x32xf32>
    %701 = arith.divf %699, %700 : vector<8x32xf32>
    %702 = arith.mulf %693, %659 : vector<8x32xf32>
    %703 = arith.mulf %687, %695 : vector<8x32xf32>
    %704 = arith.addf %702, %703 : vector<8x32xf32>
    %705 = math.tanh %704 : vector<8x32xf32>
    %706 = arith.mulf %701, %705 : vector<8x32xf32>
    %707 = vector.extract_strided_slice %676 {offsets = [0, 0], sizes = [1, 1], strides = [1, 1]} : vector<8x1xf32> to vector<1x1xf32>
    %cst_227 = arith.constant 5.000000e-01 : f32
    %708 = vector.broadcast %cst_227 : f32 to vector<1x1xf32>
    %709 = arith.cmpf ogt, %707, %708 : vector<1x1xf32>
    %710 = vector.broadcast %676 : vector<8x1xf32> to vector<8x32xf32>
    %711 = arith.mulf %706, %710 : vector<8x32xf32>
    %712 = tpu.concatenate %711, %636 in 1 : vector<8x32xf32>, vector<8x32xf32> -> vector<8x64xf32>
    %c0_228 = arith.constant 0 : index
    %c0_229 = arith.constant 0 : index
    %713 = vector.load %arg7[%c0_228, %c0_229] : memref<64x128xf32, #tpu.memory_space<vmem>>, vector<64x128xf32>
    %cst_230 = arith.constant dense<0.000000e+00> : vector<8x128xf32>
    %714 = tpu.matmul %712, %713, %cst_230 {dimension_numbers = #tpu.dot_dimension_numbers<[1], [0], [0], [1], [0, 0, 1, 1], [], []>} : vector<8x64xf32>, vector<64x128xf32>, vector<8x128xf32> -> vector<8x128xf32>
    %c0_231 = arith.constant 0 : index
    %c0_232 = arith.constant 0 : index
    %715 = vector.load %arg8[%c0_231, %c0_232] : memref<1x128xf32, #tpu.memory_space<vmem>>, vector<1x128xf32>
    %716 = vector.broadcast %715 : vector<1x128xf32> to vector<8x128xf32>
    %717 = arith.addf %714, %716 : vector<8x128xf32>
    %718 = vector.extract_strided_slice %717 {offsets = [0, 0], sizes = [8, 32], strides = [1, 1]} : vector<8x128xf32> to vector<8x32xf32>
    %719 = arith.negf %718 : vector<8x32xf32>
    %720 = math.exp %719 : vector<8x32xf32>
    %cst_233 = arith.constant 1.000000e+00 : f32
    %721 = vector.broadcast %cst_233 : f32 to vector<8x32xf32>
    %722 = arith.addf %721, %720 : vector<8x32xf32>
    %723 = arith.divf %721, %722 : vector<8x32xf32>
    %724 = vector.extract_strided_slice %717 {offsets = [0, 32], sizes = [8, 32], strides = [1, 1]} : vector<8x128xf32> to vector<8x32xf32>
    %725 = arith.negf %724 : vector<8x32xf32>
    %726 = math.exp %725 : vector<8x32xf32>
    %cst_234 = arith.constant 1.000000e+00 : f32
    %727 = vector.broadcast %cst_234 : f32 to vector<8x32xf32>
    %728 = arith.addf %727, %726 : vector<8x32xf32>
    %729 = arith.divf %727, %728 : vector<8x32xf32>
    %730 = vector.extract_strided_slice %717 {offsets = [0, 64], sizes = [8, 32], strides = [1, 1]} : vector<8x128xf32> to vector<8x32xf32>
    %731 = math.tanh %730 : vector<8x32xf32>
    %732 = vector.extract_strided_slice %717 {offsets = [0, 96], sizes = [8, 32], strides = [1, 1]} : vector<8x128xf32> to vector<8x32xf32>
    %733 = arith.negf %732 : vector<8x32xf32>
    %734 = math.exp %733 : vector<8x32xf32>
    %cst_235 = arith.constant 1.000000e+00 : f32
    %735 = vector.broadcast %cst_235 : f32 to vector<8x32xf32>
    %736 = arith.addf %735, %734 : vector<8x32xf32>
    %737 = arith.divf %735, %736 : vector<8x32xf32>
    %738 = arith.mulf %729, %639 : vector<8x32xf32>
    %739 = arith.mulf %723, %731 : vector<8x32xf32>
    %740 = arith.addf %738, %739 : vector<8x32xf32>
    %741 = math.tanh %740 : vector<8x32xf32>
    %742 = arith.mulf %737, %741 : vector<8x32xf32>
    %743 = vector.shape_cast %709 : vector<1x1xi1> to vector<1x1xi1>
    %744 = vector.broadcast %743 : vector<1x1xi1> to vector<8x32xi1>
    %745 = arith.select %744, %742, %636 : vector<8x32xi1>, vector<8x32xf32>
    %746 = vector.shape_cast %709 : vector<1x1xi1> to vector<1x1xi1>
    %747 = vector.broadcast %746 : vector<1x1xi1> to vector<8x32xi1>
    %748 = arith.select %747, %740, %639 : vector<8x32xi1>, vector<8x32xf32>
    %cst_236 = arith.constant 0.000000e+00 : f32
    %749 = vector.broadcast %cst_236 : f32 to vector<8x32xf32>
    %750 = vector.shape_cast %709 : vector<1x1xi1> to vector<1x1xi1>
    %751 = vector.broadcast %750 : vector<1x1xi1> to vector<8x32xi1>
    %752 = arith.select %751, %742, %749 : vector<8x32xi1>, vector<8x32xf32>
    %c0_237 = arith.constant 0 : index
    %c6_238 = arith.constant 6 : index
    %c0_239 = arith.constant 0 : index
    %753 = vector.load %arg20[%c0_237, %c6_238, %c0_239] : memref<8x8x32xf32, #tpu.memory_space<vmem>>, vector<8x1x32xf32>
    %754 = vector.shape_cast %753 : vector<8x1x32xf32> to vector<8x32xf32>
    %755 = vector.shape_cast %752 : vector<8x32xf32> to vector<8x1x32xf32>
    tpu.vector_store %arg20[%c0_237, %c6_238, %c0_239], %755 {strides = array<i32>} : memref<8x8x32xf32, #tpu.memory_space<vmem>>, vector<8x1x32xf32>,
    %c6_i32 = arith.constant 6 : i32
    %756 = vector.broadcast %c6_i32 : i32 to vector<1x8xi32>
    %757 = arith.cmpi eq, %5, %756 : vector<1x8xi32>
    %758 = vector.shape_cast %707 : vector<1x1xf32> to vector<1x1xf32>
    %759 = vector.broadcast %758 : vector<1x1xf32> to vector<1x8xf32>
    %760 = arith.select %757, %759, %651 : vector<1x8xi1>, vector<1x8xf32>
    %cst_240 = arith.constant 1.000000e+00 : f32
    %761 = vector.broadcast %cst_240 : f32 to vector<8x1xf32>
    %762 = arith.subf %761, %676 : vector<8x1xf32>
    %763 = vector.broadcast %762 : vector<8x1xf32> to vector<8x32xf32>
    %764 = arith.mulf %706, %763 : vector<8x32xf32>
    %cst_241 = arith.constant 1.000000e+00 : f32
    %765 = vector.broadcast %cst_241 : f32 to vector<8x1xf32>
    %766 = arith.subf %765, %676 : vector<8x1xf32>
    %767 = vector.broadcast %766 : vector<8x1xf32> to vector<8x32xf32>
    %768 = arith.mulf %704, %767 : vector<8x32xf32>
    %c7 = arith.constant 7 : index
    %c0_242 = arith.constant 0 : index
    %c0_243 = arith.constant 0 : index
    %769 = vector.load %arg0[%c7, %c0_242, %c0_243] : memref<8x8x32xf32, #tpu.memory_space<vmem>>, vector<1x8x32xf32>
    %770 = vector.shape_cast %769 : vector<1x8x32xf32> to vector<8x32xf32>
    %771 = tpu.concatenate %770, %764 in 1 : vector<8x32xf32>, vector<8x32xf32> -> vector<8x64xf32>
    %c0_244 = arith.constant 0 : index
    %c0_245 = arith.constant 0 : index
    %772 = vector.load %arg4[%c0_244, %c0_245] : memref<64x16xf32, #tpu.memory_space<vmem>>, vector<64x16xf32>
    %cst_246 = arith.constant dense<0.000000e+00> : vector<8x16xf32>
    %773 = tpu.matmul %771, %772, %cst_246 {dimension_numbers = #tpu.dot_dimension_numbers<[1], [0], [0], [1], [0, 0, 1, 1], [], []>} : vector<8x64xf32>, vector<64x16xf32>, vector<8x16xf32> -> vector<8x16xf32>
    %c0_247 = arith.constant 0 : index
    %c0_248 = arith.constant 0 : index
    %774 = vector.load %arg5[%c0_247, %c0_248] : memref<1x16xf32, #tpu.memory_space<vmem>>, vector<1x16xf32>
    %775 = vector.broadcast %774 : vector<1x16xf32> to vector<8x16xf32>
    %776 = arith.addf %773, %775 : vector<8x16xf32>
    %c0_249 = arith.constant 0 : index
    %c0_250 = arith.constant 0 : index
    %777 = vector.load %arg6[%c0_249, %c0_250] : memref<1x16xf32, #tpu.memory_space<vmem>>, vector<1x16xf32>
    %778 = vector.broadcast %777 : vector<1x16xf32> to vector<8x16xf32>
    %779 = arith.mulf %776, %778 : vector<8x16xf32>
    %cst_251 = arith.constant dense<0.000000e+00> : vector<8xf32>
    %780 = vector.multi_reduction <add>, %779, %cst_251 [1] : vector<8x16xf32> to vector<8xf32>
    %781 = vector.shape_cast %780 : vector<8xf32> to vector<8x1xf32>
    %cst_252 = arith.constant 0.000000e+00 : f32
    %782 = vector.broadcast %cst_252 : f32 to vector<8x1xf32>
    %783 = arith.cmpf ogt, %781, %782 : vector<8x1xf32>
    %784 = arith.extui %783 : vector<8x1xi1> to vector<8x1xi32>
    %785 = arith.sitofp %784 : vector<8x1xi32> to vector<8x1xf32>
    %c0_253 = arith.constant 0 : index
    %c0_254 = arith.constant 0 : index
    %786 = vector.load %arg2[%c0_253, %c0_254] : memref<64x128xf32, #tpu.memory_space<vmem>>, vector<64x128xf32>
    %cst_255 = arith.constant dense<0.000000e+00> : vector<8x128xf32>
    %787 = tpu.matmul %771, %786, %cst_255 {dimension_numbers = #tpu.dot_dimension_numbers<[1], [0], [0], [1], [0, 0, 1, 1], [], []>} : vector<8x64xf32>, vector<64x128xf32>, vector<8x128xf32> -> vector<8x128xf32>
    %c0_256 = arith.constant 0 : index
    %c0_257 = arith.constant 0 : index
    %788 = vector.load %arg3[%c0_256, %c0_257] : memref<1x128xf32, #tpu.memory_space<vmem>>, vector<1x128xf32>
    %789 = vector.broadcast %788 : vector<1x128xf32> to vector<8x128xf32>
    %790 = arith.addf %787, %789 : vector<8x128xf32>
    %791 = vector.extract_strided_slice %790 {offsets = [0, 0], sizes = [8, 32], strides = [1, 1]} : vector<8x128xf32> to vector<8x32xf32>
    %792 = arith.negf %791 : vector<8x32xf32>
    %793 = math.exp %792 : vector<8x32xf32>
    %cst_258 = arith.constant 1.000000e+00 : f32
    %794 = vector.broadcast %cst_258 : f32 to vector<8x32xf32>
    %795 = arith.addf %794, %793 : vector<8x32xf32>
    %796 = arith.divf %794, %795 : vector<8x32xf32>
    %797 = vector.extract_strided_slice %790 {offsets = [0, 32], sizes = [8, 32], strides = [1, 1]} : vector<8x128xf32> to vector<8x32xf32>
    %798 = arith.negf %797 : vector<8x32xf32>
    %799 = math.exp %798 : vector<8x32xf32>
    %cst_259 = arith.constant 1.000000e+00 : f32
    %800 = vector.broadcast %cst_259 : f32 to vector<8x32xf32>
    %801 = arith.addf %800, %799 : vector<8x32xf32>
    %802 = arith.divf %800, %801 : vector<8x32xf32>
    %803 = vector.extract_strided_slice %790 {offsets = [0, 64], sizes = [8, 32], strides = [1, 1]} : vector<8x128xf32> to vector<8x32xf32>
    %804 = math.tanh %803 : vector<8x32xf32>
    %805 = vector.extract_strided_slice %790 {offsets = [0, 96], sizes = [8, 32], strides = [1, 1]} : vector<8x128xf32> to vector<8x32xf32>
    %806 = arith.negf %805 : vector<8x32xf32>
    %807 = math.exp %806 : vector<8x32xf32>
    %cst_260 = arith.constant 1.000000e+00 : f32
    %808 = vector.broadcast %cst_260 : f32 to vector<8x32xf32>
    %809 = arith.addf %808, %807 : vector<8x32xf32>
    %810 = arith.divf %808, %809 : vector<8x32xf32>
    %811 = arith.mulf %802, %768 : vector<8x32xf32>
    %812 = arith.mulf %796, %804 : vector<8x32xf32>
    %813 = arith.addf %811, %812 : vector<8x32xf32>
    %814 = math.tanh %813 : vector<8x32xf32>
    %815 = arith.mulf %810, %814 : vector<8x32xf32>
    %816 = vector.extract_strided_slice %785 {offsets = [0, 0], sizes = [1, 1], strides = [1, 1]} : vector<8x1xf32> to vector<1x1xf32>
    %cst_261 = arith.constant 5.000000e-01 : f32
    %817 = vector.broadcast %cst_261 : f32 to vector<1x1xf32>
    %818 = arith.cmpf ogt, %816, %817 : vector<1x1xf32>
    %819 = vector.broadcast %785 : vector<8x1xf32> to vector<8x32xf32>
    %820 = arith.mulf %815, %819 : vector<8x32xf32>
    %821 = tpu.concatenate %820, %745 in 1 : vector<8x32xf32>, vector<8x32xf32> -> vector<8x64xf32>
    %c0_262 = arith.constant 0 : index
    %c0_263 = arith.constant 0 : index
    %822 = vector.load %arg7[%c0_262, %c0_263] : memref<64x128xf32, #tpu.memory_space<vmem>>, vector<64x128xf32>
    %cst_264 = arith.constant dense<0.000000e+00> : vector<8x128xf32>
    %823 = tpu.matmul %821, %822, %cst_264 {dimension_numbers = #tpu.dot_dimension_numbers<[1], [0], [0], [1], [0, 0, 1, 1], [], []>} : vector<8x64xf32>, vector<64x128xf32>, vector<8x128xf32> -> vector<8x128xf32>
    %c0_265 = arith.constant 0 : index
    %c0_266 = arith.constant 0 : index
    %824 = vector.load %arg8[%c0_265, %c0_266] : memref<1x128xf32, #tpu.memory_space<vmem>>, vector<1x128xf32>
    %825 = vector.broadcast %824 : vector<1x128xf32> to vector<8x128xf32>
    %826 = arith.addf %823, %825 : vector<8x128xf32>
    %827 = vector.extract_strided_slice %826 {offsets = [0, 0], sizes = [8, 32], strides = [1, 1]} : vector<8x128xf32> to vector<8x32xf32>
    %828 = arith.negf %827 : vector<8x32xf32>
    %829 = math.exp %828 : vector<8x32xf32>
    %cst_267 = arith.constant 1.000000e+00 : f32
    %830 = vector.broadcast %cst_267 : f32 to vector<8x32xf32>
    %831 = arith.addf %830, %829 : vector<8x32xf32>
    %832 = arith.divf %830, %831 : vector<8x32xf32>
    %833 = vector.extract_strided_slice %826 {offsets = [0, 32], sizes = [8, 32], strides = [1, 1]} : vector<8x128xf32> to vector<8x32xf32>
    %834 = arith.negf %833 : vector<8x32xf32>
    %835 = math.exp %834 : vector<8x32xf32>
    %cst_268 = arith.constant 1.000000e+00 : f32
    %836 = vector.broadcast %cst_268 : f32 to vector<8x32xf32>
    %837 = arith.addf %836, %835 : vector<8x32xf32>
    %838 = arith.divf %836, %837 : vector<8x32xf32>
    %839 = vector.extract_strided_slice %826 {offsets = [0, 64], sizes = [8, 32], strides = [1, 1]} : vector<8x128xf32> to vector<8x32xf32>
    %840 = math.tanh %839 : vector<8x32xf32>
    %841 = vector.extract_strided_slice %826 {offsets = [0, 96], sizes = [8, 32], strides = [1, 1]} : vector<8x128xf32> to vector<8x32xf32>
    %842 = arith.negf %841 : vector<8x32xf32>
    %843 = math.exp %842 : vector<8x32xf32>
    %cst_269 = arith.constant 1.000000e+00 : f32
    %844 = vector.broadcast %cst_269 : f32 to vector<8x32xf32>
    %845 = arith.addf %844, %843 : vector<8x32xf32>
    %846 = arith.divf %844, %845 : vector<8x32xf32>
    %847 = arith.mulf %838, %748 : vector<8x32xf32>
    %848 = arith.mulf %832, %840 : vector<8x32xf32>
    %849 = arith.addf %847, %848 : vector<8x32xf32>
    %850 = math.tanh %849 : vector<8x32xf32>
    %851 = arith.mulf %846, %850 : vector<8x32xf32>
    %852 = vector.shape_cast %818 : vector<1x1xi1> to vector<1x1xi1>
    %853 = vector.broadcast %852 : vector<1x1xi1> to vector<8x32xi1>
    %854 = arith.select %853, %851, %745 : vector<8x32xi1>, vector<8x32xf32>
    %855 = vector.shape_cast %818 : vector<1x1xi1> to vector<1x1xi1>
    %856 = vector.broadcast %855 : vector<1x1xi1> to vector<8x32xi1>
    %857 = arith.select %856, %849, %748 : vector<8x32xi1>, vector<8x32xf32>
    %cst_270 = arith.constant 0.000000e+00 : f32
    %858 = vector.broadcast %cst_270 : f32 to vector<8x32xf32>
    %859 = vector.shape_cast %818 : vector<1x1xi1> to vector<1x1xi1>
    %860 = vector.broadcast %859 : vector<1x1xi1> to vector<8x32xi1>
    %861 = arith.select %860, %851, %858 : vector<8x32xi1>, vector<8x32xf32>
    %c0_271 = arith.constant 0 : index
    %c7_272 = arith.constant 7 : index
    %c0_273 = arith.constant 0 : index
    %862 = vector.load %arg20[%c0_271, %c7_272, %c0_273] : memref<8x8x32xf32, #tpu.memory_space<vmem>>, vector<8x1x32xf32>
    %863 = vector.shape_cast %862 : vector<8x1x32xf32> to vector<8x32xf32>
    %864 = vector.shape_cast %861 : vector<8x32xf32> to vector<8x1x32xf32>
    tpu.vector_store %arg20[%c0_271, %c7_272, %c0_273], %864 {strides = array<i32>} : memref<8x8x32xf32, #tpu.memory_space<vmem>>, vector<8x1x32xf32>,
    %c7_i32 = arith.constant 7 : i32
    %865 = vector.broadcast %c7_i32 : i32 to vector<1x8xi32>
    %866 = arith.cmpi eq, %5, %865 : vector<1x8xi32>
    %867 = vector.shape_cast %816 : vector<1x1xf32> to vector<1x1xf32>
    %868 = vector.broadcast %867 : vector<1x1xf32> to vector<1x8xf32>
    %869 = arith.select %866, %868, %760 : vector<1x8xi1>, vector<1x8xf32>
    %c0_274 = arith.constant 0 : index
    %c0_275 = arith.constant 0 : index
    %870 = vector.load %arg17[%c0_274, %c0_275] : memref<1x8xf32, #tpu.memory_space<vmem>>, vector<1x8xf32>
    tpu.vector_store %arg17[%c0_274, %c0_275], %869 {strides = array<i32>} : memref<1x8xf32, #tpu.memory_space<vmem>>, vector<1x8xf32>,
    %c0_276 = arith.constant 0 : index
    %c0_277 = arith.constant 0 : index
    %c0_278 = arith.constant 0 : index
    %871 = vector.load %arg1[%c0_276, %c0_277, %c0_278] : memref<8x8x32xf32, #tpu.memory_space<vmem>>, vector<1x8x32xf32>
    %872 = vector.shape_cast %871 : vector<1x8x32xf32> to vector<8x32xf32>
    %873 = tpu.concatenate %872, %854 in 1 : vector<8x32xf32>, vector<8x32xf32> -> vector<8x64xf32>
    %c0_279 = arith.constant 0 : index
    %c0_280 = arith.constant 0 : index
    %874 = vector.load %arg9[%c0_279, %c0_280] : memref<64x128xf32, #tpu.memory_space<vmem>>, vector<64x128xf32>
    %cst_281 = arith.constant dense<0.000000e+00> : vector<8x128xf32>
    %875 = tpu.matmul %873, %874, %cst_281 {dimension_numbers = #tpu.dot_dimension_numbers<[1], [0], [0], [1], [0, 0, 1, 1], [], []>} : vector<8x64xf32>, vector<64x128xf32>, vector<8x128xf32> -> vector<8x128xf32>
    %c0_282 = arith.constant 0 : index
    %c0_283 = arith.constant 0 : index
    %876 = vector.load %arg10[%c0_282, %c0_283] : memref<1x128xf32, #tpu.memory_space<vmem>>, vector<1x128xf32>
    %877 = vector.broadcast %876 : vector<1x128xf32> to vector<8x128xf32>
    %878 = arith.addf %875, %877 : vector<8x128xf32>
    %879 = vector.extract_strided_slice %878 {offsets = [0, 0], sizes = [8, 32], strides = [1, 1]} : vector<8x128xf32> to vector<8x32xf32>
    %880 = arith.negf %879 : vector<8x32xf32>
    %881 = math.exp %880 : vector<8x32xf32>
    %cst_284 = arith.constant 1.000000e+00 : f32
    %882 = vector.broadcast %cst_284 : f32 to vector<8x32xf32>
    %883 = arith.addf %882, %881 : vector<8x32xf32>
    %884 = arith.divf %882, %883 : vector<8x32xf32>
    %885 = vector.extract_strided_slice %878 {offsets = [0, 32], sizes = [8, 32], strides = [1, 1]} : vector<8x128xf32> to vector<8x32xf32>
    %886 = arith.negf %885 : vector<8x32xf32>
    %887 = math.exp %886 : vector<8x32xf32>
    %cst_285 = arith.constant 1.000000e+00 : f32
    %888 = vector.broadcast %cst_285 : f32 to vector<8x32xf32>
    %889 = arith.addf %888, %887 : vector<8x32xf32>
    %890 = arith.divf %888, %889 : vector<8x32xf32>
    %891 = vector.extract_strided_slice %878 {offsets = [0, 64], sizes = [8, 32], strides = [1, 1]} : vector<8x128xf32> to vector<8x32xf32>
    %892 = math.tanh %891 : vector<8x32xf32>
    %893 = vector.extract_strided_slice %878 {offsets = [0, 96], sizes = [8, 32], strides = [1, 1]} : vector<8x128xf32> to vector<8x32xf32>
    %894 = arith.negf %893 : vector<8x32xf32>
    %895 = math.exp %894 : vector<8x32xf32>
    %cst_286 = arith.constant 1.000000e+00 : f32
    %896 = vector.broadcast %cst_286 : f32 to vector<8x32xf32>
    %897 = arith.addf %896, %895 : vector<8x32xf32>
    %898 = arith.divf %896, %897 : vector<8x32xf32>
    %899 = arith.mulf %890, %857 : vector<8x32xf32>
    %900 = arith.mulf %884, %892 : vector<8x32xf32>
    %901 = arith.addf %899, %900 : vector<8x32xf32>
    %902 = math.tanh %901 : vector<8x32xf32>
    %903 = arith.mulf %898, %902 : vector<8x32xf32>
    %c0_287 = arith.constant 0 : index
    %c0_288 = arith.constant 0 : index
    %c0_289 = arith.constant 0 : index
    %904 = vector.load %arg21[%c0_287, %c0_288, %c0_289] : memref<8x8x32xf32, #tpu.memory_space<vmem>>, vector<8x1x32xf32>
    %905 = vector.shape_cast %904 : vector<8x1x32xf32> to vector<8x32xf32>
    %906 = vector.shape_cast %903 : vector<8x32xf32> to vector<8x1x32xf32>
    tpu.vector_store %arg21[%c0_287, %c0_288, %c0_289], %906 {strides = array<i32>} : memref<8x8x32xf32, #tpu.memory_space<vmem>>, vector<8x1x32xf32>,
    %c1_290 = arith.constant 1 : index
    %c0_291 = arith.constant 0 : index
    %c0_292 = arith.constant 0 : index
    %907 = vector.load %arg1[%c1_290, %c0_291, %c0_292] : memref<8x8x32xf32, #tpu.memory_space<vmem>>, vector<1x8x32xf32>
    %908 = vector.shape_cast %907 : vector<1x8x32xf32> to vector<8x32xf32>
    %909 = tpu.concatenate %908, %903 in 1 : vector<8x32xf32>, vector<8x32xf32> -> vector<8x64xf32>
    %c0_293 = arith.constant 0 : index
    %c0_294 = arith.constant 0 : index
    %910 = vector.load %arg9[%c0_293, %c0_294] : memref<64x128xf32, #tpu.memory_space<vmem>>, vector<64x128xf32>
    %cst_295 = arith.constant dense<0.000000e+00> : vector<8x128xf32>
    %911 = tpu.matmul %909, %910, %cst_295 {dimension_numbers = #tpu.dot_dimension_numbers<[1], [0], [0], [1], [0, 0, 1, 1], [], []>} : vector<8x64xf32>, vector<64x128xf32>, vector<8x128xf32> -> vector<8x128xf32>
    %c0_296 = arith.constant 0 : index
    %c0_297 = arith.constant 0 : index
    %912 = vector.load %arg10[%c0_296, %c0_297] : memref<1x128xf32, #tpu.memory_space<vmem>>, vector<1x128xf32>
    %913 = vector.broadcast %912 : vector<1x128xf32> to vector<8x128xf32>
    %914 = arith.addf %911, %913 : vector<8x128xf32>
    %915 = vector.extract_strided_slice %914 {offsets = [0, 0], sizes = [8, 32], strides = [1, 1]} : vector<8x128xf32> to vector<8x32xf32>
    %916 = arith.negf %915 : vector<8x32xf32>
    %917 = math.exp %916 : vector<8x32xf32>
    %cst_298 = arith.constant 1.000000e+00 : f32
    %918 = vector.broadcast %cst_298 : f32 to vector<8x32xf32>
    %919 = arith.addf %918, %917 : vector<8x32xf32>
    %920 = arith.divf %918, %919 : vector<8x32xf32>
    %921 = vector.extract_strided_slice %914 {offsets = [0, 32], sizes = [8, 32], strides = [1, 1]} : vector<8x128xf32> to vector<8x32xf32>
    %922 = arith.negf %921 : vector<8x32xf32>
    %923 = math.exp %922 : vector<8x32xf32>
    %cst_299 = arith.constant 1.000000e+00 : f32
    %924 = vector.broadcast %cst_299 : f32 to vector<8x32xf32>
    %925 = arith.addf %924, %923 : vector<8x32xf32>
    %926 = arith.divf %924, %925 : vector<8x32xf32>
    %927 = vector.extract_strided_slice %914 {offsets = [0, 64], sizes = [8, 32], strides = [1, 1]} : vector<8x128xf32> to vector<8x32xf32>
    %928 = math.tanh %927 : vector<8x32xf32>
    %929 = vector.extract_strided_slice %914 {offsets = [0, 96], sizes = [8, 32], strides = [1, 1]} : vector<8x128xf32> to vector<8x32xf32>
    %930 = arith.negf %929 : vector<8x32xf32>
    %931 = math.exp %930 : vector<8x32xf32>
    %cst_300 = arith.constant 1.000000e+00 : f32
    %932 = vector.broadcast %cst_300 : f32 to vector<8x32xf32>
    %933 = arith.addf %932, %931 : vector<8x32xf32>
    %934 = arith.divf %932, %933 : vector<8x32xf32>
    %935 = arith.mulf %926, %901 : vector<8x32xf32>
    %936 = arith.mulf %920, %928 : vector<8x32xf32>
    %937 = arith.addf %935, %936 : vector<8x32xf32>
    %938 = math.tanh %937 : vector<8x32xf32>
    %939 = arith.mulf %934, %938 : vector<8x32xf32>
    %c0_301 = arith.constant 0 : index
    %c1_302 = arith.constant 1 : index
    %c0_303 = arith.constant 0 : index
    %940 = vector.load %arg21[%c0_301, %c1_302, %c0_303] : memref<8x8x32xf32, #tpu.memory_space<vmem>>, vector<8x1x32xf32>
    %941 = vector.shape_cast %940 : vector<8x1x32xf32> to vector<8x32xf32>
    %942 = vector.shape_cast %939 : vector<8x32xf32> to vector<8x1x32xf32>
    tpu.vector_store %arg21[%c0_301, %c1_302, %c0_303], %942 {strides = array<i32>} : memref<8x8x32xf32, #tpu.memory_space<vmem>>, vector<8x1x32xf32>,
    %c2_304 = arith.constant 2 : index
    %c0_305 = arith.constant 0 : index
    %c0_306 = arith.constant 0 : index
    %943 = vector.load %arg1[%c2_304, %c0_305, %c0_306] : memref<8x8x32xf32, #tpu.memory_space<vmem>>, vector<1x8x32xf32>
    %944 = vector.shape_cast %943 : vector<1x8x32xf32> to vector<8x32xf32>
    %945 = tpu.concatenate %944, %939 in 1 : vector<8x32xf32>, vector<8x32xf32> -> vector<8x64xf32>
    %c0_307 = arith.constant 0 : index
    %c0_308 = arith.constant 0 : index
    %946 = vector.load %arg9[%c0_307, %c0_308] : memref<64x128xf32, #tpu.memory_space<vmem>>, vector<64x128xf32>
    %cst_309 = arith.constant dense<0.000000e+00> : vector<8x128xf32>
    %947 = tpu.matmul %945, %946, %cst_309 {dimension_numbers = #tpu.dot_dimension_numbers<[1], [0], [0], [1], [0, 0, 1, 1], [], []>} : vector<8x64xf32>, vector<64x128xf32>, vector<8x128xf32> -> vector<8x128xf32>
    %c0_310 = arith.constant 0 : index
    %c0_311 = arith.constant 0 : index
    %948 = vector.load %arg10[%c0_310, %c0_311] : memref<1x128xf32, #tpu.memory_space<vmem>>, vector<1x128xf32>
    %949 = vector.broadcast %948 : vector<1x128xf32> to vector<8x128xf32>
    %950 = arith.addf %947, %949 : vector<8x128xf32>
    %951 = vector.extract_strided_slice %950 {offsets = [0, 0], sizes = [8, 32], strides = [1, 1]} : vector<8x128xf32> to vector<8x32xf32>
    %952 = arith.negf %951 : vector<8x32xf32>
    %953 = math.exp %952 : vector<8x32xf32>
    %cst_312 = arith.constant 1.000000e+00 : f32
    %954 = vector.broadcast %cst_312 : f32 to vector<8x32xf32>
    %955 = arith.addf %954, %953 : vector<8x32xf32>
    %956 = arith.divf %954, %955 : vector<8x32xf32>
    %957 = vector.extract_strided_slice %950 {offsets = [0, 32], sizes = [8, 32], strides = [1, 1]} : vector<8x128xf32> to vector<8x32xf32>
    %958 = arith.negf %957 : vector<8x32xf32>
    %959 = math.exp %958 : vector<8x32xf32>
    %cst_313 = arith.constant 1.000000e+00 : f32
    %960 = vector.broadcast %cst_313 : f32 to vector<8x32xf32>
    %961 = arith.addf %960, %959 : vector<8x32xf32>
    %962 = arith.divf %960, %961 : vector<8x32xf32>
    %963 = vector.extract_strided_slice %950 {offsets = [0, 64], sizes = [8, 32], strides = [1, 1]} : vector<8x128xf32> to vector<8x32xf32>
    %964 = math.tanh %963 : vector<8x32xf32>
    %965 = vector.extract_strided_slice %950 {offsets = [0, 96], sizes = [8, 32], strides = [1, 1]} : vector<8x128xf32> to vector<8x32xf32>
    %966 = arith.negf %965 : vector<8x32xf32>
    %967 = math.exp %966 : vector<8x32xf32>
    %cst_314 = arith.constant 1.000000e+00 : f32
    %968 = vector.broadcast %cst_314 : f32 to vector<8x32xf32>
    %969 = arith.addf %968, %967 : vector<8x32xf32>
    %970 = arith.divf %968, %969 : vector<8x32xf32>
    %971 = arith.mulf %962, %937 : vector<8x32xf32>
    %972 = arith.mulf %956, %964 : vector<8x32xf32>
    %973 = arith.addf %971, %972 : vector<8x32xf32>
    %974 = math.tanh %973 : vector<8x32xf32>
    %975 = arith.mulf %970, %974 : vector<8x32xf32>
    %c0_315 = arith.constant 0 : index
    %c2_316 = arith.constant 2 : index
    %c0_317 = arith.constant 0 : index
    %976 = vector.load %arg21[%c0_315, %c2_316, %c0_317] : memref<8x8x32xf32, #tpu.memory_space<vmem>>, vector<8x1x32xf32>
    %977 = vector.shape_cast %976 : vector<8x1x32xf32> to vector<8x32xf32>
    %978 = vector.shape_cast %975 : vector<8x32xf32> to vector<8x1x32xf32>
    tpu.vector_store %arg21[%c0_315, %c2_316, %c0_317], %978 {strides = array<i32>} : memref<8x8x32xf32, #tpu.memory_space<vmem>>, vector<8x1x32xf32>,
    %c3_318 = arith.constant 3 : index
    %c0_319 = arith.constant 0 : index
    %c0_320 = arith.constant 0 : index
    %979 = vector.load %arg1[%c3_318, %c0_319, %c0_320] : memref<8x8x32xf32, #tpu.memory_space<vmem>>, vector<1x8x32xf32>
    %980 = vector.shape_cast %979 : vector<1x8x32xf32> to vector<8x32xf32>
    %981 = tpu.concatenate %980, %975 in 1 : vector<8x32xf32>, vector<8x32xf32> -> vector<8x64xf32>
    %c0_321 = arith.constant 0 : index
    %c0_322 = arith.constant 0 : index
    %982 = vector.load %arg9[%c0_321, %c0_322] : memref<64x128xf32, #tpu.memory_space<vmem>>, vector<64x128xf32>
    %cst_323 = arith.constant dense<0.000000e+00> : vector<8x128xf32>
    %983 = tpu.matmul %981, %982, %cst_323 {dimension_numbers = #tpu.dot_dimension_numbers<[1], [0], [0], [1], [0, 0, 1, 1], [], []>} : vector<8x64xf32>, vector<64x128xf32>, vector<8x128xf32> -> vector<8x128xf32>
    %c0_324 = arith.constant 0 : index
    %c0_325 = arith.constant 0 : index
    %984 = vector.load %arg10[%c0_324, %c0_325] : memref<1x128xf32, #tpu.memory_space<vmem>>, vector<1x128xf32>
    %985 = vector.broadcast %984 : vector<1x128xf32> to vector<8x128xf32>
    %986 = arith.addf %983, %985 : vector<8x128xf32>
    %987 = vector.extract_strided_slice %986 {offsets = [0, 0], sizes = [8, 32], strides = [1, 1]} : vector<8x128xf32> to vector<8x32xf32>
    %988 = arith.negf %987 : vector<8x32xf32>
    %989 = math.exp %988 : vector<8x32xf32>
    %cst_326 = arith.constant 1.000000e+00 : f32
    %990 = vector.broadcast %cst_326 : f32 to vector<8x32xf32>
    %991 = arith.addf %990, %989 : vector<8x32xf32>
    %992 = arith.divf %990, %991 : vector<8x32xf32>
    %993 = vector.extract_strided_slice %986 {offsets = [0, 32], sizes = [8, 32], strides = [1, 1]} : vector<8x128xf32> to vector<8x32xf32>
    %994 = arith.negf %993 : vector<8x32xf32>
    %995 = math.exp %994 : vector<8x32xf32>
    %cst_327 = arith.constant 1.000000e+00 : f32
    %996 = vector.broadcast %cst_327 : f32 to vector<8x32xf32>
    %997 = arith.addf %996, %995 : vector<8x32xf32>
    %998 = arith.divf %996, %997 : vector<8x32xf32>
    %999 = vector.extract_strided_slice %986 {offsets = [0, 64], sizes = [8, 32], strides = [1, 1]} : vector<8x128xf32> to vector<8x32xf32>
    %1000 = math.tanh %999 : vector<8x32xf32>
    %1001 = vector.extract_strided_slice %986 {offsets = [0, 96], sizes = [8, 32], strides = [1, 1]} : vector<8x128xf32> to vector<8x32xf32>
    %1002 = arith.negf %1001 : vector<8x32xf32>
    %1003 = math.exp %1002 : vector<8x32xf32>
    %cst_328 = arith.constant 1.000000e+00 : f32
    %1004 = vector.broadcast %cst_328 : f32 to vector<8x32xf32>
    %1005 = arith.addf %1004, %1003 : vector<8x32xf32>
    %1006 = arith.divf %1004, %1005 : vector<8x32xf32>
    %1007 = arith.mulf %998, %973 : vector<8x32xf32>
    %1008 = arith.mulf %992, %1000 : vector<8x32xf32>
    %1009 = arith.addf %1007, %1008 : vector<8x32xf32>
    %1010 = math.tanh %1009 : vector<8x32xf32>
    %1011 = arith.mulf %1006, %1010 : vector<8x32xf32>
    %c0_329 = arith.constant 0 : index
    %c3_330 = arith.constant 3 : index
    %c0_331 = arith.constant 0 : index
    %1012 = vector.load %arg21[%c0_329, %c3_330, %c0_331] : memref<8x8x32xf32, #tpu.memory_space<vmem>>, vector<8x1x32xf32>
    %1013 = vector.shape_cast %1012 : vector<8x1x32xf32> to vector<8x32xf32>
    %1014 = vector.shape_cast %1011 : vector<8x32xf32> to vector<8x1x32xf32>
    tpu.vector_store %arg21[%c0_329, %c3_330, %c0_331], %1014 {strides = array<i32>} : memref<8x8x32xf32, #tpu.memory_space<vmem>>, vector<8x1x32xf32>,
    %c4_332 = arith.constant 4 : index
    %c0_333 = arith.constant 0 : index
    %c0_334 = arith.constant 0 : index
    %1015 = vector.load %arg1[%c4_332, %c0_333, %c0_334] : memref<8x8x32xf32, #tpu.memory_space<vmem>>, vector<1x8x32xf32>
    %1016 = vector.shape_cast %1015 : vector<1x8x32xf32> to vector<8x32xf32>
    %1017 = tpu.concatenate %1016, %1011 in 1 : vector<8x32xf32>, vector<8x32xf32> -> vector<8x64xf32>
    %c0_335 = arith.constant 0 : index
    %c0_336 = arith.constant 0 : index
    %1018 = vector.load %arg9[%c0_335, %c0_336] : memref<64x128xf32, #tpu.memory_space<vmem>>, vector<64x128xf32>
    %cst_337 = arith.constant dense<0.000000e+00> : vector<8x128xf32>
    %1019 = tpu.matmul %1017, %1018, %cst_337 {dimension_numbers = #tpu.dot_dimension_numbers<[1], [0], [0], [1], [0, 0, 1, 1], [], []>} : vector<8x64xf32>, vector<64x128xf32>, vector<8x128xf32> -> vector<8x128xf32>
    %c0_338 = arith.constant 0 : index
    %c0_339 = arith.constant 0 : index
    %1020 = vector.load %arg10[%c0_338, %c0_339] : memref<1x128xf32, #tpu.memory_space<vmem>>, vector<1x128xf32>
    %1021 = vector.broadcast %1020 : vector<1x128xf32> to vector<8x128xf32>
    %1022 = arith.addf %1019, %1021 : vector<8x128xf32>
    %1023 = vector.extract_strided_slice %1022 {offsets = [0, 0], sizes = [8, 32], strides = [1, 1]} : vector<8x128xf32> to vector<8x32xf32>
    %1024 = arith.negf %1023 : vector<8x32xf32>
    %1025 = math.exp %1024 : vector<8x32xf32>
    %cst_340 = arith.constant 1.000000e+00 : f32
    %1026 = vector.broadcast %cst_340 : f32 to vector<8x32xf32>
    %1027 = arith.addf %1026, %1025 : vector<8x32xf32>
    %1028 = arith.divf %1026, %1027 : vector<8x32xf32>
    %1029 = vector.extract_strided_slice %1022 {offsets = [0, 32], sizes = [8, 32], strides = [1, 1]} : vector<8x128xf32> to vector<8x32xf32>
    %1030 = arith.negf %1029 : vector<8x32xf32>
    %1031 = math.exp %1030 : vector<8x32xf32>
    %cst_341 = arith.constant 1.000000e+00 : f32
    %1032 = vector.broadcast %cst_341 : f32 to vector<8x32xf32>
    %1033 = arith.addf %1032, %1031 : vector<8x32xf32>
    %1034 = arith.divf %1032, %1033 : vector<8x32xf32>
    %1035 = vector.extract_strided_slice %1022 {offsets = [0, 64], sizes = [8, 32], strides = [1, 1]} : vector<8x128xf32> to vector<8x32xf32>
    %1036 = math.tanh %1035 : vector<8x32xf32>
    %1037 = vector.extract_strided_slice %1022 {offsets = [0, 96], sizes = [8, 32], strides = [1, 1]} : vector<8x128xf32> to vector<8x32xf32>
    %1038 = arith.negf %1037 : vector<8x32xf32>
    %1039 = math.exp %1038 : vector<8x32xf32>
    %cst_342 = arith.constant 1.000000e+00 : f32
    %1040 = vector.broadcast %cst_342 : f32 to vector<8x32xf32>
    %1041 = arith.addf %1040, %1039 : vector<8x32xf32>
    %1042 = arith.divf %1040, %1041 : vector<8x32xf32>
    %1043 = arith.mulf %1034, %1009 : vector<8x32xf32>
    %1044 = arith.mulf %1028, %1036 : vector<8x32xf32>
    %1045 = arith.addf %1043, %1044 : vector<8x32xf32>
    %1046 = math.tanh %1045 : vector<8x32xf32>
    %1047 = arith.mulf %1042, %1046 : vector<8x32xf32>
    %c0_343 = arith.constant 0 : index
    %c4_344 = arith.constant 4 : index
    %c0_345 = arith.constant 0 : index
    %1048 = vector.load %arg21[%c0_343, %c4_344, %c0_345] : memref<8x8x32xf32, #tpu.memory_space<vmem>>, vector<8x1x32xf32>
    %1049 = vector.shape_cast %1048 : vector<8x1x32xf32> to vector<8x32xf32>
    %1050 = vector.shape_cast %1047 : vector<8x32xf32> to vector<8x1x32xf32>
    tpu.vector_store %arg21[%c0_343, %c4_344, %c0_345], %1050 {strides = array<i32>} : memref<8x8x32xf32, #tpu.memory_space<vmem>>, vector<8x1x32xf32>,
    %c5_346 = arith.constant 5 : index
    %c0_347 = arith.constant 0 : index
    %c0_348 = arith.constant 0 : index
    %1051 = vector.load %arg1[%c5_346, %c0_347, %c0_348] : memref<8x8x32xf32, #tpu.memory_space<vmem>>, vector<1x8x32xf32>
    %1052 = vector.shape_cast %1051 : vector<1x8x32xf32> to vector<8x32xf32>
    %1053 = tpu.concatenate %1052, %1047 in 1 : vector<8x32xf32>, vector<8x32xf32> -> vector<8x64xf32>
    %c0_349 = arith.constant 0 : index
    %c0_350 = arith.constant 0 : index
    %1054 = vector.load %arg9[%c0_349, %c0_350] : memref<64x128xf32, #tpu.memory_space<vmem>>, vector<64x128xf32>
    %cst_351 = arith.constant dense<0.000000e+00> : vector<8x128xf32>
    %1055 = tpu.matmul %1053, %1054, %cst_351 {dimension_numbers = #tpu.dot_dimension_numbers<[1], [0], [0], [1], [0, 0, 1, 1], [], []>} : vector<8x64xf32>, vector<64x128xf32>, vector<8x128xf32> -> vector<8x128xf32>
    %c0_352 = arith.constant 0 : index
    %c0_353 = arith.constant 0 : index
    %1056 = vector.load %arg10[%c0_352, %c0_353] : memref<1x128xf32, #tpu.memory_space<vmem>>, vector<1x128xf32>
    %1057 = vector.broadcast %1056 : vector<1x128xf32> to vector<8x128xf32>
    %1058 = arith.addf %1055, %1057 : vector<8x128xf32>
    %1059 = vector.extract_strided_slice %1058 {offsets = [0, 0], sizes = [8, 32], strides = [1, 1]} : vector<8x128xf32> to vector<8x32xf32>
    %1060 = arith.negf %1059 : vector<8x32xf32>
    %1061 = math.exp %1060 : vector<8x32xf32>
    %cst_354 = arith.constant 1.000000e+00 : f32
    %1062 = vector.broadcast %cst_354 : f32 to vector<8x32xf32>
    %1063 = arith.addf %1062, %1061 : vector<8x32xf32>
    %1064 = arith.divf %1062, %1063 : vector<8x32xf32>
    %1065 = vector.extract_strided_slice %1058 {offsets = [0, 32], sizes = [8, 32], strides = [1, 1]} : vector<8x128xf32> to vector<8x32xf32>
    %1066 = arith.negf %1065 : vector<8x32xf32>
    %1067 = math.exp %1066 : vector<8x32xf32>
    %cst_355 = arith.constant 1.000000e+00 : f32
    %1068 = vector.broadcast %cst_355 : f32 to vector<8x32xf32>
    %1069 = arith.addf %1068, %1067 : vector<8x32xf32>
    %1070 = arith.divf %1068, %1069 : vector<8x32xf32>
    %1071 = vector.extract_strided_slice %1058 {offsets = [0, 64], sizes = [8, 32], strides = [1, 1]} : vector<8x128xf32> to vector<8x32xf32>
    %1072 = math.tanh %1071 : vector<8x32xf32>
    %1073 = vector.extract_strided_slice %1058 {offsets = [0, 96], sizes = [8, 32], strides = [1, 1]} : vector<8x128xf32> to vector<8x32xf32>
    %1074 = arith.negf %1073 : vector<8x32xf32>
    %1075 = math.exp %1074 : vector<8x32xf32>
    %cst_356 = arith.constant 1.000000e+00 : f32
    %1076 = vector.broadcast %cst_356 : f32 to vector<8x32xf32>
    %1077 = arith.addf %1076, %1075 : vector<8x32xf32>
    %1078 = arith.divf %1076, %1077 : vector<8x32xf32>
    %1079 = arith.mulf %1070, %1045 : vector<8x32xf32>
    %1080 = arith.mulf %1064, %1072 : vector<8x32xf32>
    %1081 = arith.addf %1079, %1080 : vector<8x32xf32>
    %1082 = math.tanh %1081 : vector<8x32xf32>
    %1083 = arith.mulf %1078, %1082 : vector<8x32xf32>
    %c0_357 = arith.constant 0 : index
    %c5_358 = arith.constant 5 : index
    %c0_359 = arith.constant 0 : index
    %1084 = vector.load %arg21[%c0_357, %c5_358, %c0_359] : memref<8x8x32xf32, #tpu.memory_space<vmem>>, vector<8x1x32xf32>
    %1085 = vector.shape_cast %1084 : vector<8x1x32xf32> to vector<8x32xf32>
    %1086 = vector.shape_cast %1083 : vector<8x32xf32> to vector<8x1x32xf32>
    tpu.vector_store %arg21[%c0_357, %c5_358, %c0_359], %1086 {strides = array<i32>} : memref<8x8x32xf32, #tpu.memory_space<vmem>>, vector<8x1x32xf32>,
    %c6_360 = arith.constant 6 : index
    %c0_361 = arith.constant 0 : index
    %c0_362 = arith.constant 0 : index
    %1087 = vector.load %arg1[%c6_360, %c0_361, %c0_362] : memref<8x8x32xf32, #tpu.memory_space<vmem>>, vector<1x8x32xf32>
    %1088 = vector.shape_cast %1087 : vector<1x8x32xf32> to vector<8x32xf32>
    %1089 = tpu.concatenate %1088, %1083 in 1 : vector<8x32xf32>, vector<8x32xf32> -> vector<8x64xf32>
    %c0_363 = arith.constant 0 : index
    %c0_364 = arith.constant 0 : index
    %1090 = vector.load %arg9[%c0_363, %c0_364] : memref<64x128xf32, #tpu.memory_space<vmem>>, vector<64x128xf32>
    %cst_365 = arith.constant dense<0.000000e+00> : vector<8x128xf32>
    %1091 = tpu.matmul %1089, %1090, %cst_365 {dimension_numbers = #tpu.dot_dimension_numbers<[1], [0], [0], [1], [0, 0, 1, 1], [], []>} : vector<8x64xf32>, vector<64x128xf32>, vector<8x128xf32> -> vector<8x128xf32>
    %c0_366 = arith.constant 0 : index
    %c0_367 = arith.constant 0 : index
    %1092 = vector.load %arg10[%c0_366, %c0_367] : memref<1x128xf32, #tpu.memory_space<vmem>>, vector<1x128xf32>
    %1093 = vector.broadcast %1092 : vector<1x128xf32> to vector<8x128xf32>
    %1094 = arith.addf %1091, %1093 : vector<8x128xf32>
    %1095 = vector.extract_strided_slice %1094 {offsets = [0, 0], sizes = [8, 32], strides = [1, 1]} : vector<8x128xf32> to vector<8x32xf32>
    %1096 = arith.negf %1095 : vector<8x32xf32>
    %1097 = math.exp %1096 : vector<8x32xf32>
    %cst_368 = arith.constant 1.000000e+00 : f32
    %1098 = vector.broadcast %cst_368 : f32 to vector<8x32xf32>
    %1099 = arith.addf %1098, %1097 : vector<8x32xf32>
    %1100 = arith.divf %1098, %1099 : vector<8x32xf32>
    %1101 = vector.extract_strided_slice %1094 {offsets = [0, 32], sizes = [8, 32], strides = [1, 1]} : vector<8x128xf32> to vector<8x32xf32>
    %1102 = arith.negf %1101 : vector<8x32xf32>
    %1103 = math.exp %1102 : vector<8x32xf32>
    %cst_369 = arith.constant 1.000000e+00 : f32
    %1104 = vector.broadcast %cst_369 : f32 to vector<8x32xf32>
    %1105 = arith.addf %1104, %1103 : vector<8x32xf32>
    %1106 = arith.divf %1104, %1105 : vector<8x32xf32>
    %1107 = vector.extract_strided_slice %1094 {offsets = [0, 64], sizes = [8, 32], strides = [1, 1]} : vector<8x128xf32> to vector<8x32xf32>
    %1108 = math.tanh %1107 : vector<8x32xf32>
    %1109 = vector.extract_strided_slice %1094 {offsets = [0, 96], sizes = [8, 32], strides = [1, 1]} : vector<8x128xf32> to vector<8x32xf32>
    %1110 = arith.negf %1109 : vector<8x32xf32>
    %1111 = math.exp %1110 : vector<8x32xf32>
    %cst_370 = arith.constant 1.000000e+00 : f32
    %1112 = vector.broadcast %cst_370 : f32 to vector<8x32xf32>
    %1113 = arith.addf %1112, %1111 : vector<8x32xf32>
    %1114 = arith.divf %1112, %1113 : vector<8x32xf32>
    %1115 = arith.mulf %1106, %1081 : vector<8x32xf32>
    %1116 = arith.mulf %1100, %1108 : vector<8x32xf32>
    %1117 = arith.addf %1115, %1116 : vector<8x32xf32>
    %1118 = math.tanh %1117 : vector<8x32xf32>
    %1119 = arith.mulf %1114, %1118 : vector<8x32xf32>
    %c0_371 = arith.constant 0 : index
    %c6_372 = arith.constant 6 : index
    %c0_373 = arith.constant 0 : index
    %1120 = vector.load %arg21[%c0_371, %c6_372, %c0_373] : memref<8x8x32xf32, #tpu.memory_space<vmem>>, vector<8x1x32xf32>
    %1121 = vector.shape_cast %1120 : vector<8x1x32xf32> to vector<8x32xf32>
    %1122 = vector.shape_cast %1119 : vector<8x32xf32> to vector<8x1x32xf32>
    tpu.vector_store %arg21[%c0_371, %c6_372, %c0_373], %1122 {strides = array<i32>} : memref<8x8x32xf32, #tpu.memory_space<vmem>>, vector<8x1x32xf32>,
    %c7_374 = arith.constant 7 : index
    %c0_375 = arith.constant 0 : index
    %c0_376 = arith.constant 0 : index
    %1123 = vector.load %arg1[%c7_374, %c0_375, %c0_376] : memref<8x8x32xf32, #tpu.memory_space<vmem>>, vector<1x8x32xf32>
    %1124 = vector.shape_cast %1123 : vector<1x8x32xf32> to vector<8x32xf32>
    %1125 = tpu.concatenate %1124, %1119 in 1 : vector<8x32xf32>, vector<8x32xf32> -> vector<8x64xf32>
    %c0_377 = arith.constant 0 : index
    %c0_378 = arith.constant 0 : index
    %1126 = vector.load %arg9[%c0_377, %c0_378] : memref<64x128xf32, #tpu.memory_space<vmem>>, vector<64x128xf32>
    %cst_379 = arith.constant dense<0.000000e+00> : vector<8x128xf32>
    %1127 = tpu.matmul %1125, %1126, %cst_379 {dimension_numbers = #tpu.dot_dimension_numbers<[1], [0], [0], [1], [0, 0, 1, 1], [], []>} : vector<8x64xf32>, vector<64x128xf32>, vector<8x128xf32> -> vector<8x128xf32>
    %c0_380 = arith.constant 0 : index
    %c0_381 = arith.constant 0 : index
    %1128 = vector.load %arg10[%c0_380, %c0_381] : memref<1x128xf32, #tpu.memory_space<vmem>>, vector<1x128xf32>
    %1129 = vector.broadcast %1128 : vector<1x128xf32> to vector<8x128xf32>
    %1130 = arith.addf %1127, %1129 : vector<8x128xf32>
    %1131 = vector.extract_strided_slice %1130 {offsets = [0, 0], sizes = [8, 32], strides = [1, 1]} : vector<8x128xf32> to vector<8x32xf32>
    %1132 = arith.negf %1131 : vector<8x32xf32>
    %1133 = math.exp %1132 : vector<8x32xf32>
    %cst_382 = arith.constant 1.000000e+00 : f32
    %1134 = vector.broadcast %cst_382 : f32 to vector<8x32xf32>
    %1135 = arith.addf %1134, %1133 : vector<8x32xf32>
    %1136 = arith.divf %1134, %1135 : vector<8x32xf32>
    %1137 = vector.extract_strided_slice %1130 {offsets = [0, 32], sizes = [8, 32], strides = [1, 1]} : vector<8x128xf32> to vector<8x32xf32>
    %1138 = arith.negf %1137 : vector<8x32xf32>
    %1139 = math.exp %1138 : vector<8x32xf32>
    %cst_383 = arith.constant 1.000000e+00 : f32
    %1140 = vector.broadcast %cst_383 : f32 to vector<8x32xf32>
    %1141 = arith.addf %1140, %1139 : vector<8x32xf32>
    %1142 = arith.divf %1140, %1141 : vector<8x32xf32>
    %1143 = vector.extract_strided_slice %1130 {offsets = [0, 64], sizes = [8, 32], strides = [1, 1]} : vector<8x128xf32> to vector<8x32xf32>
    %1144 = math.tanh %1143 : vector<8x32xf32>
    %1145 = vector.extract_strided_slice %1130 {offsets = [0, 96], sizes = [8, 32], strides = [1, 1]} : vector<8x128xf32> to vector<8x32xf32>
    %1146 = arith.negf %1145 : vector<8x32xf32>
    %1147 = math.exp %1146 : vector<8x32xf32>
    %cst_384 = arith.constant 1.000000e+00 : f32
    %1148 = vector.broadcast %cst_384 : f32 to vector<8x32xf32>
    %1149 = arith.addf %1148, %1147 : vector<8x32xf32>
    %1150 = arith.divf %1148, %1149 : vector<8x32xf32>
    %1151 = arith.mulf %1142, %1117 : vector<8x32xf32>
    %1152 = arith.mulf %1136, %1144 : vector<8x32xf32>
    %1153 = arith.addf %1151, %1152 : vector<8x32xf32>
    %1154 = math.tanh %1153 : vector<8x32xf32>
    %1155 = arith.mulf %1150, %1154 : vector<8x32xf32>
    %c0_385 = arith.constant 0 : index
    %c7_386 = arith.constant 7 : index
    %c0_387 = arith.constant 0 : index
    %1156 = vector.load %arg21[%c0_385, %c7_386, %c0_387] : memref<8x8x32xf32, #tpu.memory_space<vmem>>, vector<8x1x32xf32>
    %1157 = vector.shape_cast %1156 : vector<8x1x32xf32> to vector<8x32xf32>
    %1158 = vector.shape_cast %1155 : vector<8x32xf32> to vector<8x1x32xf32>
    tpu.vector_store %arg21[%c0_385, %c7_386, %c0_387], %1158 {strides = array<i32>} : memref<8x8x32xf32, #tpu.memory_space<vmem>>, vector<8x1x32xf32>,
    %c0_388 = arith.constant 0 : index
    %c0_389 = arith.constant 0 : index
    %1159 = vector.load %arg18[%c0_388, %c0_389] : memref<8x32xf32, #tpu.memory_space<vmem>>, vector<8x32xf32>
    tpu.vector_store %arg18[%c0_388, %c0_389], %1155 {strides = array<i32>} : memref<8x32xf32, #tpu.memory_space<vmem>>, vector<8x32xf32>,
    %c0_390 = arith.constant 0 : index
    %c0_391 = arith.constant 0 : index
    %1160 = vector.load %arg19[%c0_390, %c0_391] : memref<8x32xf32, #tpu.memory_space<vmem>>, vector<8x32xf32>
    tpu.vector_store %arg19[%c0_390, %c0_391], %1153 {strides = array<i32>} : memref<8x32xf32, #tpu.memory_space<vmem>>, vector<8x32xf32>,
    %c0_392 = arith.constant 0 : index
    %c0_393 = arith.constant 0 : index
    %c0_394 = arith.constant 0 : index
    %1161 = vector.load %arg21[%c0_392, %c0_393, %c0_394] : memref<8x8x32xf32, #tpu.memory_space<vmem>>, vector<8x8x32xf32>
    %c0_395 = arith.constant 0 : index
    %c0_396 = arith.constant 0 : index
    %c0_397 = arith.constant 0 : index
    %1162 = vector.load %arg20[%c0_395, %c0_396, %c0_397] : memref<8x8x32xf32, #tpu.memory_space<vmem>>, vector<8x8x32xf32>
    "tpu.trace_start"() <{level = 10 : i32, message = "bqd,bkd->bqk"}> : () -> ()
    %cst_398 = arith.constant dense<0.000000e+00> : vector<8x8x8xf32>
    %1163 = tpu.matmul %1161, %1162, %cst_398 {dimension_numbers = #tpu.dot_dimension_numbers<[2], [2], [1], [1], [0, 0, 0, 1, 1, 1], [0], [0]>} : vector<8x8x32xf32>, vector<8x8x32xf32>, vector<8x8x8xf32> -> vector<8x8x8xf32>
    "tpu.trace_stop"() : () -> ()
    %cst_399 = arith.constant 1.000000e+00 : f32
    %1164 = vector.broadcast %cst_399 : f32 to vector<1x8xf32>
    %1165 = arith.subf %869, %1164 : vector<1x8xf32>
    %cst_400 = arith.constant 1.000000e+30 : f32
    %1166 = vector.broadcast %cst_400 : f32 to vector<1x8xf32>
    %1167 = arith.mulf %1165, %1166 : vector<1x8xf32>
    %1168 = vector.shape_cast %1167 : vector<1x8xf32> to vector<1x1x8xf32>
    %1169 = vector.broadcast %1168 : vector<1x1x8xf32> to vector<8x8x8xf32>
    %1170 = arith.addf %1163, %1169 : vector<8x8x8xf32>
    %cst_401 = arith.constant dense<0xFF800000> : vector<8x8xf32>
    %1171 = vector.multi_reduction <maximumf>, %1170, %cst_401 [2] : vector<8x8x8xf32> to vector<8x8xf32>
    %1172 = vector.shape_cast %1171 : vector<8x8xf32> to vector<8x8x1xf32>
    %1173 = vector.broadcast %1172 : vector<8x8x1xf32> to vector<8x8x8xf32>
    %1174 = arith.subf %1170, %1173 : vector<8x8x8xf32>
    %1175 = math.exp %1174 : vector<8x8x8xf32>
    %cst_402 = arith.constant dense<0.000000e+00> : vector<8x8xf32>
    %1176 = vector.multi_reduction <add>, %1175, %cst_402 [2] : vector<8x8x8xf32> to vector<8x8xf32>
    %1177 = vector.shape_cast %1176 : vector<8x8xf32> to vector<8x8x1xf32>
    %1178 = tpu.reciprocal %1177 {approx = true} : vector<8x8x1xf32> -> vector<8x8x1xf32>
    %1179 = vector.broadcast %1178 : vector<8x8x1xf32> to vector<8x8x8xf32>
    %1180 = arith.mulf %1175, %1179 : vector<8x8x8xf32>
    "tpu.trace_start"() <{level = 10 : i32, message = "bqk,bkd->bqd"}> : () -> ()
    %cst_403 = arith.constant dense<0.000000e+00> : vector<8x8x32xf32>
    %1181 = tpu.matmul %1180, %1162, %cst_403 {dimension_numbers = #tpu.dot_dimension_numbers<[2], [1], [1], [2], [0, 0, 0, 1, 1, 2], [0], [0]>} : vector<8x8x8xf32>, vector<8x8x32xf32>, vector<8x8x32xf32> -> vector<8x8x32xf32>
    "tpu.trace_stop"() : () -> ()
    %1182 = vector.shape_cast %1161 : vector<8x8x32xf32> to vector<64x32xf32>
    %1183 = vector.shape_cast %1181 : vector<8x8x32xf32> to vector<64x32xf32>
    %c0_404 = arith.constant 0 : index
    %c0_405 = arith.constant 0 : index
    %1184 = vector.load %arg11[%c0_404, %c0_405] : memref<32x32xf32, #tpu.memory_space<vmem>>, vector<32x32xf32>
    %cst_406 = arith.constant dense<0.000000e+00> : vector<64x32xf32>
    %1185 = tpu.matmul %1182, %1184, %cst_406 {dimension_numbers = #tpu.dot_dimension_numbers<[1], [0], [0], [1], [0, 0, 1, 1], [], []>} : vector<64x32xf32>, vector<32x32xf32>, vector<64x32xf32> -> vector<64x32xf32>
    %c0_407 = arith.constant 0 : index
    %c0_408 = arith.constant 0 : index
    %1186 = vector.load %arg12[%c0_407, %c0_408] : memref<32x32xf32, #tpu.memory_space<vmem>>, vector<32x32xf32>
    %cst_409 = arith.constant dense<0.000000e+00> : vector<64x32xf32>
    %1187 = tpu.matmul %1183, %1186, %cst_409 {dimension_numbers = #tpu.dot_dimension_numbers<[1], [0], [0], [1], [0, 0, 1, 1], [], []>} : vector<64x32xf32>, vector<32x32xf32>, vector<64x32xf32> -> vector<64x32xf32>
    %1188 = arith.addf %1185, %1187 : vector<64x32xf32>
    %c0_410 = arith.constant 0 : index
    %c0_411 = arith.constant 0 : index
    %1189 = vector.load %arg13[%c0_410, %c0_411] : memref<1x32xf32, #tpu.memory_space<vmem>>, vector<1x32xf32>
    %1190 = vector.broadcast %1189 : vector<1x32xf32> to vector<64x32xf32>
    %1191 = arith.addf %1188, %1190 : vector<64x32xf32>
    %1192 = math.tanh %1191 : vector<64x32xf32>
    %c0_412 = arith.constant 0 : index
    %c0_413 = arith.constant 0 : index
    %1193 = vector.load %arg14[%c0_412, %c0_413] : memref<32x128xf32, #tpu.memory_space<vmem>>, vector<32x128xf32>
    %cst_414 = arith.constant dense<0.000000e+00> : vector<64x128xf32>
    %1194 = tpu.matmul %1192, %1193, %cst_414 {dimension_numbers = #tpu.dot_dimension_numbers<[1], [0], [0], [1], [0, 0, 1, 1], [], []>} : vector<64x32xf32>, vector<32x128xf32>, vector<64x128xf32> -> vector<64x128xf32>
    %c0_415 = arith.constant 0 : index
    %c0_416 = arith.constant 0 : index
    %1195 = vector.load %arg15[%c0_415, %c0_416] : memref<1x128xf32, #tpu.memory_space<vmem>>, vector<1x128xf32>
    %1196 = vector.broadcast %1195 : vector<1x128xf32> to vector<64x128xf32>
    %1197 = arith.addf %1194, %1196 : vector<64x128xf32>
    %cst_417 = arith.constant dense<0xFF800000> : vector<64xf32>
    %1198 = vector.multi_reduction <maximumf>, %1197, %cst_417 [1] : vector<64x128xf32> to vector<64xf32>
    %1199 = vector.shape_cast %1198 : vector<64xf32> to vector<64x1xf32>
    %1200 = vector.broadcast %1199 : vector<64x1xf32> to vector<64x128xf32>
    %1201 = arith.subf %1197, %1200 : vector<64x128xf32>
    %1202 = math.exp %1201 : vector<64x128xf32>
    %cst_418 = arith.constant dense<0.000000e+00> : vector<64xf32>
    %1203 = vector.multi_reduction <add>, %1202, %cst_418 [1] : vector<64x128xf32> to vector<64xf32>
    %1204 = vector.shape_cast %1203 : vector<64xf32> to vector<64x1xf32>
    %1205 = math.log %1204 : vector<64x1xf32>
    %1206 = arith.addf %1199, %1205 : vector<64x1xf32>
    %1207 = vector.broadcast %1206 : vector<64x1xf32> to vector<64x128xf32>
    %1208 = arith.subf %1197, %1207 : vector<64x128xf32>
    %c0_419 = arith.constant 0 : index
    %c0_420 = arith.constant 0 : index
    %1209 = vector.load %arg16[%c0_419, %c0_420] : memref<64x128xf32, #tpu.memory_space<vmem>>, vector<64x128xf32>
    tpu.vector_store %arg16[%c0_419, %c0_420], %1208 {strides = array<i32>} : memref<64x128xf32, #tpu.memory_space<vmem>>, vector<64x128xf32>,
    return
  }
}

</mosaic_0001>

<llo_original>
// kernel: boundary_encoder_decoder_forward.1
$region0: #{boundary_encoder_decoder_forward.1}
  #allocation0 [shape = 'u32[]', space=smem, size = 0x4, offset = 0x4, fixed_abs, tag = 'smem constant byte address 0x4 - core index']
  #allocation1 [shape = 'u32[144,128]{1,0:T(1,128)}', space=vmem, size = 0x12000, scoped, tag = 'internal scratch']
  #allocation2 [shape = 'f32[8,8,32]{2,1,0:T(8,128)}', space=vmem, size = 0x8000, scoped, tag = 'scratch operand']
  #allocation3 [shape = 'f32[8,8,32]{2,1,0:T(8,128)}', space=vmem, size = 0x8000, scoped, tag = 'scratch operand']
  %s0 = inlined_call_operand.vmem [shape: f32[8,8,32], index: 0, kind: input, shape index: {}]
  %s1 = inlined_call_operand.vmem [shape: f32[8,8,32], index: 1, kind: input, shape index: {}]
  %s2 = inlined_call_operand.vmem [shape: f32[64,128], index: 2, kind: input, shape index: {}]
  %s3 = inlined_call_operand.vmem [shape: f32[1,128], index: 3, kind: input, shape index: {}]
  %s4 = inlined_call_operand.vmem [shape: f32[64,16], index: 4, kind: input, shape index: {}]
  %s5 = inlined_call_operand.vmem [shape: f32[1,16], index: 5, kind: input, shape index: {}]
  %s6 = inlined_call_operand.vmem [shape: f32[1,16], index: 6, kind: input, shape index: {}]
  %s7 = inlined_call_operand.vmem [shape: f32[64,128], index: 7, kind: input, shape index: {}]
  %s8 = inlined_call_operand.vmem [shape: f32[1,128], index: 8, kind: input, shape index: {}]
  %s9 = inlined_call_operand.vmem [shape: f32[64,128], index: 9, kind: input, shape index: {}]
  %s10 = inlined_call_operand.vmem [shape: f32[1,128], index: 10, kind: input, shape index: {}]
  %s11 = inlined_call_operand.vmem [shape: f32[32,32], index: 11, kind: input, shape index: {}]
  %s12 = inlined_call_operand.vmem [shape: f32[32,32], index: 12, kind: input, shape index: {}]
  %s13 = inlined_call_operand.vmem [shape: f32[1,32], index: 13, kind: input, shape index: {}]
  %s14 = inlined_call_operand.vmem [shape: f32[32,128], index: 14, kind: input, shape index: {}]
  %s15 = inlined_call_operand.vmem [shape: f32[1,128], index: 15, kind: input, shape index: {}]
  %s16 = inlined_call_operand.vmem [shape: f32[64,128], index: 16, kind: output, shape index: {0}]
  %s17 = inlined_call_operand.hbm [shape: f32[1,8], index: 17, kind: output, shape index: {1}]
  %s18 = inlined_call_operand.vmem [shape: f32[8,32], index: 18, kind: output, shape index: {2}]
  %s19 = inlined_call_operand.vmem [shape: f32[8,32], index: 19, kind: output, shape index: {3}]
  %20 = xla_tuple %s16, %s17, %s18, %s19
  %s21 = sld [smem:[#allocation0]]
  $region98: #{boundary_encoder_decoder_forward.1} parent=0
    _
  %s23 = ssub.s32 1, %s21
  %s24 = scalar_select 0, %s23, %s21
  $region1: #{boundary_encoder_decoder_forward.1} parent=0
    #allocation4 [shape = 'u8[512]{0}', space=vmem, size = 0x400, scoped, tag = 'output window, operand 1, single buffered']
    #allocation5 [shape = 's32[1]{0}', space=sflag, size = 0x4, scoped, tag = 'scoped memory for boundary_encoder_decoder_forward.1']
    %25 = vsyncpa [#allocation5], 0
    // Predicated region
    $region2: #{boundary_encoder_decoder_forward.1} parent=1 // pred_check
      _
    $region3: #{boundary_encoder_decoder_forward.1} parent=1 // pred_check_branch
      %27 = sbr.rel (0) target = $region5
    $region4: #{boundary_encoder_decoder_forward.1} parent=1 // pred_region
      _
    $region5: #{boundary_encoder_decoder_forward.1} parent=1 // pred_fallthru
      _
    // Predicated region
    $region6: #{boundary_encoder_decoder_forward.1} parent=1 // pred_check
      _
    $region7: #{boundary_encoder_decoder_forward.1} parent=1 // pred_check_branch
      %29 = sbr.rel (0) target = $region9
    $region8: #{boundary_encoder_decoder_forward.1} parent=1 // pred_region
      _
    $region9: #{boundary_encoder_decoder_forward.1} parent=1 // pred_fallthru
      _
    // Predicated region
    $region10: #{boundary_encoder_decoder_forward.1} parent=1 // pred_check
      _
    $region11: #{boundary_encoder_decoder_forward.1} parent=1 // pred_check_branch
      %31 = sbr.rel (0) target = $region13
    $region12: #{boundary_encoder_decoder_forward.1} parent=1 // pred_region
      _
    $region13: #{boundary_encoder_decoder_forward.1} parent=1 // pred_fallthru
      _
    // Predicated region
    $region14: #{boundary_encoder_decoder_forward.1} parent=1 // pred_check
      _
    $region15: #{boundary_encoder_decoder_forward.1} parent=1 // pred_check_branch
      %33 = sbr.rel (0) target = $region17
    $region16: #{boundary_encoder_decoder_forward.1} parent=1 // pred_region
      _
    $region17: #{boundary_encoder_decoder_forward.1} parent=1 // pred_fallthru
      _
    // Predicated region
    $region18: #{boundary_encoder_decoder_forward.1} parent=1 // pred_check
      _
    $region19: #{boundary_encoder_decoder_forward.1} parent=1 // pred_check_branch
      %35 = sbr.rel (0) target = $region21
    $region20: #{boundary_encoder_decoder_forward.1} parent=1 // pred_region
      _
    $region21: #{boundary_encoder_decoder_forward.1} parent=1 // pred_fallthru
      _
    // Predicated region
    $region22: #{boundary_encoder_decoder_forward.1} parent=1 // pred_check
      _
    $region23: #{boundary_encoder_decoder_forward.1} parent=1 // pred_check_branch
      %37 = sbr.rel (0) target = $region25
    $region24: #{boundary_encoder_decoder_forward.1} parent=1 // pred_region
      _
    $region25: #{boundary_encoder_decoder_forward.1} parent=1 // pred_fallthru
      _
    // Predicated region
    $region26: #{boundary_encoder_decoder_forward.1} parent=1 // pred_check
      _
    $region27: #{boundary_encoder_decoder_forward.1} parent=1 // pred_check_branch
      %39 = sbr.rel (0) target = $region29
    $region28: #{boundary_encoder_decoder_forward.1} parent=1 // pred_region
      _
    $region29: #{boundary_encoder_decoder_forward.1} parent=1 // pred_fallthru
      _
    // Predicated region
    $region30: #{boundary_encoder_decoder_forward.1} parent=1 // pred_check
      _
    $region31: #{boundary_encoder_decoder_forward.1} parent=1 // pred_check_branch
      %41 = sbr.rel (0) target = $region33
    $region32: #{boundary_encoder_decoder_forward.1} parent=1 // pred_region
      _
    $region33: #{boundary_encoder_decoder_forward.1} parent=1 // pred_fallthru
      _
    // Predicated region
    $region34: #{boundary_encoder_decoder_forward.1} parent=1 // pred_check
      _
    $region35: #{boundary_encoder_decoder_forward.1} parent=1 // pred_check_branch
      %43 = sbr.rel (0) target = $region37
    $region36: #{boundary_encoder_decoder_forward.1} parent=1 // pred_region
      _
    $region37: #{boundary_encoder_decoder_forward.1} parent=1 // pred_fallthru
      _
    // Predicated region
    $region38: #{boundary_encoder_decoder_forward.1} parent=1 // pred_check
      _
    $region39: #{boundary_encoder_decoder_forward.1} parent=1 // pred_check_branch
      %45 = sbr.rel (0) target = $region41
    $region40: #{boundary_encoder_decoder_forward.1} parent=1 // pred_region
      _
    $region41: #{boundary_encoder_decoder_forward.1} parent=1 // pred_fallthru
      _
    // Predicated region
    $region42: #{boundary_encoder_decoder_forward.1} parent=1 // pred_check
      _
    $region43: #{boundary_encoder_decoder_forward.1} parent=1 // pred_check_branch
      %47 = sbr.rel (0) target = $region45
    $region44: #{boundary_encoder_decoder_forward.1} parent=1 // pred_region
      _
    $region45: #{boundary_encoder_decoder_forward.1} parent=1 // pred_fallthru
      _
    // Predicated region
    $region46: #{boundary_encoder_decoder_forward.1} parent=1 // pred_check
      _
    $region47: #{boundary_encoder_decoder_forward.1} parent=1 // pred_check_branch
      %49 = sbr.rel (0) target = $region49
    $region48: #{boundary_encoder_decoder_forward.1} parent=1 // pred_region
      _
    $region49: #{boundary_encoder_decoder_forward.1} parent=1 // pred_fallthru
      _
    // Predicated region
    $region50: #{boundary_encoder_decoder_forward.1} parent=1 // pred_check
      _
    $region51: #{boundary_encoder_decoder_forward.1} parent=1 // pred_check_branch
      %51 = sbr.rel (0) target = $region53
    $region52: #{boundary_encoder_decoder_forward.1} parent=1 // pred_region
      _
    $region53: #{boundary_encoder_decoder_forward.1} parent=1 // pred_fallthru
      _
    // Predicated region
    $region54: #{boundary_encoder_decoder_forward.1} parent=1 // pred_check
      _
    $region55: #{boundary_encoder_decoder_forward.1} parent=1 // pred_check_branch
      %53 = sbr.rel (0) target = $region57
    $region56: #{boundary_encoder_decoder_forward.1} parent=1 // pred_region
      _
    $region57: #{boundary_encoder_decoder_forward.1} parent=1 // pred_fallthru
      _
    // Predicated region
    $region58: #{boundary_encoder_decoder_forward.1} parent=1 // pred_check
      _
    $region59: #{boundary_encoder_decoder_forward.1} parent=1 // pred_check_branch
      %55 = sbr.rel (0) target = $region61
    $region60: #{boundary_encoder_decoder_forward.1} parent=1 // pred_region
      _
    $region61: #{boundary_encoder_decoder_forward.1} parent=1 // pred_fallthru
      _
    // Predicated region
    $region62: #{boundary_encoder_decoder_forward.1} parent=1 // pred_check
      _
    $region63: #{boundary_encoder_decoder_forward.1} parent=1 // pred_check_branch
      %57 = sbr.rel (0) target = $region65
    $region64: #{boundary_encoder_decoder_forward.1} parent=1 // pred_region
      _
    $region65: #{boundary_encoder_decoder_forward.1} parent=1 // pred_fallthru
      _
    %v58 = vlaneseq
    %v59 = vand.u32 %v58, 127
    %v60 = vld [vmem:[%s0] sm:$0xff]
    %vm61 = vcmask 261120
    %v62 = vsel %vm61, %v60, 0.0
    %v63 = vld [vmem:[%s4] sm:$0xff]
    %v64 = vld [vmem:[%s4 + $0x8] sm:$0xff]
    %v65 = vld [vmem:[%s4 + $0x10] sm:$0xff]
    %v66 = vld [vmem:[%s4 + $0x18] sm:$0xff]
    %v67 = vld [vmem:[%s4 + $0x20] sm:$0xff]
    %v68 = vld [vmem:[%s4 + $0x28] sm:$0xff]
    %v69 = vld [vmem:[%s4 + $0x30] sm:$0xff]
    %v70 = vld [vmem:[%s4 + $0x38] sm:$0xff]
    %v71 = vld [vmem:[%s5] sm:$0x1]
    %v73 = vlaneseq
    %v74 = vshrl.u32 %v73, 7
    %v75 = vsub.s32 0, %v74
    %v76 = vrot.slane %v71, %v75
    %vm78 = vcmask 523264
    %v80 = vsel %vm78, %v62, 0
    %82 = vmatprep.subr.mxu0 0.0
    %83 = vmatpush1.msra.mxu0 %v63
    %84 = vmatprep.subr.mxu0 0.0
    %85 = vmatpush1.msra.mxu0 %v64
    %86 = vmatprep.subr.mxu0 0.0
    %87 = vmatpush1.msra.mxu0 %v65
    %88 = vmatprep.subr.mxu0 0.0
    %89 = vmatpush1.msra.mxu0 %v66
    %90 = vmatprep.subr.mxu0 0.0
    %91 = vmatpush1.msra.mxu0 %v67
    %92 = vmatprep.subr.mxu0 0.0
    %93 = vmatpush1.msra.mxu0 %v68
    %94 = vmatprep.subr.mxu0 0.0
    %95 = vmatpush1.msra.mxu0 %v69
    %96 = vmatprep.subr.mxu0 0.0
    %97 = vmatpush1.msra.mxu0 %v70
    %98 = vmatprep.subr.mxu0 0.0
    %99 = vmatpush1.msra.mxu0 0.0
    %100 = vmatprep.subr.mxu0 0.0
    %101 = vmatpush1.msra.mxu0 0.0
    %102 = vmatprep.subr.mxu0 0.0
    %103 = vmatpush1.msra.mxu0 0.0
    %104 = vmatprep.subr.mxu0 0.0
    %105 = vmatpush1.msra.mxu0 0.0
    %106 = vmatprep.subr.mxu0 0.0
    %107 = vmatpush1.msra.mxu0 0.0
    %108 = vmatprep.subr.mxu0 0.0
    %109 = vmatpush1.msra.mxu0 0.0
    %110 = vmatprep.subr.mxu0 0.0
    %111 = vmatpush1.msra.mxu0 0.0
    %112 = vmatprep.subr.mxu0 0.0
    %113 = vmatpush1.msra.mxu0 0.0
    %114 = vmatprep.subr.mxu0 0.0
    %115 = vmatpush1.msra.mxu0 0.0
    %116 = vmatprep.subr.mxu0 0.0
    %117 = vmatpush1.msra.mxu0 0.0
    %118 = vmatprep.subr.mxu0 0.0
    %119 = vmatpush1.msra.mxu0 0.0
    %120 = vmatprep.subr.mxu0 0.0
    %121 = vmatpush1.msra.mxu0 0.0
    %122 = vmatprep.subr.mxu0 0.0
    %123 = vmatpush1.msra.mxu0 0.0
    %124 = vmatprep.subr.mxu0 0.0
    %125 = vmatpush1.msra.mxu0 0.0
    %126 = vmatprep.subr.mxu0 0.0
    %127 = vmatpush1.msra.mxu0 0.0
    %128 = vmatprep.subr.mxu0 0.0
    %129 = vmatpush1.msra.mxu0 0.0
    %130 = vmatprep.subr.mxu0 0.0
    %131 = vmatpush1.msra.mxu0 0.0
    %132 = vmatprep.subr.mxu0 0.0
    %133 = vmatpush1.msra.mxu0 0.0
    %134 = vmatprep.subr.mxu0 0.0
    %135 = vmatpush1.msra.mxu0 0.0
    %136 = vmatprep.subr.mxu0 0.0
    %137 = vmatpush1.msra.mxu0 0.0
    %138 = vmatprep.subr.mxu0 0.0
    %139 = vmatpush1.msra.mxu0 0.0
    %140 = vmatprep.subr.mxu0 0.0
    %141 = vmatpush1.msra.mxu0 0.0
    %142 = vmatprep.subr.mxu0 0.0
    %143 = vmatpush1.msra.mxu0 0.0
    %144 = vmatprep.subr.mxu0 0.0
    %145 = vmatpush1.msra.mxu0 0.0
    %146 = vmatprep.mubr.f32.mxu0 0.0
    %147 = vmatmul.mubr.f32.gmra.mrb[0].mxu0 %v80
    %v148 = vpop.f32.mrb[0].mxu0
    %v149 = vadd.f32 %v76, %v148
    %v150 = vpop.f32.mrb[0].mxu0
    %151 = vdwg.mxu0
    %v152 = vld [vmem:[%s6] sm:$0x1]
    %v154 = vlaneseq
    %v155 = vshrl.u32 %v154, 7
    %v156 = vsub.s32 0, %v155
    %v157 = vrot.slane %v152, %v156
    %v159 = vmul.f32 %v149, %v157
    %vm160 = vcmask 130048
    %v161 = vsel %vm160, %v159, 0.0
    %162 = vadd.xlane.f32.xlu0 %v161
    %v163 = vpop.xlane.xlu0 %162
    %vm164 = vcmp.gt.f32.partialorder %v163, 0.0
    %v165 = vsel %vm164, 1, 0
    %v166 = vcvt.s32.f32 %v165
    %v167 = vld [vmem:[%s2] sm:$0xff]
    %v168 = vld [vmem:[%s2 + $0x8] sm:$0xff]
    %v169 = vld [vmem:[%s2 + $0x10] sm:$0xff]
    %v170 = vld [vmem:[%s2 + $0x18] sm:$0xff]
    %v171 = vld [vmem:[%s2 + $0x20] sm:$0xff]
    %v172 = vld [vmem:[%s2 + $0x28] sm:$0xff]
    %v173 = vld [vmem:[%s2 + $0x30] sm:$0xff]
    %v174 = vld [vmem:[%s2 + $0x38] sm:$0xff]
    %v175 = vld [vmem:[%s3] sm:$0x1]
    %v177 = vlaneseq
    %v178 = vshrl.u32 %v177, 7
    %v179 = vsub.s32 0, %v178
    %v180 = vrot.slane %v175, %v179
    %182 = vmatprep.subr.mxu0 0.0
    %183 = vmatpush1.msra.mxu0 %v167
    %184 = vmatprep.subr.mxu0 0.0
    %185 = vmatpush1.msra.mxu0 %v168
    %186 = vmatprep.subr.mxu0 0.0
    %187 = vmatpush1.msra.mxu0 %v169
    %188 = vmatprep.subr.mxu0 0.0
    %189 = vmatpush1.msra.mxu0 %v170
    %190 = vmatprep.subr.mxu0 0.0
    %191 = vmatpush1.msra.mxu0 %v171
    %192 = vmatprep.subr.mxu0 0.0
    %193 = vmatpush1.msra.mxu0 %v172
    %194 = vmatprep.subr.mxu0 0.0
    %195 = vmatpush1.msra.mxu0 %v173
    %196 = vmatprep.subr.mxu0 0.0
    %197 = vmatpush1.msra.mxu0 %v174
    %198 = vmatprep.subr.mxu0 0.0
    %199 = vmatpush1.msra.mxu0 0.0
    %200 = vmatprep.subr.mxu0 0.0
    %201 = vmatpush1.msra.mxu0 0.0
    %202 = vmatprep.subr.mxu0 0.0
    %203 = vmatpush1.msra.mxu0 0.0
    %204 = vmatprep.subr.mxu0 0.0
    %205 = vmatpush1.msra.mxu0 0.0
    %206 = vmatprep.subr.mxu0 0.0
    %207 = vmatpush1.msra.mxu0 0.0
    %208 = vmatprep.subr.mxu0 0.0
    %209 = vmatpush1.msra.mxu0 0.0
    %210 = vmatprep.subr.mxu0 0.0
    %211 = vmatpush1.msra.mxu0 0.0
    %212 = vmatprep.subr.mxu0 0.0
    %213 = vmatpush1.msra.mxu0 0.0
    %214 = vmatprep.subr.mxu0 0.0
    %215 = vmatpush1.msra.mxu0 0.0
    %216 = vmatprep.subr.mxu0 0.0
    %217 = vmatpush1.msra.mxu0 0.0
    %218 = vmatprep.subr.mxu0 0.0
    %219 = vmatpush1.msra.mxu0 0.0
    %220 = vmatprep.subr.mxu0 0.0
    %221 = vmatpush1.msra.mxu0 0.0
    %222 = vmatprep.subr.mxu0 0.0
    %223 = vmatpush1.msra.mxu0 0.0
    %224 = vmatprep.subr.mxu0 0.0
    %225 = vmatpush1.msra.mxu0 0.0
    %226 = vmatprep.subr.mxu0 0.0
    %227 = vmatpush1.msra.mxu0 0.0
    %228 = vmatprep.subr.mxu0 0.0
    %229 = vmatpush1.msra.mxu0 0.0
    %230 = vmatprep.subr.mxu0 0.0
    %231 = vmatpush1.msra.mxu0 0.0
    %232 = vmatprep.subr.mxu0 0.0
    %233 = vmatpush1.msra.mxu0 0.0
    %234 = vmatprep.subr.mxu0 0.0
    %235 = vmatpush1.msra.mxu0 0.0
    %236 = vmatprep.subr.mxu0 0.0
    %237 = vmatpush1.msra.mxu0 0.0
    %238 = vmatprep.subr.mxu0 0.0
    %239 = vmatpush1.msra.mxu0 0.0
    %240 = vmatprep.subr.mxu0 0.0
    %241 = vmatpush1.msra.mxu0 0.0
    %242 = vmatprep.subr.mxu0 0.0
    %243 = vmatpush1.msra.mxu0 0.0
    %244 = vmatprep.subr.mxu0 0.0
    %245 = vmatpush1.msra.mxu0 0.0
    %246 = vmatprep.mubr.f32.mxu0 0.0
    %247 = vmatmul.mubr.f32.gmra.mrb[0].mxu0 %v80
    %v248 = vpop.f32.mrb[0].mxu0
    %v249 = vadd.f32 %v180, %v248
    %v250 = vpop.f32.mrb[0].mxu0
    %251 = vdwg.mxu0
    %v252 = vxor.u32 %v249, 2147483648
    %v253 = vmul.f32 %v252, 1.442695
    %v254 = vpow.pop %v253
    %v255 = vadd.f32 %v254, 1.0
    %v256 = vrcp.pop %v255
    %v257 = vmul.f32 1.0, %v256
    %v258 = vtanh.pop %v249
    %v259 = vmul.f32 %v257, 0.0
    %261 = vrot.lane.b32.xlu0 %v258, 64
    %v262 = vpop.permute.xlu0 %261
    %v264 = vmul.f32 %v257, %v262
    %266 = vrot.lane.b32.xlu0 %v264, 32
    %v267 = vpop.permute.xlu0 %266
    %v269 = vadd.f32 %v259, %v267
    %v270 = vtanh.pop %v269
    %272 = vrot.lane.b32.xlu0 %v270, 64
    %v273 = vpop.permute.xlu0 %272
    %v275 = vmul.f32 %v257, %v273
    %vm276 = vcmp.gt.f32.partialorder %v166, 0.5
    %v277 = vmul.f32 %v275, %v166
    %279 = vrot.lane.b32.xlu0 %v277, 32
    %v280 = vpop.permute.xlu0 %279
    %v282 = vsel %vm61, %v280, 0.0
    %v283 = vld [vmem:[%s7] sm:$0xff]
    %v284 = vld [vmem:[%s7 + $0x8] sm:$0xff]
    %v285 = vld [vmem:[%s7 + $0x10] sm:$0xff]
    %v286 = vld [vmem:[%s7 + $0x18] sm:$0xff]
    %v287 = vld [vmem:[%s7 + $0x20] sm:$0xff]
    %v288 = vld [vmem:[%s7 + $0x28] sm:$0xff]
    %v289 = vld [vmem:[%s7 + $0x30] sm:$0xff]
    %v290 = vld [vmem:[%s7 + $0x38] sm:$0xff]
    %v291 = vld [vmem:[%s8] sm:$0x1]
    %v293 = vlaneseq
    %v294 = vshrl.u32 %v293, 7
    %v295 = vsub.s32 0, %v294
    %v296 = vrot.slane %v291, %v295
    %v299 = vsel %vm78, %v282, 0
    %301 = vmatprep.subr.mxu0 0.0
    %302 = vmatpush1.msra.mxu0 %v283
    %303 = vmatprep.subr.mxu0 0.0
    %304 = vmatpush1.msra.mxu0 %v284
    %305 = vmatprep.subr.mxu0 0.0
    %306 = vmatpush1.msra.mxu0 %v285
    %307 = vmatprep.subr.mxu0 0.0
    %308 = vmatpush1.msra.mxu0 %v286
    %309 = vmatprep.subr.mxu0 0.0
    %310 = vmatpush1.msra.mxu0 %v287
    %311 = vmatprep.subr.mxu0 0.0
    %312 = vmatpush1.msra.mxu0 %v288
    %313 = vmatprep.subr.mxu0 0.0
    %314 = vmatpush1.msra.mxu0 %v289
    %315 = vmatprep.subr.mxu0 0.0
    %316 = vmatpush1.msra.mxu0 %v290
    %317 = vmatprep.subr.mxu0 0.0
    %318 = vmatpush1.msra.mxu0 0.0
    %319 = vmatprep.subr.mxu0 0.0
    %320 = vmatpush1.msra.mxu0 0.0
    %321 = vmatprep.subr.mxu0 0.0
    %322 = vmatpush1.msra.mxu0 0.0
    %323 = vmatprep.subr.mxu0 0.0
    %324 = vmatpush1.msra.mxu0 0.0
    %325 = vmatprep.subr.mxu0 0.0
    %326 = vmatpush1.msra.mxu0 0.0
    %327 = vmatprep.subr.mxu0 0.0
    %328 = vmatpush1.msra.mxu0 0.0
    %329 = vmatprep.subr.mxu0 0.0
    %330 = vmatpush1.msra.mxu0 0.0
    %331 = vmatprep.subr.mxu0 0.0
    %332 = vmatpush1.msra.mxu0 0.0
    %333 = vmatprep.subr.mxu0 0.0
    %334 = vmatpush1.msra.mxu0 0.0
    %335 = vmatprep.subr.mxu0 0.0
    %336 = vmatpush1.msra.mxu0 0.0
    %337 = vmatprep.subr.mxu0 0.0
    %338 = vmatpush1.msra.mxu0 0.0
    %339 = vmatprep.subr.mxu0 0.0
    %340 = vmatpush1.msra.mxu0 0.0
    %341 = vmatprep.subr.mxu0 0.0
    %342 = vmatpush1.msra.mxu0 0.0
    %343 = vmatprep.subr.mxu0 0.0
    %344 = vmatpush1.msra.mxu0 0.0
    %345 = vmatprep.subr.mxu0 0.0
    %346 = vmatpush1.msra.mxu0 0.0
    %347 = vmatprep.subr.mxu0 0.0
    %348 = vmatpush1.msra.mxu0 0.0
    %349 = vmatprep.subr.mxu0 0.0
    %350 = vmatpush1.msra.mxu0 0.0
    %351 = vmatprep.subr.mxu0 0.0
    %352 = vmatpush1.msra.mxu0 0.0
    %353 = vmatprep.subr.mxu0 0.0
    %354 = vmatpush1.msra.mxu0 0.0
    %355 = vmatprep.subr.mxu0 0.0
    %356 = vmatpush1.msra.mxu0 0.0
    %357 = vmatprep.subr.mxu0 0.0
    %358 = vmatpush1.msra.mxu0 0.0
    %359 = vmatprep.subr.mxu0 0.0
    %360 = vmatpush1.msra.mxu0 0.0
    %361 = vmatprep.subr.mxu0 0.0
    %362 = vmatpush1.msra.mxu0 0.0
    %363 = vmatprep.subr.mxu0 0.0
    %364 = vmatpush1.msra.mxu0 0.0
    %365 = vmatprep.mubr.f32.mxu0 0.0
    %366 = vmatmul.mubr.f32.gmra.mrb[0].mxu0 %v299
    %v367 = vpop.f32.mrb[0].mxu0
    %v368 = vadd.f32 %v296, %v367
    %v369 = vpop.f32.mrb[0].mxu0
    %370 = vdwg.mxu0
    %v371 = vxor.u32 %v368, 2147483648
    %v372 = vmul.f32 %v371, 1.442695
    %v373 = vpow.pop %v372
    %v374 = vadd.f32 %v373, 1.0
    %v375 = vrcp.pop %v374
    %v376 = vmul.f32 1.0, %v375
    %v377 = vtanh.pop %v368
    %v378 = vmul.f32 %v376, 0.0
    %380 = vrot.lane.b32.xlu0 %v377, 64
    %v381 = vpop.permute.xlu0 %380
    %v383 = vmul.f32 %v376, %v381
    %385 = vrot.lane.b32.xlu0 %v383, 32
    %v386 = vpop.permute.xlu0 %385
    %v388 = vadd.f32 %v378, %v386
    %v389 = vtanh.pop %v388
    %391 = vrot.lane.b32.xlu0 %v389, 64
    %v392 = vpop.permute.xlu0 %391
    %v394 = vmul.f32 %v376, %v392
    %v395 = vsel %vm276, 1, 0
    %v396 = vlaneseq
    %v397 = vshrl.u32 %v396, 7
    %v398 = vsub.s32 0, %v397
    %v399 = vrot.slane %v395, %v398
    %vm400 = vcmp.eq.s32.totalorder %v399, 1
    %v401 = vsel %vm400, %v394, 0.0
    %v402 = vsel %vm400, %v388, 0.0
    %v404 = vcombine.high %v401, %v401
    %v406 = vunpack.c.l.s4 1966171168
    %v407 = vunpack.c.0.s8 %v406
    %v408 = vlaneseq
    %v409 = vshrl.u32 %v408, 7
    %v410 = vsub.s32 %v407, %v409
    %v411 = vrot.slane %v401, %v410
    %v413 = vunpack.c.l.s4 1966171168
    %v414 = vunpack.c.0.s8 %v413
    %v415 = vlaneseq
    %v416 = vshrl.u32 %v415, 7
    %v417 = vsub.s32 %v414, %v416
    %v418 = vrot.slane %v404, %v417
    %v419 = vcombine.high %v411, %v411
    %v420 = vcombine.high %v418, %v418
    %v422 = vunpack.c.l.s4 1966171168
    %v423 = vunpack.c.0.s8 %v422
    %v424 = vlaneseq
    %v425 = vshrl.u32 %v424, 7
    %v426 = vsub.s32 %v423, %v425
    %v427 = vrot.slane %v411, %v426
    %v429 = vunpack.c.l.s4 1966171168
    %v430 = vunpack.c.0.s8 %v429
    %v431 = vlaneseq
    %v432 = vshrl.u32 %v431, 7
    %v433 = vsub.s32 %v430, %v432
    %v434 = vrot.slane %v418, %v433
    %v436 = vunpack.c.l.s4 1966171168
    %v437 = vunpack.c.0.s8 %v436
    %v438 = vlaneseq
    %v439 = vshrl.u32 %v438, 7
    %v440 = vsub.s32 %v437, %v439
    %v441 = vrot.slane %v419, %v440
    %v443 = vunpack.c.l.s4 1966171168
    %v444 = vunpack.c.0.s8 %v443
    %v445 = vlaneseq
    %v446 = vshrl.u32 %v445, 7
    %v447 = vsub.s32 %v444, %v446
    %v448 = vrot.slane %v420, %v447
    %v449 = vcombine.high %v427, %v427
    %v450 = vcombine.high %v434, %v434
    %v451 = vcombine.high %v441, %v441
    %v452 = vcombine.high %v448, %v448
    %v453 = vlaneseq
    %v454 = vshrl.u32 %v453, 7
    %v455 = vsub.s32 0, %v454
    %v456 = vrot.slane %v427, %v455
    %v457 = vlaneseq
    %v458 = vshrl.u32 %v457, 7
    %v459 = vsub.s32 0, %v458
    %v460 = vrot.slane %v441, %v459
    %v461 = vlaneseq
    %v462 = vshrl.u32 %v461, 7
    %v463 = vsub.s32 0, %v462
    %v464 = vrot.slane %v449, %v463
    %v465 = vlaneseq
    %v466 = vshrl.u32 %v465, 7
    %v467 = vsub.s32 0, %v466
    %v468 = vrot.slane %v451, %v467
    %v469 = vlaneseq
    %v470 = vshrl.u32 %v469, 7
    %v471 = vsub.s32 0, %v470
    %v472 = vrot.slane %v434, %v471
    %v473 = vlaneseq
    %v474 = vshrl.u32 %v473, 7
    %v475 = vsub.s32 0, %v474
    %v476 = vrot.slane %v448, %v475
    %v477 = vlaneseq
    %v478 = vshrl.u32 %v477, 7
    %v479 = vsub.s32 0, %v478
    %v480 = vrot.slane %v450, %v479
    %v481 = vlaneseq
    %v482 = vshrl.u32 %v481, 7
    %v483 = vsub.s32 0, %v482
    %v484 = vrot.slane %v452, %v483
    %485 = vrot.lane.b32.xlu0 %v456, 32
    %v486 = vpop.permute.xlu0 %485
    %487 = vrot.lane.b32.xlu0 %v460, 32
    %v488 = vpop.permute.xlu0 %487
    %489 = vrot.lane.b32.xlu0 %v464, 32
    %v490 = vpop.permute.xlu0 %489
    %491 = vrot.lane.b32.xlu0 %v468, 32
    %v492 = vpop.permute.xlu0 %491
    %493 = vrot.lane.b32.xlu0 %v472, 32
    %v494 = vpop.permute.xlu0 %493
    %495 = vrot.lane.b32.xlu0 %v476, 32
    %v496 = vpop.permute.xlu0 %495
    %497 = vrot.lane.b32.xlu0 %v480, 32
    %v498 = vpop.permute.xlu0 %497
    %499 = vrot.lane.b32.xlu0 %v484, 32
    %v500 = vpop.permute.xlu0 %499
    %vm509 = vcmask 253952
    %510 = vst.msk [vmem:[#allocation2] sm:$0x1] %vm509, %v486
    %511 = vst.msk [vmem:[#allocation2 + $0x8] sm:$0x1] %vm509, %v488
    %512 = vst.msk [vmem:[#allocation2 + $0x10] sm:$0x1] %vm509, %v490
    %513 = vst.msk [vmem:[#allocation2 + $0x18] sm:$0x1] %vm509, %v492
    %514 = vst.msk [vmem:[#allocation2 + $0x20] sm:$0x1] %vm509, %v494
    %515 = vst.msk [vmem:[#allocation2 + $0x28] sm:$0x1] %vm509, %v496
    %516 = vst.msk [vmem:[#allocation2 + $0x30] sm:$0x1] %vm509, %v498
    %517 = vst.msk [vmem:[#allocation2 + $0x38] sm:$0x1] %vm509, %v500
    %vm518 = vcmp.eq.s32.totalorder %v59, 0
    %v519 = vsel %vm518, %v166, 0.0
    %v520 = vsub.f32 1.0, %v166
    %v521 = vmul.f32 %v275, %v520
    %v522 = vmul.f32 %v269, %v520
    %s523 = scalar_lea.vmem %s0, 8
    %v524 = vld [vmem:[%s523] sm:$0xff]
    %526 = vrot.lane.b32.xlu0 %v521, 64
    %v527 = vpop.permute.xlu0 %526
    %v529 = vsel %vm61, %v524, %v527
    %v530 = vld [vmem:[%s4] sm:$0xff]
    %v531 = vld [vmem:[%s4 + $0x8] sm:$0xff]
    %v532 = vld [vmem:[%s4 + $0x10] sm:$0xff]
    %v533 = vld [vmem:[%s4 + $0x18] sm:$0xff]
    %v534 = vld [vmem:[%s4 + $0x20] sm:$0xff]
    %v535 = vld [vmem:[%s4 + $0x28] sm:$0xff]
    %v536 = vld [vmem:[%s4 + $0x30] sm:$0xff]
    %v537 = vld [vmem:[%s4 + $0x38] sm:$0xff]
    %v538 = vld [vmem:[%s5] sm:$0x1]
    %v540 = vlaneseq
    %v541 = vshrl.u32 %v540, 7
    %v542 = vsub.s32 0, %v541
    %v543 = vrot.slane %v538, %v542
    %v546 = vsel %vm78, %v529, 0
    %548 = vmatprep.subr.mxu0 0.0
    %549 = vmatpush1.msra.mxu0 %v530
    %550 = vmatprep.subr.mxu0 0.0
    %551 = vmatpush1.msra.mxu0 %v531
    %552 = vmatprep.subr.mxu0 0.0
    %553 = vmatpush1.msra.mxu0 %v532
    %554 = vmatprep.subr.mxu0 0.0
    %555 = vmatpush1.msra.mxu0 %v533
    %556 = vmatprep.subr.mxu0 0.0
    %557 = vmatpush1.msra.mxu0 %v534
    %558 = vmatprep.subr.mxu0 0.0
    %559 = vmatpush1.msra.mxu0 %v535
    %560 = vmatprep.subr.mxu0 0.0
    %561 = vmatpush1.msra.mxu0 %v536
    %562 = vmatprep.subr.mxu0 0.0
    %563 = vmatpush1.msra.mxu0 %v537
    %564 = vmatprep.subr.mxu0 0.0
    %565 = vmatpush1.msra.mxu0 0.0
    %566 = vmatprep.subr.mxu0 0.0
    %567 = vmatpush1.msra.mxu0 0.0
    %568 = vmatprep.subr.mxu0 0.0
    %569 = vmatpush1.msra.mxu0 0.0
    %570 = vmatprep.subr.mxu0 0.0
    %571 = vmatpush1.msra.mxu0 0.0
    %572 = vmatprep.subr.mxu0 0.0
    %573 = vmatpush1.msra.mxu0 0.0
    %574 = vmatprep.subr.mxu0 0.0
    %575 = vmatpush1.msra.mxu0 0.0
    %576 = vmatprep.subr.mxu0 0.0
    %577 = vmatpush1.msra.mxu0 0.0
    %578 = vmatprep.subr.mxu0 0.0
    %579 = vmatpush1.msra.mxu0 0.0
    %580 = vmatprep.subr.mxu0 0.0
    %581 = vmatpush1.msra.mxu0 0.0
    %582 = vmatprep.subr.mxu0 0.0
    %583 = vmatpush1.msra.mxu0 0.0
    %584 = vmatprep.subr.mxu0 0.0
    %585 = vmatpush1.msra.mxu0 0.0
    %586 = vmatprep.subr.mxu0 0.0
    %587 = vmatpush1.msra.mxu0 0.0
    %588 = vmatprep.subr.mxu0 0.0
    %589 = vmatpush1.msra.mxu0 0.0
    %590 = vmatprep.subr.mxu0 0.0
    %591 = vmatpush1.msra.mxu0 0.0
    %592 = vmatprep.subr.mxu0 0.0
    %593 = vmatpush1.msra.mxu0 0.0
    %594 = vmatprep.subr.mxu0 0.0
    %595 = vmatpush1.msra.mxu0 0.0
    %596 = vmatprep.subr.mxu0 0.0
    %597 = vmatpush1.msra.mxu0 0.0
    %598 = vmatprep.subr.mxu0 0.0
    %599 = vmatpush1.msra.mxu0 0.0
    %600 = vmatprep.subr.mxu0 0.0
    %601 = vmatpush1.msra.mxu0 0.0
    %602 = vmatprep.subr.mxu0 0.0
    %603 = vmatpush1.msra.mxu0 0.0
    %604 = vmatprep.subr.mxu0 0.0
    %605 = vmatpush1.msra.mxu0 0.0
    %606 = vmatprep.subr.mxu0 0.0
    %607 = vmatpush1.msra.mxu0 0.0
    %608 = vmatprep.subr.mxu0 0.0
    %609 = vmatpush1.msra.mxu0 0.0
    %610 = vmatprep.subr.mxu0 0.0
    %611 = vmatpush1.msra.mxu0 0.0
    %612 = vmatprep.mubr.f32.mxu0 0.0
    %613 = vmatmul.mubr.f32.gmra.mrb[0].mxu0 %v546
    %v614 = vpop.f32.mrb[0].mxu0
    %v615 = vadd.f32 %v543, %v614
    %v616 = vpop.f32.mrb[0].mxu0
    %617 = vdwg.mxu0
    %v618 = vld [vmem:[%s6] sm:$0x1]
    %v620 = vlaneseq
    %v621 = vshrl.u32 %v620, 7
    %v622 = vsub.s32 0, %v621
    %v623 = vrot.slane %v618, %v622
    %v625 = vmul.f32 %v615, %v623
    %v626 = vsel %vm160, %v625, 0.0
    %627 = vadd.xlane.f32.xlu0 %v626
    %v628 = vpop.xlane.xlu0 %627
    %vm629 = vcmp.gt.f32.partialorder %v628, 0.0
    %v630 = vsel %vm629, 1, 0
    %v631 = vcvt.s32.f32 %v630
    %v632 = vld [vmem:[%s2] sm:$0xff]
    %v633 = vld [vmem:[%s2 + $0x8] sm:$0xff]
    %v634 = vld [vmem:[%s2 + $0x10] sm:$0xff]
    %v635 = vld [vmem:[%s2 + $0x18] sm:$0xff]
    %v636 = vld [vmem:[%s2 + $0x20] sm:$0xff]
    %v637 = vld [vmem:[%s2 + $0x28] sm:$0xff]
    %v638 = vld [vmem:[%s2 + $0x30] sm:$0xff]
    %v639 = vld [vmem:[%s2 + $0x38] sm:$0xff]
    %v640 = vld [vmem:[%s3] sm:$0x1]
    %v642 = vlaneseq
    %v643 = vshrl.u32 %v642, 7
    %v644 = vsub.s32 0, %v643
    %v645 = vrot.slane %v640, %v644
    %647 = vmatprep.subr.mxu0 0.0
    %648 = vmatpush1.msra.mxu0 %v632
    %649 = vmatprep.subr.mxu0 0.0
    %650 = vmatpush1.msra.mxu0 %v633
    %651 = vmatprep.subr.mxu0 0.0
    %652 = vmatpush1.msra.mxu0 %v634
    %653 = vmatprep.subr.mxu0 0.0
    %654 = vmatpush1.msra.mxu0 %v635
    %655 = vmatprep.subr.mxu0 0.0
    %656 = vmatpush1.msra.mxu0 %v636
    %657 = vmatprep.subr.mxu0 0.0
    %658 = vmatpush1.msra.mxu0 %v637
    %659 = vmatprep.subr.mxu0 0.0
    %660 = vmatpush1.msra.mxu0 %v638
    %661 = vmatprep.subr.mxu0 0.0
    %662 = vmatpush1.msra.mxu0 %v639
    %663 = vmatprep.subr.mxu0 0.0
    %664 = vmatpush1.msra.mxu0 0.0
    %665 = vmatprep.subr.mxu0 0.0
    %666 = vmatpush1.msra.mxu0 0.0
    %667 = vmatprep.subr.mxu0 0.0
    %668 = vmatpush1.msra.mxu0 0.0
    %669 = vmatprep.subr.mxu0 0.0
    %670 = vmatpush1.msra.mxu0 0.0
    %671 = vmatprep.subr.mxu0 0.0
    %672 = vmatpush1.msra.mxu0 0.0
    %673 = vmatprep.subr.mxu0 0.0
    %674 = vmatpush1.msra.mxu0 0.0
    %675 = vmatprep.subr.mxu0 0.0
    %676 = vmatpush1.msra.mxu0 0.0
    %677 = vmatprep.subr.mxu0 0.0
    %678 = vmatpush1.msra.mxu0 0.0
    %679 = vmatprep.subr.mxu0 0.0
    %680 = vmatpush1.msra.mxu0 0.0
    %681 = vmatprep.subr.mxu0 0.0
    %682 = vmatpush1.msra.mxu0 0.0
    %683 = vmatprep.subr.mxu0 0.0
    %684 = vmatpush1.msra.mxu0 0.0
    %685 = vmatprep.subr.mxu0 0.0
    %686 = vmatpush1.msra.mxu0 0.0
    %687 = vmatprep.subr.mxu0 0.0
    %688 = vmatpush1.msra.mxu0 0.0
    %689 = vmatprep.subr.mxu0 0.0
    %690 = vmatpush1.msra.mxu0 0.0
    %691 = vmatprep.subr.mxu0 0.0
    %692 = vmatpush1.msra.mxu0 0.0
    %693 = vmatprep.subr.mxu0 0.0
    %694 = vmatpush1.msra.mxu0 0.0
    %695 = vmatprep.subr.mxu0 0.0
    %696 = vmatpush1.msra.mxu0 0.0
    %697 = vmatprep.subr.mxu0 0.0
    %698 = vmatpush1.msra.mxu0 0.0
    %699 = vmatprep.subr.mxu0 0.0
    %700 = vmatpush1.msra.mxu0 0.0
    %701 = vmatprep.subr.mxu0 0.0
    %702 = vmatpush1.msra.mxu0 0.0
    %703 = vmatprep.subr.mxu0 0.0
    %704 = vmatpush1.msra.mxu0 0.0
    %705 = vmatprep.subr.mxu0 0.0
    %706 = vmatpush1.msra.mxu0 0.0
    %707 = vmatprep.subr.mxu0 0.0
    %708 = vmatpush1.msra.mxu0 0.0
    %709 = vmatprep.subr.mxu0 0.0
    %710 = vmatpush1.msra.mxu0 0.0
    %711 = vmatprep.mubr.f32.mxu0 0.0
    %712 = vmatmul.mubr.f32.gmra.mrb[0].mxu0 %v546
    %v713 = vpop.f32.mrb[0].mxu0
    %v714 = vadd.f32 %v645, %v713
    %v715 = vpop.f32.mrb[0].mxu0
    %716 = vdwg.mxu0
    %v717 = vxor.u32 %v714, 2147483648
    %v718 = vmul.f32 %v717, 1.442695
    %v719 = vpow.pop %v718
    %v720 = vadd.f32 %v719, 1.0
    %v721 = vrcp.pop %v720
    %v722 = vmul.f32 1.0, %v721
    %v723 = vtanh.pop %v714
    %v724 = vmul.f32 %v722, %v522
    %726 = vrot.lane.b32.xlu0 %v723, 64
    %v727 = vpop.permute.xlu0 %726
    %v729 = vmul.f32 %v722, %v727
    %731 = vrot.lane.b32.xlu0 %v729, 32
    %v732 = vpop.permute.xlu0 %731
    %v734 = vadd.f32 %v724, %v732
    %v735 = vtanh.pop %v734
    %737 = vrot.lane.b32.xlu0 %v735, 64
    %v738 = vpop.permute.xlu0 %737
    %v740 = vmul.f32 %v722, %v738
    %vm741 = vcmp.gt.f32.partialorder %v631, 0.5
    %v742 = vmul.f32 %v740, %v631
    %744 = vrot.lane.b32.xlu0 %v742, 32
    %v745 = vpop.permute.xlu0 %744
    %747 = vrot.lane.b32.xlu0 %v401, 64
    %v748 = vpop.permute.xlu0 %747
    %v750 = vsel %vm61, %v745, %v748
    %v751 = vld [vmem:[%s7] sm:$0xff]
    %v752 = vld [vmem:[%s7 + $0x8] sm:$0xff]
    %v753 = vld [vmem:[%s7 + $0x10] sm:$0xff]
    %v754 = vld [vmem:[%s7 + $0x18] sm:$0xff]
    %v755 = vld [vmem:[%s7 + $0x20] sm:$0xff]
    %v756 = vld [vmem:[%s7 + $0x28] sm:$0xff]
    %v757 = vld [vmem:[%s7 + $0x30] sm:$0xff]
    %v758 = vld [vmem:[%s7 + $0x38] sm:$0xff]
    %v759 = vld [vmem:[%s8] sm:$0x1]
    %v761 = vlaneseq
    %v762 = vshrl.u32 %v761, 7
    %v763 = vsub.s32 0, %v762
    %v764 = vrot.slane %v759, %v763
    %v767 = vsel %vm78, %v750, 0
    %769 = vmatprep.subr.mxu0 0.0
    %770 = vmatpush1.msra.mxu0 %v751
    %771 = vmatprep.subr.mxu0 0.0
    %772 = vmatpush1.msra.mxu0 %v752
    %773 = vmatprep.subr.mxu0 0.0
    %774 = vmatpush1.msra.mxu0 %v753
    %775 = vmatprep.subr.mxu0 0.0
    %776 = vmatpush1.msra.mxu0 %v754
    %777 = vmatprep.subr.mxu0 0.0
    %778 = vmatpush1.msra.mxu0 %v755
    %779 = vmatprep.subr.mxu0 0.0
    %780 = vmatpush1.msra.mxu0 %v756
    %781 = vmatprep.subr.mxu0 0.0
    %782 = vmatpush1.msra.mxu0 %v757
    %783 = vmatprep.subr.mxu0 0.0
    %784 = vmatpush1.msra.mxu0 %v758
    %785 = vmatprep.subr.mxu0 0.0
    %786 = vmatpush1.msra.mxu0 0.0
    %787 = vmatprep.subr.mxu0 0.0
    %788 = vmatpush1.msra.mxu0 0.0
    %789 = vmatprep.subr.mxu0 0.0
    %790 = vmatpush1.msra.mxu0 0.0
    %791 = vmatprep.subr.mxu0 0.0
    %792 = vmatpush1.msra.mxu0 0.0
    %793 = vmatprep.subr.mxu0 0.0
    %794 = vmatpush1.msra.mxu0 0.0
    %795 = vmatprep.subr.mxu0 0.0
    %796 = vmatpush1.msra.mxu0 0.0
    %797 = vmatprep.subr.mxu0 0.0
    %798 = vmatpush1.msra.mxu0 0.0
    %799 = vmatprep.subr.mxu0 0.0
    %800 = vmatpush1.msra.mxu0 0.0
    %801 = vmatprep.subr.mxu0 0.0
    %802 = vmatpush1.msra.mxu0 0.0
    %803 = vmatprep.subr.mxu0 0.0
    %804 = vmatpush1.msra.mxu0 0.0
    %805 = vmatprep.subr.mxu0 0.0
    %806 = vmatpush1.msra.mxu0 0.0
    %807 = vmatprep.subr.mxu0 0.0
    %808 = vmatpush1.msra.mxu0 0.0
    %809 = vmatprep.subr.mxu0 0.0
    %810 = vmatpush1.msra.mxu0 0.0
    %811 = vmatprep.subr.mxu0 0.0
    %812 = vmatpush1.msra.mxu0 0.0
    %813 = vmatprep.subr.mxu0 0.0
    %814 = vmatpush1.msra.mxu0 0.0
    %815 = vmatprep.subr.mxu0 0.0
    %816 = vmatpush1.msra.mxu0 0.0
    %817 = vmatprep.subr.mxu0 0.0
    %818 = vmatpush1.msra.mxu0 0.0
    %819 = vmatprep.subr.mxu0 0.0
    %820 = vmatpush1.msra.mxu0 0.0
    %821 = vmatprep.subr.mxu0 0.0
    %822 = vmatpush1.msra.mxu0 0.0
    %823 = vmatprep.subr.mxu0 0.0
    %824 = vmatpush1.msra.mxu0 0.0
    %825 = vmatprep.subr.mxu0 0.0
    %826 = vmatpush1.msra.mxu0 0.0
    %827 = vmatprep.subr.mxu0 0.0
    %828 = vmatpush1.msra.mxu0 0.0
    %829 = vmatprep.subr.mxu0 0.0
    %830 = vmatpush1.msra.mxu0 0.0
    %831 = vmatprep.subr.mxu0 0.0
    %832 = vmatpush1.msra.mxu0 0.0
    %833 = vmatprep.mubr.f32.mxu0 0.0
    %834 = vmatmul.mubr.f32.gmra.mrb[0].mxu0 %v767
    %v835 = vpop.f32.mrb[0].mxu0
    %v836 = vadd.f32 %v764, %v835
    %v837 = vpop.f32.mrb[0].mxu0
    %838 = vdwg.mxu0
    %v839 = vxor.u32 %v836, 2147483648
    %v840 = vmul.f32 %v839, 1.442695
    %v841 = vpow.pop %v840
    %v842 = vadd.f32 %v841, 1.0
    %v843 = vrcp.pop %v842
    %v844 = vmul.f32 1.0, %v843
    %v845 = vtanh.pop %v836
    %v846 = vmul.f32 %v844, %v402
    %848 = vrot.lane.b32.xlu0 %v845, 64
    %v849 = vpop.permute.xlu0 %848
    %v851 = vmul.f32 %v844, %v849
    %853 = vrot.lane.b32.xlu0 %v851, 32
    %v854 = vpop.permute.xlu0 %853
    %v856 = vadd.f32 %v846, %v854
    %v857 = vtanh.pop %v856
    %859 = vrot.lane.b32.xlu0 %v857, 64
    %v860 = vpop.permute.xlu0 %859
    %v862 = vmul.f32 %v844, %v860
    %v863 = vsel %vm741, 1, 0
    %v864 = vlaneseq
    %v865 = vshrl.u32 %v864, 7
    %v866 = vsub.s32 0, %v865
    %v867 = vrot.slane %v863, %v866
    %vm868 = vcmp.eq.s32.totalorder %v867, 1
    %v869 = vsel %vm868, %v862, %v401
    %v870 = vsel %vm868, %v856, %v402
    %v871 = vsel %vm868, %v862, 0.0
    %v873 = vcombine.high %v871, %v871
    %v875 = vunpack.c.l.s4 1966171168
    %v876 = vunpack.c.0.s8 %v875
    %v877 = vlaneseq
    %v878 = vshrl.u32 %v877, 7
    %v879 = vsub.s32 %v876, %v878
    %v880 = vrot.slane %v871, %v879
    %v882 = vunpack.c.l.s4 1966171168
    %v883 = vunpack.c.0.s8 %v882
    %v884 = vlaneseq
    %v885 = vshrl.u32 %v884, 7
    %v886 = vsub.s32 %v883, %v885
    %v887 = vrot.slane %v873, %v886
    %v888 = vcombine.high %v880, %v880
    %v889 = vcombine.high %v887, %v887
    %v891 = vunpack.c.l.s4 1966171168
    %v892 = vunpack.c.0.s8 %v891
    %v893 = vlaneseq
    %v894 = vshrl.u32 %v893, 7
    %v895 = vsub.s32 %v892, %v894
    %v896 = vrot.slane %v880, %v895
    %v898 = vunpack.c.l.s4 1966171168
    %v899 = vunpack.c.0.s8 %v898
    %v900 = vlaneseq
    %v901 = vshrl.u32 %v900, 7
    %v902 = vsub.s32 %v899, %v901
    %v903 = vrot.slane %v887, %v902
    %v905 = vunpack.c.l.s4 1966171168
    %v906 = vunpack.c.0.s8 %v905
    %v907 = vlaneseq
    %v908 = vshrl.u32 %v907, 7
    %v909 = vsub.s32 %v906, %v908
    %v910 = vrot.slane %v888, %v909
    %v912 = vunpack.c.l.s4 1966171168
    %v913 = vunpack.c.0.s8 %v912
    %v914 = vlaneseq
    %v915 = vshrl.u32 %v914, 7
    %v916 = vsub.s32 %v913, %v915
    %v917 = vrot.slane %v889, %v916
    %v918 = vcombine.high %v896, %v896
    %v919 = vcombine.high %v903, %v903
    %v920 = vcombine.high %v910, %v910
    %v921 = vcombine.high %v917, %v917
    %v922 = vlaneseq
    %v923 = vshrl.u32 %v922, 7
    %v924 = vsub.s32 0, %v923
    %v925 = vrot.slane %v896, %v924
    %v926 = vlaneseq
    %v927 = vshrl.u32 %v926, 7
    %v928 = vsub.s32 0, %v927
    %v929 = vrot.slane %v910, %v928
    %v930 = vlaneseq
    %v931 = vshrl.u32 %v930, 7
    %v932 = vsub.s32 0, %v931
    %v933 = vrot.slane %v918, %v932
    %v934 = vlaneseq
    %v935 = vshrl.u32 %v934, 7
    %v936 = vsub.s32 0, %v935
    %v937 = vrot.slane %v920, %v936
    %v938 = vlaneseq
    %v939 = vshrl.u32 %v938, 7
    %v940 = vsub.s32 0, %v939
    %v941 = vrot.slane %v903, %v940
    %v942 = vlaneseq
    %v943 = vshrl.u32 %v942, 7
    %v944 = vsub.s32 0, %v943
    %v945 = vrot.slane %v917, %v944
    %v946 = vlaneseq
    %v947 = vshrl.u32 %v946, 7
    %v948 = vsub.s32 0, %v947
    %v949 = vrot.slane %v919, %v948
    %v950 = vlaneseq
    %v951 = vshrl.u32 %v950, 7
    %v952 = vsub.s32 0, %v951
    %v953 = vrot.slane %v921, %v952
    %954 = vrot.lane.b32.xlu0 %v925, 32
    %v955 = vpop.permute.xlu0 %954
    %956 = vrot.lane.b32.xlu0 %v929, 32
    %v957 = vpop.permute.xlu0 %956
    %958 = vrot.lane.b32.xlu0 %v933, 32
    %v959 = vpop.permute.xlu0 %958
    %960 = vrot.lane.b32.xlu0 %v937, 32
    %v961 = vpop.permute.xlu0 %960
    %962 = vrot.lane.b32.xlu0 %v941, 32
    %v963 = vpop.permute.xlu0 %962
    %964 = vrot.lane.b32.xlu0 %v945, 32
    %v965 = vpop.permute.xlu0 %964
    %966 = vrot.lane.b32.xlu0 %v949, 32
    %v967 = vpop.permute.xlu0 %966
    %968 = vrot.lane.b32.xlu0 %v953, 32
    %v969 = vpop.permute.xlu0 %968
    %978 = vst.msk [vmem:[#allocation2 + $0x1] sm:$0x1] %vm509, %v955
    %979 = vst.msk [vmem:[#allocation2 + $0x9] sm:$0x1] %vm509, %v957
    %980 = vst.msk [vmem:[#allocation2 + $0x11] sm:$0x1] %vm509, %v959
    %981 = vst.msk [vmem:[#allocation2 + $0x19] sm:$0x1] %vm509, %v961
    %982 = vst.msk [vmem:[#allocation2 + $0x21] sm:$0x1] %vm509, %v963
    %983 = vst.msk [vmem:[#allocation2 + $0x29] sm:$0x1] %vm509, %v965
    %984 = vst.msk [vmem:[#allocation2 + $0x31] sm:$0x1] %vm509, %v967
    %985 = vst.msk [vmem:[#allocation2 + $0x39] sm:$0x1] %vm509, %v969
    %vm986 = vcmp.eq.s32.totalorder %v59, 1
    %v987 = vsel %vm986, %v631, %v519
    %v988 = vsub.f32 1.0, %v631
    %v989 = vmul.f32 %v740, %v988
    %v990 = vmul.f32 %v734, %v988
    %s991 = scalar_lea.vmem %s0, 16
    %v992 = vld [vmem:[%s991] sm:$0xff]
    %994 = vrot.lane.b32.xlu0 %v989, 64
    %v995 = vpop.permute.xlu0 %994
    %v997 = vsel %vm61, %v992, %v995
    %v998 = vld [vmem:[%s4] sm:$0xff]
    %v999 = vld [vmem:[%s4 + $0x8] sm:$0xff]
    %v1000 = vld [vmem:[%s4 + $0x10] sm:$0xff]
    %v1001 = vld [vmem:[%s4 + $0x18] sm:$0xff]
    %v1002 = vld [vmem:[%s4 + $0x20] sm:$0xff]
    %v1003 = vld [vmem:[%s4 + $0x28] sm:$0xff]
    %v1004 = vld [vmem:[%s4 + $0x30] sm:$0xff]
    %v1005 = vld [vmem:[%s4 + $0x38] sm:$0xff]
    %v1006 = vld [vmem:[%s5] sm:$0x1]
    %v1008 = vlaneseq
    %v1009 = vshrl.u32 %v1008, 7
    %v1010 = vsub.s32 0, %v1009
    %v1011 = vrot.slane %v1006, %v1010
    %v1014 = vsel %vm78, %v997, 0
    %1016 = vmatprep.subr.mxu0 0.0
    %1017 = vmatpush1.msra.mxu0 %v998
    %1018 = vmatprep.subr.mxu0 0.0
    %1019 = vmatpush1.msra.mxu0 %v999
    %1020 = vmatprep.subr.mxu0 0.0
    %1021 = vmatpush1.msra.mxu0 %v1000
    %1022 = vmatprep.subr.mxu0 0.0
    %1023 = vmatpush1.msra.mxu0 %v1001
    %1024 = vmatprep.subr.mxu0 0.0
    %1025 = vmatpush1.msra.mxu0 %v1002
    %1026 = vmatprep.subr.mxu0 0.0
    %1027 = vmatpush1.msra.mxu0 %v1003
    %1028 = vmatprep.subr.mxu0 0.0
    %1029 = vmatpush1.msra.mxu0 %v1004
    %1030 = vmatprep.subr.mxu0 0.0
    %1031 = vmatpush1.msra.mxu0 %v1005
    %1032 = vmatprep.subr.mxu0 0.0
    %1033 = vmatpush1.msra.mxu0 0.0
    %1034 = vmatprep.subr.mxu0 0.0
    %1035 = vmatpush1.msra.mxu0 0.0
    %1036 = vmatprep.subr.mxu0 0.0
    %1037 = vmatpush1.msra.mxu0 0.0
    %1038 = vmatprep.subr.mxu0 0.0
    %1039 = vmatpush1.msra.mxu0 0.0
    %1040 = vmatprep.subr.mxu0 0.0
    %1041 = vmatpush1.msra.mxu0 0.0
    %1042 = vmatprep.subr.mxu0 0.0
    %1043 = vmatpush1.msra.mxu0 0.0
    %1044 = vmatprep.subr.mxu0 0.0
    %1045 = vmatpush1.msra.mxu0 0.0
    %1046 = vmatprep.subr.mxu0 0.0
    %1047 = vmatpush1.msra.mxu0 0.0
    %1048 = vmatprep.subr.mxu0 0.0
    %1049 = vmatpush1.msra.mxu0 0.0
    %1050 = vmatprep.subr.mxu0 0.0
    %1051 = vmatpush1.msra.mxu0 0.0
    %1052 = vmatprep.subr.mxu0 0.0
    %1053 = vmatpush1.msra.mxu0 0.0
    %1054 = vmatprep.subr.mxu0 0.0
    %1055 = vmatpush1.msra.mxu0 0.0
    %1056 = vmatprep.subr.mxu0 0.0
    %1057 = vmatpush1.msra.mxu0 0.0
    %1058 = vmatprep.subr.mxu0 0.0
    %1059 = vmatpush1.msra.mxu0 0.0
    %1060 = vmatprep.subr.mxu0 0.0
    %1061 = vmatpush1.msra.mxu0 0.0
    %1062 = vmatprep.subr.mxu0 0.0
    %1063 = vmatpush1.msra.mxu0 0.0
    %1064 = vmatprep.subr.mxu0 0.0
    %1065 = vmatpush1.msra.mxu0 0.0
    %1066 = vmatprep.subr.mxu0 0.0
    %1067 = vmatpush1.msra.mxu0 0.0
    %1068 = vmatprep.subr.mxu0 0.0
    %1069 = vmatpush1.msra.mxu0 0.0
    %1070 = vmatprep.subr.mxu0 0.0
    %1071 = vmatpush1.msra.mxu0 0.0
    %1072 = vmatprep.subr.mxu0 0.0
    %1073 = vmatpush1.msra.mxu0 0.0
    %1074 = vmatprep.subr.mxu0 0.0
    %1075 = vmatpush1.msra.mxu0 0.0
    %1076 = vmatprep.subr.mxu0 0.0
    %1077 = vmatpush1.msra.mxu0 0.0
    %1078 = vmatprep.subr.mxu0 0.0
    %1079 = vmatpush1.msra.mxu0 0.0
    %1080 = vmatprep.mubr.f32.mxu0 0.0
    %1081 = vmatmul.mubr.f32.gmra.mrb[0].mxu0 %v1014
    %v1082 = vpop.f32.mrb[0].mxu0
    %v1083 = vadd.f32 %v1011, %v1082
    %v1084 = vpop.f32.mrb[0].mxu0
    %1085 = vdwg.mxu0
    %v1086 = vld [vmem:[%s6] sm:$0x1]
    %v1088 = vlaneseq
    %v1089 = vshrl.u32 %v1088, 7
    %v1090 = vsub.s32 0, %v1089
    %v1091 = vrot.slane %v1086, %v1090
    %v1093 = vmul.f32 %v1083, %v1091
    %v1094 = vsel %vm160, %v1093, 0.0
    %1095 = vadd.xlane.f32.xlu0 %v1094
    %v1096 = vpop.xlane.xlu0 %1095
    %vm1097 = vcmp.gt.f32.partialorder %v1096, 0.0
    %v1098 = vsel %vm1097, 1, 0
    %v1099 = vcvt.s32.f32 %v1098
    %v1100 = vld [vmem:[%s2] sm:$0xff]
    %v1101 = vld [vmem:[%s2 + $0x8] sm:$0xff]
    %v1102 = vld [vmem:[%s2 + $0x10] sm:$0xff]
    %v1103 = vld [vmem:[%s2 + $0x18] sm:$0xff]
    %v1104 = vld [vmem:[%s2 + $0x20] sm:$0xff]
    %v1105 = vld [vmem:[%s2 + $0x28] sm:$0xff]
    %v1106 = vld [vmem:[%s2 + $0x30] sm:$0xff]
    %v1107 = vld [vmem:[%s2 + $0x38] sm:$0xff]
    %v1108 = vld [vmem:[%s3] sm:$0x1]
    %v1110 = vlaneseq
    %v1111 = vshrl.u32 %v1110, 7
    %v1112 = vsub.s32 0, %v1111
    %v1113 = vrot.slane %v1108, %v1112
    %1115 = vmatprep.subr.mxu0 0.0
    %1116 = vmatpush1.msra.mxu0 %v1100
    %1117 = vmatprep.subr.mxu0 0.0
    %1118 = vmatpush1.msra.mxu0 %v1101
    %1119 = vmatprep.subr.mxu0 0.0
    %1120 = vmatpush1.msra.mxu0 %v1102
    %1121 = vmatprep.subr.mxu0 0.0
    %1122 = vmatpush1.msra.mxu0 %v1103
    %1123 = vmatprep.subr.mxu0 0.0
    %1124 = vmatpush1.msra.mxu0 %v1104
    %1125 = vmatprep.subr.mxu0 0.0
    %1126 = vmatpush1.msra.mxu0 %v1105
    %1127 = vmatprep.subr.mxu0 0.0
    %1128 = vmatpush1.msra.mxu0 %v1106
    %1129 = vmatprep.subr.mxu0 0.0
    %1130 = vmatpush1.msra.mxu0 %v1107
    %1131 = vmatprep.subr.mxu0 0.0
    %1132 = vmatpush1.msra.mxu0 0.0
    %1133 = vmatprep.subr.mxu0 0.0
    %1134 = vmatpush1.msra.mxu0 0.0
    %1135 = vmatprep.subr.mxu0 0.0
    %1136 = vmatpush1.msra.mxu0 0.0
    %1137 = vmatprep.subr.mxu0 0.0
    %1138 = vmatpush1.msra.mxu0 0.0
    %1139 = vmatprep.subr.mxu0 0.0
    %1140 = vmatpush1.msra.mxu0 0.0
    %1141 = vmatprep.subr.mxu0 0.0
    %1142 = vmatpush1.msra.mxu0 0.0
    %1143 = vmatprep.subr.mxu0 0.0
    %1144 = vmatpush1.msra.mxu0 0.0
    %1145 = vmatprep.subr.mxu0 0.0
    %1146 = vmatpush1.msra.mxu0 0.0
    %1147 = vmatprep.subr.mxu0 0.0
    %1148 = vmatpush1.msra.mxu0 0.0
    %1149 = vmatprep.subr.mxu0 0.0
    %1150 = vmatpush1.msra.mxu0 0.0
    %1151 = vmatprep.subr.mxu0 0.0
    %1152 = vmatpush1.msra.mxu0 0.0
    %1153 = vmatprep.subr.mxu0 0.0
    %1154 = vmatpush1.msra.mxu0 0.0
    %1155 = vmatprep.subr.mxu0 0.0
    %1156 = vmatpush1.msra.mxu0 0.0
    %1157 = vmatprep.subr.mxu0 0.0
    %1158 = vmatpush1.msra.mxu0 0.0
    %1159 = vmatprep.subr.mxu0 0.0
    %1160 = vmatpush1.msra.mxu0 0.0
    %1161 = vmatprep.subr.mxu0 0.0
    %1162 = vmatpush1.msra.mxu0 0.0
    %1163 = vmatprep.subr.mxu0 0.0
    %1164 = vmatpush1.msra.mxu0 0.0
    %1165 = vmatprep.subr.mxu0 0.0
    %1166 = vmatpush1.msra.mxu0 0.0
    %1167 = vmatprep.subr.mxu0 0.0
    %1168 = vmatpush1.msra.mxu0 0.0
    %1169 = vmatprep.subr.mxu0 0.0
    %1170 = vmatpush1.msra.mxu0 0.0
    %1171 = vmatprep.subr.mxu0 0.0
    %1172 = vmatpush1.msra.mxu0 0.0
    %1173 = vmatprep.subr.mxu0 0.0
    %1174 = vmatpush1.msra.mxu0 0.0
    %1175 = vmatprep.subr.mxu0 0.0
    %1176 = vmatpush1.msra.mxu0 0.0
    %1177 = vmatprep.subr.mxu0 0.0
    %1178 = vmatpush1.msra.mxu0 0.0
    %1179 = vmatprep.mubr.f32.mxu0 0.0
    %1180 = vmatmul.mubr.f32.gmra.mrb[0].mxu0 %v1014
    %v1181 = vpop.f32.mrb[0].mxu0
    %v1182 = vadd.f32 %v1113, %v1181
    %v1183 = vpop.f32.mrb[0].mxu0
    %1184 = vdwg.mxu0
    %v1185 = vxor.u32 %v1182, 2147483648
    %v1186 = vmul.f32 %v1185, 1.442695
    %v1187 = vpow.pop %v1186
    %v1188 = vadd.f32 %v1187, 1.0
    %v1189 = vrcp.pop %v1188
    %v1190 = vmul.f32 1.0, %v1189
    %v1191 = vtanh.pop %v1182
    %v1192 = vmul.f32 %v1190, %v990
    %1194 = vrot.lane.b32.xlu0 %v1191, 64
    %v1195 = vpop.permute.xlu0 %1194
    %v1197 = vmul.f32 %v1190, %v1195
    %1199 = vrot.lane.b32.xlu0 %v1197, 32
    %v1200 = vpop.permute.xlu0 %1199
    %v1202 = vadd.f32 %v1192, %v1200
    %v1203 = vtanh.pop %v1202
    %1205 = vrot.lane.b32.xlu0 %v1203, 64
    %v1206 = vpop.permute.xlu0 %1205
    %v1208 = vmul.f32 %v1190, %v1206
    %vm1209 = vcmp.gt.f32.partialorder %v1099, 0.5
    %v1210 = vmul.f32 %v1208, %v1099
    %1212 = vrot.lane.b32.xlu0 %v1210, 32
    %v1213 = vpop.permute.xlu0 %1212
    %1216 = vrot.lane.b32.xlu0 %v869, 64
    %v1217 = vpop.permute.xlu0 %1216
    %v1219 = vsel %vm61, %v1213, %v1217
    %v1220 = vld [vmem:[%s7] sm:$0xff]
    %v1221 = vld [vmem:[%s7 + $0x8] sm:$0xff]
    %v1222 = vld [vmem:[%s7 + $0x10] sm:$0xff]
    %v1223 = vld [vmem:[%s7 + $0x18] sm:$0xff]
    %v1224 = vld [vmem:[%s7 + $0x20] sm:$0xff]
    %v1225 = vld [vmem:[%s7 + $0x28] sm:$0xff]
    %v1226 = vld [vmem:[%s7 + $0x30] sm:$0xff]
    %v1227 = vld [vmem:[%s7 + $0x38] sm:$0xff]
    %v1228 = vld [vmem:[%s8] sm:$0x1]
    %v1230 = vlaneseq
    %v1231 = vshrl.u32 %v1230, 7
    %v1232 = vsub.s32 0, %v1231
    %v1233 = vrot.slane %v1228, %v1232
    %v1236 = vsel %vm78, %v1219, 0
    %1238 = vmatprep.subr.mxu0 0.0
    %1239 = vmatpush1.msra.mxu0 %v1220
    %1240 = vmatprep.subr.mxu0 0.0
    %1241 = vmatpush1.msra.mxu0 %v1221
    %1242 = vmatprep.subr.mxu0 0.0
    %1243 = vmatpush1.msra.mxu0 %v1222
    %1244 = vmatprep.subr.mxu0 0.0
    %1245 = vmatpush1.msra.mxu0 %v1223
    %1246 = vmatprep.subr.mxu0 0.0
    %1247 = vmatpush1.msra.mxu0 %v1224
    %1248 = vmatprep.subr.mxu0 0.0
    %1249 = vmatpush1.msra.mxu0 %v1225
    %1250 = vmatprep.subr.mxu0 0.0
    %1251 = vmatpush1.msra.mxu0 %v1226
    %1252 = vmatprep.subr.mxu0 0.0
    %1253 = vmatpush1.msra.mxu0 %v1227
    %1254 = vmatprep.subr.mxu0 0.0
    %1255 = vmatpush1.msra.mxu0 0.0
    %1256 = vmatprep.subr.mxu0 0.0
    %1257 = vmatpush1.msra.mxu0 0.0
    %1258 = vmatprep.subr.mxu0 0.0
    %1259 = vmatpush1.msra.mxu0 0.0
    %1260 = vmatprep.subr.mxu0 0.0
    %1261 = vmatpush1.msra.mxu0 0.0
    %1262 = vmatprep.subr.mxu0 0.0
    %1263 = vmatpush1.msra.mxu0 0.0
    %1264 = vmatprep.subr.mxu0 0.0
    %1265 = vmatpush1.msra.mxu0 0.0
    %1266 = vmatprep.subr.mxu0 0.0
    %1267 = vmatpush1.msra.mxu0 0.0
    %1268 = vmatprep.subr.mxu0 0.0
    %1269 = vmatpush1.msra.mxu0 0.0
    %1270 = vmatprep.subr.mxu0 0.0
    %1271 = vmatpush1.msra.mxu0 0.0
    %1272 = vmatprep.subr.mxu0 0.0
    %1273 = vmatpush1.msra.mxu0 0.0
    %1274 = vmatprep.subr.mxu0 0.0
    %1275 = vmatpush1.msra.mxu0 0.0
    %1276 = vmatprep.subr.mxu0 0.0
    %1277 = vmatpush1.msra.mxu0 0.0
    %1278 = vmatprep.subr.mxu0 0.0
    %1279 = vmatpush1.msra.mxu0 0.0
    %1280 = vmatprep.subr.mxu0 0.0
    %1281 = vmatpush1.msra.mxu0 0.0
    %1282 = vmatprep.subr.mxu0 0.0
    %1283 = vmatpush1.msra.mxu0 0.0
    %1284 = vmatprep.subr.mxu0 0.0
    %1285 = vmatpush1.msra.mxu0 0.0
    %1286 = vmatprep.subr.mxu0 0.0
    %1287 = vmatpush1.msra.mxu0 0.0
    %1288 = vmatprep.subr.mxu0 0.0
    %1289 = vmatpush1.msra.mxu0 0.0
    %1290 = vmatprep.subr.mxu0 0.0
    %1291 = vmatpush1.msra.mxu0 0.0
    %1292 = vmatprep.subr.mxu0 0.0
    %1293 = vmatpush1.msra.mxu0 0.0
    %1294 = vmatprep.subr.mxu0 0.0
    %1295 = vmatpush1.msra.mxu0 0.0
    %1296 = vmatprep.subr.mxu0 0.0
    %1297 = vmatpush1.msra.mxu0 0.0
    %1298 = vmatprep.subr.mxu0 0.0
    %1299 = vmatpush1.msra.mxu0 0.0
    %1300 = vmatprep.subr.mxu0 0.0
    %1301 = vmatpush1.msra.mxu0 0.0
    %1302 = vmatprep.mubr.f32.mxu0 0.0
    %1303 = vmatmul.mubr.f32.gmra.mrb[0].mxu0 %v1236
    %v1304 = vpop.f32.mrb[0].mxu0
    %v1305 = vadd.f32 %v1233, %v1304
    %v1306 = vpop.f32.mrb[0].mxu0
    %1307 = vdwg.mxu0
    %v1308 = vxor.u32 %v1305, 2147483648
    %v1309 = vmul.f32 %v1308, 1.442695
    %v1310 = vpow.pop %v1309
    %v1311 = vadd.f32 %v1310, 1.0
    %v1312 = vrcp.pop %v1311
    %v1313 = vmul.f32 1.0, %v1312
    %v1314 = vtanh.pop %v1305
    %v1315 = vmul.f32 %v1313, %v870
    %1317 = vrot.lane.b32.xlu0 %v1314, 64
    %v1318 = vpop.permute.xlu0 %1317
    %v1320 = vmul.f32 %v1313, %v1318
    %1322 = vrot.lane.b32.xlu0 %v1320, 32
    %v1323 = vpop.permute.xlu0 %1322
    %v1325 = vadd.f32 %v1315, %v1323
    %v1326 = vtanh.pop %v1325
    %1328 = vrot.lane.b32.xlu0 %v1326, 64
    %v1329 = vpop.permute.xlu0 %1328
    %v1331 = vmul.f32 %v1313, %v1329
    %v1332 = vsel %vm1209, 1, 0
    %v1333 = vlaneseq
    %v1334 = vshrl.u32 %v1333, 7
    %v1335 = vsub.s32 0, %v1334
    %v1336 = vrot.slane %v1332, %v1335
    %vm1337 = vcmp.eq.s32.totalorder %v1336, 1
    %v1338 = vsel %vm1337, %v1331, %v869
    %v1339 = vsel %vm1337, %v1325, %v870
    %v1340 = vsel %vm1337, %v1331, 0.0
    %v1342 = vcombine.high %v1340, %v1340
    %v1344 = vunpack.c.l.s4 1966171168
    %v1345 = vunpack.c.0.s8 %v1344
    %v1346 = vlaneseq
    %v1347 = vshrl.u32 %v1346, 7
    %v1348 = vsub.s32 %v1345, %v1347
    %v1349 = vrot.slane %v1340, %v1348
    %v1351 = vunpack.c.l.s4 1966171168
    %v1352 = vunpack.c.0.s8 %v1351
    %v1353 = vlaneseq
    %v1354 = vshrl.u32 %v1353, 7
    %v1355 = vsub.s32 %v1352, %v1354
    %v1356 = vrot.slane %v1342, %v1355
    %v1357 = vcombine.high %v1349, %v1349
    %v1358 = vcombine.high %v1356, %v1356
    %v1360 = vunpack.c.l.s4 1966171168
    %v1361 = vunpack.c.0.s8 %v1360
    %v1362 = vlaneseq
    %v1363 = vshrl.u32 %v1362, 7
    %v1364 = vsub.s32 %v1361, %v1363
    %v1365 = vrot.slane %v1349, %v1364
    %v1367 = vunpack.c.l.s4 1966171168
    %v1368 = vunpack.c.0.s8 %v1367
    %v1369 = vlaneseq
    %v1370 = vshrl.u32 %v1369, 7
    %v1371 = vsub.s32 %v1368, %v1370
    %v1372 = vrot.slane %v1356, %v1371
    %v1374 = vunpack.c.l.s4 1966171168
    %v1375 = vunpack.c.0.s8 %v1374
    %v1376 = vlaneseq
    %v1377 = vshrl.u32 %v1376, 7
    %v1378 = vsub.s32 %v1375, %v1377
    %v1379 = vrot.slane %v1357, %v1378
    %v1381 = vunpack.c.l.s4 1966171168
    %v1382 = vunpack.c.0.s8 %v1381
    %v1383 = vlaneseq
    %v1384 = vshrl.u32 %v1383, 7
    %v1385 = vsub.s32 %v1382, %v1384
    %v1386 = vrot.slane %v1358, %v1385
    %v1387 = vcombine.high %v1365, %v1365
    %v1388 = vcombine.high %v1372, %v1372
    %v1389 = vcombine.high %v1379, %v1379
    %v1390 = vcombine.high %v1386, %v1386
    %v1391 = vlaneseq
    %v1392 = vshrl.u32 %v1391, 7
    %v1393 = vsub.s32 0, %v1392
    %v1394 = vrot.slane %v1365, %v1393
    %v1395 = vlaneseq
    %v1396 = vshrl.u32 %v1395, 7
    %v1397 = vsub.s32 0, %v1396
    %v1398 = vrot.slane %v1379, %v1397
    %v1399 = vlaneseq
    %v1400 = vshrl.u32 %v1399, 7
    %v1401 = vsub.s32 0, %v1400
    %v1402 = vrot.slane %v1387, %v1401
    %v1403 = vlaneseq
    %v1404 = vshrl.u32 %v1403, 7
    %v1405 = vsub.s32 0, %v1404
    %v1406 = vrot.slane %v1389, %v1405
    %v1407 = vlaneseq
    %v1408 = vshrl.u32 %v1407, 7
    %v1409 = vsub.s32 0, %v1408
    %v1410 = vrot.slane %v1372, %v1409
    %v1411 = vlaneseq
    %v1412 = vshrl.u32 %v1411, 7
    %v1413 = vsub.s32 0, %v1412
    %v1414 = vrot.slane %v1386, %v1413
    %v1415 = vlaneseq
    %v1416 = vshrl.u32 %v1415, 7
    %v1417 = vsub.s32 0, %v1416
    %v1418 = vrot.slane %v1388, %v1417
    %v1419 = vlaneseq
    %v1420 = vshrl.u32 %v1419, 7
    %v1421 = vsub.s32 0, %v1420
    %v1422 = vrot.slane %v1390, %v1421
    %1423 = vrot.lane.b32.xlu0 %v1394, 32
    %v1424 = vpop.permute.xlu0 %1423
    %1425 = vrot.lane.b32.xlu0 %v1398, 32
    %v1426 = vpop.permute.xlu0 %1425
    %1427 = vrot.lane.b32.xlu0 %v1402, 32
    %v1428 = vpop.permute.xlu0 %1427
    %1429 = vrot.lane.b32.xlu0 %v1406, 32
    %v1430 = vpop.permute.xlu0 %1429
    %1431 = vrot.lane.b32.xlu0 %v1410, 32
    %v1432 = vpop.permute.xlu0 %1431
    %1433 = vrot.lane.b32.xlu0 %v1414, 32
    %v1434 = vpop.permute.xlu0 %1433
    %1435 = vrot.lane.b32.xlu0 %v1418, 32
    %v1436 = vpop.permute.xlu0 %1435
    %1437 = vrot.lane.b32.xlu0 %v1422, 32
    %v1438 = vpop.permute.xlu0 %1437
    %1447 = vst.msk [vmem:[#allocation2 + $0x2] sm:$0x1] %vm509, %v1424
    %1448 = vst.msk [vmem:[#allocation2 + $0xa] sm:$0x1] %vm509, %v1426
    %1449 = vst.msk [vmem:[#allocation2 + $0x12] sm:$0x1] %vm509, %v1428
    %1450 = vst.msk [vmem:[#allocation2 + $0x1a] sm:$0x1] %vm509, %v1430
    %1451 = vst.msk [vmem:[#allocation2 + $0x22] sm:$0x1] %vm509, %v1432
    %1452 = vst.msk [vmem:[#allocation2 + $0x2a] sm:$0x1] %vm509, %v1434
    %1453 = vst.msk [vmem:[#allocation2 + $0x32] sm:$0x1] %vm509, %v1436
    %1454 = vst.msk [vmem:[#allocation2 + $0x3a] sm:$0x1] %vm509, %v1438
    %vm1455 = vcmp.eq.s32.totalorder %v59, 2
    %v1456 = vsel %vm1455, %v1099, %v987
    %v1457 = vsub.f32 1.0, %v1099
    %v1458 = vmul.f32 %v1208, %v1457
    %v1459 = vmul.f32 %v1202, %v1457
    %s1460 = scalar_lea.vmem %s0, 24
    %v1461 = vld [vmem:[%s1460] sm:$0xff]
    %1463 = vrot.lane.b32.xlu0 %v1458, 64
    %v1464 = vpop.permute.xlu0 %1463
    %v1466 = vsel %vm61, %v1461, %v1464
    %v1467 = vld [vmem:[%s4] sm:$0xff]
    %v1468 = vld [vmem:[%s4 + $0x8] sm:$0xff]
    %v1469 = vld [vmem:[%s4 + $0x10] sm:$0xff]
    %v1470 = vld [vmem:[%s4 + $0x18] sm:$0xff]
    %v1471 = vld [vmem:[%s4 + $0x20] sm:$0xff]
    %v1472 = vld [vmem:[%s4 + $0x28] sm:$0xff]
    %v1473 = vld [vmem:[%s4 + $0x30] sm:$0xff]
    %v1474 = vld [vmem:[%s4 + $0x38] sm:$0xff]
    %v1475 = vld [vmem:[%s5] sm:$0x1]
    %v1477 = vlaneseq
    %v1478 = vshrl.u32 %v1477, 7
    %v1479 = vsub.s32 0, %v1478
    %v1480 = vrot.slane %v1475, %v1479
    %v1483 = vsel %vm78, %v1466, 0
    %1485 = vmatprep.subr.mxu0 0.0
    %1486 = vmatpush1.msra.mxu0 %v1467
    %1487 = vmatprep.subr.mxu0 0.0
    %1488 = vmatpush1.msra.mxu0 %v1468
    %1489 = vmatprep.subr.mxu0 0.0
    %1490 = vmatpush1.msra.mxu0 %v1469
    %1491 = vmatprep.subr.mxu0 0.0
    %1492 = vmatpush1.msra.mxu0 %v1470
    %1493 = vmatprep.subr.mxu0 0.0
    %1494 = vmatpush1.msra.mxu0 %v1471
    %1495 = vmatprep.subr.mxu0 0.0
    %1496 = vmatpush1.msra.mxu0 %v1472
    %1497 = vmatprep.subr.mxu0 0.0
    %1498 = vmatpush1.msra.mxu0 %v1473
    %1499 = vmatprep.subr.mxu0 0.0
    %1500 = vmatpush1.msra.mxu0 %v1474
    %1501 = vmatprep.subr.mxu0 0.0
    %1502 = vmatpush1.msra.mxu0 0.0
    %1503 = vmatprep.subr.mxu0 0.0
    %1504 = vmatpush1.msra.mxu0 0.0
    %1505 = vmatprep.subr.mxu0 0.0
    %1506 = vmatpush1.msra.mxu0 0.0
    %1507 = vmatprep.subr.mxu0 0.0
    %1508 = vmatpush1.msra.mxu0 0.0
    %1509 = vmatprep.subr.mxu0 0.0
    %1510 = vmatpush1.msra.mxu0 0.0
    %1511 = vmatprep.subr.mxu0 0.0
    %1512 = vmatpush1.msra.mxu0 0.0
    %1513 = vmatprep.subr.mxu0 0.0
    %1514 = vmatpush1.msra.mxu0 0.0
    %1515 = vmatprep.subr.mxu0 0.0
    %1516 = vmatpush1.msra.mxu0 0.0
    %1517 = vmatprep.subr.mxu0 0.0
    %1518 = vmatpush1.msra.mxu0 0.0
    %1519 = vmatprep.subr.mxu0 0.0
    %1520 = vmatpush1.msra.mxu0 0.0
    %1521 = vmatprep.subr.mxu0 0.0
    %1522 = vmatpush1.msra.mxu0 0.0
    %1523 = vmatprep.subr.mxu0 0.0
    %1524 = vmatpush1.msra.mxu0 0.0
    %1525 = vmatprep.subr.mxu0 0.0
    %1526 = vmatpush1.msra.mxu0 0.0
    %1527 = vmatprep.subr.mxu0 0.0
    %1528 = vmatpush1.msra.mxu0 0.0
    %1529 = vmatprep.subr.mxu0 0.0
    %1530 = vmatpush1.msra.mxu0 0.0
    %1531 = vmatprep.subr.mxu0 0.0
    %1532 = vmatpush1.msra.mxu0 0.0
    %1533 = vmatprep.subr.mxu0 0.0
    %1534 = vmatpush1.msra.mxu0 0.0
    %1535 = vmatprep.subr.mxu0 0.0
    %1536 = vmatpush1.msra.mxu0 0.0
    %1537 = vmatprep.subr.mxu0 0.0
    %1538 = vmatpush1.msra.mxu0 0.0
    %1539 = vmatprep.subr.mxu0 0.0
    %1540 = vmatpush1.msra.mxu0 0.0
    %1541 = vmatprep.subr.mxu0 0.0
    %1542 = vmatpush1.msra.mxu0 0.0
    %1543 = vmatprep.subr.mxu0 0.0
    %1544 = vmatpush1.msra.mxu0 0.0
    %1545 = vmatprep.subr.mxu0 0.0
    %1546 = vmatpush1.msra.mxu0 0.0
    %1547 = vmatprep.subr.mxu0 0.0
    %1548 = vmatpush1.msra.mxu0 0.0
    %1549 = vmatprep.mubr.f32.mxu0 0.0
    %1550 = vmatmul.mubr.f32.gmra.mrb[0].mxu0 %v1483
    %v1551 = vpop.f32.mrb[0].mxu0
    %v1552 = vadd.f32 %v1480, %v1551
    %v1553 = vpop.f32.mrb[0].mxu0
    %1554 = vdwg.mxu0
    %v1555 = vld [vmem:[%s6] sm:$0x1]
    %v1557 = vlaneseq
    %v1558 = vshrl.u32 %v1557, 7
    %v1559 = vsub.s32 0, %v1558
    %v1560 = vrot.slane %v1555, %v1559
    %v1562 = vmul.f32 %v1552, %v1560
    %v1563 = vsel %vm160, %v1562, 0.0
    %1564 = vadd.xlane.f32.xlu0 %v1563
    %v1565 = vpop.xlane.xlu0 %1564
    %vm1566 = vcmp.gt.f32.partialorder %v1565, 0.0
    %v1567 = vsel %vm1566, 1, 0
    %v1568 = vcvt.s32.f32 %v1567
    %v1569 = vld [vmem:[%s2] sm:$0xff]
    %v1570 = vld [vmem:[%s2 + $0x8] sm:$0xff]
    %v1571 = vld [vmem:[%s2 + $0x10] sm:$0xff]
    %v1572 = vld [vmem:[%s2 + $0x18] sm:$0xff]
    %v1573 = vld [vmem:[%s2 + $0x20] sm:$0xff]
    %v1574 = vld [vmem:[%s2 + $0x28] sm:$0xff]
    %v1575 = vld [vmem:[%s2 + $0x30] sm:$0xff]
    %v1576 = vld [vmem:[%s2 + $0x38] sm:$0xff]
    %v1577 = vld [vmem:[%s3] sm:$0x1]
    %v1579 = vlaneseq
    %v1580 = vshrl.u32 %v1579, 7
    %v1581 = vsub.s32 0, %v1580
    %v1582 = vrot.slane %v1577, %v1581
    %1584 = vmatprep.subr.mxu0 0.0
    %1585 = vmatpush1.msra.mxu0 %v1569
    %1586 = vmatprep.subr.mxu0 0.0
    %1587 = vmatpush1.msra.mxu0 %v1570
    %1588 = vmatprep.subr.mxu0 0.0
    %1589 = vmatpush1.msra.mxu0 %v1571
    %1590 = vmatprep.subr.mxu0 0.0
    %1591 = vmatpush1.msra.mxu0 %v1572
    %1592 = vmatprep.subr.mxu0 0.0
    %1593 = vmatpush1.msra.mxu0 %v1573
    %1594 = vmatprep.subr.mxu0 0.0
    %1595 = vmatpush1.msra.mxu0 %v1574
    %1596 = vmatprep.subr.mxu0 0.0
    %1597 = vmatpush1.msra.mxu0 %v1575
    %1598 = vmatprep.subr.mxu0 0.0
    %1599 = vmatpush1.msra.mxu0 %v1576
    %1600 = vmatprep.subr.mxu0 0.0
    %1601 = vmatpush1.msra.mxu0 0.0
    %1602 = vmatprep.subr.mxu0 0.0
    %1603 = vmatpush1.msra.mxu0 0.0
    %1604 = vmatprep.subr.mxu0 0.0
    %1605 = vmatpush1.msra.mxu0 0.0
    %1606 = vmatprep.subr.mxu0 0.0
    %1607 = vmatpush1.msra.mxu0 0.0
    %1608 = vmatprep.subr.mxu0 0.0
    %1609 = vmatpush1.msra.mxu0 0.0
    %1610 = vmatprep.subr.mxu0 0.0
    %1611 = vmatpush1.msra.mxu0 0.0
    %1612 = vmatprep.subr.mxu0 0.0
    %1613 = vmatpush1.msra.mxu0 0.0
    %1614 = vmatprep.subr.mxu0 0.0
    %1615 = vmatpush1.msra.mxu0 0.0
    %1616 = vmatprep.subr.mxu0 0.0
    %1617 = vmatpush1.msra.mxu0 0.0
    %1618 = vmatprep.subr.mxu0 0.0
    %1619 = vmatpush1.msra.mxu0 0.0
    %1620 = vmatprep.subr.mxu0 0.0
    %1621 = vmatpush1.msra.mxu0 0.0
    %1622 = vmatprep.subr.mxu0 0.0
    %1623 = vmatpush1.msra.mxu0 0.0
    %1624 = vmatprep.subr.mxu0 0.0
    %1625 = vmatpush1.msra.mxu0 0.0
    %1626 = vmatprep.subr.mxu0 0.0
    %1627 = vmatpush1.msra.mxu0 0.0
    %1628 = vmatprep.subr.mxu0 0.0
    %1629 = vmatpush1.msra.mxu0 0.0
    %1630 = vmatprep.subr.mxu0 0.0
    %1631 = vmatpush1.msra.mxu0 0.0
    %1632 = vmatprep.subr.mxu0 0.0
    %1633 = vmatpush1.msra.mxu0 0.0
    %1634 = vmatprep.subr.mxu0 0.0
    %1635 = vmatpush1.msra.mxu0 0.0
    %1636 = vmatprep.subr.mxu0 0.0
    %1637 = vmatpush1.msra.mxu0 0.0
    %1638 = vmatprep.subr.mxu0 0.0
    %1639 = vmatpush1.msra.mxu0 0.0
    %1640 = vmatprep.subr.mxu0 0.0
    %1641 = vmatpush1.msra.mxu0 0.0
    %1642 = vmatprep.subr.mxu0 0.0
    %1643 = vmatpush1.msra.mxu0 0.0
    %1644 = vmatprep.subr.mxu0 0.0
    %1645 = vmatpush1.msra.mxu0 0.0
    %1646 = vmatprep.subr.mxu0 0.0
    %1647 = vmatpush1.msra.mxu0 0.0
    %1648 = vmatprep.mubr.f32.mxu0 0.0
    %1649 = vmatmul.mubr.f32.gmra.mrb[0].mxu0 %v1483
    %v1650 = vpop.f32.mrb[0].mxu0
    %v1651 = vadd.f32 %v1582, %v1650
    %v1652 = vpop.f32.mrb[0].mxu0
    %1653 = vdwg.mxu0
    %v1654 = vxor.u32 %v1651, 2147483648
    %v1655 = vmul.f32 %v1654, 1.442695
    %v1656 = vpow.pop %v1655
    %v1657 = vadd.f32 %v1656, 1.0
    %v1658 = vrcp.pop %v1657
    %v1659 = vmul.f32 1.0, %v1658
    %v1660 = vtanh.pop %v1651
    %v1661 = vmul.f32 %v1659, %v1459
    %1663 = vrot.lane.b32.xlu0 %v1660, 64
    %v1664 = vpop.permute.xlu0 %1663
    %v1666 = vmul.f32 %v1659, %v1664
    %1668 = vrot.lane.b32.xlu0 %v1666, 32
    %v1669 = vpop.permute.xlu0 %1668
    %v1671 = vadd.f32 %v1661, %v1669
    %v1672 = vtanh.pop %v1671
    %1674 = vrot.lane.b32.xlu0 %v1672, 64
    %v1675 = vpop.permute.xlu0 %1674
    %v1677 = vmul.f32 %v1659, %v1675
    %vm1678 = vcmp.gt.f32.partialorder %v1568, 0.5
    %v1679 = vmul.f32 %v1677, %v1568
    %1681 = vrot.lane.b32.xlu0 %v1679, 32
    %v1682 = vpop.permute.xlu0 %1681
    %1685 = vrot.lane.b32.xlu0 %v1338, 64
    %v1686 = vpop.permute.xlu0 %1685
    %v1688 = vsel %vm61, %v1682, %v1686
    %v1689 = vld [vmem:[%s7] sm:$0xff]
    %v1690 = vld [vmem:[%s7 + $0x8] sm:$0xff]
    %v1691 = vld [vmem:[%s7 + $0x10] sm:$0xff]
    %v1692 = vld [vmem:[%s7 + $0x18] sm:$0xff]
    %v1693 = vld [vmem:[%s7 + $0x20] sm:$0xff]
    %v1694 = vld [vmem:[%s7 + $0x28] sm:$0xff]
    %v1695 = vld [vmem:[%s7 + $0x30] sm:$0xff]
    %v1696 = vld [vmem:[%s7 + $0x38] sm:$0xff]
    %v1697 = vld [vmem:[%s8] sm:$0x1]
    %v1699 = vlaneseq
    %v1700 = vshrl.u32 %v1699, 7
    %v1701 = vsub.s32 0, %v1700
    %v1702 = vrot.slane %v1697, %v1701
    %v1705 = vsel %vm78, %v1688, 0
    %1707 = vmatprep.subr.mxu0 0.0
    %1708 = vmatpush1.msra.mxu0 %v1689
    %1709 = vmatprep.subr.mxu0 0.0
    %1710 = vmatpush1.msra.mxu0 %v1690
    %1711 = vmatprep.subr.mxu0 0.0
    %1712 = vmatpush1.msra.mxu0 %v1691
    %1713 = vmatprep.subr.mxu0 0.0
    %1714 = vmatpush1.msra.mxu0 %v1692
    %1715 = vmatprep.subr.mxu0 0.0
    %1716 = vmatpush1.msra.mxu0 %v1693
    %1717 = vmatprep.subr.mxu0 0.0
    %1718 = vmatpush1.msra.mxu0 %v1694
    %1719 = vmatprep.subr.mxu0 0.0
    %1720 = vmatpush1.msra.mxu0 %v1695
    %1721 = vmatprep.subr.mxu0 0.0
    %1722 = vmatpush1.msra.mxu0 %v1696
    %1723 = vmatprep.subr.mxu0 0.0
    %1724 = vmatpush1.msra.mxu0 0.0
    %1725 = vmatprep.subr.mxu0 0.0
    %1726 = vmatpush1.msra.mxu0 0.0
    %1727 = vmatprep.subr.mxu0 0.0
    %1728 = vmatpush1.msra.mxu0 0.0
    %1729 = vmatprep.subr.mxu0 0.0
    %1730 = vmatpush1.msra.mxu0 0.0
    %1731 = vmatprep.subr.mxu0 0.0
    %1732 = vmatpush1.msra.mxu0 0.0
    %1733 = vmatprep.subr.mxu0 0.0
    %1734 = vmatpush1.msra.mxu0 0.0
    %1735 = vmatprep.subr.mxu0 0.0
    %1736 = vmatpush1.msra.mxu0 0.0
    %1737 = vmatprep.subr.mxu0 0.0
    %1738 = vmatpush1.msra.mxu0 0.0
    %1739 = vmatprep.subr.mxu0 0.0
    %1740 = vmatpush1.msra.mxu0 0.0
    %1741 = vmatprep.subr.mxu0 0.0
    %1742 = vmatpush1.msra.mxu0 0.0
    %1743 = vmatprep.subr.mxu0 0.0
    %1744 = vmatpush1.msra.mxu0 0.0
    %1745 = vmatprep.subr.mxu0 0.0
    %1746 = vmatpush1.msra.mxu0 0.0
    %1747 = vmatprep.subr.mxu0 0.0
    %1748 = vmatpush1.msra.mxu0 0.0
    %1749 = vmatprep.subr.mxu0 0.0
    %1750 = vmatpush1.msra.mxu0 0.0
    %1751 = vmatprep.subr.mxu0 0.0
    %1752 = vmatpush1.msra.mxu0 0.0
    %1753 = vmatprep.subr.mxu0 0.0
    %1754 = vmatpush1.msra.mxu0 0.0
    %1755 = vmatprep.subr.mxu0 0.0
    %1756 = vmatpush1.msra.mxu0 0.0
    %1757 = vmatprep.subr.mxu0 0.0
    %1758 = vmatpush1.msra.mxu0 0.0
    %1759 = vmatprep.subr.mxu0 0.0
    %1760 = vmatpush1.msra.mxu0 0.0
    %1761 = vmatprep.subr.mxu0 0.0
    %1762 = vmatpush1.msra.mxu0 0.0
    %1763 = vmatprep.subr.mxu0 0.0
    %1764 = vmatpush1.msra.mxu0 0.0
    %1765 = vmatprep.subr.mxu0 0.0
    %1766 = vmatpush1.msra.mxu0 0.0
    %1767 = vmatprep.subr.mxu0 0.0
    %1768 = vmatpush1.msra.mxu0 0.0
    %1769 = vmatprep.subr.mxu0 0.0
    %1770 = vmatpush1.msra.mxu0 0.0
    %1771 = vmatprep.mubr.f32.mxu0 0.0
    %1772 = vmatmul.mubr.f32.gmra.mrb[0].mxu0 %v1705
    %v1773 = vpop.f32.mrb[0].mxu0
    %v1774 = vadd.f32 %v1702, %v1773
    %v1775 = vpop.f32.mrb[0].mxu0
    %1776 = vdwg.mxu0
    %v1777 = vxor.u32 %v1774, 2147483648
    %v1778 = vmul.f32 %v1777, 1.442695
    %v1779 = vpow.pop %v1778
    %v1780 = vadd.f32 %v1779, 1.0
    %v1781 = vrcp.pop %v1780
    %v1782 = vmul.f32 1.0, %v1781
    %v1783 = vtanh.pop %v1774
    %v1784 = vmul.f32 %v1782, %v1339
    %1786 = vrot.lane.b32.xlu0 %v1783, 64
    %v1787 = vpop.permute.xlu0 %1786
    %v1789 = vmul.f32 %v1782, %v1787
    %1791 = vrot.lane.b32.xlu0 %v1789, 32
    %v1792 = vpop.permute.xlu0 %1791
    %v1794 = vadd.f32 %v1784, %v1792
    %v1795 = vtanh.pop %v1794
    %1797 = vrot.lane.b32.xlu0 %v1795, 64
    %v1798 = vpop.permute.xlu0 %1797
    %v1800 = vmul.f32 %v1782, %v1798
    %v1801 = vsel %vm1678, 1, 0
    %v1802 = vlaneseq
    %v1803 = vshrl.u32 %v1802, 7
    %v1804 = vsub.s32 0, %v1803
    %v1805 = vrot.slane %v1801, %v1804
    %vm1806 = vcmp.eq.s32.totalorder %v1805, 1
    %v1807 = vsel %vm1806, %v1800, %v1338
    %v1808 = vsel %vm1806, %v1794, %v1339
    %v1809 = vsel %vm1806, %v1800, 0.0
    %v1811 = vcombine.high %v1809, %v1809
    %v1813 = vunpack.c.l.s4 1966171168
    %v1814 = vunpack.c.0.s8 %v1813
    %v1815 = vlaneseq
    %v1816 = vshrl.u32 %v1815, 7
    %v1817 = vsub.s32 %v1814, %v1816
    %v1818 = vrot.slane %v1809, %v1817
    %v1820 = vunpack.c.l.s4 1966171168
    %v1821 = vunpack.c.0.s8 %v1820
    %v1822 = vlaneseq
    %v1823 = vshrl.u32 %v1822, 7
    %v1824 = vsub.s32 %v1821, %v1823
    %v1825 = vrot.slane %v1811, %v1824
    %v1826 = vcombine.high %v1818, %v1818
    %v1827 = vcombine.high %v1825, %v1825
    %v1829 = vunpack.c.l.s4 1966171168
    %v1830 = vunpack.c.0.s8 %v1829
    %v1831 = vlaneseq
    %v1832 = vshrl.u32 %v1831, 7
    %v1833 = vsub.s32 %v1830, %v1832
    %v1834 = vrot.slane %v1818, %v1833
    %v1836 = vunpack.c.l.s4 1966171168
    %v1837 = vunpack.c.0.s8 %v1836
    %v1838 = vlaneseq
    %v1839 = vshrl.u32 %v1838, 7
    %v1840 = vsub.s32 %v1837, %v1839
    %v1841 = vrot.slane %v1825, %v1840
    %v1843 = vunpack.c.l.s4 1966171168
    %v1844 = vunpack.c.0.s8 %v1843
    %v1845 = vlaneseq
    %v1846 = vshrl.u32 %v1845, 7
    %v1847 = vsub.s32 %v1844, %v1846
    %v1848 = vrot.slane %v1826, %v1847
    %v1850 = vunpack.c.l.s4 1966171168
    %v1851 = vunpack.c.0.s8 %v1850
    %v1852 = vlaneseq
    %v1853 = vshrl.u32 %v1852, 7
    %v1854 = vsub.s32 %v1851, %v1853
    %v1855 = vrot.slane %v1827, %v1854
    %v1856 = vcombine.high %v1834, %v1834
    %v1857 = vcombine.high %v1841, %v1841
    %v1858 = vcombine.high %v1848, %v1848
    %v1859 = vcombine.high %v1855, %v1855
    %v1860 = vlaneseq
    %v1861 = vshrl.u32 %v1860, 7
    %v1862 = vsub.s32 0, %v1861
    %v1863 = vrot.slane %v1834, %v1862
    %v1864 = vlaneseq
    %v1865 = vshrl.u32 %v1864, 7
    %v1866 = vsub.s32 0, %v1865
    %v1867 = vrot.slane %v1848, %v1866
    %v1868 = vlaneseq
    %v1869 = vshrl.u32 %v1868, 7
    %v1870 = vsub.s32 0, %v1869
    %v1871 = vrot.slane %v1856, %v1870
    %v1872 = vlaneseq
    %v1873 = vshrl.u32 %v1872, 7
    %v1874 = vsub.s32 0, %v1873
    %v1875 = vrot.slane %v1858, %v1874
    %v1876 = vlaneseq
    %v1877 = vshrl.u32 %v1876, 7
    %v1878 = vsub.s32 0, %v1877
    %v1879 = vrot.slane %v1841, %v1878
    %v1880 = vlaneseq
    %v1881 = vshrl.u32 %v1880, 7
    %v1882 = vsub.s32 0, %v1881
    %v1883 = vrot.slane %v1855, %v1882
    %v1884 = vlaneseq
    %v1885 = vshrl.u32 %v1884, 7
    %v1886 = vsub.s32 0, %v1885
    %v1887 = vrot.slane %v1857, %v1886
    %v1888 = vlaneseq
    %v1889 = vshrl.u32 %v1888, 7
    %v1890 = vsub.s32 0, %v1889
    %v1891 = vrot.slane %v1859, %v1890
    %1892 = vrot.lane.b32.xlu0 %v1863, 32
    %v1893 = vpop.permute.xlu0 %1892
    %1894 = vrot.lane.b32.xlu0 %v1867, 32
    %v1895 = vpop.permute.xlu0 %1894
    %1896 = vrot.lane.b32.xlu0 %v1871, 32
    %v1897 = vpop.permute.xlu0 %1896
    %1898 = vrot.lane.b32.xlu0 %v1875, 32
    %v1899 = vpop.permute.xlu0 %1898
    %1900 = vrot.lane.b32.xlu0 %v1879, 32
    %v1901 = vpop.permute.xlu0 %1900
    %1902 = vrot.lane.b32.xlu0 %v1883, 32
    %v1903 = vpop.permute.xlu0 %1902
    %1904 = vrot.lane.b32.xlu0 %v1887, 32
    %v1905 = vpop.permute.xlu0 %1904
    %1906 = vrot.lane.b32.xlu0 %v1891, 32
    %v1907 = vpop.permute.xlu0 %1906
    %1916 = vst.msk [vmem:[#allocation2 + $0x3] sm:$0x1] %vm509, %v1893
    %1917 = vst.msk [vmem:[#allocation2 + $0xb] sm:$0x1] %vm509, %v1895
    %1918 = vst.msk [vmem:[#allocation2 + $0x13] sm:$0x1] %vm509, %v1897
    %1919 = vst.msk [vmem:[#allocation2 + $0x1b] sm:$0x1] %vm509, %v1899
    %1920 = vst.msk [vmem:[#allocation2 + $0x23] sm:$0x1] %vm509, %v1901
    %1921 = vst.msk [vmem:[#allocation2 + $0x2b] sm:$0x1] %vm509, %v1903
    %1922 = vst.msk [vmem:[#allocation2 + $0x33] sm:$0x1] %vm509, %v1905
    %1923 = vst.msk [vmem:[#allocation2 + $0x3b] sm:$0x1] %vm509, %v1907
    %vm1924 = vcmp.eq.s32.totalorder %v59, 3
    %v1925 = vsel %vm1924, %v1568, %v1456
    %v1926 = vsub.f32 1.0, %v1568
    %v1927 = vmul.f32 %v1677, %v1926
    %v1928 = vmul.f32 %v1671, %v1926
    %s1929 = scalar_lea.vmem %s0, 32
    %v1930 = vld [vmem:[%s1929] sm:$0xff]
    %1932 = vrot.lane.b32.xlu0 %v1927, 64
    %v1933 = vpop.permute.xlu0 %1932
    %v1935 = vsel %vm61, %v1930, %v1933
    %v1936 = vld [vmem:[%s4] sm:$0xff]
    %v1937 = vld [vmem:[%s4 + $0x8] sm:$0xff]
    %v1938 = vld [vmem:[%s4 + $0x10] sm:$0xff]
    %v1939 = vld [vmem:[%s4 + $0x18] sm:$0xff]
    %v1940 = vld [vmem:[%s4 + $0x20] sm:$0xff]
    %v1941 = vld [vmem:[%s4 + $0x28] sm:$0xff]
    %v1942 = vld [vmem:[%s4 + $0x30] sm:$0xff]
    %v1943 = vld [vmem:[%s4 + $0x38] sm:$0xff]
    %v1944 = vld [vmem:[%s5] sm:$0x1]
    %v1946 = vlaneseq
    %v1947 = vshrl.u32 %v1946, 7
    %v1948 = vsub.s32 0, %v1947
    %v1949 = vrot.slane %v1944, %v1948
    %v1952 = vsel %vm78, %v1935, 0
    %1954 = vmatprep.subr.mxu0 0.0
    %1955 = vmatpush1.msra.mxu0 %v1936
    %1956 = vmatprep.subr.mxu0 0.0
    %1957 = vmatpush1.msra.mxu0 %v1937
    %1958 = vmatprep.subr.mxu0 0.0
    %1959 = vmatpush1.msra.mxu0 %v1938
    %1960 = vmatprep.subr.mxu0 0.0
    %1961 = vmatpush1.msra.mxu0 %v1939
    %1962 = vmatprep.subr.mxu0 0.0
    %1963 = vmatpush1.msra.mxu0 %v1940
    %1964 = vmatprep.subr.mxu0 0.0
    %1965 = vmatpush1.msra.mxu0 %v1941
    %1966 = vmatprep.subr.mxu0 0.0
    %1967 = vmatpush1.msra.mxu0 %v1942
    %1968 = vmatprep.subr.mxu0 0.0
    %1969 = vmatpush1.msra.mxu0 %v1943
    %1970 = vmatprep.subr.mxu0 0.0
    %1971 = vmatpush1.msra.mxu0 0.0
    %1972 = vmatprep.subr.mxu0 0.0
    %1973 = vmatpush1.msra.mxu0 0.0
    %1974 = vmatprep.subr.mxu0 0.0
    %1975 = vmatpush1.msra.mxu0 0.0
    %1976 = vmatprep.subr.mxu0 0.0
    %1977 = vmatpush1.msra.mxu0 0.0
    %1978 = vmatprep.subr.mxu0 0.0
    %1979 = vmatpush1.msra.mxu0 0.0
    %1980 = vmatprep.subr.mxu0 0.0
    %1981 = vmatpush1.msra.mxu0 0.0
    %1982 = vmatprep.subr.mxu0 0.0
    %1983 = vmatpush1.msra.mxu0 0.0
    %1984 = vmatprep.subr.mxu0 0.0
    %1985 = vmatpush1.msra.mxu0 0.0
    %1986 = vmatprep.subr.mxu0 0.0
    %1987 = vmatpush1.msra.mxu0 0.0
    %1988 = vmatprep.subr.mxu0 0.0
    %1989 = vmatpush1.msra.mxu0 0.0
    %1990 = vmatprep.subr.mxu0 0.0
    %1991 = vmatpush1.msra.mxu0 0.0
    %1992 = vmatprep.subr.mxu0 0.0
    %1993 = vmatpush1.msra.mxu0 0.0
    %1994 = vmatprep.subr.mxu0 0.0
    %1995 = vmatpush1.msra.mxu0 0.0
    %1996 = vmatprep.subr.mxu0 0.0
    %1997 = vmatpush1.msra.mxu0 0.0
    %1998 = vmatprep.subr.mxu0 0.0
    %1999 = vmatpush1.msra.mxu0 0.0
    %2000 = vmatprep.subr.mxu0 0.0
    %2001 = vmatpush1.msra.mxu0 0.0
    %2002 = vmatprep.subr.mxu0 0.0
    %2003 = vmatpush1.msra.mxu0 0.0
    %2004 = vmatprep.subr.mxu0 0.0
    %2005 = vmatpush1.msra.mxu0 0.0
    %2006 = vmatprep.subr.mxu0 0.0
    %2007 = vmatpush1.msra.mxu0 0.0
    %2008 = vmatprep.subr.mxu0 0.0
    %2009 = vmatpush1.msra.mxu0 0.0
    %2010 = vmatprep.subr.mxu0 0.0
    %2011 = vmatpush1.msra.mxu0 0.0
    %2012 = vmatprep.subr.mxu0 0.0
    %2013 = vmatpush1.msra.mxu0 0.0
    %2014 = vmatprep.subr.mxu0 0.0
    %2015 = vmatpush1.msra.mxu0 0.0
    %2016 = vmatprep.subr.mxu0 0.0
    %2017 = vmatpush1.msra.mxu0 0.0
    %2018 = vmatprep.mubr.f32.mxu0 0.0
    %2019 = vmatmul.mubr.f32.gmra.mrb[0].mxu0 %v1952
    %v2020 = vpop.f32.mrb[0].mxu0
    %v2021 = vadd.f32 %v1949, %v2020
    %v2022 = vpop.f32.mrb[0].mxu0
    %2023 = vdwg.mxu0
    %v2024 = vld [vmem:[%s6] sm:$0x1]
    %v2026 = vlaneseq
    %v2027 = vshrl.u32 %v2026, 7
    %v2028 = vsub.s32 0, %v2027
    %v2029 = vrot.slane %v2024, %v2028
    %v2031 = vmul.f32 %v2021, %v2029
    %v2032 = vsel %vm160, %v2031, 0.0
    %2033 = vadd.xlane.f32.xlu0 %v2032
    %v2034 = vpop.xlane.xlu0 %2033
    %vm2035 = vcmp.gt.f32.partialorder %v2034, 0.0
    %v2036 = vsel %vm2035, 1, 0
    %v2037 = vcvt.s32.f32 %v2036
    %v2038 = vld [vmem:[%s2] sm:$0xff]
    %v2039 = vld [vmem:[%s2 + $0x8] sm:$0xff]
    %v2040 = vld [vmem:[%s2 + $0x10] sm:$0xff]
    %v2041 = vld [vmem:[%s2 + $0x18] sm:$0xff]
    %v2042 = vld [vmem:[%s2 + $0x20] sm:$0xff]
    %v2043 = vld [vmem:[%s2 + $0x28] sm:$0xff]
    %v2044 = vld [vmem:[%s2 + $0x30] sm:$0xff]
    %v2045 = vld [vmem:[%s2 + $0x38] sm:$0xff]
    %v2046 = vld [vmem:[%s3] sm:$0x1]
    %v2048 = vlaneseq
    %v2049 = vshrl.u32 %v2048, 7
    %v2050 = vsub.s32 0, %v2049
    %v2051 = vrot.slane %v2046, %v2050
    %2053 = vmatprep.subr.mxu0 0.0
    %2054 = vmatpush1.msra.mxu0 %v2038
    %2055 = vmatprep.subr.mxu0 0.0
    %2056 = vmatpush1.msra.mxu0 %v2039
    %2057 = vmatprep.subr.mxu0 0.0
    %2058 = vmatpush1.msra.mxu0 %v2040
    %2059 = vmatprep.subr.mxu0 0.0
    %2060 = vmatpush1.msra.mxu0 %v2041
    %2061 = vmatprep.subr.mxu0 0.0
    %2062 = vmatpush1.msra.mxu0 %v2042
    %2063 = vmatprep.subr.mxu0 0.0
    %2064 = vmatpush1.msra.mxu0 %v2043
    %2065 = vmatprep.subr.mxu0 0.0
    %2066 = vmatpush1.msra.mxu0 %v2044
    %2067 = vmatprep.subr.mxu0 0.0
    %2068 = vmatpush1.msra.mxu0 %v2045
    %2069 = vmatprep.subr.mxu0 0.0
    %2070 = vmatpush1.msra.mxu0 0.0
    %2071 = vmatprep.subr.mxu0 0.0
    %2072 = vmatpush1.msra.mxu0 0.0
    %2073 = vmatprep.subr.mxu0 0.0
    %2074 = vmatpush1.msra.mxu0 0.0
    %2075 = vmatprep.subr.mxu0 0.0
    %2076 = vmatpush1.msra.mxu0 0.0
    %2077 = vmatprep.subr.mxu0 0.0
    %2078 = vmatpush1.msra.mxu0 0.0
    %2079 = vmatprep.subr.mxu0 0.0
    %2080 = vmatpush1.msra.mxu0 0.0
    %2081 = vmatprep.subr.mxu0 0.0
    %2082 = vmatpush1.msra.mxu0 0.0
    %2083 = vmatprep.subr.mxu0 0.0
    %2084 = vmatpush1.msra.mxu0 0.0
    %2085 = vmatprep.subr.mxu0 0.0
    %2086 = vmatpush1.msra.mxu0 0.0
    %2087 = vmatprep.subr.mxu0 0.0
    %2088 = vmatpush1.msra.mxu0 0.0
    %2089 = vmatprep.subr.mxu0 0.0
    %2090 = vmatpush1.msra.mxu0 0.0
    %2091 = vmatprep.subr.mxu0 0.0
    %2092 = vmatpush1.msra.mxu0 0.0
    %2093 = vmatprep.subr.mxu0 0.0
    %2094 = vmatpush1.msra.mxu0 0.0
    %2095 = vmatprep.subr.mxu0 0.0
    %2096 = vmatpush1.msra.mxu0 0.0
    %2097 = vmatprep.subr.mxu0 0.0
    %2098 = vmatpush1.msra.mxu0 0.0
    %2099 = vmatprep.subr.mxu0 0.0
    %2100 = vmatpush1.msra.mxu0 0.0
    %2101 = vmatprep.subr.mxu0 0.0
    %2102 = vmatpush1.msra.mxu0 0.0
    %2103 = vmatprep.subr.mxu0 0.0
    %2104 = vmatpush1.msra.mxu0 0.0
    %2105 = vmatprep.subr.mxu0 0.0
    %2106 = vmatpush1.msra.mxu0 0.0
    %2107 = vmatprep.subr.mxu0 0.0
    %2108 = vmatpush1.msra.mxu0 0.0
    %2109 = vmatprep.subr.mxu0 0.0
    %2110 = vmatpush1.msra.mxu0 0.0
    %2111 = vmatprep.subr.mxu0 0.0
    %2112 = vmatpush1.msra.mxu0 0.0
    %2113 = vmatprep.subr.mxu0 0.0
    %2114 = vmatpush1.msra.mxu0 0.0
    %2115 = vmatprep.subr.mxu0 0.0
    %2116 = vmatpush1.msra.mxu0 0.0
    %2117 = vmatprep.mubr.f32.mxu0 0.0
    %2118 = vmatmul.mubr.f32.gmra.mrb[0].mxu0 %v1952
    %v2119 = vpop.f32.mrb[0].mxu0
    %v2120 = vadd.f32 %v2051, %v2119
    %v2121 = vpop.f32.mrb[0].mxu0
    %2122 = vdwg.mxu0
    %v2123 = vxor.u32 %v2120, 2147483648
    %v2124 = vmul.f32 %v2123, 1.442695
    %v2125 = vpow.pop %v2124
    %v2126 = vadd.f32 %v2125, 1.0
    %v2127 = vrcp.pop %v2126
    %v2128 = vmul.f32 1.0, %v2127
    %v2129 = vtanh.pop %v2120
    %v2130 = vmul.f32 %v2128, %v1928
    %2132 = vrot.lane.b32.xlu0 %v2129, 64
    %v2133 = vpop.permute.xlu0 %2132
    %v2135 = vmul.f32 %v2128, %v2133
    %2137 = vrot.lane.b32.xlu0 %v2135, 32
    %v2138 = vpop.permute.xlu0 %2137
    %v2140 = vadd.f32 %v2130, %v2138
    %v2141 = vtanh.pop %v2140
    %2143 = vrot.lane.b32.xlu0 %v2141, 64
    %v2144 = vpop.permute.xlu0 %2143
    %v2146 = vmul.f32 %v2128, %v2144
    %vm2147 = vcmp.gt.f32.partialorder %v2037, 0.5
    %v2148 = vmul.f32 %v2146, %v2037
    %2150 = vrot.lane.b32.xlu0 %v2148, 32
    %v2151 = vpop.permute.xlu0 %2150
    %2154 = vrot.lane.b32.xlu0 %v1807, 64
    %v2155 = vpop.permute.xlu0 %2154
    %v2157 = vsel %vm61, %v2151, %v2155
    %v2158 = vld [vmem:[%s7] sm:$0xff]
    %v2159 = vld [vmem:[%s7 + $0x8] sm:$0xff]
    %v2160 = vld [vmem:[%s7 + $0x10] sm:$0xff]
    %v2161 = vld [vmem:[%s7 + $0x18] sm:$0xff]
    %v2162 = vld [vmem:[%s7 + $0x20] sm:$0xff]
    %v2163 = vld [vmem:[%s7 + $0x28] sm:$0xff]
    %v2164 = vld [vmem:[%s7 + $0x30] sm:$0xff]
    %v2165 = vld [vmem:[%s7 + $0x38] sm:$0xff]
    %v2166 = vld [vmem:[%s8] sm:$0x1]
    %v2168 = vlaneseq
    %v2169 = vshrl.u32 %v2168, 7
    %v2170 = vsub.s32 0, %v2169
    %v2171 = vrot.slane %v2166, %v2170
    %v2174 = vsel %vm78, %v2157, 0
    %2176 = vmatprep.subr.mxu0 0.0
    %2177 = vmatpush1.msra.mxu0 %v2158
    %2178 = vmatprep.subr.mxu0 0.0
    %2179 = vmatpush1.msra.mxu0 %v2159
    %2180 = vmatprep.subr.mxu0 0.0
    %2181 = vmatpush1.msra.mxu0 %v2160
    %2182 = vmatprep.subr.mxu0 0.0
    %2183 = vmatpush1.msra.mxu0 %v2161
    %2184 = vmatprep.subr.mxu0 0.0
    %2185 = vmatpush1.msra.mxu0 %v2162
    %2186 = vmatprep.subr.mxu0 0.0
    %2187 = vmatpush1.msra.mxu0 %v2163
    %2188 = vmatprep.subr.mxu0 0.0
    %2189 = vmatpush1.msra.mxu0 %v2164
    %2190 = vmatprep.subr.mxu0 0.0
    %2191 = vmatpush1.msra.mxu0 %v2165
    %2192 = vmatprep.subr.mxu0 0.0
    %2193 = vmatpush1.msra.mxu0 0.0
    %2194 = vmatprep.subr.mxu0 0.0
    %2195 = vmatpush1.msra.mxu0 0.0
    %2196 = vmatprep.subr.mxu0 0.0
    %2197 = vmatpush1.msra.mxu0 0.0
    %2198 = vmatprep.subr.mxu0 0.0
    %2199 = vmatpush1.msra.mxu0 0.0
    %2200 = vmatprep.subr.mxu0 0.0
    %2201 = vmatpush1.msra.mxu0 0.0
    %2202 = vmatprep.subr.mxu0 0.0
    %2203 = vmatpush1.msra.mxu0 0.0
    %2204 = vmatprep.subr.mxu0 0.0
    %2205 = vmatpush1.msra.mxu0 0.0
    %2206 = vmatprep.subr.mxu0 0.0
    %2207 = vmatpush1.msra.mxu0 0.0
    %2208 = vmatprep.subr.mxu0 0.0
    %2209 = vmatpush1.msra.mxu0 0.0
    %2210 = vmatprep.subr.mxu0 0.0
    %2211 = vmatpush1.msra.mxu0 0.0
    %2212 = vmatprep.subr.mxu0 0.0
    %2213 = vmatpush1.msra.mxu0 0.0
    %2214 = vmatprep.subr.mxu0 0.0
    %2215 = vmatpush1.msra.mxu0 0.0
    %2216 = vmatprep.subr.mxu0 0.0
    %2217 = vmatpush1.msra.mxu0 0.0
    %2218 = vmatprep.subr.mxu0 0.0
    %2219 = vmatpush1.msra.mxu0 0.0
    %2220 = vmatprep.subr.mxu0 0.0
    %2221 = vmatpush1.msra.mxu0 0.0
    %2222 = vmatprep.subr.mxu0 0.0
    %2223 = vmatpush1.msra.mxu0 0.0
    %2224 = vmatprep.subr.mxu0 0.0
    %2225 = vmatpush1.msra.mxu0 0.0
    %2226 = vmatprep.subr.mxu0 0.0
    %2227 = vmatpush1.msra.mxu0 0.0
    %2228 = vmatprep.subr.mxu0 0.0
    %2229 = vmatpush1.msra.mxu0 0.0
    %2230 = vmatprep.subr.mxu0 0.0
    %2231 = vmatpush1.msra.mxu0 0.0
    %2232 = vmatprep.subr.mxu0 0.0
    %2233 = vmatpush1.msra.mxu0 0.0
    %2234 = vmatprep.subr.mxu0 0.0
    %2235 = vmatpush1.msra.mxu0 0.0
    %2236 = vmatprep.subr.mxu0 0.0
    %2237 = vmatpush1.msra.mxu0 0.0
    %2238 = vmatprep.subr.mxu0 0.0
    %2239 = vmatpush1.msra.mxu0 0.0
    %2240 = vmatprep.mubr.f32.mxu0 0.0
    %2241 = vmatmul.mubr.f32.gmra.mrb[0].mxu0 %v2174
    %v2242 = vpop.f32.mrb[0].mxu0
    %v2243 = vadd.f32 %v2171, %v2242
    %v2244 = vpop.f32.mrb[0].mxu0
    %2245 = vdwg.mxu0
    %v2246 = vxor.u32 %v2243, 2147483648
    %v2247 = vmul.f32 %v2246, 1.442695
    %v2248 = vpow.pop %v2247
    %v2249 = vadd.f32 %v2248, 1.0
    %v2250 = vrcp.pop %v2249
    %v2251 = vmul.f32 1.0, %v2250
    %v2252 = vtanh.pop %v2243
    %v2253 = vmul.f32 %v2251, %v1808
    %2255 = vrot.lane.b32.xlu0 %v2252, 64
    %v2256 = vpop.permute.xlu0 %2255
    %v2258 = vmul.f32 %v2251, %v2256
    %2260 = vrot.lane.b32.xlu0 %v2258, 32
    %v2261 = vpop.permute.xlu0 %2260
    %v2263 = vadd.f32 %v2253, %v2261
    %v2264 = vtanh.pop %v2263
    %2266 = vrot.lane.b32.xlu0 %v2264, 64
    %v2267 = vpop.permute.xlu0 %2266
    %v2269 = vmul.f32 %v2251, %v2267
    %v2270 = vsel %vm2147, 1, 0
    %v2271 = vlaneseq
    %v2272 = vshrl.u32 %v2271, 7
    %v2273 = vsub.s32 0, %v2272
    %v2274 = vrot.slane %v2270, %v2273
    %vm2275 = vcmp.eq.s32.totalorder %v2274, 1
    %v2276 = vsel %vm2275, %v2269, %v1807
    %v2277 = vsel %vm2275, %v2263, %v1808
    %v2278 = vsel %vm2275, %v2269, 0.0
    %v2280 = vcombine.high %v2278, %v2278
    %v2282 = vunpack.c.l.s4 1966171168
    %v2283 = vunpack.c.0.s8 %v2282
    %v2284 = vlaneseq
    %v2285 = vshrl.u32 %v2284, 7
    %v2286 = vsub.s32 %v2283, %v2285
    %v2287 = vrot.slane %v2278, %v2286
    %v2289 = vunpack.c.l.s4 1966171168
    %v2290 = vunpack.c.0.s8 %v2289
    %v2291 = vlaneseq
    %v2292 = vshrl.u32 %v2291, 7
    %v2293 = vsub.s32 %v2290, %v2292
    %v2294 = vrot.slane %v2280, %v2293
    %v2295 = vcombine.high %v2287, %v2287
    %v2296 = vcombine.high %v2294, %v2294
    %v2298 = vunpack.c.l.s4 1966171168
    %v2299 = vunpack.c.0.s8 %v2298
    %v2300 = vlaneseq
    %v2301 = vshrl.u32 %v2300, 7
    %v2302 = vsub.s32 %v2299, %v2301
    %v2303 = vrot.slane %v2287, %v2302
    %v2305 = vunpack.c.l.s4 1966171168
    %v2306 = vunpack.c.0.s8 %v2305
    %v2307 = vlaneseq
    %v2308 = vshrl.u32 %v2307, 7
    %v2309 = vsub.s32 %v2306, %v2308
    %v2310 = vrot.slane %v2294, %v2309
    %v2312 = vunpack.c.l.s4 1966171168
    %v2313 = vunpack.c.0.s8 %v2312
    %v2314 = vlaneseq
    %v2315 = vshrl.u32 %v2314, 7
    %v2316 = vsub.s32 %v2313, %v2315
    %v2317 = vrot.slane %v2295, %v2316
    %v2319 = vunpack.c.l.s4 1966171168
    %v2320 = vunpack.c.0.s8 %v2319
    %v2321 = vlaneseq
    %v2322 = vshrl.u32 %v2321, 7
    %v2323 = vsub.s32 %v2320, %v2322
    %v2324 = vrot.slane %v2296, %v2323
    %v2325 = vcombine.high %v2303, %v2303
    %v2326 = vcombine.high %v2310, %v2310
    %v2327 = vcombine.high %v2317, %v2317
    %v2328 = vcombine.high %v2324, %v2324
    %v2329 = vlaneseq
    %v2330 = vshrl.u32 %v2329, 7
    %v2331 = vsub.s32 0, %v2330
    %v2332 = vrot.slane %v2303, %v2331
    %v2333 = vlaneseq
    %v2334 = vshrl.u32 %v2333, 7
    %v2335 = vsub.s32 0, %v2334
    %v2336 = vrot.slane %v2317, %v2335
    %v2337 = vlaneseq
    %v2338 = vshrl.u32 %v2337, 7
    %v2339 = vsub.s32 0, %v2338
    %v2340 = vrot.slane %v2325, %v2339
    %v2341 = vlaneseq
    %v2342 = vshrl.u32 %v2341, 7
    %v2343 = vsub.s32 0, %v2342
    %v2344 = vrot.slane %v2327, %v2343
    %v2345 = vlaneseq
    %v2346 = vshrl.u32 %v2345, 7
    %v2347 = vsub.s32 0, %v2346
    %v2348 = vrot.slane %v2310, %v2347
    %v2349 = vlaneseq
    %v2350 = vshrl.u32 %v2349, 7
    %v2351 = vsub.s32 0, %v2350
    %v2352 = vrot.slane %v2324, %v2351
    %v2353 = vlaneseq
    %v2354 = vshrl.u32 %v2353, 7
    %v2355 = vsub.s32 0, %v2354
    %v2356 = vrot.slane %v2326, %v2355
    %v2357 = vlaneseq
    %v2358 = vshrl.u32 %v2357, 7
    %v2359 = vsub.s32 0, %v2358
    %v2360 = vrot.slane %v2328, %v2359
    %2361 = vrot.lane.b32.xlu0 %v2332, 32
    %v2362 = vpop.permute.xlu0 %2361
    %2363 = vrot.lane.b32.xlu0 %v2336, 32
    %v2364 = vpop.permute.xlu0 %2363
    %2365 = vrot.lane.b32.xlu0 %v2340, 32
    %v2366 = vpop.permute.xlu0 %2365
    %2367 = vrot.lane.b32.xlu0 %v2344, 32
    %v2368 = vpop.permute.xlu0 %2367
    %2369 = vrot.lane.b32.xlu0 %v2348, 32
    %v2370 = vpop.permute.xlu0 %2369
    %2371 = vrot.lane.b32.xlu0 %v2352, 32
    %v2372 = vpop.permute.xlu0 %2371
    %2373 = vrot.lane.b32.xlu0 %v2356, 32
    %v2374 = vpop.permute.xlu0 %2373
    %2375 = vrot.lane.b32.xlu0 %v2360, 32
    %v2376 = vpop.permute.xlu0 %2375
    %2385 = vst.msk [vmem:[#allocation2 + $0x4] sm:$0x1] %vm509, %v2362
    %2386 = vst.msk [vmem:[#allocation2 + $0xc] sm:$0x1] %vm509, %v2364
    %2387 = vst.msk [vmem:[#allocation2 + $0x14] sm:$0x1] %vm509, %v2366
    %2388 = vst.msk [vmem:[#allocation2 + $0x1c] sm:$0x1] %vm509, %v2368
    %2389 = vst.msk [vmem:[#allocation2 + $0x24] sm:$0x1] %vm509, %v2370
    %2390 = vst.msk [vmem:[#allocation2 + $0x2c] sm:$0x1] %vm509, %v2372
    %2391 = vst.msk [vmem:[#allocation2 + $0x34] sm:$0x1] %vm509, %v2374
    %2392 = vst.msk [vmem:[#allocation2 + $0x3c] sm:$0x1] %vm509, %v2376
    %vm2393 = vcmp.eq.s32.totalorder %v59, 4
    %v2394 = vsel %vm2393, %v2037, %v1925
    %v2395 = vsub.f32 1.0, %v2037
    %v2396 = vmul.f32 %v2146, %v2395
    %v2397 = vmul.f32 %v2140, %v2395
    %s2398 = scalar_lea.vmem %s0, 40
    %v2399 = vld [vmem:[%s2398] sm:$0xff]
    %2401 = vrot.lane.b32.xlu0 %v2396, 64
    %v2402 = vpop.permute.xlu0 %2401
    %v2404 = vsel %vm61, %v2399, %v2402
    %v2405 = vld [vmem:[%s4] sm:$0xff]
    %v2406 = vld [vmem:[%s4 + $0x8] sm:$0xff]
    %v2407 = vld [vmem:[%s4 + $0x10] sm:$0xff]
    %v2408 = vld [vmem:[%s4 + $0x18] sm:$0xff]
    %v2409 = vld [vmem:[%s4 + $0x20] sm:$0xff]
    %v2410 = vld [vmem:[%s4 + $0x28] sm:$0xff]
    %v2411 = vld [vmem:[%s4 + $0x30] sm:$0xff]
    %v2412 = vld [vmem:[%s4 + $0x38] sm:$0xff]
    %v2413 = vld [vmem:[%s5] sm:$0x1]
    %v2415 = vlaneseq
    %v2416 = vshrl.u32 %v2415, 7
    %v2417 = vsub.s32 0, %v2416
    %v2418 = vrot.slane %v2413, %v2417
    %v2421 = vsel %vm78, %v2404, 0
    %2423 = vmatprep.subr.mxu0 0.0
    %2424 = vmatpush1.msra.mxu0 %v2405
    %2425 = vmatprep.subr.mxu0 0.0
    %2426 = vmatpush1.msra.mxu0 %v2406
    %2427 = vmatprep.subr.mxu0 0.0
    %2428 = vmatpush1.msra.mxu0 %v2407
    %2429 = vmatprep.subr.mxu0 0.0
    %2430 = vmatpush1.msra.mxu0 %v2408
    %2431 = vmatprep.subr.mxu0 0.0
    %2432 = vmatpush1.msra.mxu0 %v2409
    %2433 = vmatprep.subr.mxu0 0.0
    %2434 = vmatpush1.msra.mxu0 %v2410
    %2435 = vmatprep.subr.mxu0 0.0
    %2436 = vmatpush1.msra.mxu0 %v2411
    %2437 = vmatprep.subr.mxu0 0.0
    %2438 = vmatpush1.msra.mxu0 %v2412
    %2439 = vmatprep.subr.mxu0 0.0
    %2440 = vmatpush1.msra.mxu0 0.0
    %2441 = vmatprep.subr.mxu0 0.0
    %2442 = vmatpush1.msra.mxu0 0.0
    %2443 = vmatprep.subr.mxu0 0.0
    %2444 = vmatpush1.msra.mxu0 0.0
    %2445 = vmatprep.subr.mxu0 0.0
    %2446 = vmatpush1.msra.mxu0 0.0
    %2447 = vmatprep.subr.mxu0 0.0
    %2448 = vmatpush1.msra.mxu0 0.0
    %2449 = vmatprep.subr.mxu0 0.0
    %2450 = vmatpush1.msra.mxu0 0.0
    %2451 = vmatprep.subr.mxu0 0.0
    %2452 = vmatpush1.msra.mxu0 0.0
    %2453 = vmatprep.subr.mxu0 0.0
    %2454 = vmatpush1.msra.mxu0 0.0
    %2455 = vmatprep.subr.mxu0 0.0
    %2456 = vmatpush1.msra.mxu0 0.0
    %2457 = vmatprep.subr.mxu0 0.0
    %2458 = vmatpush1.msra.mxu0 0.0
    %2459 = vmatprep.subr.mxu0 0.0
    %2460 = vmatpush1.msra.mxu0 0.0
    %2461 = vmatprep.subr.mxu0 0.0
    %2462 = vmatpush1.msra.mxu0 0.0
    %2463 = vmatprep.subr.mxu0 0.0
    %2464 = vmatpush1.msra.mxu0 0.0
    %2465 = vmatprep.subr.mxu0 0.0
    %2466 = vmatpush1.msra.mxu0 0.0
    %2467 = vmatprep.subr.mxu0 0.0
    %2468 = vmatpush1.msra.mxu0 0.0
    %2469 = vmatprep.subr.mxu0 0.0
    %2470 = vmatpush1.msra.mxu0 0.0
    %2471 = vmatprep.subr.mxu0 0.0
    %2472 = vmatpush1.msra.mxu0 0.0
    %2473 = vmatprep.subr.mxu0 0.0
    %2474 = vmatpush1.msra.mxu0 0.0
    %2475 = vmatprep.subr.mxu0 0.0
    %2476 = vmatpush1.msra.mxu0 0.0
    %2477 = vmatprep.subr.mxu0 0.0
    %2478 = vmatpush1.msra.mxu0 0.0
    %2479 = vmatprep.subr.mxu0 0.0
    %2480 = vmatpush1.msra.mxu0 0.0
    %2481 = vmatprep.subr.mxu0 0.0
    %2482 = vmatpush1.msra.mxu0 0.0
    %2483 = vmatprep.subr.mxu0 0.0
    %2484 = vmatpush1.msra.mxu0 0.0
    %2485 = vmatprep.subr.mxu0 0.0
    %2486 = vmatpush1.msra.mxu0 0.0
    %2487 = vmatprep.mubr.f32.mxu0 0.0
    %2488 = vmatmul.mubr.f32.gmra.mrb[0].mxu0 %v2421
    %v2489 = vpop.f32.mrb[0].mxu0
    %v2490 = vadd.f32 %v2418, %v2489
    %v2491 = vpop.f32.mrb[0].mxu0
    %2492 = vdwg.mxu0
    %v2493 = vld [vmem:[%s6] sm:$0x1]
    %v2495 = vlaneseq
    %v2496 = vshrl.u32 %v2495, 7
    %v2497 = vsub.s32 0, %v2496
    %v2498 = vrot.slane %v2493, %v2497
    %v2500 = vmul.f32 %v2490, %v2498
    %v2501 = vsel %vm160, %v2500, 0.0
    %2502 = vadd.xlane.f32.xlu0 %v2501
    %v2503 = vpop.xlane.xlu0 %2502
    %vm2504 = vcmp.gt.f32.partialorder %v2503, 0.0
    %v2505 = vsel %vm2504, 1, 0
    %v2506 = vcvt.s32.f32 %v2505
    %v2507 = vld [vmem:[%s2] sm:$0xff]
    %v2508 = vld [vmem:[%s2 + $0x8] sm:$0xff]
    %v2509 = vld [vmem:[%s2 + $0x10] sm:$0xff]
    %v2510 = vld [vmem:[%s2 + $0x18] sm:$0xff]
    %v2511 = vld [vmem:[%s2 + $0x20] sm:$0xff]
    %v2512 = vld [vmem:[%s2 + $0x28] sm:$0xff]
    %v2513 = vld [vmem:[%s2 + $0x30] sm:$0xff]
    %v2514 = vld [vmem:[%s2 + $0x38] sm:$0xff]
    %v2515 = vld [vmem:[%s3] sm:$0x1]
    %v2517 = vlaneseq
    %v2518 = vshrl.u32 %v2517, 7
    %v2519 = vsub.s32 0, %v2518
    %v2520 = vrot.slane %v2515, %v2519
    %2522 = vmatprep.subr.mxu0 0.0
    %2523 = vmatpush1.msra.mxu0 %v2507
    %2524 = vmatprep.subr.mxu0 0.0
    %2525 = vmatpush1.msra.mxu0 %v2508
    %2526 = vmatprep.subr.mxu0 0.0
    %2527 = vmatpush1.msra.mxu0 %v2509
    %2528 = vmatprep.subr.mxu0 0.0
    %2529 = vmatpush1.msra.mxu0 %v2510
    %2530 = vmatprep.subr.mxu0 0.0
    %2531 = vmatpush1.msra.mxu0 %v2511
    %2532 = vmatprep.subr.mxu0 0.0
    %2533 = vmatpush1.msra.mxu0 %v2512
    %2534 = vmatprep.subr.mxu0 0.0
    %2535 = vmatpush1.msra.mxu0 %v2513
    %2536 = vmatprep.subr.mxu0 0.0
    %2537 = vmatpush1.msra.mxu0 %v2514
    %2538 = vmatprep.subr.mxu0 0.0
    %2539 = vmatpush1.msra.mxu0 0.0
    %2540 = vmatprep.subr.mxu0 0.0
    %2541 = vmatpush1.msra.mxu0 0.0
    %2542 = vmatprep.subr.mxu0 0.0
    %2543 = vmatpush1.msra.mxu0 0.0
    %2544 = vmatprep.subr.mxu0 0.0
    %2545 = vmatpush1.msra.mxu0 0.0
    %2546 = vmatprep.subr.mxu0 0.0
    %2547 = vmatpush1.msra.mxu0 0.0
    %2548 = vmatprep.subr.mxu0 0.0
    %2549 = vmatpush1.msra.mxu0 0.0
    %2550 = vmatprep.subr.mxu0 0.0
    %2551 = vmatpush1.msra.mxu0 0.0
    %2552 = vmatprep.subr.mxu0 0.0
    %2553 = vmatpush1.msra.mxu0 0.0
    %2554 = vmatprep.subr.mxu0 0.0
    %2555 = vmatpush1.msra.mxu0 0.0
    %2556 = vmatprep.subr.mxu0 0.0
    %2557 = vmatpush1.msra.mxu0 0.0
    %2558 = vmatprep.subr.mxu0 0.0
    %2559 = vmatpush1.msra.mxu0 0.0
    %2560 = vmatprep.subr.mxu0 0.0
    %2561 = vmatpush1.msra.mxu0 0.0
    %2562 = vmatprep.subr.mxu0 0.0
    %2563 = vmatpush1.msra.mxu0 0.0
    %2564 = vmatprep.subr.mxu0 0.0
    %2565 = vmatpush1.msra.mxu0 0.0
    %2566 = vmatprep.subr.mxu0 0.0
    %2567 = vmatpush1.msra.mxu0 0.0
    %2568 = vmatprep.subr.mxu0 0.0
    %2569 = vmatpush1.msra.mxu0 0.0
    %2570 = vmatprep.subr.mxu0 0.0
    %2571 = vmatpush1.msra.mxu0 0.0
    %2572 = vmatprep.subr.mxu0 0.0
    %2573 = vmatpush1.msra.mxu0 0.0
    %2574 = vmatprep.subr.mxu0 0.0
    %2575 = vmatpush1.msra.mxu0 0.0
    %2576 = vmatprep.subr.mxu0 0.0
    %2577 = vmatpush1.msra.mxu0 0.0
    %2578 = vmatprep.subr.mxu0 0.0
    %2579 = vmatpush1.msra.mxu0 0.0
    %2580 = vmatprep.subr.mxu0 0.0
    %2581 = vmatpush1.msra.mxu0 0.0
    %2582 = vmatprep.subr.mxu0 0.0
    %2583 = vmatpush1.msra.mxu0 0.0
    %2584 = vmatprep.subr.mxu0 0.0
    %2585 = vmatpush1.msra.mxu0 0.0
    %2586 = vmatprep.mubr.f32.mxu0 0.0
    %2587 = vmatmul.mubr.f32.gmra.mrb[0].mxu0 %v2421
    %v2588 = vpop.f32.mrb[0].mxu0
    %v2589 = vadd.f32 %v2520, %v2588
    %v2590 = vpop.f32.mrb[0].mxu0
    %2591 = vdwg.mxu0
    %v2592 = vxor.u32 %v2589, 2147483648
    %v2593 = vmul.f32 %v2592, 1.442695
    %v2594 = vpow.pop %v2593
    %v2595 = vadd.f32 %v2594, 1.0
    %v2596 = vrcp.pop %v2595
    %v2597 = vmul.f32 1.0, %v2596
    %v2598 = vtanh.pop %v2589
    %v2599 = vmul.f32 %v2597, %v2397
    %2601 = vrot.lane.b32.xlu0 %v2598, 64
    %v2602 = vpop.permute.xlu0 %2601
    %v2604 = vmul.f32 %v2597, %v2602
    %2606 = vrot.lane.b32.xlu0 %v2604, 32
    %v2607 = vpop.permute.xlu0 %2606
    %v2609 = vadd.f32 %v2599, %v2607
    %v2610 = vtanh.pop %v2609
    %2612 = vrot.lane.b32.xlu0 %v2610, 64
    %v2613 = vpop.permute.xlu0 %2612
    %v2615 = vmul.f32 %v2597, %v2613
    %vm2616 = vcmp.gt.f32.partialorder %v2506, 0.5
    %v2617 = vmul.f32 %v2615, %v2506
    %2619 = vrot.lane.b32.xlu0 %v2617, 32
    %v2620 = vpop.permute.xlu0 %2619
    %2623 = vrot.lane.b32.xlu0 %v2276, 64
    %v2624 = vpop.permute.xlu0 %2623
    %v2626 = vsel %vm61, %v2620, %v2624
    %v2627 = vld [vmem:[%s7] sm:$0xff]
    %v2628 = vld [vmem:[%s7 + $0x8] sm:$0xff]
    %v2629 = vld [vmem:[%s7 + $0x10] sm:$0xff]
    %v2630 = vld [vmem:[%s7 + $0x18] sm:$0xff]
    %v2631 = vld [vmem:[%s7 + $0x20] sm:$0xff]
    %v2632 = vld [vmem:[%s7 + $0x28] sm:$0xff]
    %v2633 = vld [vmem:[%s7 + $0x30] sm:$0xff]
    %v2634 = vld [vmem:[%s7 + $0x38] sm:$0xff]
    %v2635 = vld [vmem:[%s8] sm:$0x1]
    %v2637 = vlaneseq
    %v2638 = vshrl.u32 %v2637, 7
    %v2639 = vsub.s32 0, %v2638
    %v2640 = vrot.slane %v2635, %v2639
    %v2643 = vsel %vm78, %v2626, 0
    %2645 = vmatprep.subr.mxu0 0.0
    %2646 = vmatpush1.msra.mxu0 %v2627
    %2647 = vmatprep.subr.mxu0 0.0
    %2648 = vmatpush1.msra.mxu0 %v2628
    %2649 = vmatprep.subr.mxu0 0.0
    %2650 = vmatpush1.msra.mxu0 %v2629
    %2651 = vmatprep.subr.mxu0 0.0
    %2652 = vmatpush1.msra.mxu0 %v2630
    %2653 = vmatprep.subr.mxu0 0.0
    %2654 = vmatpush1.msra.mxu0 %v2631
    %2655 = vmatprep.subr.mxu0 0.0
    %2656 = vmatpush1.msra.mxu0 %v2632
    %2657 = vmatprep.subr.mxu0 0.0
    %2658 = vmatpush1.msra.mxu0 %v2633
    %2659 = vmatprep.subr.mxu0 0.0
    %2660 = vmatpush1.msra.mxu0 %v2634
    %2661 = vmatprep.subr.mxu0 0.0
    %2662 = vmatpush1.msra.mxu0 0.0
    %2663 = vmatprep.subr.mxu0 0.0
    %2664 = vmatpush1.msra.mxu0 0.0
    %2665 = vmatprep.subr.mxu0 0.0
    %2666 = vmatpush1.msra.mxu0 0.0
    %2667 = vmatprep.subr.mxu0 0.0
    %2668 = vmatpush1.msra.mxu0 0.0
    %2669 = vmatprep.subr.mxu0 0.0
    %2670 = vmatpush1.msra.mxu0 0.0
    %2671 = vmatprep.subr.mxu0 0.0
    %2672 = vmatpush1.msra.mxu0 0.0
    %2673 = vmatprep.subr.mxu0 0.0
    %2674 = vmatpush1.msra.mxu0 0.0
    %2675 = vmatprep.subr.mxu0 0.0
    %2676 = vmatpush1.msra.mxu0 0.0
    %2677 = vmatprep.subr.mxu0 0.0
    %2678 = vmatpush1.msra.mxu0 0.0
    %2679 = vmatprep.subr.mxu0 0.0
    %2680 = vmatpush1.msra.mxu0 0.0
    %2681 = vmatprep.subr.mxu0 0.0
    %2682 = vmatpush1.msra.mxu0 0.0
    %2683 = vmatprep.subr.mxu0 0.0
    %2684 = vmatpush1.msra.mxu0 0.0
    %2685 = vmatprep.subr.mxu0 0.0
    %2686 = vmatpush1.msra.mxu0 0.0
    %2687 = vmatprep.subr.mxu0 0.0
    %2688 = vmatpush1.msra.mxu0 0.0
    %2689 = vmatprep.subr.mxu0 0.0
    %2690 = vmatpush1.msra.mxu0 0.0
    %2691 = vmatprep.subr.mxu0 0.0
    %2692 = vmatpush1.msra.mxu0 0.0
    %2693 = vmatprep.subr.mxu0 0.0
    %2694 = vmatpush1.msra.mxu0 0.0
    %2695 = vmatprep.subr.mxu0 0.0
    %2696 = vmatpush1.msra.mxu0 0.0
    %2697 = vmatprep.subr.mxu0 0.0
    %2698 = vmatpush1.msra.mxu0 0.0
    %2699 = vmatprep.subr.mxu0 0.0
    %2700 = vmatpush1.msra.mxu0 0.0
    %2701 = vmatprep.subr.mxu0 0.0
    %2702 = vmatpush1.msra.mxu0 0.0
    %2703 = vmatprep.subr.mxu0 0.0
    %2704 = vmatpush1.msra.mxu0 0.0
    %2705 = vmatprep.subr.mxu0 0.0
    %2706 = vmatpush1.msra.mxu0 0.0
    %2707 = vmatprep.subr.mxu0 0.0
    %2708 = vmatpush1.msra.mxu0 0.0
    %2709 = vmatprep.mubr.f32.mxu0 0.0
    %2710 = vmatmul.mubr.f32.gmra.mrb[0].mxu0 %v2643
    %v2711 = vpop.f32.mrb[0].mxu0
    %v2712 = vadd.f32 %v2640, %v2711
    %v2713 = vpop.f32.mrb[0].mxu0
    %2714 = vdwg.mxu0
    %v2715 = vxor.u32 %v2712, 2147483648
    %v2716 = vmul.f32 %v2715, 1.442695
    %v2717 = vpow.pop %v2716
    %v2718 = vadd.f32 %v2717, 1.0
    %v2719 = vrcp.pop %v2718
    %v2720 = vmul.f32 1.0, %v2719
    %v2721 = vtanh.pop %v2712
    %v2722 = vmul.f32 %v2720, %v2277
    %2724 = vrot.lane.b32.xlu0 %v2721, 64
    %v2725 = vpop.permute.xlu0 %2724
    %v2727 = vmul.f32 %v2720, %v2725
    %2729 = vrot.lane.b32.xlu0 %v2727, 32
    %v2730 = vpop.permute.xlu0 %2729
    %v2732 = vadd.f32 %v2722, %v2730
    %v2733 = vtanh.pop %v2732
    %2735 = vrot.lane.b32.xlu0 %v2733, 64
    %v2736 = vpop.permute.xlu0 %2735
    %v2738 = vmul.f32 %v2720, %v2736
    %v2739 = vsel %vm2616, 1, 0
    %v2740 = vlaneseq
    %v2741 = vshrl.u32 %v2740, 7
    %v2742 = vsub.s32 0, %v2741
    %v2743 = vrot.slane %v2739, %v2742
    %vm2744 = vcmp.eq.s32.totalorder %v2743, 1
    %v2745 = vsel %vm2744, %v2738, %v2276
    %v2746 = vsel %vm2744, %v2732, %v2277
    %v2747 = vsel %vm2744, %v2738, 0.0
    %v2749 = vcombine.high %v2747, %v2747
    %v2751 = vunpack.c.l.s4 1966171168
    %v2752 = vunpack.c.0.s8 %v2751
    %v2753 = vlaneseq
    %v2754 = vshrl.u32 %v2753, 7
    %v2755 = vsub.s32 %v2752, %v2754
    %v2756 = vrot.slane %v2747, %v2755
    %v2758 = vunpack.c.l.s4 1966171168
    %v2759 = vunpack.c.0.s8 %v2758
    %v2760 = vlaneseq
    %v2761 = vshrl.u32 %v2760, 7
    %v2762 = vsub.s32 %v2759, %v2761
    %v2763 = vrot.slane %v2749, %v2762
    %v2764 = vcombine.high %v2756, %v2756
    %v2765 = vcombine.high %v2763, %v2763
    %v2767 = vunpack.c.l.s4 1966171168
    %v2768 = vunpack.c.0.s8 %v2767
    %v2769 = vlaneseq
    %v2770 = vshrl.u32 %v2769, 7
    %v2771 = vsub.s32 %v2768, %v2770
    %v2772 = vrot.slane %v2756, %v2771
    %v2774 = vunpack.c.l.s4 1966171168
    %v2775 = vunpack.c.0.s8 %v2774
    %v2776 = vlaneseq
    %v2777 = vshrl.u32 %v2776, 7
    %v2778 = vsub.s32 %v2775, %v2777
    %v2779 = vrot.slane %v2763, %v2778
    %v2781 = vunpack.c.l.s4 1966171168
    %v2782 = vunpack.c.0.s8 %v2781
    %v2783 = vlaneseq
    %v2784 = vshrl.u32 %v2783, 7
    %v2785 = vsub.s32 %v2782, %v2784
    %v2786 = vrot.slane %v2764, %v2785
    %v2788 = vunpack.c.l.s4 1966171168
    %v2789 = vunpack.c.0.s8 %v2788
    %v2790 = vlaneseq
    %v2791 = vshrl.u32 %v2790, 7
    %v2792 = vsub.s32 %v2789, %v2791
    %v2793 = vrot.slane %v2765, %v2792
    %v2794 = vcombine.high %v2772, %v2772
    %v2795 = vcombine.high %v2779, %v2779
    %v2796 = vcombine.high %v2786, %v2786
    %v2797 = vcombine.high %v2793, %v2793
    %v2798 = vlaneseq
    %v2799 = vshrl.u32 %v2798, 7
    %v2800 = vsub.s32 0, %v2799
    %v2801 = vrot.slane %v2772, %v2800
    %v2802 = vlaneseq
    %v2803 = vshrl.u32 %v2802, 7
    %v2804 = vsub.s32 0, %v2803
    %v2805 = vrot.slane %v2786, %v2804
    %v2806 = vlaneseq
    %v2807 = vshrl.u32 %v2806, 7
    %v2808 = vsub.s32 0, %v2807
    %v2809 = vrot.slane %v2794, %v2808
    %v2810 = vlaneseq
    %v2811 = vshrl.u32 %v2810, 7
    %v2812 = vsub.s32 0, %v2811
    %v2813 = vrot.slane %v2796, %v2812
    %v2814 = vlaneseq
    %v2815 = vshrl.u32 %v2814, 7
    %v2816 = vsub.s32 0, %v2815
    %v2817 = vrot.slane %v2779, %v2816
    %v2818 = vlaneseq
    %v2819 = vshrl.u32 %v2818, 7
    %v2820 = vsub.s32 0, %v2819
    %v2821 = vrot.slane %v2793, %v2820
    %v2822 = vlaneseq
    %v2823 = vshrl.u32 %v2822, 7
    %v2824 = vsub.s32 0, %v2823
    %v2825 = vrot.slane %v2795, %v2824
    %v2826 = vlaneseq
    %v2827 = vshrl.u32 %v2826, 7
    %v2828 = vsub.s32 0, %v2827
    %v2829 = vrot.slane %v2797, %v2828
    %2830 = vrot.lane.b32.xlu0 %v2801, 32
    %v2831 = vpop.permute.xlu0 %2830
    %2832 = vrot.lane.b32.xlu0 %v2805, 32
    %v2833 = vpop.permute.xlu0 %2832
    %2834 = vrot.lane.b32.xlu0 %v2809, 32
    %v2835 = vpop.permute.xlu0 %2834
    %2836 = vrot.lane.b32.xlu0 %v2813, 32
    %v2837 = vpop.permute.xlu0 %2836
    %2838 = vrot.lane.b32.xlu0 %v2817, 32
    %v2839 = vpop.permute.xlu0 %2838
    %2840 = vrot.lane.b32.xlu0 %v2821, 32
    %v2841 = vpop.permute.xlu0 %2840
    %2842 = vrot.lane.b32.xlu0 %v2825, 32
    %v2843 = vpop.permute.xlu0 %2842
    %2844 = vrot.lane.b32.xlu0 %v2829, 32
    %v2845 = vpop.permute.xlu0 %2844
    %2854 = vst.msk [vmem:[#allocation2 + $0x5] sm:$0x1] %vm509, %v2831
    %2855 = vst.msk [vmem:[#allocation2 + $0xd] sm:$0x1] %vm509, %v2833
    %2856 = vst.msk [vmem:[#allocation2 + $0x15] sm:$0x1] %vm509, %v2835
    %2857 = vst.msk [vmem:[#allocation2 + $0x1d] sm:$0x1] %vm509, %v2837
    %2858 = vst.msk [vmem:[#allocation2 + $0x25] sm:$0x1] %vm509, %v2839
    %2859 = vst.msk [vmem:[#allocation2 + $0x2d] sm:$0x1] %vm509, %v2841
    %2860 = vst.msk [vmem:[#allocation2 + $0x35] sm:$0x1] %vm509, %v2843
    %2861 = vst.msk [vmem:[#allocation2 + $0x3d] sm:$0x1] %vm509, %v2845
    %vm2862 = vcmp.eq.s32.totalorder %v59, 5
    %v2863 = vsel %vm2862, %v2506, %v2394
    %v2864 = vsub.f32 1.0, %v2506
    %v2865 = vmul.f32 %v2615, %v2864
    %v2866 = vmul.f32 %v2609, %v2864
    %s2867 = scalar_lea.vmem %s0, 48
    %v2868 = vld [vmem:[%s2867] sm:$0xff]
    %2870 = vrot.lane.b32.xlu0 %v2865, 64
    %v2871 = vpop.permute.xlu0 %2870
    %v2873 = vsel %vm61, %v2868, %v2871
    %v2874 = vld [vmem:[%s4] sm:$0xff]
    %v2875 = vld [vmem:[%s4 + $0x8] sm:$0xff]
    %v2876 = vld [vmem:[%s4 + $0x10] sm:$0xff]
    %v2877 = vld [vmem:[%s4 + $0x18] sm:$0xff]
    %v2878 = vld [vmem:[%s4 + $0x20] sm:$0xff]
    %v2879 = vld [vmem:[%s4 + $0x28] sm:$0xff]
    %v2880 = vld [vmem:[%s4 + $0x30] sm:$0xff]
    %v2881 = vld [vmem:[%s4 + $0x38] sm:$0xff]
    %v2882 = vld [vmem:[%s5] sm:$0x1]
    %v2884 = vlaneseq
    %v2885 = vshrl.u32 %v2884, 7
    %v2886 = vsub.s32 0, %v2885
    %v2887 = vrot.slane %v2882, %v2886
    %v2890 = vsel %vm78, %v2873, 0
    %2892 = vmatprep.subr.mxu0 0.0
    %2893 = vmatpush1.msra.mxu0 %v2874
    %2894 = vmatprep.subr.mxu0 0.0
    %2895 = vmatpush1.msra.mxu0 %v2875
    %2896 = vmatprep.subr.mxu0 0.0
    %2897 = vmatpush1.msra.mxu0 %v2876
    %2898 = vmatprep.subr.mxu0 0.0
    %2899 = vmatpush1.msra.mxu0 %v2877
    %2900 = vmatprep.subr.mxu0 0.0
    %2901 = vmatpush1.msra.mxu0 %v2878
    %2902 = vmatprep.subr.mxu0 0.0
    %2903 = vmatpush1.msra.mxu0 %v2879
    %2904 = vmatprep.subr.mxu0 0.0
    %2905 = vmatpush1.msra.mxu0 %v2880
    %2906 = vmatprep.subr.mxu0 0.0
    %2907 = vmatpush1.msra.mxu0 %v2881
    %2908 = vmatprep.subr.mxu0 0.0
    %2909 = vmatpush1.msra.mxu0 0.0
    %2910 = vmatprep.subr.mxu0 0.0
    %2911 = vmatpush1.msra.mxu0 0.0
    %2912 = vmatprep.subr.mxu0 0.0
    %2913 = vmatpush1.msra.mxu0 0.0
    %2914 = vmatprep.subr.mxu0 0.0
    %2915 = vmatpush1.msra.mxu0 0.0
    %2916 = vmatprep.subr.mxu0 0.0
    %2917 = vmatpush1.msra.mxu0 0.0
    %2918 = vmatprep.subr.mxu0 0.0
    %2919 = vmatpush1.msra.mxu0 0.0
    %2920 = vmatprep.subr.mxu0 0.0
    %2921 = vmatpush1.msra.mxu0 0.0
    %2922 = vmatprep.subr.mxu0 0.0
    %2923 = vmatpush1.msra.mxu0 0.0
    %2924 = vmatprep.subr.mxu0 0.0
    %2925 = vmatpush1.msra.mxu0 0.0
    %2926 = vmatprep.subr.mxu0 0.0
    %2927 = vmatpush1.msra.mxu0 0.0
    %2928 = vmatprep.subr.mxu0 0.0
    %2929 = vmatpush1.msra.mxu0 0.0
    %2930 = vmatprep.subr.mxu0 0.0
    %2931 = vmatpush1.msra.mxu0 0.0
    %2932 = vmatprep.subr.mxu0 0.0
    %2933 = vmatpush1.msra.mxu0 0.0
    %2934 = vmatprep.subr.mxu0 0.0
    %2935 = vmatpush1.msra.mxu0 0.0
    %2936 = vmatprep.subr.mxu0 0.0
    %2937 = vmatpush1.msra.mxu0 0.0
    %2938 = vmatprep.subr.mxu0 0.0
    %2939 = vmatpush1.msra.mxu0 0.0
    %2940 = vmatprep.subr.mxu0 0.0
    %2941 = vmatpush1.msra.mxu0 0.0
    %2942 = vmatprep.subr.mxu0 0.0
    %2943 = vmatpush1.msra.mxu0 0.0
    %2944 = vmatprep.subr.mxu0 0.0
    %2945 = vmatpush1.msra.mxu0 0.0
    %2946 = vmatprep.subr.mxu0 0.0
    %2947 = vmatpush1.msra.mxu0 0.0
    %2948 = vmatprep.subr.mxu0 0.0
    %2949 = vmatpush1.msra.mxu0 0.0
    %2950 = vmatprep.subr.mxu0 0.0
    %2951 = vmatpush1.msra.mxu0 0.0
    %2952 = vmatprep.subr.mxu0 0.0
    %2953 = vmatpush1.msra.mxu0 0.0
    %2954 = vmatprep.subr.mxu0 0.0
    %2955 = vmatpush1.msra.mxu0 0.0
    %2956 = vmatprep.mubr.f32.mxu0 0.0
    %2957 = vmatmul.mubr.f32.gmra.mrb[0].mxu0 %v2890
    %v2958 = vpop.f32.mrb[0].mxu0
    %v2959 = vadd.f32 %v2887, %v2958
    %v2960 = vpop.f32.mrb[0].mxu0
    %2961 = vdwg.mxu0
    %v2962 = vld [vmem:[%s6] sm:$0x1]
    %v2964 = vlaneseq
    %v2965 = vshrl.u32 %v2964, 7
    %v2966 = vsub.s32 0, %v2965
    %v2967 = vrot.slane %v2962, %v2966
    %v2969 = vmul.f32 %v2959, %v2967
    %v2970 = vsel %vm160, %v2969, 0.0
    %2971 = vadd.xlane.f32.xlu0 %v2970
    %v2972 = vpop.xlane.xlu0 %2971
    %vm2973 = vcmp.gt.f32.partialorder %v2972, 0.0
    %v2974 = vsel %vm2973, 1, 0
    %v2975 = vcvt.s32.f32 %v2974
    %v2976 = vld [vmem:[%s2] sm:$0xff]
    %v2977 = vld [vmem:[%s2 + $0x8] sm:$0xff]
    %v2978 = vld [vmem:[%s2 + $0x10] sm:$0xff]
    %v2979 = vld [vmem:[%s2 + $0x18] sm:$0xff]
    %v2980 = vld [vmem:[%s2 + $0x20] sm:$0xff]
    %v2981 = vld [vmem:[%s2 + $0x28] sm:$0xff]
    %v2982 = vld [vmem:[%s2 + $0x30] sm:$0xff]
    %v2983 = vld [vmem:[%s2 + $0x38] sm:$0xff]
    %v2984 = vld [vmem:[%s3] sm:$0x1]
    %v2986 = vlaneseq
    %v2987 = vshrl.u32 %v2986, 7
    %v2988 = vsub.s32 0, %v2987
    %v2989 = vrot.slane %v2984, %v2988
    %2991 = vmatprep.subr.mxu0 0.0
    %2992 = vmatpush1.msra.mxu0 %v2976
    %2993 = vmatprep.subr.mxu0 0.0
    %2994 = vmatpush1.msra.mxu0 %v2977
    %2995 = vmatprep.subr.mxu0 0.0
    %2996 = vmatpush1.msra.mxu0 %v2978
    %2997 = vmatprep.subr.mxu0 0.0
    %2998 = vmatpush1.msra.mxu0 %v2979
    %2999 = vmatprep.subr.mxu0 0.0
    %3000 = vmatpush1.msra.mxu0 %v2980
    %3001 = vmatprep.subr.mxu0 0.0
    %3002 = vmatpush1.msra.mxu0 %v2981
    %3003 = vmatprep.subr.mxu0 0.0
    %3004 = vmatpush1.msra.mxu0 %v2982
    %3005 = vmatprep.subr.mxu0 0.0
    %3006 = vmatpush1.msra.mxu0 %v2983
    %3007 = vmatprep.subr.mxu0 0.0
    %3008 = vmatpush1.msra.mxu0 0.0
    %3009 = vmatprep.subr.mxu0 0.0
    %3010 = vmatpush1.msra.mxu0 0.0
    %3011 = vmatprep.subr.mxu0 0.0
    %3012 = vmatpush1.msra.mxu0 0.0
    %3013 = vmatprep.subr.mxu0 0.0
    %3014 = vmatpush1.msra.mxu0 0.0
    %3015 = vmatprep.subr.mxu0 0.0
    %3016 = vmatpush1.msra.mxu0 0.0
    %3017 = vmatprep.subr.mxu0 0.0
    %3018 = vmatpush1.msra.mxu0 0.0
    %3019 = vmatprep.subr.mxu0 0.0
    %3020 = vmatpush1.msra.mxu0 0.0
    %3021 = vmatprep.subr.mxu0 0.0
    %3022 = vmatpush1.msra.mxu0 0.0
    %3023 = vmatprep.subr.mxu0 0.0
    %3024 = vmatpush1.msra.mxu0 0.0
    %3025 = vmatprep.subr.mxu0 0.0
    %3026 = vmatpush1.msra.mxu0 0.0
    %3027 = vmatprep.subr.mxu0 0.0
    %3028 = vmatpush1.msra.mxu0 0.0
    %3029 = vmatprep.subr.mxu0 0.0
    %3030 = vmatpush1.msra.mxu0 0.0
    %3031 = vmatprep.subr.mxu0 0.0
    %3032 = vmatpush1.msra.mxu0 0.0
    %3033 = vmatprep.subr.mxu0 0.0
    %3034 = vmatpush1.msra.mxu0 0.0
    %3035 = vmatprep.subr.mxu0 0.0
    %3036 = vmatpush1.msra.mxu0 0.0
    %3037 = vmatprep.subr.mxu0 0.0
    %3038 = vmatpush1.msra.mxu0 0.0
    %3039 = vmatprep.subr.mxu0 0.0
    %3040 = vmatpush1.msra.mxu0 0.0
    %3041 = vmatprep.subr.mxu0 0.0
    %3042 = vmatpush1.msra.mxu0 0.0
    %3043 = vmatprep.subr.mxu0 0.0
    %3044 = vmatpush1.msra.mxu0 0.0
    %3045 = vmatprep.subr.mxu0 0.0
    %3046 = vmatpush1.msra.mxu0 0.0
    %3047 = vmatprep.subr.mxu0 0.0
    %3048 = vmatpush1.msra.mxu0 0.0
    %3049 = vmatprep.subr.mxu0 0.0
    %3050 = vmatpush1.msra.mxu0 0.0
    %3051 = vmatprep.subr.mxu0 0.0
    %3052 = vmatpush1.msra.mxu0 0.0
    %3053 = vmatprep.subr.mxu0 0.0
    %3054 = vmatpush1.msra.mxu0 0.0
    %3055 = vmatprep.mubr.f32.mxu0 0.0
    %3056 = vmatmul.mubr.f32.gmra.mrb[0].mxu0 %v2890
    %v3057 = vpop.f32.mrb[0].mxu0
    %v3058 = vadd.f32 %v2989, %v3057
    %v3059 = vpop.f32.mrb[0].mxu0
    %3060 = vdwg.mxu0
    %v3061 = vxor.u32 %v3058, 2147483648
    %v3062 = vmul.f32 %v3061, 1.442695
    %v3063 = vpow.pop %v3062
    %v3064 = vadd.f32 %v3063, 1.0
    %v3065 = vrcp.pop %v3064
    %v3066 = vmul.f32 1.0, %v3065
    %v3067 = vtanh.pop %v3058
    %v3068 = vmul.f32 %v3066, %v2866
    %3070 = vrot.lane.b32.xlu0 %v3067, 64
    %v3071 = vpop.permute.xlu0 %3070
    %v3073 = vmul.f32 %v3066, %v3071
    %3075 = vrot.lane.b32.xlu0 %v3073, 32
    %v3076 = vpop.permute.xlu0 %3075
    %v3078 = vadd.f32 %v3068, %v3076
    %v3079 = vtanh.pop %v3078
    %3081 = vrot.lane.b32.xlu0 %v3079, 64
    %v3082 = vpop.permute.xlu0 %3081
    %v3084 = vmul.f32 %v3066, %v3082
    %vm3085 = vcmp.gt.f32.partialorder %v2975, 0.5
    %v3086 = vmul.f32 %v3084, %v2975
    %3088 = vrot.lane.b32.xlu0 %v3086, 32
    %v3089 = vpop.permute.xlu0 %3088
    %3092 = vrot.lane.b32.xlu0 %v2745, 64
    %v3093 = vpop.permute.xlu0 %3092
    %v3095 = vsel %vm61, %v3089, %v3093
    %v3096 = vld [vmem:[%s7] sm:$0xff]
    %v3097 = vld [vmem:[%s7 + $0x8] sm:$0xff]
    %v3098 = vld [vmem:[%s7 + $0x10] sm:$0xff]
    %v3099 = vld [vmem:[%s7 + $0x18] sm:$0xff]
    %v3100 = vld [vmem:[%s7 + $0x20] sm:$0xff]
    %v3101 = vld [vmem:[%s7 + $0x28] sm:$0xff]
    %v3102 = vld [vmem:[%s7 + $0x30] sm:$0xff]
    %v3103 = vld [vmem:[%s7 + $0x38] sm:$0xff]
    %v3104 = vld [vmem:[%s8] sm:$0x1]
    %v3106 = vlaneseq
    %v3107 = vshrl.u32 %v3106, 7
    %v3108 = vsub.s32 0, %v3107
    %v3109 = vrot.slane %v3104, %v3108
    %v3112 = vsel %vm78, %v3095, 0
    %3114 = vmatprep.subr.mxu0 0.0
    %3115 = vmatpush1.msra.mxu0 %v3096
    %3116 = vmatprep.subr.mxu0 0.0
    %3117 = vmatpush1.msra.mxu0 %v3097
    %3118 = vmatprep.subr.mxu0 0.0
    %3119 = vmatpush1.msra.mxu0 %v3098
    %3120 = vmatprep.subr.mxu0 0.0
    %3121 = vmatpush1.msra.mxu0 %v3099
    %3122 = vmatprep.subr.mxu0 0.0
    %3123 = vmatpush1.msra.mxu0 %v3100
    %3124 = vmatprep.subr.mxu0 0.0
    %3125 = vmatpush1.msra.mxu0 %v3101
    %3126 = vmatprep.subr.mxu0 0.0
    %3127 = vmatpush1.msra.mxu0 %v3102
    %3128 = vmatprep.subr.mxu0 0.0
    %3129 = vmatpush1.msra.mxu0 %v3103
    %3130 = vmatprep.subr.mxu0 0.0
    %3131 = vmatpush1.msra.mxu0 0.0
    %3132 = vmatprep.subr.mxu0 0.0
    %3133 = vmatpush1.msra.mxu0 0.0
    %3134 = vmatprep.subr.mxu0 0.0
    %3135 = vmatpush1.msra.mxu0 0.0
    %3136 = vmatprep.subr.mxu0 0.0
    %3137 = vmatpush1.msra.mxu0 0.0
    %3138 = vmatprep.subr.mxu0 0.0
    %3139 = vmatpush1.msra.mxu0 0.0
    %3140 = vmatprep.subr.mxu0 0.0
    %3141 = vmatpush1.msra.mxu0 0.0
    %3142 = vmatprep.subr.mxu0 0.0
    %3143 = vmatpush1.msra.mxu0 0.0
    %3144 = vmatprep.subr.mxu0 0.0
    %3145 = vmatpush1.msra.mxu0 0.0
    %3146 = vmatprep.subr.mxu0 0.0
    %3147 = vmatpush1.msra.mxu0 0.0
    %3148 = vmatprep.subr.mxu0 0.0
    %3149 = vmatpush1.msra.mxu0 0.0
    %3150 = vmatprep.subr.mxu0 0.0
    %3151 = vmatpush1.msra.mxu0 0.0
    %3152 = vmatprep.subr.mxu0 0.0
    %3153 = vmatpush1.msra.mxu0 0.0
    %3154 = vmatprep.subr.mxu0 0.0
    %3155 = vmatpush1.msra.mxu0 0.0
    %3156 = vmatprep.subr.mxu0 0.0
    %3157 = vmatpush1.msra.mxu0 0.0
    %3158 = vmatprep.subr.mxu0 0.0
    %3159 = vmatpush1.msra.mxu0 0.0
    %3160 = vmatprep.subr.mxu0 0.0
    %3161 = vmatpush1.msra.mxu0 0.0
    %3162 = vmatprep.subr.mxu0 0.0
    %3163 = vmatpush1.msra.mxu0 0.0
    %3164 = vmatprep.subr.mxu0 0.0
    %3165 = vmatpush1.msra.mxu0 0.0
    %3166 = vmatprep.subr.mxu0 0.0
    %3167 = vmatpush1.msra.mxu0 0.0
    %3168 = vmatprep.subr.mxu0 0.0
    %3169 = vmatpush1.msra.mxu0 0.0
    %3170 = vmatprep.subr.mxu0 0.0
    %3171 = vmatpush1.msra.mxu0 0.0
    %3172 = vmatprep.subr.mxu0 0.0
    %3173 = vmatpush1.msra.mxu0 0.0
    %3174 = vmatprep.subr.mxu0 0.0
    %3175 = vmatpush1.msra.mxu0 0.0
    %3176 = vmatprep.subr.mxu0 0.0
    %3177 = vmatpush1.msra.mxu0 0.0
    %3178 = vmatprep.mubr.f32.mxu0 0.0
    %3179 = vmatmul.mubr.f32.gmra.mrb[0].mxu0 %v3112
    %v3180 = vpop.f32.mrb[0].mxu0
    %v3181 = vadd.f32 %v3109, %v3180
    %v3182 = vpop.f32.mrb[0].mxu0
    %3183 = vdwg.mxu0
    %v3184 = vxor.u32 %v3181, 2147483648
    %v3185 = vmul.f32 %v3184, 1.442695
    %v3186 = vpow.pop %v3185
    %v3187 = vadd.f32 %v3186, 1.0
    %v3188 = vrcp.pop %v3187
    %v3189 = vmul.f32 1.0, %v3188
    %v3190 = vtanh.pop %v3181
    %v3191 = vmul.f32 %v3189, %v2746
    %3193 = vrot.lane.b32.xlu0 %v3190, 64
    %v3194 = vpop.permute.xlu0 %3193
    %v3196 = vmul.f32 %v3189, %v3194
    %3198 = vrot.lane.b32.xlu0 %v3196, 32
    %v3199 = vpop.permute.xlu0 %3198
    %v3201 = vadd.f32 %v3191, %v3199
    %v3202 = vtanh.pop %v3201
    %3204 = vrot.lane.b32.xlu0 %v3202, 64
    %v3205 = vpop.permute.xlu0 %3204
    %v3207 = vmul.f32 %v3189, %v3205
    %v3208 = vsel %vm3085, 1, 0
    %v3209 = vlaneseq
    %v3210 = vshrl.u32 %v3209, 7
    %v3211 = vsub.s32 0, %v3210
    %v3212 = vrot.slane %v3208, %v3211
    %vm3213 = vcmp.eq.s32.totalorder %v3212, 1
    %v3214 = vsel %vm3213, %v3207, %v2745
    %v3215 = vsel %vm3213, %v3201, %v2746
    %v3216 = vsel %vm3213, %v3207, 0.0
    %v3218 = vcombine.high %v3216, %v3216
    %v3220 = vunpack.c.l.s4 1966171168
    %v3221 = vunpack.c.0.s8 %v3220
    %v3222 = vlaneseq
    %v3223 = vshrl.u32 %v3222, 7
    %v3224 = vsub.s32 %v3221, %v3223
    %v3225 = vrot.slane %v3216, %v3224
    %v3227 = vunpack.c.l.s4 1966171168
    %v3228 = vunpack.c.0.s8 %v3227
    %v3229 = vlaneseq
    %v3230 = vshrl.u32 %v3229, 7
    %v3231 = vsub.s32 %v3228, %v3230
    %v3232 = vrot.slane %v3218, %v3231
    %v3233 = vcombine.high %v3225, %v3225
    %v3234 = vcombine.high %v3232, %v3232
    %v3236 = vunpack.c.l.s4 1966171168
    %v3237 = vunpack.c.0.s8 %v3236
    %v3238 = vlaneseq
    %v3239 = vshrl.u32 %v3238, 7
    %v3240 = vsub.s32 %v3237, %v3239
    %v3241 = vrot.slane %v3225, %v3240
    %v3243 = vunpack.c.l.s4 1966171168
    %v3244 = vunpack.c.0.s8 %v3243
    %v3245 = vlaneseq
    %v3246 = vshrl.u32 %v3245, 7
    %v3247 = vsub.s32 %v3244, %v3246
    %v3248 = vrot.slane %v3232, %v3247
    %v3250 = vunpack.c.l.s4 1966171168
    %v3251 = vunpack.c.0.s8 %v3250
    %v3252 = vlaneseq
    %v3253 = vshrl.u32 %v3252, 7
    %v3254 = vsub.s32 %v3251, %v3253
    %v3255 = vrot.slane %v3233, %v3254
    %v3257 = vunpack.c.l.s4 1966171168
    %v3258 = vunpack.c.0.s8 %v3257
    %v3259 = vlaneseq
    %v3260 = vshrl.u32 %v3259, 7
    %v3261 = vsub.s32 %v3258, %v3260
    %v3262 = vrot.slane %v3234, %v3261
    %v3263 = vcombine.high %v3241, %v3241
    %v3264 = vcombine.high %v3248, %v3248
    %v3265 = vcombine.high %v3255, %v3255
    %v3266 = vcombine.high %v3262, %v3262
    %v3267 = vlaneseq
    %v3268 = vshrl.u32 %v3267, 7
    %v3269 = vsub.s32 0, %v3268
    %v3270 = vrot.slane %v3241, %v3269
    %v3271 = vlaneseq
    %v3272 = vshrl.u32 %v3271, 7
    %v3273 = vsub.s32 0, %v3272
    %v3274 = vrot.slane %v3255, %v3273
    %v3275 = vlaneseq
    %v3276 = vshrl.u32 %v3275, 7
    %v3277 = vsub.s32 0, %v3276
    %v3278 = vrot.slane %v3263, %v3277
    %v3279 = vlaneseq
    %v3280 = vshrl.u32 %v3279, 7
    %v3281 = vsub.s32 0, %v3280
    %v3282 = vrot.slane %v3265, %v3281
    %v3283 = vlaneseq
    %v3284 = vshrl.u32 %v3283, 7
    %v3285 = vsub.s32 0, %v3284
    %v3286 = vrot.slane %v3248, %v3285
    %v3287 = vlaneseq
    %v3288 = vshrl.u32 %v3287, 7
    %v3289 = vsub.s32 0, %v3288
    %v3290 = vrot.slane %v3262, %v3289
    %v3291 = vlaneseq
    %v3292 = vshrl.u32 %v3291, 7
    %v3293 = vsub.s32 0, %v3292
    %v3294 = vrot.slane %v3264, %v3293
    %v3295 = vlaneseq
    %v3296 = vshrl.u32 %v3295, 7
    %v3297 = vsub.s32 0, %v3296
    %v3298 = vrot.slane %v3266, %v3297
    %3299 = vrot.lane.b32.xlu0 %v3270, 32
    %v3300 = vpop.permute.xlu0 %3299
    %3301 = vrot.lane.b32.xlu0 %v3274, 32
    %v3302 = vpop.permute.xlu0 %3301
    %3303 = vrot.lane.b32.xlu0 %v3278, 32
    %v3304 = vpop.permute.xlu0 %3303
    %3305 = vrot.lane.b32.xlu0 %v3282, 32
    %v3306 = vpop.permute.xlu0 %3305
    %3307 = vrot.lane.b32.xlu0 %v3286, 32
    %v3308 = vpop.permute.xlu0 %3307
    %3309 = vrot.lane.b32.xlu0 %v3290, 32
    %v3310 = vpop.permute.xlu0 %3309
    %3311 = vrot.lane.b32.xlu0 %v3294, 32
    %v3312 = vpop.permute.xlu0 %3311
    %3313 = vrot.lane.b32.xlu0 %v3298, 32
    %v3314 = vpop.permute.xlu0 %3313
    %3323 = vst.msk [vmem:[#allocation2 + $0x6] sm:$0x1] %vm509, %v3300
    %3324 = vst.msk [vmem:[#allocation2 + $0xe] sm:$0x1] %vm509, %v3302
    %3325 = vst.msk [vmem:[#allocation2 + $0x16] sm:$0x1] %vm509, %v3304
    %3326 = vst.msk [vmem:[#allocation2 + $0x1e] sm:$0x1] %vm509, %v3306
    %3327 = vst.msk [vmem:[#allocation2 + $0x26] sm:$0x1] %vm509, %v3308
    %3328 = vst.msk [vmem:[#allocation2 + $0x2e] sm:$0x1] %vm509, %v3310
    %3329 = vst.msk [vmem:[#allocation2 + $0x36] sm:$0x1] %vm509, %v3312
    %3330 = vst.msk [vmem:[#allocation2 + $0x3e] sm:$0x1] %vm509, %v3314
    %vm3331 = vcmp.eq.s32.totalorder %v59, 6
    %v3332 = vsel %vm3331, %v2975, %v2863
    %v3333 = vsub.f32 1.0, %v2975
    %v3334 = vmul.f32 %v3084, %v3333
    %v3335 = vmul.f32 %v3078, %v3333
    %s3336 = scalar_lea.vmem %s0, 56
    %v3337 = vld [vmem:[%s3336] sm:$0xff]
    %3339 = vrot.lane.b32.xlu0 %v3334, 64
    %v3340 = vpop.permute.xlu0 %3339
    %v3342 = vsel %vm61, %v3337, %v3340
    %v3343 = vld [vmem:[%s4] sm:$0xff]
    %v3344 = vld [vmem:[%s4 + $0x8] sm:$0xff]
    %v3345 = vld [vmem:[%s4 + $0x10] sm:$0xff]
    %v3346 = vld [vmem:[%s4 + $0x18] sm:$0xff]
    %v3347 = vld [vmem:[%s4 + $0x20] sm:$0xff]
    %v3348 = vld [vmem:[%s4 + $0x28] sm:$0xff]
    %v3349 = vld [vmem:[%s4 + $0x30] sm:$0xff]
    %v3350 = vld [vmem:[%s4 + $0x38] sm:$0xff]
    %v3351 = vld [vmem:[%s5] sm:$0x1]
    %v3353 = vlaneseq
    %v3354 = vshrl.u32 %v3353, 7
    %v3355 = vsub.s32 0, %v3354
    %v3356 = vrot.slane %v3351, %v3355
    %v3359 = vsel %vm78, %v3342, 0
    %3361 = vmatprep.subr.mxu0 0.0
    %3362 = vmatpush1.msra.mxu0 %v3343
    %3363 = vmatprep.subr.mxu0 0.0
    %3364 = vmatpush1.msra.mxu0 %v3344
    %3365 = vmatprep.subr.mxu0 0.0
    %3366 = vmatpush1.msra.mxu0 %v3345
    %3367 = vmatprep.subr.mxu0 0.0
    %3368 = vmatpush1.msra.mxu0 %v3346
    %3369 = vmatprep.subr.mxu0 0.0
    %3370 = vmatpush1.msra.mxu0 %v3347
    %3371 = vmatprep.subr.mxu0 0.0
    %3372 = vmatpush1.msra.mxu0 %v3348
    %3373 = vmatprep.subr.mxu0 0.0
    %3374 = vmatpush1.msra.mxu0 %v3349
    %3375 = vmatprep.subr.mxu0 0.0
    %3376 = vmatpush1.msra.mxu0 %v3350
    %3377 = vmatprep.subr.mxu0 0.0
    %3378 = vmatpush1.msra.mxu0 0.0
    %3379 = vmatprep.subr.mxu0 0.0
    %3380 = vmatpush1.msra.mxu0 0.0
    %3381 = vmatprep.subr.mxu0 0.0
    %3382 = vmatpush1.msra.mxu0 0.0
    %3383 = vmatprep.subr.mxu0 0.0
    %3384 = vmatpush1.msra.mxu0 0.0
    %3385 = vmatprep.subr.mxu0 0.0
    %3386 = vmatpush1.msra.mxu0 0.0
    %3387 = vmatprep.subr.mxu0 0.0
    %3388 = vmatpush1.msra.mxu0 0.0
    %3389 = vmatprep.subr.mxu0 0.0
    %3390 = vmatpush1.msra.mxu0 0.0
    %3391 = vmatprep.subr.mxu0 0.0
    %3392 = vmatpush1.msra.mxu0 0.0
    %3393 = vmatprep.subr.mxu0 0.0
    %3394 = vmatpush1.msra.mxu0 0.0
    %3395 = vmatprep.subr.mxu0 0.0
    %3396 = vmatpush1.msra.mxu0 0.0
    %3397 = vmatprep.subr.mxu0 0.0
    %3398 = vmatpush1.msra.mxu0 0.0
    %3399 = vmatprep.subr.mxu0 0.0
    %3400 = vmatpush1.msra.mxu0 0.0
    %3401 = vmatprep.subr.mxu0 0.0
    %3402 = vmatpush1.msra.mxu0 0.0
    %3403 = vmatprep.subr.mxu0 0.0
    %3404 = vmatpush1.msra.mxu0 0.0
    %3405 = vmatprep.subr.mxu0 0.0
    %3406 = vmatpush1.msra.mxu0 0.0
    %3407 = vmatprep.subr.mxu0 0.0
    %3408 = vmatpush1.msra.mxu0 0.0
    %3409 = vmatprep.subr.mxu0 0.0
    %3410 = vmatpush1.msra.mxu0 0.0
    %3411 = vmatprep.subr.mxu0 0.0
    %3412 = vmatpush1.msra.mxu0 0.0
    %3413 = vmatprep.subr.mxu0 0.0
    %3414 = vmatpush1.msra.mxu0 0.0
    %3415 = vmatprep.subr.mxu0 0.0
    %3416 = vmatpush1.msra.mxu0 0.0
    %3417 = vmatprep.subr.mxu0 0.0
    %3418 = vmatpush1.msra.mxu0 0.0
    %3419 = vmatprep.subr.mxu0 0.0
    %3420 = vmatpush1.msra.mxu0 0.0
    %3421 = vmatprep.subr.mxu0 0.0
    %3422 = vmatpush1.msra.mxu0 0.0
    %3423 = vmatprep.subr.mxu0 0.0
    %3424 = vmatpush1.msra.mxu0 0.0
    %3425 = vmatprep.mubr.f32.mxu0 0.0
    %3426 = vmatmul.mubr.f32.gmra.mrb[0].mxu0 %v3359
    %v3427 = vpop.f32.mrb[0].mxu0
    %v3428 = vadd.f32 %v3356, %v3427
    %v3429 = vpop.f32.mrb[0].mxu0
    %3430 = vdwg.mxu0
    %v3431 = vld [vmem:[%s6] sm:$0x1]
    %v3433 = vlaneseq
    %v3434 = vshrl.u32 %v3433, 7
    %v3435 = vsub.s32 0, %v3434
    %v3436 = vrot.slane %v3431, %v3435
    %v3438 = vmul.f32 %v3428, %v3436
    %v3439 = vsel %vm160, %v3438, 0.0
    %3440 = vadd.xlane.f32.xlu0 %v3439
    %v3441 = vpop.xlane.xlu0 %3440
    %vm3442 = vcmp.gt.f32.partialorder %v3441, 0.0
    %v3443 = vsel %vm3442, 1, 0
    %v3444 = vcvt.s32.f32 %v3443
    %v3445 = vld [vmem:[%s2] sm:$0xff]
    %v3446 = vld [vmem:[%s2 + $0x8] sm:$0xff]
    %v3447 = vld [vmem:[%s2 + $0x10] sm:$0xff]
    %v3448 = vld [vmem:[%s2 + $0x18] sm:$0xff]
    %v3449 = vld [vmem:[%s2 + $0x20] sm:$0xff]
    %v3450 = vld [vmem:[%s2 + $0x28] sm:$0xff]
    %v3451 = vld [vmem:[%s2 + $0x30] sm:$0xff]
    %v3452 = vld [vmem:[%s2 + $0x38] sm:$0xff]
    %v3453 = vld [vmem:[%s3] sm:$0x1]
    %v3455 = vlaneseq
    %v3456 = vshrl.u32 %v3455, 7
    %v3457 = vsub.s32 0, %v3456
    %v3458 = vrot.slane %v3453, %v3457
    %3460 = vmatprep.subr.mxu0 0.0
    %3461 = vmatpush1.msra.mxu0 %v3445
    %3462 = vmatprep.subr.mxu0 0.0
    %3463 = vmatpush1.msra.mxu0 %v3446
    %3464 = vmatprep.subr.mxu0 0.0
    %3465 = vmatpush1.msra.mxu0 %v3447
    %3466 = vmatprep.subr.mxu0 0.0
    %3467 = vmatpush1.msra.mxu0 %v3448
    %3468 = vmatprep.subr.mxu0 0.0
    %3469 = vmatpush1.msra.mxu0 %v3449
    %3470 = vmatprep.subr.mxu0 0.0
    %3471 = vmatpush1.msra.mxu0 %v3450
    %3472 = vmatprep.subr.mxu0 0.0
    %3473 = vmatpush1.msra.mxu0 %v3451
    %3474 = vmatprep.subr.mxu0 0.0
    %3475 = vmatpush1.msra.mxu0 %v3452
    %3476 = vmatprep.subr.mxu0 0.0
    %3477 = vmatpush1.msra.mxu0 0.0
    %3478 = vmatprep.subr.mxu0 0.0
    %3479 = vmatpush1.msra.mxu0 0.0
    %3480 = vmatprep.subr.mxu0 0.0
    %3481 = vmatpush1.msra.mxu0 0.0
    %3482 = vmatprep.subr.mxu0 0.0
    %3483 = vmatpush1.msra.mxu0 0.0
    %3484 = vmatprep.subr.mxu0 0.0
    %3485 = vmatpush1.msra.mxu0 0.0
    %3486 = vmatprep.subr.mxu0 0.0
    %3487 = vmatpush1.msra.mxu0 0.0
    %3488 = vmatprep.subr.mxu0 0.0
    %3489 = vmatpush1.msra.mxu0 0.0
    %3490 = vmatprep.subr.mxu0 0.0
    %3491 = vmatpush1.msra.mxu0 0.0
    %3492 = vmatprep.subr.mxu0 0.0
    %3493 = vmatpush1.msra.mxu0 0.0
    %3494 = vmatprep.subr.mxu0 0.0
    %3495 = vmatpush1.msra.mxu0 0.0
    %3496 = vmatprep.subr.mxu0 0.0
    %3497 = vmatpush1.msra.mxu0 0.0
    %3498 = vmatprep.subr.mxu0 0.0
    %3499 = vmatpush1.msra.mxu0 0.0
    %3500 = vmatprep.subr.mxu0 0.0
    %3501 = vmatpush1.msra.mxu0 0.0
    %3502 = vmatprep.subr.mxu0 0.0
    %3503 = vmatpush1.msra.mxu0 0.0
    %3504 = vmatprep.subr.mxu0 0.0
    %3505 = vmatpush1.msra.mxu0 0.0
    %3506 = vmatprep.subr.mxu0 0.0
    %3507 = vmatpush1.msra.mxu0 0.0
    %3508 = vmatprep.subr.mxu0 0.0
    %3509 = vmatpush1.msra.mxu0 0.0
    %3510 = vmatprep.subr.mxu0 0.0
    %3511 = vmatpush1.msra.mxu0 0.0
    %3512 = vmatprep.subr.mxu0 0.0
    %3513 = vmatpush1.msra.mxu0 0.0
    %3514 = vmatprep.subr.mxu0 0.0
    %3515 = vmatpush1.msra.mxu0 0.0
    %3516 = vmatprep.subr.mxu0 0.0
    %3517 = vmatpush1.msra.mxu0 0.0
    %3518 = vmatprep.subr.mxu0 0.0
    %3519 = vmatpush1.msra.mxu0 0.0
    %3520 = vmatprep.subr.mxu0 0.0
    %3521 = vmatpush1.msra.mxu0 0.0
    %3522 = vmatprep.subr.mxu0 0.0
    %3523 = vmatpush1.msra.mxu0 0.0
    %3524 = vmatprep.mubr.f32.mxu0 0.0
    %3525 = vmatmul.mubr.f32.gmra.mrb[0].mxu0 %v3359
    %v3526 = vpop.f32.mrb[0].mxu0
    %v3527 = vadd.f32 %v3458, %v3526
    %v3528 = vpop.f32.mrb[0].mxu0
    %3529 = vdwg.mxu0
    %v3530 = vxor.u32 %v3527, 2147483648
    %v3531 = vmul.f32 %v3530, 1.442695
    %v3532 = vpow.pop %v3531
    %v3533 = vadd.f32 %v3532, 1.0
    %v3534 = vrcp.pop %v3533
    %v3535 = vmul.f32 1.0, %v3534
    %v3536 = vtanh.pop %v3527
    %v3537 = vmul.f32 %v3535, %v3335
    %3539 = vrot.lane.b32.xlu0 %v3536, 64
    %v3540 = vpop.permute.xlu0 %3539
    %v3542 = vmul.f32 %v3535, %v3540
    %3544 = vrot.lane.b32.xlu0 %v3542, 32
    %v3545 = vpop.permute.xlu0 %3544
    %v3547 = vadd.f32 %v3537, %v3545
    %v3548 = vtanh.pop %v3547
    %3550 = vrot.lane.b32.xlu0 %v3548, 64
    %v3551 = vpop.permute.xlu0 %3550
    %v3553 = vmul.f32 %v3535, %v3551
    %vm3554 = vcmp.gt.f32.partialorder %v3444, 0.5
    %v3555 = vmul.f32 %v3553, %v3444
    %3557 = vrot.lane.b32.xlu0 %v3555, 32
    %v3558 = vpop.permute.xlu0 %3557
    %3561 = vrot.lane.b32.xlu0 %v3214, 64
    %v3562 = vpop.permute.xlu0 %3561
    %v3564 = vsel %vm61, %v3558, %v3562
    %v3565 = vld [vmem:[%s7] sm:$0xff]
    %v3566 = vld [vmem:[%s7 + $0x8] sm:$0xff]
    %v3567 = vld [vmem:[%s7 + $0x10] sm:$0xff]
    %v3568 = vld [vmem:[%s7 + $0x18] sm:$0xff]
    %v3569 = vld [vmem:[%s7 + $0x20] sm:$0xff]
    %v3570 = vld [vmem:[%s7 + $0x28] sm:$0xff]
    %v3571 = vld [vmem:[%s7 + $0x30] sm:$0xff]
    %v3572 = vld [vmem:[%s7 + $0x38] sm:$0xff]
    %v3573 = vld [vmem:[%s8] sm:$0x1]
    %v3575 = vlaneseq
    %v3576 = vshrl.u32 %v3575, 7
    %v3577 = vsub.s32 0, %v3576
    %v3578 = vrot.slane %v3573, %v3577
    %v3581 = vsel %vm78, %v3564, 0
    %3583 = vmatprep.subr.mxu0 0.0
    %3584 = vmatpush1.msra.mxu0 %v3565
    %3585 = vmatprep.subr.mxu0 0.0
    %3586 = vmatpush1.msra.mxu0 %v3566
    %3587 = vmatprep.subr.mxu0 0.0
    %3588 = vmatpush1.msra.mxu0 %v3567
    %3589 = vmatprep.subr.mxu0 0.0
    %3590 = vmatpush1.msra.mxu0 %v3568
    %3591 = vmatprep.subr.mxu0 0.0
    %3592 = vmatpush1.msra.mxu0 %v3569
    %3593 = vmatprep.subr.mxu0 0.0
    %3594 = vmatpush1.msra.mxu0 %v3570
    %3595 = vmatprep.subr.mxu0 0.0
    %3596 = vmatpush1.msra.mxu0 %v3571
    %3597 = vmatprep.subr.mxu0 0.0
    %3598 = vmatpush1.msra.mxu0 %v3572
    %3599 = vmatprep.subr.mxu0 0.0
    %3600 = vmatpush1.msra.mxu0 0.0
    %3601 = vmatprep.subr.mxu0 0.0
    %3602 = vmatpush1.msra.mxu0 0.0
    %3603 = vmatprep.subr.mxu0 0.0
    %3604 = vmatpush1.msra.mxu0 0.0
    %3605 = vmatprep.subr.mxu0 0.0
    %3606 = vmatpush1.msra.mxu0 0.0
    %3607 = vmatprep.subr.mxu0 0.0
    %3608 = vmatpush1.msra.mxu0 0.0
    %3609 = vmatprep.subr.mxu0 0.0
    %3610 = vmatpush1.msra.mxu0 0.0
    %3611 = vmatprep.subr.mxu0 0.0
    %3612 = vmatpush1.msra.mxu0 0.0
    %3613 = vmatprep.subr.mxu0 0.0
    %3614 = vmatpush1.msra.mxu0 0.0
    %3615 = vmatprep.subr.mxu0 0.0
    %3616 = vmatpush1.msra.mxu0 0.0
    %3617 = vmatprep.subr.mxu0 0.0
    %3618 = vmatpush1.msra.mxu0 0.0
    %3619 = vmatprep.subr.mxu0 0.0
    %3620 = vmatpush1.msra.mxu0 0.0
    %3621 = vmatprep.subr.mxu0 0.0
    %3622 = vmatpush1.msra.mxu0 0.0
    %3623 = vmatprep.subr.mxu0 0.0
    %3624 = vmatpush1.msra.mxu0 0.0
    %3625 = vmatprep.subr.mxu0 0.0
    %3626 = vmatpush1.msra.mxu0 0.0
    %3627 = vmatprep.subr.mxu0 0.0
    %3628 = vmatpush1.msra.mxu0 0.0
    %3629 = vmatprep.subr.mxu0 0.0
    %3630 = vmatpush1.msra.mxu0 0.0
    %3631 = vmatprep.subr.mxu0 0.0
    %3632 = vmatpush1.msra.mxu0 0.0
    %3633 = vmatprep.subr.mxu0 0.0
    %3634 = vmatpush1.msra.mxu0 0.0
    %3635 = vmatprep.subr.mxu0 0.0
    %3636 = vmatpush1.msra.mxu0 0.0
    %3637 = vmatprep.subr.mxu0 0.0
    %3638 = vmatpush1.msra.mxu0 0.0
    %3639 = vmatprep.subr.mxu0 0.0
    %3640 = vmatpush1.msra.mxu0 0.0
    %3641 = vmatprep.subr.mxu0 0.0
    %3642 = vmatpush1.msra.mxu0 0.0
    %3643 = vmatprep.subr.mxu0 0.0
    %3644 = vmatpush1.msra.mxu0 0.0
    %3645 = vmatprep.subr.mxu0 0.0
    %3646 = vmatpush1.msra.mxu0 0.0
    %3647 = vmatprep.mubr.f32.mxu0 0.0
    %3648 = vmatmul.mubr.f32.gmra.mrb[0].mxu0 %v3581
    %v3649 = vpop.f32.mrb[0].mxu0
    %v3650 = vadd.f32 %v3578, %v3649
    %v3651 = vpop.f32.mrb[0].mxu0
    %3652 = vdwg.mxu0
    %v3653 = vxor.u32 %v3650, 2147483648
    %v3654 = vmul.f32 %v3653, 1.442695
    %v3655 = vpow.pop %v3654
    %v3656 = vadd.f32 %v3655, 1.0
    %v3657 = vrcp.pop %v3656
    %v3658 = vmul.f32 1.0, %v3657
    %v3659 = vtanh.pop %v3650
    %v3660 = vmul.f32 %v3658, %v3215
    %3662 = vrot.lane.b32.xlu0 %v3659, 64
    %v3663 = vpop.permute.xlu0 %3662
    %v3665 = vmul.f32 %v3658, %v3663
    %3667 = vrot.lane.b32.xlu0 %v3665, 32
    %v3668 = vpop.permute.xlu0 %3667
    %v3670 = vadd.f32 %v3660, %v3668
    %v3671 = vtanh.pop %v3670
    %3673 = vrot.lane.b32.xlu0 %v3671, 64
    %v3674 = vpop.permute.xlu0 %3673
    %v3676 = vmul.f32 %v3658, %v3674
    %v3677 = vsel %vm3554, 1, 0
    %v3678 = vlaneseq
    %v3679 = vshrl.u32 %v3678, 7
    %v3680 = vsub.s32 0, %v3679
    %v3681 = vrot.slane %v3677, %v3680
    %vm3682 = vcmp.eq.s32.totalorder %v3681, 1
    %v3683 = vsel %vm3682, %v3676, %v3214
    %v3684 = vsel %vm3682, %v3670, %v3215
    %v3685 = vsel %vm3682, %v3676, 0.0
    %v3687 = vcombine.high %v3685, %v3685
    %v3689 = vunpack.c.l.s4 1966171168
    %v3690 = vunpack.c.0.s8 %v3689
    %v3691 = vlaneseq
    %v3692 = vshrl.u32 %v3691, 7
    %v3693 = vsub.s32 %v3690, %v3692
    %v3694 = vrot.slane %v3685, %v3693
    %v3696 = vunpack.c.l.s4 1966171168
    %v3697 = vunpack.c.0.s8 %v3696
    %v3698 = vlaneseq
    %v3699 = vshrl.u32 %v3698, 7
    %v3700 = vsub.s32 %v3697, %v3699
    %v3701 = vrot.slane %v3687, %v3700
    %v3702 = vcombine.high %v3694, %v3694
    %v3703 = vcombine.high %v3701, %v3701
    %v3705 = vunpack.c.l.s4 1966171168
    %v3706 = vunpack.c.0.s8 %v3705
    %v3707 = vlaneseq
    %v3708 = vshrl.u32 %v3707, 7
    %v3709 = vsub.s32 %v3706, %v3708
    %v3710 = vrot.slane %v3694, %v3709
    %v3712 = vunpack.c.l.s4 1966171168
    %v3713 = vunpack.c.0.s8 %v3712
    %v3714 = vlaneseq
    %v3715 = vshrl.u32 %v3714, 7
    %v3716 = vsub.s32 %v3713, %v3715
    %v3717 = vrot.slane %v3701, %v3716
    %v3719 = vunpack.c.l.s4 1966171168
    %v3720 = vunpack.c.0.s8 %v3719
    %v3721 = vlaneseq
    %v3722 = vshrl.u32 %v3721, 7
    %v3723 = vsub.s32 %v3720, %v3722
    %v3724 = vrot.slane %v3702, %v3723
    %v3726 = vunpack.c.l.s4 1966171168
    %v3727 = vunpack.c.0.s8 %v3726
    %v3728 = vlaneseq
    %v3729 = vshrl.u32 %v3728, 7
    %v3730 = vsub.s32 %v3727, %v3729
    %v3731 = vrot.slane %v3703, %v3730
    %v3732 = vcombine.high %v3710, %v3710
    %v3733 = vcombine.high %v3717, %v3717
    %v3734 = vcombine.high %v3724, %v3724
    %v3735 = vcombine.high %v3731, %v3731
    %v3736 = vlaneseq
    %v3737 = vshrl.u32 %v3736, 7
    %v3738 = vsub.s32 0, %v3737
    %v3739 = vrot.slane %v3710, %v3738
    %v3740 = vlaneseq
    %v3741 = vshrl.u32 %v3740, 7
    %v3742 = vsub.s32 0, %v3741
    %v3743 = vrot.slane %v3724, %v3742
    %v3744 = vlaneseq
    %v3745 = vshrl.u32 %v3744, 7
    %v3746 = vsub.s32 0, %v3745
    %v3747 = vrot.slane %v3732, %v3746
    %v3748 = vlaneseq
    %v3749 = vshrl.u32 %v3748, 7
    %v3750 = vsub.s32 0, %v3749
    %v3751 = vrot.slane %v3734, %v3750
    %v3752 = vlaneseq
    %v3753 = vshrl.u32 %v3752, 7
    %v3754 = vsub.s32 0, %v3753
    %v3755 = vrot.slane %v3717, %v3754
    %v3756 = vlaneseq
    %v3757 = vshrl.u32 %v3756, 7
    %v3758 = vsub.s32 0, %v3757
    %v3759 = vrot.slane %v3731, %v3758
    %v3760 = vlaneseq
    %v3761 = vshrl.u32 %v3760, 7
    %v3762 = vsub.s32 0, %v3761
    %v3763 = vrot.slane %v3733, %v3762
    %v3764 = vlaneseq
    %v3765 = vshrl.u32 %v3764, 7
    %v3766 = vsub.s32 0, %v3765
    %v3767 = vrot.slane %v3735, %v3766
    %3768 = vrot.lane.b32.xlu0 %v3739, 32
    %v3769 = vpop.permute.xlu0 %3768
    %3770 = vrot.lane.b32.xlu0 %v3743, 32
    %v3771 = vpop.permute.xlu0 %3770
    %3772 = vrot.lane.b32.xlu0 %v3747, 32
    %v3773 = vpop.permute.xlu0 %3772
    %3774 = vrot.lane.b32.xlu0 %v3751, 32
    %v3775 = vpop.permute.xlu0 %3774
    %3776 = vrot.lane.b32.xlu0 %v3755, 32
    %v3777 = vpop.permute.xlu0 %3776
    %3778 = vrot.lane.b32.xlu0 %v3759, 32
    %v3779 = vpop.permute.xlu0 %3778
    %3780 = vrot.lane.b32.xlu0 %v3763, 32
    %v3781 = vpop.permute.xlu0 %3780
    %3782 = vrot.lane.b32.xlu0 %v3767, 32
    %v3783 = vpop.permute.xlu0 %3782
    %3792 = vst.msk [vmem:[#allocation2 + $0x7] sm:$0x1] %vm509, %v3769
    %3793 = vst.msk [vmem:[#allocation2 + $0xf] sm:$0x1] %vm509, %v3771
    %3794 = vst.msk [vmem:[#allocation2 + $0x17] sm:$0x1] %vm509, %v3773
    %3795 = vst.msk [vmem:[#allocation2 + $0x1f] sm:$0x1] %vm509, %v3775
    %3796 = vst.msk [vmem:[#allocation2 + $0x27] sm:$0x1] %vm509, %v3777
    %3797 = vst.msk [vmem:[#allocation2 + $0x2f] sm:$0x1] %vm509, %v3779
    %3798 = vst.msk [vmem:[#allocation2 + $0x37] sm:$0x1] %vm509, %v3781
    %3799 = vst.msk [vmem:[#allocation2 + $0x3f] sm:$0x1] %vm509, %v3783
    %vm3800 = vcmp.eq.s32.totalorder %v59, 7
    %v3801 = vsel %vm3800, %v3444, %v3332
    %vm3802 = vcmask 57344
    %3803 = vst.msk [vmem:[#allocation4] sm:$0x1] %vm3802, %v3801
    %v3804 = vld [vmem:[%s1] sm:$0xff]
    %3806 = vrot.lane.b32.xlu0 %v3683, 64
    %v3807 = vpop.permute.xlu0 %3806
    %v3809 = vsel %vm61, %v3804, %v3807
    %v3810 = vld [vmem:[%s9] sm:$0xff]
    %v3811 = vld [vmem:[%s9 + $0x8] sm:$0xff]
    %v3812 = vld [vmem:[%s9 + $0x10] sm:$0xff]
    %v3813 = vld [vmem:[%s9 + $0x18] sm:$0xff]
    %v3814 = vld [vmem:[%s9 + $0x20] sm:$0xff]
    %v3815 = vld [vmem:[%s9 + $0x28] sm:$0xff]
    %v3816 = vld [vmem:[%s9 + $0x30] sm:$0xff]
    %v3817 = vld [vmem:[%s9 + $0x38] sm:$0xff]
    %v3818 = vld [vmem:[%s10] sm:$0x1]
    %v3820 = vlaneseq
    %v3821 = vshrl.u32 %v3820, 7
    %v3822 = vsub.s32 0, %v3821
    %v3823 = vrot.slane %v3818, %v3822
    %v3826 = vsel %vm78, %v3809, 0
    %3828 = vmatprep.subr.mxu0 0.0
    %3829 = vmatpush1.msra.mxu0 %v3810
    %3830 = vmatprep.subr.mxu0 0.0
    %3831 = vmatpush1.msra.mxu0 %v3811
    %3832 = vmatprep.subr.mxu0 0.0
    %3833 = vmatpush1.msra.mxu0 %v3812
    %3834 = vmatprep.subr.mxu0 0.0
    %3835 = vmatpush1.msra.mxu0 %v3813
    %3836 = vmatprep.subr.mxu0 0.0
    %3837 = vmatpush1.msra.mxu0 %v3814
    %3838 = vmatprep.subr.mxu0 0.0
    %3839 = vmatpush1.msra.mxu0 %v3815
    %3840 = vmatprep.subr.mxu0 0.0
    %3841 = vmatpush1.msra.mxu0 %v3816
    %3842 = vmatprep.subr.mxu0 0.0
    %3843 = vmatpush1.msra.mxu0 %v3817
    %3844 = vmatprep.subr.mxu0 0.0
    %3845 = vmatpush1.msra.mxu0 0.0
    %3846 = vmatprep.subr.mxu0 0.0
    %3847 = vmatpush1.msra.mxu0 0.0
    %3848 = vmatprep.subr.mxu0 0.0
    %3849 = vmatpush1.msra.mxu0 0.0
    %3850 = vmatprep.subr.mxu0 0.0
    %3851 = vmatpush1.msra.mxu0 0.0
    %3852 = vmatprep.subr.mxu0 0.0
    %3853 = vmatpush1.msra.mxu0 0.0
    %3854 = vmatprep.subr.mxu0 0.0
    %3855 = vmatpush1.msra.mxu0 0.0
    %3856 = vmatprep.subr.mxu0 0.0
    %3857 = vmatpush1.msra.mxu0 0.0
    %3858 = vmatprep.subr.mxu0 0.0
    %3859 = vmatpush1.msra.mxu0 0.0
    %3860 = vmatprep.subr.mxu0 0.0
    %3861 = vmatpush1.msra.mxu0 0.0
    %3862 = vmatprep.subr.mxu0 0.0
    %3863 = vmatpush1.msra.mxu0 0.0
    %3864 = vmatprep.subr.mxu0 0.0
    %3865 = vmatpush1.msra.mxu0 0.0
    %3866 = vmatprep.subr.mxu0 0.0
    %3867 = vmatpush1.msra.mxu0 0.0
    %3868 = vmatprep.subr.mxu0 0.0
    %3869 = vmatpush1.msra.mxu0 0.0
    %3870 = vmatprep.subr.mxu0 0.0
    %3871 = vmatpush1.msra.mxu0 0.0
    %3872 = vmatprep.subr.mxu0 0.0
    %3873 = vmatpush1.msra.mxu0 0.0
    %3874 = vmatprep.subr.mxu0 0.0
    %3875 = vmatpush1.msra.mxu0 0.0
    %3876 = vmatprep.subr.mxu0 0.0
    %3877 = vmatpush1.msra.mxu0 0.0
    %3878 = vmatprep.subr.mxu0 0.0
    %3879 = vmatpush1.msra.mxu0 0.0
    %3880 = vmatprep.subr.mxu0 0.0
    %3881 = vmatpush1.msra.mxu0 0.0
    %3882 = vmatprep.subr.mxu0 0.0
    %3883 = vmatpush1.msra.mxu0 0.0
    %3884 = vmatprep.subr.mxu0 0.0
    %3885 = vmatpush1.msra.mxu0 0.0
    %3886 = vmatprep.subr.mxu0 0.0
    %3887 = vmatpush1.msra.mxu0 0.0
    %3888 = vmatprep.subr.mxu0 0.0
    %3889 = vmatpush1.msra.mxu0 0.0
    %3890 = vmatprep.subr.mxu0 0.0
    %3891 = vmatpush1.msra.mxu0 0.0
    %3892 = vmatprep.mubr.f32.mxu0 0.0
    %3893 = vmatmul.mubr.f32.gmra.mrb[0].mxu0 %v3826
    %v3894 = vpop.f32.mrb[0].mxu0
    %v3895 = vadd.f32 %v3823, %v3894
    %v3896 = vpop.f32.mrb[0].mxu0
    %3897 = vdwg.mxu0
    %v3898 = vxor.u32 %v3895, 2147483648
    %v3899 = vmul.f32 %v3898, 1.442695
    %v3900 = vpow.pop %v3899
    %v3901 = vadd.f32 %v3900, 1.0
    %v3902 = vrcp.pop %v3901
    %v3903 = vmul.f32 1.0, %v3902
    %v3904 = vtanh.pop %v3895
    %v3905 = vmul.f32 %v3903, %v3684
    %3907 = vrot.lane.b32.xlu0 %v3904, 64
    %v3908 = vpop.permute.xlu0 %3907
    %v3910 = vmul.f32 %v3903, %v3908
    %3912 = vrot.lane.b32.xlu0 %v3910, 32
    %v3913 = vpop.permute.xlu0 %3912
    %v3915 = vadd.f32 %v3905, %v3913
    %v3916 = vtanh.pop %v3915
    %3918 = vrot.lane.b32.xlu0 %v3916, 64
    %v3919 = vpop.permute.xlu0 %3918
    %v3921 = vmul.f32 %v3903, %v3919
    %v3923 = vcombine.high %v3921, %v3921
    %v3925 = vunpack.c.l.s4 1966171168
    %v3926 = vunpack.c.0.s8 %v3925
    %v3927 = vlaneseq
    %v3928 = vshrl.u32 %v3927, 7
    %v3929 = vsub.s32 %v3926, %v3928
    %v3930 = vrot.slane %v3921, %v3929
    %v3932 = vunpack.c.l.s4 1966171168
    %v3933 = vunpack.c.0.s8 %v3932
    %v3934 = vlaneseq
    %v3935 = vshrl.u32 %v3934, 7
    %v3936 = vsub.s32 %v3933, %v3935
    %v3937 = vrot.slane %v3923, %v3936
    %v3938 = vcombine.high %v3930, %v3930
    %v3939 = vcombine.high %v3937, %v3937
    %v3941 = vunpack.c.l.s4 1966171168
    %v3942 = vunpack.c.0.s8 %v3941
    %v3943 = vlaneseq
    %v3944 = vshrl.u32 %v3943, 7
    %v3945 = vsub.s32 %v3942, %v3944
    %v3946 = vrot.slane %v3930, %v3945
    %v3948 = vunpack.c.l.s4 1966171168
    %v3949 = vunpack.c.0.s8 %v3948
    %v3950 = vlaneseq
    %v3951 = vshrl.u32 %v3950, 7
    %v3952 = vsub.s32 %v3949, %v3951
    %v3953 = vrot.slane %v3937, %v3952
    %v3955 = vunpack.c.l.s4 1966171168
    %v3956 = vunpack.c.0.s8 %v3955
    %v3957 = vlaneseq
    %v3958 = vshrl.u32 %v3957, 7
    %v3959 = vsub.s32 %v3956, %v3958
    %v3960 = vrot.slane %v3938, %v3959
    %v3962 = vunpack.c.l.s4 1966171168
    %v3963 = vunpack.c.0.s8 %v3962
    %v3964 = vlaneseq
    %v3965 = vshrl.u32 %v3964, 7
    %v3966 = vsub.s32 %v3963, %v3965
    %v3967 = vrot.slane %v3939, %v3966
    %v3968 = vcombine.high %v3946, %v3946
    %v3969 = vcombine.high %v3953, %v3953
    %v3970 = vcombine.high %v3960, %v3960
    %v3971 = vcombine.high %v3967, %v3967
    %v3972 = vlaneseq
    %v3973 = vshrl.u32 %v3972, 7
    %v3974 = vsub.s32 0, %v3973
    %v3975 = vrot.slane %v3946, %v3974
    %v3976 = vlaneseq
    %v3977 = vshrl.u32 %v3976, 7
    %v3978 = vsub.s32 0, %v3977
    %v3979 = vrot.slane %v3960, %v3978
    %v3980 = vlaneseq
    %v3981 = vshrl.u32 %v3980, 7
    %v3982 = vsub.s32 0, %v3981
    %v3983 = vrot.slane %v3968, %v3982
    %v3984 = vlaneseq
    %v3985 = vshrl.u32 %v3984, 7
    %v3986 = vsub.s32 0, %v3985
    %v3987 = vrot.slane %v3970, %v3986
    %v3988 = vlaneseq
    %v3989 = vshrl.u32 %v3988, 7
    %v3990 = vsub.s32 0, %v3989
    %v3991 = vrot.slane %v3953, %v3990
    %v3992 = vlaneseq
    %v3993 = vshrl.u32 %v3992, 7
    %v3994 = vsub.s32 0, %v3993
    %v3995 = vrot.slane %v3967, %v3994
    %v3996 = vlaneseq
    %v3997 = vshrl.u32 %v3996, 7
    %v3998 = vsub.s32 0, %v3997
    %v3999 = vrot.slane %v3969, %v3998
    %v4000 = vlaneseq
    %v4001 = vshrl.u32 %v4000, 7
    %v4002 = vsub.s32 0, %v4001
    %v4003 = vrot.slane %v3971, %v4002
    %4004 = vrot.lane.b32.xlu0 %v3975, 32
    %v4005 = vpop.permute.xlu0 %4004
    %4006 = vrot.lane.b32.xlu0 %v3979, 32
    %v4007 = vpop.permute.xlu0 %4006
    %4008 = vrot.lane.b32.xlu0 %v3983, 32
    %v4009 = vpop.permute.xlu0 %4008
    %4010 = vrot.lane.b32.xlu0 %v3987, 32
    %v4011 = vpop.permute.xlu0 %4010
    %4012 = vrot.lane.b32.xlu0 %v3991, 32
    %v4013 = vpop.permute.xlu0 %4012
    %4014 = vrot.lane.b32.xlu0 %v3995, 32
    %v4015 = vpop.permute.xlu0 %4014
    %4016 = vrot.lane.b32.xlu0 %v3999, 32
    %v4017 = vpop.permute.xlu0 %4016
    %4018 = vrot.lane.b32.xlu0 %v4003, 32
    %v4019 = vpop.permute.xlu0 %4018
    %4028 = vst.msk [vmem:[#allocation3] sm:$0x1] %vm509, %v4005
    %4029 = vst.msk [vmem:[#allocation3 + $0x8] sm:$0x1] %vm509, %v4007
    %4030 = vst.msk [vmem:[#allocation3 + $0x10] sm:$0x1] %vm509, %v4009
    %4031 = vst.msk [vmem:[#allocation3 + $0x18] sm:$0x1] %vm509, %v4011
    %4032 = vst.msk [vmem:[#allocation3 + $0x20] sm:$0x1] %vm509, %v4013
    %4033 = vst.msk [vmem:[#allocation3 + $0x28] sm:$0x1] %vm509, %v4015
    %4034 = vst.msk [vmem:[#allocation3 + $0x30] sm:$0x1] %vm509, %v4017
    %4035 = vst.msk [vmem:[#allocation3 + $0x38] sm:$0x1] %vm509, %v4019
    %s4036 = scalar_lea.vmem %s1, 8
    %v4037 = vld [vmem:[%s4036] sm:$0xff]
    %4038 = vrot.lane.b32.xlu0 %v3921, 64
    %v4039 = vpop.permute.xlu0 %4038
    %v4041 = vsel %vm61, %v4037, %v4039
    %v4042 = vld [vmem:[%s9] sm:$0xff]
    %v4043 = vld [vmem:[%s9 + $0x8] sm:$0xff]
    %v4044 = vld [vmem:[%s9 + $0x10] sm:$0xff]
    %v4045 = vld [vmem:[%s9 + $0x18] sm:$0xff]
    %v4046 = vld [vmem:[%s9 + $0x20] sm:$0xff]
    %v4047 = vld [vmem:[%s9 + $0x28] sm:$0xff]
    %v4048 = vld [vmem:[%s9 + $0x30] sm:$0xff]
    %v4049 = vld [vmem:[%s9 + $0x38] sm:$0xff]
    %v4050 = vld [vmem:[%s10] sm:$0x1]
    %v4052 = vlaneseq
    %v4053 = vshrl.u32 %v4052, 7
    %v4054 = vsub.s32 0, %v4053
    %v4055 = vrot.slane %v4050, %v4054
    %v4058 = vsel %vm78, %v4041, 0
    %4060 = vmatprep.subr.mxu0 0.0
    %4061 = vmatpush1.msra.mxu0 %v4042
    %4062 = vmatprep.subr.mxu0 0.0
    %4063 = vmatpush1.msra.mxu0 %v4043
    %4064 = vmatprep.subr.mxu0 0.0
    %4065 = vmatpush1.msra.mxu0 %v4044
    %4066 = vmatprep.subr.mxu0 0.0
    %4067 = vmatpush1.msra.mxu0 %v4045
    %4068 = vmatprep.subr.mxu0 0.0
    %4069 = vmatpush1.msra.mxu0 %v4046
    %4070 = vmatprep.subr.mxu0 0.0
    %4071 = vmatpush1.msra.mxu0 %v4047
    %4072 = vmatprep.subr.mxu0 0.0
    %4073 = vmatpush1.msra.mxu0 %v4048
    %4074 = vmatprep.subr.mxu0 0.0
    %4075 = vmatpush1.msra.mxu0 %v4049
    %4076 = vmatprep.subr.mxu0 0.0
    %4077 = vmatpush1.msra.mxu0 0.0
    %4078 = vmatprep.subr.mxu0 0.0
    %4079 = vmatpush1.msra.mxu0 0.0
    %4080 = vmatprep.subr.mxu0 0.0
    %4081 = vmatpush1.msra.mxu0 0.0
    %4082 = vmatprep.subr.mxu0 0.0
    %4083 = vmatpush1.msra.mxu0 0.0
    %4084 = vmatprep.subr.mxu0 0.0
    %4085 = vmatpush1.msra.mxu0 0.0
    %4086 = vmatprep.subr.mxu0 0.0
    %4087 = vmatpush1.msra.mxu0 0.0
    %4088 = vmatprep.subr.mxu0 0.0
    %4089 = vmatpush1.msra.mxu0 0.0
    %4090 = vmatprep.subr.mxu0 0.0
    %4091 = vmatpush1.msra.mxu0 0.0
    %4092 = vmatprep.subr.mxu0 0.0
    %4093 = vmatpush1.msra.mxu0 0.0
    %4094 = vmatprep.subr.mxu0 0.0
    %4095 = vmatpush1.msra.mxu0 0.0
    %4096 = vmatprep.subr.mxu0 0.0
    %4097 = vmatpush1.msra.mxu0 0.0
    %4098 = vmatprep.subr.mxu0 0.0
    %4099 = vmatpush1.msra.mxu0 0.0
    %4100 = vmatprep.subr.mxu0 0.0
    %4101 = vmatpush1.msra.mxu0 0.0
    %4102 = vmatprep.subr.mxu0 0.0
    %4103 = vmatpush1.msra.mxu0 0.0
    %4104 = vmatprep.subr.mxu0 0.0
    %4105 = vmatpush1.msra.mxu0 0.0
    %4106 = vmatprep.subr.mxu0 0.0
    %4107 = vmatpush1.msra.mxu0 0.0
    %4108 = vmatprep.subr.mxu0 0.0
    %4109 = vmatpush1.msra.mxu0 0.0
    %4110 = vmatprep.subr.mxu0 0.0
    %4111 = vmatpush1.msra.mxu0 0.0
    %4112 = vmatprep.subr.mxu0 0.0
    %4113 = vmatpush1.msra.mxu0 0.0
    %4114 = vmatprep.subr.mxu0 0.0
    %4115 = vmatpush1.msra.mxu0 0.0
    %4116 = vmatprep.subr.mxu0 0.0
    %4117 = vmatpush1.msra.mxu0 0.0
    %4118 = vmatprep.subr.mxu0 0.0
    %4119 = vmatpush1.msra.mxu0 0.0
    %4120 = vmatprep.subr.mxu0 0.0
    %4121 = vmatpush1.msra.mxu0 0.0
    %4122 = vmatprep.subr.mxu0 0.0
    %4123 = vmatpush1.msra.mxu0 0.0
    %4124 = vmatprep.mubr.f32.mxu0 0.0
    %4125 = vmatmul.mubr.f32.gmra.mrb[0].mxu0 %v4058
    %v4126 = vpop.f32.mrb[0].mxu0
    %v4127 = vadd.f32 %v4055, %v4126
    %v4128 = vpop.f32.mrb[0].mxu0
    %4129 = vdwg.mxu0
    %v4130 = vxor.u32 %v4127, 2147483648
    %v4131 = vmul.f32 %v4130, 1.442695
    %v4132 = vpow.pop %v4131
    %v4133 = vadd.f32 %v4132, 1.0
    %v4134 = vrcp.pop %v4133
    %v4135 = vmul.f32 1.0, %v4134
    %v4136 = vtanh.pop %v4127
    %v4137 = vmul.f32 %v4135, %v3915
    %4139 = vrot.lane.b32.xlu0 %v4136, 64
    %v4140 = vpop.permute.xlu0 %4139
    %v4142 = vmul.f32 %v4135, %v4140
    %4144 = vrot.lane.b32.xlu0 %v4142, 32
    %v4145 = vpop.permute.xlu0 %4144
    %v4147 = vadd.f32 %v4137, %v4145
    %v4148 = vtanh.pop %v4147
    %4150 = vrot.lane.b32.xlu0 %v4148, 64
    %v4151 = vpop.permute.xlu0 %4150
    %v4153 = vmul.f32 %v4135, %v4151
    %v4155 = vcombine.high %v4153, %v4153
    %v4157 = vunpack.c.l.s4 1966171168
    %v4158 = vunpack.c.0.s8 %v4157
    %v4159 = vlaneseq
    %v4160 = vshrl.u32 %v4159, 7
    %v4161 = vsub.s32 %v4158, %v4160
    %v4162 = vrot.slane %v4153, %v4161
    %v4164 = vunpack.c.l.s4 1966171168
    %v4165 = vunpack.c.0.s8 %v4164
    %v4166 = vlaneseq
    %v4167 = vshrl.u32 %v4166, 7
    %v4168 = vsub.s32 %v4165, %v4167
    %v4169 = vrot.slane %v4155, %v4168
    %v4170 = vcombine.high %v4162, %v4162
    %v4171 = vcombine.high %v4169, %v4169
    %v4173 = vunpack.c.l.s4 1966171168
    %v4174 = vunpack.c.0.s8 %v4173
    %v4175 = vlaneseq
    %v4176 = vshrl.u32 %v4175, 7
    %v4177 = vsub.s32 %v4174, %v4176
    %v4178 = vrot.slane %v4162, %v4177
    %v4180 = vunpack.c.l.s4 1966171168
    %v4181 = vunpack.c.0.s8 %v4180
    %v4182 = vlaneseq
    %v4183 = vshrl.u32 %v4182, 7
    %v4184 = vsub.s32 %v4181, %v4183
    %v4185 = vrot.slane %v4169, %v4184
    %v4187 = vunpack.c.l.s4 1966171168
    %v4188 = vunpack.c.0.s8 %v4187
    %v4189 = vlaneseq
    %v4190 = vshrl.u32 %v4189, 7
    %v4191 = vsub.s32 %v4188, %v4190
    %v4192 = vrot.slane %v4170, %v4191
    %v4194 = vunpack.c.l.s4 1966171168
    %v4195 = vunpack.c.0.s8 %v4194
    %v4196 = vlaneseq
    %v4197 = vshrl.u32 %v4196, 7
    %v4198 = vsub.s32 %v4195, %v4197
    %v4199 = vrot.slane %v4171, %v4198
    %v4200 = vcombine.high %v4178, %v4178
    %v4201 = vcombine.high %v4185, %v4185
    %v4202 = vcombine.high %v4192, %v4192
    %v4203 = vcombine.high %v4199, %v4199
    %v4204 = vlaneseq
    %v4205 = vshrl.u32 %v4204, 7
    %v4206 = vsub.s32 0, %v4205
    %v4207 = vrot.slane %v4178, %v4206
    %v4208 = vlaneseq
    %v4209 = vshrl.u32 %v4208, 7
    %v4210 = vsub.s32 0, %v4209
    %v4211 = vrot.slane %v4192, %v4210
    %v4212 = vlaneseq
    %v4213 = vshrl.u32 %v4212, 7
    %v4214 = vsub.s32 0, %v4213
    %v4215 = vrot.slane %v4200, %v4214
    %v4216 = vlaneseq
    %v4217 = vshrl.u32 %v4216, 7
    %v4218 = vsub.s32 0, %v4217
    %v4219 = vrot.slane %v4202, %v4218
    %v4220 = vlaneseq
    %v4221 = vshrl.u32 %v4220, 7
    %v4222 = vsub.s32 0, %v4221
    %v4223 = vrot.slane %v4185, %v4222
    %v4224 = vlaneseq
    %v4225 = vshrl.u32 %v4224, 7
    %v4226 = vsub.s32 0, %v4225
    %v4227 = vrot.slane %v4199, %v4226
    %v4228 = vlaneseq
    %v4229 = vshrl.u32 %v4228, 7
    %v4230 = vsub.s32 0, %v4229
    %v4231 = vrot.slane %v4201, %v4230
    %v4232 = vlaneseq
    %v4233 = vshrl.u32 %v4232, 7
    %v4234 = vsub.s32 0, %v4233
    %v4235 = vrot.slane %v4203, %v4234
    %4236 = vrot.lane.b32.xlu0 %v4207, 32
    %v4237 = vpop.permute.xlu0 %4236
    %4238 = vrot.lane.b32.xlu0 %v4211, 32
    %v4239 = vpop.permute.xlu0 %4238
    %4240 = vrot.lane.b32.xlu0 %v4215, 32
    %v4241 = vpop.permute.xlu0 %4240
    %4242 = vrot.lane.b32.xlu0 %v4219, 32
    %v4243 = vpop.permute.xlu0 %4242
    %4244 = vrot.lane.b32.xlu0 %v4223, 32
    %v4245 = vpop.permute.xlu0 %4244
    %4246 = vrot.lane.b32.xlu0 %v4227, 32
    %v4247 = vpop.permute.xlu0 %4246
    %4248 = vrot.lane.b32.xlu0 %v4231, 32
    %v4249 = vpop.permute.xlu0 %4248
    %4250 = vrot.lane.b32.xlu0 %v4235, 32
    %v4251 = vpop.permute.xlu0 %4250
    %4260 = vst.msk [vmem:[#allocation3 + $0x1] sm:$0x1] %vm509, %v4237
    %4261 = vst.msk [vmem:[#allocation3 + $0x9] sm:$0x1] %vm509, %v4239
    %4262 = vst.msk [vmem:[#allocation3 + $0x11] sm:$0x1] %vm509, %v4241
    %4263 = vst.msk [vmem:[#allocation3 + $0x19] sm:$0x1] %vm509, %v4243
    %4264 = vst.msk [vmem:[#allocation3 + $0x21] sm:$0x1] %vm509, %v4245
    %4265 = vst.msk [vmem:[#allocation3 + $0x29] sm:$0x1] %vm509, %v4247
    %4266 = vst.msk [vmem:[#allocation3 + $0x31] sm:$0x1] %vm509, %v4249
    %4267 = vst.msk [vmem:[#allocation3 + $0x39] sm:$0x1] %vm509, %v4251
    %s4268 = scalar_lea.vmem %s1, 16
    %v4269 = vld [vmem:[%s4268] sm:$0xff]
    %4270 = vrot.lane.b32.xlu0 %v4153, 64
    %v4271 = vpop.permute.xlu0 %4270
    %v4273 = vsel %vm61, %v4269, %v4271
    %v4274 = vld [vmem:[%s9] sm:$0xff]
    %v4275 = vld [vmem:[%s9 + $0x8] sm:$0xff]
    %v4276 = vld [vmem:[%s9 + $0x10] sm:$0xff]
    %v4277 = vld [vmem:[%s9 + $0x18] sm:$0xff]
    %v4278 = vld [vmem:[%s9 + $0x20] sm:$0xff]
    %v4279 = vld [vmem:[%s9 + $0x28] sm:$0xff]
    %v4280 = vld [vmem:[%s9 + $0x30] sm:$0xff]
    %v4281 = vld [vmem:[%s9 + $0x38] sm:$0xff]
    %v4282 = vld [vmem:[%s10] sm:$0x1]
    %v4284 = vlaneseq
    %v4285 = vshrl.u32 %v4284, 7
    %v4286 = vsub.s32 0, %v4285
    %v4287 = vrot.slane %v4282, %v4286
    %v4290 = vsel %vm78, %v4273, 0
    %4292 = vmatprep.subr.mxu0 0.0
    %4293 = vmatpush1.msra.mxu0 %v4274
    %4294 = vmatprep.subr.mxu0 0.0
    %4295 = vmatpush1.msra.mxu0 %v4275
    %4296 = vmatprep.subr.mxu0 0.0
    %4297 = vmatpush1.msra.mxu0 %v4276
    %4298 = vmatprep.subr.mxu0 0.0
    %4299 = vmatpush1.msra.mxu0 %v4277
    %4300 = vmatprep.subr.mxu0 0.0
    %4301 = vmatpush1.msra.mxu0 %v4278
    %4302 = vmatprep.subr.mxu0 0.0
    %4303 = vmatpush1.msra.mxu0 %v4279
    %4304 = vmatprep.subr.mxu0 0.0
    %4305 = vmatpush1.msra.mxu0 %v4280
    %4306 = vmatprep.subr.mxu0 0.0
    %4307 = vmatpush1.msra.mxu0 %v4281
    %4308 = vmatprep.subr.mxu0 0.0
    %4309 = vmatpush1.msra.mxu0 0.0
    %4310 = vmatprep.subr.mxu0 0.0
    %4311 = vmatpush1.msra.mxu0 0.0
    %4312 = vmatprep.subr.mxu0 0.0
    %4313 = vmatpush1.msra.mxu0 0.0
    %4314 = vmatprep.subr.mxu0 0.0
    %4315 = vmatpush1.msra.mxu0 0.0
    %4316 = vmatprep.subr.mxu0 0.0
    %4317 = vmatpush1.msra.mxu0 0.0
    %4318 = vmatprep.subr.mxu0 0.0
    %4319 = vmatpush1.msra.mxu0 0.0
    %4320 = vmatprep.subr.mxu0 0.0
    %4321 = vmatpush1.msra.mxu0 0.0
    %4322 = vmatprep.subr.mxu0 0.0
    %4323 = vmatpush1.msra.mxu0 0.0
    %4324 = vmatprep.subr.mxu0 0.0
    %4325 = vmatpush1.msra.mxu0 0.0
    %4326 = vmatprep.subr.mxu0 0.0
    %4327 = vmatpush1.msra.mxu0 0.0
    %4328 = vmatprep.subr.mxu0 0.0
    %4329 = vmatpush1.msra.mxu0 0.0
    %4330 = vmatprep.subr.mxu0 0.0
    %4331 = vmatpush1.msra.mxu0 0.0
    %4332 = vmatprep.subr.mxu0 0.0
    %4333 = vmatpush1.msra.mxu0 0.0
    %4334 = vmatprep.subr.mxu0 0.0
    %4335 = vmatpush1.msra.mxu0 0.0
    %4336 = vmatprep.subr.mxu0 0.0
    %4337 = vmatpush1.msra.mxu0 0.0
    %4338 = vmatprep.subr.mxu0 0.0
    %4339 = vmatpush1.msra.mxu0 0.0
    %4340 = vmatprep.subr.mxu0 0.0
    %4341 = vmatpush1.msra.mxu0 0.0
    %4342 = vmatprep.subr.mxu0 0.0
    %4343 = vmatpush1.msra.mxu0 0.0
    %4344 = vmatprep.subr.mxu0 0.0
    %4345 = vmatpush1.msra.mxu0 0.0
    %4346 = vmatprep.subr.mxu0 0.0
    %4347 = vmatpush1.msra.mxu0 0.0
    %4348 = vmatprep.subr.mxu0 0.0
    %4349 = vmatpush1.msra.mxu0 0.0
    %4350 = vmatprep.subr.mxu0 0.0
    %4351 = vmatpush1.msra.mxu0 0.0
    %4352 = vmatprep.subr.mxu0 0.0
    %4353 = vmatpush1.msra.mxu0 0.0
    %4354 = vmatprep.subr.mxu0 0.0
    %4355 = vmatpush1.msra.mxu0 0.0
    %4356 = vmatprep.mubr.f32.mxu0 0.0
    %4357 = vmatmul.mubr.f32.gmra.mrb[0].mxu0 %v4290
    %v4358 = vpop.f32.mrb[0].mxu0
    %v4359 = vadd.f32 %v4287, %v4358
    %v4360 = vpop.f32.mrb[0].mxu0
    %4361 = vdwg.mxu0
    %v4362 = vxor.u32 %v4359, 2147483648
    %v4363 = vmul.f32 %v4362, 1.442695
    %v4364 = vpow.pop %v4363
    %v4365 = vadd.f32 %v4364, 1.0
    %v4366 = vrcp.pop %v4365
    %v4367 = vmul.f32 1.0, %v4366
    %v4368 = vtanh.pop %v4359
    %v4369 = vmul.f32 %v4367, %v4147
    %4371 = vrot.lane.b32.xlu0 %v4368, 64
    %v4372 = vpop.permute.xlu0 %4371
    %v4374 = vmul.f32 %v4367, %v4372
    %4376 = vrot.lane.b32.xlu0 %v4374, 32
    %v4377 = vpop.permute.xlu0 %4376
    %v4379 = vadd.f32 %v4369, %v4377
    %v4380 = vtanh.pop %v4379
    %4382 = vrot.lane.b32.xlu0 %v4380, 64
    %v4383 = vpop.permute.xlu0 %4382
    %v4385 = vmul.f32 %v4367, %v4383
    %v4387 = vcombine.high %v4385, %v4385
    %v4389 = vunpack.c.l.s4 1966171168
    %v4390 = vunpack.c.0.s8 %v4389
    %v4391 = vlaneseq
    %v4392 = vshrl.u32 %v4391, 7
    %v4393 = vsub.s32 %v4390, %v4392
    %v4394 = vrot.slane %v4385, %v4393
    %v4396 = vunpack.c.l.s4 1966171168
    %v4397 = vunpack.c.0.s8 %v4396
    %v4398 = vlaneseq
    %v4399 = vshrl.u32 %v4398, 7
    %v4400 = vsub.s32 %v4397, %v4399
    %v4401 = vrot.slane %v4387, %v4400
    %v4402 = vcombine.high %v4394, %v4394
    %v4403 = vcombine.high %v4401, %v4401
    %v4405 = vunpack.c.l.s4 1966171168
    %v4406 = vunpack.c.0.s8 %v4405
    %v4407 = vlaneseq
    %v4408 = vshrl.u32 %v4407, 7
    %v4409 = vsub.s32 %v4406, %v4408
    %v4410 = vrot.slane %v4394, %v4409
    %v4412 = vunpack.c.l.s4 1966171168
    %v4413 = vunpack.c.0.s8 %v4412
    %v4414 = vlaneseq
    %v4415 = vshrl.u32 %v4414, 7
    %v4416 = vsub.s32 %v4413, %v4415
    %v4417 = vrot.slane %v4401, %v4416
    %v4419 = vunpack.c.l.s4 1966171168
    %v4420 = vunpack.c.0.s8 %v4419
    %v4421 = vlaneseq
    %v4422 = vshrl.u32 %v4421, 7
    %v4423 = vsub.s32 %v4420, %v4422
    %v4424 = vrot.slane %v4402, %v4423
    %v4426 = vunpack.c.l.s4 1966171168
    %v4427 = vunpack.c.0.s8 %v4426
    %v4428 = vlaneseq
    %v4429 = vshrl.u32 %v4428, 7
    %v4430 = vsub.s32 %v4427, %v4429
    %v4431 = vrot.slane %v4403, %v4430
    %v4432 = vcombine.high %v4410, %v4410
    %v4433 = vcombine.high %v4417, %v4417
    %v4434 = vcombine.high %v4424, %v4424
    %v4435 = vcombine.high %v4431, %v4431
    %v4436 = vlaneseq
    %v4437 = vshrl.u32 %v4436, 7
    %v4438 = vsub.s32 0, %v4437
    %v4439 = vrot.slane %v4410, %v4438
    %v4440 = vlaneseq
    %v4441 = vshrl.u32 %v4440, 7
    %v4442 = vsub.s32 0, %v4441
    %v4443 = vrot.slane %v4424, %v4442
    %v4444 = vlaneseq
    %v4445 = vshrl.u32 %v4444, 7
    %v4446 = vsub.s32 0, %v4445
    %v4447 = vrot.slane %v4432, %v4446
    %v4448 = vlaneseq
    %v4449 = vshrl.u32 %v4448, 7
    %v4450 = vsub.s32 0, %v4449
    %v4451 = vrot.slane %v4434, %v4450
    %v4452 = vlaneseq
    %v4453 = vshrl.u32 %v4452, 7
    %v4454 = vsub.s32 0, %v4453
    %v4455 = vrot.slane %v4417, %v4454
    %v4456 = vlaneseq
    %v4457 = vshrl.u32 %v4456, 7
    %v4458 = vsub.s32 0, %v4457
    %v4459 = vrot.slane %v4431, %v4458
    %v4460 = vlaneseq
    %v4461 = vshrl.u32 %v4460, 7
    %v4462 = vsub.s32 0, %v4461
    %v4463 = vrot.slane %v4433, %v4462
    %v4464 = vlaneseq
    %v4465 = vshrl.u32 %v4464, 7
    %v4466 = vsub.s32 0, %v4465
    %v4467 = vrot.slane %v4435, %v4466
    %4468 = vrot.lane.b32.xlu0 %v4439, 32
    %v4469 = vpop.permute.xlu0 %4468
    %4470 = vrot.lane.b32.xlu0 %v4443, 32
    %v4471 = vpop.permute.xlu0 %4470
    %4472 = vrot.lane.b32.xlu0 %v4447, 32
    %v4473 = vpop.permute.xlu0 %4472
    %4474 = vrot.lane.b32.xlu0 %v4451, 32
    %v4475 = vpop.permute.xlu0 %4474
    %4476 = vrot.lane.b32.xlu0 %v4455, 32
    %v4477 = vpop.permute.xlu0 %4476
    %4478 = vrot.lane.b32.xlu0 %v4459, 32
    %v4479 = vpop.permute.xlu0 %4478
    %4480 = vrot.lane.b32.xlu0 %v4463, 32
    %v4481 = vpop.permute.xlu0 %4480
    %4482 = vrot.lane.b32.xlu0 %v4467, 32
    %v4483 = vpop.permute.xlu0 %4482
    %4492 = vst.msk [vmem:[#allocation3 + $0x2] sm:$0x1] %vm509, %v4469
    %4493 = vst.msk [vmem:[#allocation3 + $0xa] sm:$0x1] %vm509, %v4471
    %4494 = vst.msk [vmem:[#allocation3 + $0x12] sm:$0x1] %vm509, %v4473
    %4495 = vst.msk [vmem:[#allocation3 + $0x1a] sm:$0x1] %vm509, %v4475
    %4496 = vst.msk [vmem:[#allocation3 + $0x22] sm:$0x1] %vm509, %v4477
    %4497 = vst.msk [vmem:[#allocation3 + $0x2a] sm:$0x1] %vm509, %v4479
    %4498 = vst.msk [vmem:[#allocation3 + $0x32] sm:$0x1] %vm509, %v4481
    %4499 = vst.msk [vmem:[#allocation3 + $0x3a] sm:$0x1] %vm509, %v4483
    %s4500 = scalar_lea.vmem %s1, 24
    %v4501 = vld [vmem:[%s4500] sm:$0xff]
    %4502 = vrot.lane.b32.xlu0 %v4385, 64
    %v4503 = vpop.permute.xlu0 %4502
    %v4505 = vsel %vm61, %v4501, %v4503
    %v4506 = vld [vmem:[%s9] sm:$0xff]
    %v4507 = vld [vmem:[%s9 + $0x8] sm:$0xff]
    %v4508 = vld [vmem:[%s9 + $0x10] sm:$0xff]
    %v4509 = vld [vmem:[%s9 + $0x18] sm:$0xff]
    %v4510 = vld [vmem:[%s9 + $0x20] sm:$0xff]
    %v4511 = vld [vmem:[%s9 + $0x28] sm:$0xff]
    %v4512 = vld [vmem:[%s9 + $0x30] sm:$0xff]
    %v4513 = vld [vmem:[%s9 + $0x38] sm:$0xff]
    %v4514 = vld [vmem:[%s10] sm:$0x1]
    %v4516 = vlaneseq
    %v4517 = vshrl.u32 %v4516, 7
    %v4518 = vsub.s32 0, %v4517
    %v4519 = vrot.slane %v4514, %v4518
    %v4522 = vsel %vm78, %v4505, 0
    %4524 = vmatprep.subr.mxu0 0.0
    %4525 = vmatpush1.msra.mxu0 %v4506
    %4526 = vmatprep.subr.mxu0 0.0
    %4527 = vmatpush1.msra.mxu0 %v4507
    %4528 = vmatprep.subr.mxu0 0.0
    %4529 = vmatpush1.msra.mxu0 %v4508
    %4530 = vmatprep.subr.mxu0 0.0
    %4531 = vmatpush1.msra.mxu0 %v4509
    %4532 = vmatprep.subr.mxu0 0.0
    %4533 = vmatpush1.msra.mxu0 %v4510
    %4534 = vmatprep.subr.mxu0 0.0
    %4535 = vmatpush1.msra.mxu0 %v4511
    %4536 = vmatprep.subr.mxu0 0.0
    %4537 = vmatpush1.msra.mxu0 %v4512
    %4538 = vmatprep.subr.mxu0 0.0
    %4539 = vmatpush1.msra.mxu0 %v4513
    %4540 = vmatprep.subr.mxu0 0.0
    %4541 = vmatpush1.msra.mxu0 0.0
    %4542 = vmatprep.subr.mxu0 0.0
    %4543 = vmatpush1.msra.mxu0 0.0
    %4544 = vmatprep.subr.mxu0 0.0
    %4545 = vmatpush1.msra.mxu0 0.0
    %4546 = vmatprep.subr.mxu0 0.0
    %4547 = vmatpush1.msra.mxu0 0.0
    %4548 = vmatprep.subr.mxu0 0.0
    %4549 = vmatpush1.msra.mxu0 0.0
    %4550 = vmatprep.subr.mxu0 0.0
    %4551 = vmatpush1.msra.mxu0 0.0
    %4552 = vmatprep.subr.mxu0 0.0
    %4553 = vmatpush1.msra.mxu0 0.0
    %4554 = vmatprep.subr.mxu0 0.0
    %4555 = vmatpush1.msra.mxu0 0.0
    %4556 = vmatprep.subr.mxu0 0.0
    %4557 = vmatpush1.msra.mxu0 0.0
    %4558 = vmatprep.subr.mxu0 0.0
    %4559 = vmatpush1.msra.mxu0 0.0
    %4560 = vmatprep.subr.mxu0 0.0
    %4561 = vmatpush1.msra.mxu0 0.0
    %4562 = vmatprep.subr.mxu0 0.0
    %4563 = vmatpush1.msra.mxu0 0.0
    %4564 = vmatprep.subr.mxu0 0.0
    %4565 = vmatpush1.msra.mxu0 0.0
    %4566 = vmatprep.subr.mxu0 0.0
    %4567 = vmatpush1.msra.mxu0 0.0
    %4568 = vmatprep.subr.mxu0 0.0
    %4569 = vmatpush1.msra.mxu0 0.0
    %4570 = vmatprep.subr.mxu0 0.0
    %4571 = vmatpush1.msra.mxu0 0.0
    %4572 = vmatprep.subr.mxu0 0.0
    %4573 = vmatpush1.msra.mxu0 0.0
    %4574 = vmatprep.subr.mxu0 0.0
    %4575 = vmatpush1.msra.mxu0 0.0
    %4576 = vmatprep.subr.mxu0 0.0
    %4577 = vmatpush1.msra.mxu0 0.0
    %4578 = vmatprep.subr.mxu0 0.0
    %4579 = vmatpush1.msra.mxu0 0.0
    %4580 = vmatprep.subr.mxu0 0.0
    %4581 = vmatpush1.msra.mxu0 0.0
    %4582 = vmatprep.subr.mxu0 0.0
    %4583 = vmatpush1.msra.mxu0 0.0
    %4584 = vmatprep.subr.mxu0 0.0
    %4585 = vmatpush1.msra.mxu0 0.0
    %4586 = vmatprep.subr.mxu0 0.0
    %4587 = vmatpush1.msra.mxu0 0.0
    %4588 = vmatprep.mubr.f32.mxu0 0.0
    %4589 = vmatmul.mubr.f32.gmra.mrb[0].mxu0 %v4522
    %v4590 = vpop.f32.mrb[0].mxu0
    %v4591 = vadd.f32 %v4519, %v4590
    %v4592 = vpop.f32.mrb[0].mxu0
    %4593 = vdwg.mxu0
    %v4594 = vxor.u32 %v4591, 2147483648
    %v4595 = vmul.f32 %v4594, 1.442695
    %v4596 = vpow.pop %v4595
    %v4597 = vadd.f32 %v4596, 1.0
    %v4598 = vrcp.pop %v4597
    %v4599 = vmul.f32 1.0, %v4598
    %v4600 = vtanh.pop %v4591
    %v4601 = vmul.f32 %v4599, %v4379
    %4603 = vrot.lane.b32.xlu0 %v4600, 64
    %v4604 = vpop.permute.xlu0 %4603
    %v4606 = vmul.f32 %v4599, %v4604
    %4608 = vrot.lane.b32.xlu0 %v4606, 32
    %v4609 = vpop.permute.xlu0 %4608
    %v4611 = vadd.f32 %v4601, %v4609
    %v4612 = vtanh.pop %v4611
    %4614 = vrot.lane.b32.xlu0 %v4612, 64
    %v4615 = vpop.permute.xlu0 %4614
    %v4617 = vmul.f32 %v4599, %v4615
    %v4619 = vcombine.high %v4617, %v4617
    %v4621 = vunpack.c.l.s4 1966171168
    %v4622 = vunpack.c.0.s8 %v4621
    %v4623 = vlaneseq
    %v4624 = vshrl.u32 %v4623, 7
    %v4625 = vsub.s32 %v4622, %v4624
    %v4626 = vrot.slane %v4617, %v4625
    %v4628 = vunpack.c.l.s4 1966171168
    %v4629 = vunpack.c.0.s8 %v4628
    %v4630 = vlaneseq
    %v4631 = vshrl.u32 %v4630, 7
    %v4632 = vsub.s32 %v4629, %v4631
    %v4633 = vrot.slane %v4619, %v4632
    %v4634 = vcombine.high %v4626, %v4626
    %v4635 = vcombine.high %v4633, %v4633
    %v4637 = vunpack.c.l.s4 1966171168
    %v4638 = vunpack.c.0.s8 %v4637
    %v4639 = vlaneseq
    %v4640 = vshrl.u32 %v4639, 7
    %v4641 = vsub.s32 %v4638, %v4640
    %v4642 = vrot.slane %v4626, %v4641
    %v4644 = vunpack.c.l.s4 1966171168
    %v4645 = vunpack.c.0.s8 %v4644
    %v4646 = vlaneseq
    %v4647 = vshrl.u32 %v4646, 7
    %v4648 = vsub.s32 %v4645, %v4647
    %v4649 = vrot.slane %v4633, %v4648
    %v4651 = vunpack.c.l.s4 1966171168
    %v4652 = vunpack.c.0.s8 %v4651
    %v4653 = vlaneseq
    %v4654 = vshrl.u32 %v4653, 7
    %v4655 = vsub.s32 %v4652, %v4654
    %v4656 = vrot.slane %v4634, %v4655
    %v4658 = vunpack.c.l.s4 1966171168
    %v4659 = vunpack.c.0.s8 %v4658
    %v4660 = vlaneseq
    %v4661 = vshrl.u32 %v4660, 7
    %v4662 = vsub.s32 %v4659, %v4661
    %v4663 = vrot.slane %v4635, %v4662
    %v4664 = vcombine.high %v4642, %v4642
    %v4665 = vcombine.high %v4649, %v4649
    %v4666 = vcombine.high %v4656, %v4656
    %v4667 = vcombine.high %v4663, %v4663
    %v4668 = vlaneseq
    %v4669 = vshrl.u32 %v4668, 7
    %v4670 = vsub.s32 0, %v4669
    %v4671 = vrot.slane %v4642, %v4670
    %v4672 = vlaneseq
    %v4673 = vshrl.u32 %v4672, 7
    %v4674 = vsub.s32 0, %v4673
    %v4675 = vrot.slane %v4656, %v4674
    %v4676 = vlaneseq
    %v4677 = vshrl.u32 %v4676, 7
    %v4678 = vsub.s32 0, %v4677
    %v4679 = vrot.slane %v4664, %v4678
    %v4680 = vlaneseq
    %v4681 = vshrl.u32 %v4680, 7
    %v4682 = vsub.s32 0, %v4681
    %v4683 = vrot.slane %v4666, %v4682
    %v4684 = vlaneseq
    %v4685 = vshrl.u32 %v4684, 7
    %v4686 = vsub.s32 0, %v4685
    %v4687 = vrot.slane %v4649, %v4686
    %v4688 = vlaneseq
    %v4689 = vshrl.u32 %v4688, 7
    %v4690 = vsub.s32 0, %v4689
    %v4691 = vrot.slane %v4663, %v4690
    %v4692 = vlaneseq
    %v4693 = vshrl.u32 %v4692, 7
    %v4694 = vsub.s32 0, %v4693
    %v4695 = vrot.slane %v4665, %v4694
    %v4696 = vlaneseq
    %v4697 = vshrl.u32 %v4696, 7
    %v4698 = vsub.s32 0, %v4697
    %v4699 = vrot.slane %v4667, %v4698
    %4700 = vrot.lane.b32.xlu0 %v4671, 32
    %v4701 = vpop.permute.xlu0 %4700
    %4702 = vrot.lane.b32.xlu0 %v4675, 32
    %v4703 = vpop.permute.xlu0 %4702
    %4704 = vrot.lane.b32.xlu0 %v4679, 32
    %v4705 = vpop.permute.xlu0 %4704
    %4706 = vrot.lane.b32.xlu0 %v4683, 32
    %v4707 = vpop.permute.xlu0 %4706
    %4708 = vrot.lane.b32.xlu0 %v4687, 32
    %v4709 = vpop.permute.xlu0 %4708
    %4710 = vrot.lane.b32.xlu0 %v4691, 32
    %v4711 = vpop.permute.xlu0 %4710
    %4712 = vrot.lane.b32.xlu0 %v4695, 32
    %v4713 = vpop.permute.xlu0 %4712
    %4714 = vrot.lane.b32.xlu0 %v4699, 32
    %v4715 = vpop.permute.xlu0 %4714
    %4724 = vst.msk [vmem:[#allocation3 + $0x3] sm:$0x1] %vm509, %v4701
    %4725 = vst.msk [vmem:[#allocation3 + $0xb] sm:$0x1] %vm509, %v4703
    %4726 = vst.msk [vmem:[#allocation3 + $0x13] sm:$0x1] %vm509, %v4705
    %4727 = vst.msk [vmem:[#allocation3 + $0x1b] sm:$0x1] %vm509, %v4707
    %4728 = vst.msk [vmem:[#allocation3 + $0x23] sm:$0x1] %vm509, %v4709
    %4729 = vst.msk [vmem:[#allocation3 + $0x2b] sm:$0x1] %vm509, %v4711
    %4730 = vst.msk [vmem:[#allocation3 + $0x33] sm:$0x1] %vm509, %v4713
    %4731 = vst.msk [vmem:[#allocation3 + $0x3b] sm:$0x1] %vm509, %v4715
    %s4732 = scalar_lea.vmem %s1, 32
    %v4733 = vld [vmem:[%s4732] sm:$0xff]
    %4734 = vrot.lane.b32.xlu0 %v4617, 64
    %v4735 = vpop.permute.xlu0 %4734
    %v4737 = vsel %vm61, %v4733, %v4735
    %v4738 = vld [vmem:[%s9] sm:$0xff]
    %v4739 = vld [vmem:[%s9 + $0x8] sm:$0xff]
    %v4740 = vld [vmem:[%s9 + $0x10] sm:$0xff]
    %v4741 = vld [vmem:[%s9 + $0x18] sm:$0xff]
    %v4742 = vld [vmem:[%s9 + $0x20] sm:$0xff]
    %v4743 = vld [vmem:[%s9 + $0x28] sm:$0xff]
    %v4744 = vld [vmem:[%s9 + $0x30] sm:$0xff]
    %v4745 = vld [vmem:[%s9 + $0x38] sm:$0xff]
    %v4746 = vld [vmem:[%s10] sm:$0x1]
    %v4748 = vlaneseq
    %v4749 = vshrl.u32 %v4748, 7
    %v4750 = vsub.s32 0, %v4749
    %v4751 = vrot.slane %v4746, %v4750
    %v4754 = vsel %vm78, %v4737, 0
    %4756 = vmatprep.subr.mxu0 0.0
    %4757 = vmatpush1.msra.mxu0 %v4738
    %4758 = vmatprep.subr.mxu0 0.0
    %4759 = vmatpush1.msra.mxu0 %v4739
    %4760 = vmatprep.subr.mxu0 0.0
    %4761 = vmatpush1.msra.mxu0 %v4740
    %4762 = vmatprep.subr.mxu0 0.0
    %4763 = vmatpush1.msra.mxu0 %v4741
    %4764 = vmatprep.subr.mxu0 0.0
    %4765 = vmatpush1.msra.mxu0 %v4742
    %4766 = vmatprep.subr.mxu0 0.0
    %4767 = vmatpush1.msra.mxu0 %v4743
    %4768 = vmatprep.subr.mxu0 0.0
    %4769 = vmatpush1.msra.mxu0 %v4744
    %4770 = vmatprep.subr.mxu0 0.0
    %4771 = vmatpush1.msra.mxu0 %v4745
    %4772 = vmatprep.subr.mxu0 0.0
    %4773 = vmatpush1.msra.mxu0 0.0
    %4774 = vmatprep.subr.mxu0 0.0
    %4775 = vmatpush1.msra.mxu0 0.0
    %4776 = vmatprep.subr.mxu0 0.0
    %4777 = vmatpush1.msra.mxu0 0.0
    %4778 = vmatprep.subr.mxu0 0.0
    %4779 = vmatpush1.msra.mxu0 0.0
    %4780 = vmatprep.subr.mxu0 0.0
    %4781 = vmatpush1.msra.mxu0 0.0
    %4782 = vmatprep.subr.mxu0 0.0
    %4783 = vmatpush1.msra.mxu0 0.0
    %4784 = vmatprep.subr.mxu0 0.0
    %4785 = vmatpush1.msra.mxu0 0.0
    %4786 = vmatprep.subr.mxu0 0.0
    %4787 = vmatpush1.msra.mxu0 0.0
    %4788 = vmatprep.subr.mxu0 0.0
    %4789 = vmatpush1.msra.mxu0 0.0
    %4790 = vmatprep.subr.mxu0 0.0
    %4791 = vmatpush1.msra.mxu0 0.0
    %4792 = vmatprep.subr.mxu0 0.0
    %4793 = vmatpush1.msra.mxu0 0.0
    %4794 = vmatprep.subr.mxu0 0.0
    %4795 = vmatpush1.msra.mxu0 0.0
    %4796 = vmatprep.subr.mxu0 0.0
    %4797 = vmatpush1.msra.mxu0 0.0
    %4798 = vmatprep.subr.mxu0 0.0
    %4799 = vmatpush1.msra.mxu0 0.0
    %4800 = vmatprep.subr.mxu0 0.0
    %4801 = vmatpush1.msra.mxu0 0.0
    %4802 = vmatprep.subr.mxu0 0.0
    %4803 = vmatpush1.msra.mxu0 0.0
    %4804 = vmatprep.subr.mxu0 0.0
    %4805 = vmatpush1.msra.mxu0 0.0
    %4806 = vmatprep.subr.mxu0 0.0
    %4807 = vmatpush1.msra.mxu0 0.0
    %4808 = vmatprep.subr.mxu0 0.0
    %4809 = vmatpush1.msra.mxu0 0.0
    %4810 = vmatprep.subr.mxu0 0.0
    %4811 = vmatpush1.msra.mxu0 0.0
    %4812 = vmatprep.subr.mxu0 0.0
    %4813 = vmatpush1.msra.mxu0 0.0
    %4814 = vmatprep.subr.mxu0 0.0
    %4815 = vmatpush1.msra.mxu0 0.0
    %4816 = vmatprep.subr.mxu0 0.0
    %4817 = vmatpush1.msra.mxu0 0.0
    %4818 = vmatprep.subr.mxu0 0.0
    %4819 = vmatpush1.msra.mxu0 0.0
    %4820 = vmatprep.mubr.f32.mxu0 0.0
    %4821 = vmatmul.mubr.f32.gmra.mrb[0].mxu0 %v4754
    %v4822 = vpop.f32.mrb[0].mxu0
    %v4823 = vadd.f32 %v4751, %v4822
    %v4824 = vpop.f32.mrb[0].mxu0
    %4825 = vdwg.mxu0
    %v4826 = vxor.u32 %v4823, 2147483648
    %v4827 = vmul.f32 %v4826, 1.442695
    %v4828 = vpow.pop %v4827
    %v4829 = vadd.f32 %v4828, 1.0
    %v4830 = vrcp.pop %v4829
    %v4831 = vmul.f32 1.0, %v4830
    %v4832 = vtanh.pop %v4823
    %v4833 = vmul.f32 %v4831, %v4611
    %4835 = vrot.lane.b32.xlu0 %v4832, 64
    %v4836 = vpop.permute.xlu0 %4835
    %v4838 = vmul.f32 %v4831, %v4836
    %4840 = vrot.lane.b32.xlu0 %v4838, 32
    %v4841 = vpop.permute.xlu0 %4840
    %v4843 = vadd.f32 %v4833, %v4841
    %v4844 = vtanh.pop %v4843
    %4846 = vrot.lane.b32.xlu0 %v4844, 64
    %v4847 = vpop.permute.xlu0 %4846
    %v4849 = vmul.f32 %v4831, %v4847
    %v4851 = vcombine.high %v4849, %v4849
    %v4853 = vunpack.c.l.s4 1966171168
    %v4854 = vunpack.c.0.s8 %v4853
    %v4855 = vlaneseq
    %v4856 = vshrl.u32 %v4855, 7
    %v4857 = vsub.s32 %v4854, %v4856
    %v4858 = vrot.slane %v4849, %v4857
    %v4860 = vunpack.c.l.s4 1966171168
    %v4861 = vunpack.c.0.s8 %v4860
    %v4862 = vlaneseq
    %v4863 = vshrl.u32 %v4862, 7
    %v4864 = vsub.s32 %v4861, %v4863
    %v4865 = vrot.slane %v4851, %v4864
    %v4866 = vcombine.high %v4858, %v4858
    %v4867 = vcombine.high %v4865, %v4865
    %v4869 = vunpack.c.l.s4 1966171168
    %v4870 = vunpack.c.0.s8 %v4869
    %v4871 = vlaneseq
    %v4872 = vshrl.u32 %v4871, 7
    %v4873 = vsub.s32 %v4870, %v4872
    %v4874 = vrot.slane %v4858, %v4873
    %v4876 = vunpack.c.l.s4 1966171168
    %v4877 = vunpack.c.0.s8 %v4876
    %v4878 = vlaneseq
    %v4879 = vshrl.u32 %v4878, 7
    %v4880 = vsub.s32 %v4877, %v4879
    %v4881 = vrot.slane %v4865, %v4880
    %v4883 = vunpack.c.l.s4 1966171168
    %v4884 = vunpack.c.0.s8 %v4883
    %v4885 = vlaneseq
    %v4886 = vshrl.u32 %v4885, 7
    %v4887 = vsub.s32 %v4884, %v4886
    %v4888 = vrot.slane %v4866, %v4887
    %v4890 = vunpack.c.l.s4 1966171168
    %v4891 = vunpack.c.0.s8 %v4890
    %v4892 = vlaneseq
    %v4893 = vshrl.u32 %v4892, 7
    %v4894 = vsub.s32 %v4891, %v4893
    %v4895 = vrot.slane %v4867, %v4894
    %v4896 = vcombine.high %v4874, %v4874
    %v4897 = vcombine.high %v4881, %v4881
    %v4898 = vcombine.high %v4888, %v4888
    %v4899 = vcombine.high %v4895, %v4895
    %v4900 = vlaneseq
    %v4901 = vshrl.u32 %v4900, 7
    %v4902 = vsub.s32 0, %v4901
    %v4903 = vrot.slane %v4874, %v4902
    %v4904 = vlaneseq
    %v4905 = vshrl.u32 %v4904, 7
    %v4906 = vsub.s32 0, %v4905
    %v4907 = vrot.slane %v4888, %v4906
    %v4908 = vlaneseq
    %v4909 = vshrl.u32 %v4908, 7
    %v4910 = vsub.s32 0, %v4909
    %v4911 = vrot.slane %v4896, %v4910
    %v4912 = vlaneseq
    %v4913 = vshrl.u32 %v4912, 7
    %v4914 = vsub.s32 0, %v4913
    %v4915 = vrot.slane %v4898, %v4914
    %v4916 = vlaneseq
    %v4917 = vshrl.u32 %v4916, 7
    %v4918 = vsub.s32 0, %v4917
    %v4919 = vrot.slane %v4881, %v4918
    %v4920 = vlaneseq
    %v4921 = vshrl.u32 %v4920, 7
    %v4922 = vsub.s32 0, %v4921
    %v4923 = vrot.slane %v4895, %v4922
    %v4924 = vlaneseq
    %v4925 = vshrl.u32 %v4924, 7
    %v4926 = vsub.s32 0, %v4925
    %v4927 = vrot.slane %v4897, %v4926
    %v4928 = vlaneseq
    %v4929 = vshrl.u32 %v4928, 7
    %v4930 = vsub.s32 0, %v4929
    %v4931 = vrot.slane %v4899, %v4930
    %4932 = vrot.lane.b32.xlu0 %v4903, 32
    %v4933 = vpop.permute.xlu0 %4932
    %4934 = vrot.lane.b32.xlu0 %v4907, 32
    %v4935 = vpop.permute.xlu0 %4934
    %4936 = vrot.lane.b32.xlu0 %v4911, 32
    %v4937 = vpop.permute.xlu0 %4936
    %4938 = vrot.lane.b32.xlu0 %v4915, 32
    %v4939 = vpop.permute.xlu0 %4938
    %4940 = vrot.lane.b32.xlu0 %v4919, 32
    %v4941 = vpop.permute.xlu0 %4940
    %4942 = vrot.lane.b32.xlu0 %v4923, 32
    %v4943 = vpop.permute.xlu0 %4942
    %4944 = vrot.lane.b32.xlu0 %v4927, 32
    %v4945 = vpop.permute.xlu0 %4944
    %4946 = vrot.lane.b32.xlu0 %v4931, 32
    %v4947 = vpop.permute.xlu0 %4946
    %4956 = vst.msk [vmem:[#allocation3 + $0x4] sm:$0x1] %vm509, %v4933
    %4957 = vst.msk [vmem:[#allocation3 + $0xc] sm:$0x1] %vm509, %v4935
    %4958 = vst.msk [vmem:[#allocation3 + $0x14] sm:$0x1] %vm509, %v4937
    %4959 = vst.msk [vmem:[#allocation3 + $0x1c] sm:$0x1] %vm509, %v4939
    %4960 = vst.msk [vmem:[#allocation3 + $0x24] sm:$0x1] %vm509, %v4941
    %4961 = vst.msk [vmem:[#allocation3 + $0x2c] sm:$0x1] %vm509, %v4943
    %4962 = vst.msk [vmem:[#allocation3 + $0x34] sm:$0x1] %vm509, %v4945
    %4963 = vst.msk [vmem:[#allocation3 + $0x3c] sm:$0x1] %vm509, %v4947
    %s4964 = scalar_lea.vmem %s1, 40
    %v4965 = vld [vmem:[%s4964] sm:$0xff]
    %4966 = vrot.lane.b32.xlu0 %v4849, 64
    %v4967 = vpop.permute.xlu0 %4966
    %v4969 = vsel %vm61, %v4965, %v4967
    %v4970 = vld [vmem:[%s9] sm:$0xff]
    %v4971 = vld [vmem:[%s9 + $0x8] sm:$0xff]
    %v4972 = vld [vmem:[%s9 + $0x10] sm:$0xff]
    %v4973 = vld [vmem:[%s9 + $0x18] sm:$0xff]
    %v4974 = vld [vmem:[%s9 + $0x20] sm:$0xff]
    %v4975 = vld [vmem:[%s9 + $0x28] sm:$0xff]
    %v4976 = vld [vmem:[%s9 + $0x30] sm:$0xff]
    %v4977 = vld [vmem:[%s9 + $0x38] sm:$0xff]
    %v4978 = vld [vmem:[%s10] sm:$0x1]
    %v4980 = vlaneseq
    %v4981 = vshrl.u32 %v4980, 7
    %v4982 = vsub.s32 0, %v4981
    %v4983 = vrot.slane %v4978, %v4982
    %v4986 = vsel %vm78, %v4969, 0
    %4988 = vmatprep.subr.mxu0 0.0
    %4989 = vmatpush1.msra.mxu0 %v4970
    %4990 = vmatprep.subr.mxu0 0.0
    %4991 = vmatpush1.msra.mxu0 %v4971
    %4992 = vmatprep.subr.mxu0 0.0
    %4993 = vmatpush1.msra.mxu0 %v4972
    %4994 = vmatprep.subr.mxu0 0.0
    %4995 = vmatpush1.msra.mxu0 %v4973
    %4996 = vmatprep.subr.mxu0 0.0
    %4997 = vmatpush1.msra.mxu0 %v4974
    %4998 = vmatprep.subr.mxu0 0.0
    %4999 = vmatpush1.msra.mxu0 %v4975
    %5000 = vmatprep.subr.mxu0 0.0
    %5001 = vmatpush1.msra.mxu0 %v4976
    %5002 = vmatprep.subr.mxu0 0.0
    %5003 = vmatpush1.msra.mxu0 %v4977
    %5004 = vmatprep.subr.mxu0 0.0
    %5005 = vmatpush1.msra.mxu0 0.0
    %5006 = vmatprep.subr.mxu0 0.0
    %5007 = vmatpush1.msra.mxu0 0.0
    %5008 = vmatprep.subr.mxu0 0.0
    %5009 = vmatpush1.msra.mxu0 0.0
    %5010 = vmatprep.subr.mxu0 0.0
    %5011 = vmatpush1.msra.mxu0 0.0
    %5012 = vmatprep.subr.mxu0 0.0
    %5013 = vmatpush1.msra.mxu0 0.0
    %5014 = vmatprep.subr.mxu0 0.0
    %5015 = vmatpush1.msra.mxu0 0.0
    %5016 = vmatprep.subr.mxu0 0.0
    %5017 = vmatpush1.msra.mxu0 0.0
    %5018 = vmatprep.subr.mxu0 0.0
    %5019 = vmatpush1.msra.mxu0 0.0
    %5020 = vmatprep.subr.mxu0 0.0
    %5021 = vmatpush1.msra.mxu0 0.0
    %5022 = vmatprep.subr.mxu0 0.0
    %5023 = vmatpush1.msra.mxu0 0.0
    %5024 = vmatprep.subr.mxu0 0.0
    %5025 = vmatpush1.msra.mxu0 0.0
    %5026 = vmatprep.subr.mxu0 0.0
    %5027 = vmatpush1.msra.mxu0 0.0
    %5028 = vmatprep.subr.mxu0 0.0
    %5029 = vmatpush1.msra.mxu0 0.0
    %5030 = vmatprep.subr.mxu0 0.0
    %5031 = vmatpush1.msra.mxu0 0.0
    %5032 = vmatprep.subr.mxu0 0.0
    %5033 = vmatpush1.msra.mxu0 0.0
    %5034 = vmatprep.subr.mxu0 0.0
    %5035 = vmatpush1.msra.mxu0 0.0
    %5036 = vmatprep.subr.mxu0 0.0
    %5037 = vmatpush1.msra.mxu0 0.0
    %5038 = vmatprep.subr.mxu0 0.0
    %5039 = vmatpush1.msra.mxu0 0.0
    %5040 = vmatprep.subr.mxu0 0.0
    %5041 = vmatpush1.msra.mxu0 0.0
    %5042 = vmatprep.subr.mxu0 0.0
    %5043 = vmatpush1.msra.mxu0 0.0
    %5044 = vmatprep.subr.mxu0 0.0
    %5045 = vmatpush1.msra.mxu0 0.0
    %5046 = vmatprep.subr.mxu0 0.0
    %5047 = vmatpush1.msra.mxu0 0.0
    %5048 = vmatprep.subr.mxu0 0.0
    %5049 = vmatpush1.msra.mxu0 0.0
    %5050 = vmatprep.subr.mxu0 0.0
    %5051 = vmatpush1.msra.mxu0 0.0
    %5052 = vmatprep.mubr.f32.mxu0 0.0
    %5053 = vmatmul.mubr.f32.gmra.mrb[0].mxu0 %v4986
    %v5054 = vpop.f32.mrb[0].mxu0
    %v5055 = vadd.f32 %v4983, %v5054
    %v5056 = vpop.f32.mrb[0].mxu0
    %5057 = vdwg.mxu0
    %v5058 = vxor.u32 %v5055, 2147483648
    %v5059 = vmul.f32 %v5058, 1.442695
    %v5060 = vpow.pop %v5059
    %v5061 = vadd.f32 %v5060, 1.0
    %v5062 = vrcp.pop %v5061
    %v5063 = vmul.f32 1.0, %v5062
    %v5064 = vtanh.pop %v5055
    %v5065 = vmul.f32 %v5063, %v4843
    %5067 = vrot.lane.b32.xlu0 %v5064, 64
    %v5068 = vpop.permute.xlu0 %5067
    %v5070 = vmul.f32 %v5063, %v5068
    %5072 = vrot.lane.b32.xlu0 %v5070, 32
    %v5073 = vpop.permute.xlu0 %5072
    %v5075 = vadd.f32 %v5065, %v5073
    %v5076 = vtanh.pop %v5075
    %5078 = vrot.lane.b32.xlu0 %v5076, 64
    %v5079 = vpop.permute.xlu0 %5078
    %v5081 = vmul.f32 %v5063, %v5079
    %v5083 = vcombine.high %v5081, %v5081
    %v5085 = vunpack.c.l.s4 1966171168
    %v5086 = vunpack.c.0.s8 %v5085
    %v5087 = vlaneseq
    %v5088 = vshrl.u32 %v5087, 7
    %v5089 = vsub.s32 %v5086, %v5088
    %v5090 = vrot.slane %v5081, %v5089
    %v5092 = vunpack.c.l.s4 1966171168
    %v5093 = vunpack.c.0.s8 %v5092
    %v5094 = vlaneseq
    %v5095 = vshrl.u32 %v5094, 7
    %v5096 = vsub.s32 %v5093, %v5095
    %v5097 = vrot.slane %v5083, %v5096
    %v5098 = vcombine.high %v5090, %v5090
    %v5099 = vcombine.high %v5097, %v5097
    %v5101 = vunpack.c.l.s4 1966171168
    %v5102 = vunpack.c.0.s8 %v5101
    %v5103 = vlaneseq
    %v5104 = vshrl.u32 %v5103, 7
    %v5105 = vsub.s32 %v5102, %v5104
    %v5106 = vrot.slane %v5090, %v5105
    %v5108 = vunpack.c.l.s4 1966171168
    %v5109 = vunpack.c.0.s8 %v5108
    %v5110 = vlaneseq
    %v5111 = vshrl.u32 %v5110, 7
    %v5112 = vsub.s32 %v5109, %v5111
    %v5113 = vrot.slane %v5097, %v5112
    %v5115 = vunpack.c.l.s4 1966171168
    %v5116 = vunpack.c.0.s8 %v5115
    %v5117 = vlaneseq
    %v5118 = vshrl.u32 %v5117, 7
    %v5119 = vsub.s32 %v5116, %v5118
    %v5120 = vrot.slane %v5098, %v5119
    %v5122 = vunpack.c.l.s4 1966171168
    %v5123 = vunpack.c.0.s8 %v5122
    %v5124 = vlaneseq
    %v5125 = vshrl.u32 %v5124, 7
    %v5126 = vsub.s32 %v5123, %v5125
    %v5127 = vrot.slane %v5099, %v5126
    %v5128 = vcombine.high %v5106, %v5106
    %v5129 = vcombine.high %v5113, %v5113
    %v5130 = vcombine.high %v5120, %v5120
    %v5131 = vcombine.high %v5127, %v5127
    %v5132 = vlaneseq
    %v5133 = vshrl.u32 %v5132, 7
    %v5134 = vsub.s32 0, %v5133
    %v5135 = vrot.slane %v5106, %v5134
    %v5136 = vlaneseq
    %v5137 = vshrl.u32 %v5136, 7
    %v5138 = vsub.s32 0, %v5137
    %v5139 = vrot.slane %v5120, %v5138
    %v5140 = vlaneseq
    %v5141 = vshrl.u32 %v5140, 7
    %v5142 = vsub.s32 0, %v5141
    %v5143 = vrot.slane %v5128, %v5142
    %v5144 = vlaneseq
    %v5145 = vshrl.u32 %v5144, 7
    %v5146 = vsub.s32 0, %v5145
    %v5147 = vrot.slane %v5130, %v5146
    %v5148 = vlaneseq
    %v5149 = vshrl.u32 %v5148, 7
    %v5150 = vsub.s32 0, %v5149
    %v5151 = vrot.slane %v5113, %v5150
    %v5152 = vlaneseq
    %v5153 = vshrl.u32 %v5152, 7
    %v5154 = vsub.s32 0, %v5153
    %v5155 = vrot.slane %v5127, %v5154
    %v5156 = vlaneseq
    %v5157 = vshrl.u32 %v5156, 7
    %v5158 = vsub.s32 0, %v5157
    %v5159 = vrot.slane %v5129, %v5158
    %v5160 = vlaneseq
    %v5161 = vshrl.u32 %v5160, 7
    %v5162 = vsub.s32 0, %v5161
    %v5163 = vrot.slane %v5131, %v5162
    %5164 = vrot.lane.b32.xlu0 %v5135, 32
    %v5165 = vpop.permute.xlu0 %5164
    %5166 = vrot.lane.b32.xlu0 %v5139, 32
    %v5167 = vpop.permute.xlu0 %5166
    %5168 = vrot.lane.b32.xlu0 %v5143, 32
    %v5169 = vpop.permute.xlu0 %5168
    %5170 = vrot.lane.b32.xlu0 %v5147, 32
    %v5171 = vpop.permute.xlu0 %5170
    %5172 = vrot.lane.b32.xlu0 %v5151, 32
    %v5173 = vpop.permute.xlu0 %5172
    %5174 = vrot.lane.b32.xlu0 %v5155, 32
    %v5175 = vpop.permute.xlu0 %5174
    %5176 = vrot.lane.b32.xlu0 %v5159, 32
    %v5177 = vpop.permute.xlu0 %5176
    %5178 = vrot.lane.b32.xlu0 %v5163, 32
    %v5179 = vpop.permute.xlu0 %5178
    %5188 = vst.msk [vmem:[#allocation3 + $0x5] sm:$0x1] %vm509, %v5165
    %5189 = vst.msk [vmem:[#allocation3 + $0xd] sm:$0x1] %vm509, %v5167
    %5190 = vst.msk [vmem:[#allocation3 + $0x15] sm:$0x1] %vm509, %v5169
    %5191 = vst.msk [vmem:[#allocation3 + $0x1d] sm:$0x1] %vm509, %v5171
    %5192 = vst.msk [vmem:[#allocation3 + $0x25] sm:$0x1] %vm509, %v5173
    %5193 = vst.msk [vmem:[#allocation3 + $0x2d] sm:$0x1] %vm509, %v5175
    %5194 = vst.msk [vmem:[#allocation3 + $0x35] sm:$0x1] %vm509, %v5177
    %5195 = vst.msk [vmem:[#allocation3 + $0x3d] sm:$0x1] %vm509, %v5179
    %s5196 = scalar_lea.vmem %s1, 48
    %v5197 = vld [vmem:[%s5196] sm:$0xff]
    %5198 = vrot.lane.b32.xlu0 %v5081, 64
    %v5199 = vpop.permute.xlu0 %5198
    %v5201 = vsel %vm61, %v5197, %v5199
    %v5202 = vld [vmem:[%s9] sm:$0xff]
    %v5203 = vld [vmem:[%s9 + $0x8] sm:$0xff]
    %v5204 = vld [vmem:[%s9 + $0x10] sm:$0xff]
    %v5205 = vld [vmem:[%s9 + $0x18] sm:$0xff]
    %v5206 = vld [vmem:[%s9 + $0x20] sm:$0xff]
    %v5207 = vld [vmem:[%s9 + $0x28] sm:$0xff]
    %v5208 = vld [vmem:[%s9 + $0x30] sm:$0xff]
    %v5209 = vld [vmem:[%s9 + $0x38] sm:$0xff]
    %v5210 = vld [vmem:[%s10] sm:$0x1]
    %v5212 = vlaneseq
    %v5213 = vshrl.u32 %v5212, 7
    %v5214 = vsub.s32 0, %v5213
    %v5215 = vrot.slane %v5210, %v5214
    %v5218 = vsel %vm78, %v5201, 0
    %5220 = vmatprep.subr.mxu0 0.0
    %5221 = vmatpush1.msra.mxu0 %v5202
    %5222 = vmatprep.subr.mxu0 0.0
    %5223 = vmatpush1.msra.mxu0 %v5203
    %5224 = vmatprep.subr.mxu0 0.0
    %5225 = vmatpush1.msra.mxu0 %v5204
    %5226 = vmatprep.subr.mxu0 0.0
    %5227 = vmatpush1.msra.mxu0 %v5205
    %5228 = vmatprep.subr.mxu0 0.0
    %5229 = vmatpush1.msra.mxu0 %v5206
    %5230 = vmatprep.subr.mxu0 0.0
    %5231 = vmatpush1.msra.mxu0 %v5207
    %5232 = vmatprep.subr.mxu0 0.0
    %5233 = vmatpush1.msra.mxu0 %v5208
    %5234 = vmatprep.subr.mxu0 0.0
    %5235 = vmatpush1.msra.mxu0 %v5209
    %5236 = vmatprep.subr.mxu0 0.0
    %5237 = vmatpush1.msra.mxu0 0.0
    %5238 = vmatprep.subr.mxu0 0.0
    %5239 = vmatpush1.msra.mxu0 0.0
    %5240 = vmatprep.subr.mxu0 0.0
    %5241 = vmatpush1.msra.mxu0 0.0
    %5242 = vmatprep.subr.mxu0 0.0
    %5243 = vmatpush1.msra.mxu0 0.0
    %5244 = vmatprep.subr.mxu0 0.0
    %5245 = vmatpush1.msra.mxu0 0.0
    %5246 = vmatprep.subr.mxu0 0.0
    %5247 = vmatpush1.msra.mxu0 0.0
    %5248 = vmatprep.subr.mxu0 0.0
    %5249 = vmatpush1.msra.mxu0 0.0
    %5250 = vmatprep.subr.mxu0 0.0
    %5251 = vmatpush1.msra.mxu0 0.0
    %5252 = vmatprep.subr.mxu0 0.0
    %5253 = vmatpush1.msra.mxu0 0.0
    %5254 = vmatprep.subr.mxu0 0.0
    %5255 = vmatpush1.msra.mxu0 0.0
    %5256 = vmatprep.subr.mxu0 0.0
    %5257 = vmatpush1.msra.mxu0 0.0
    %5258 = vmatprep.subr.mxu0 0.0
    %5259 = vmatpush1.msra.mxu0 0.0
    %5260 = vmatprep.subr.mxu0 0.0
    %5261 = vmatpush1.msra.mxu0 0.0
    %5262 = vmatprep.subr.mxu0 0.0
    %5263 = vmatpush1.msra.mxu0 0.0
    %5264 = vmatprep.subr.mxu0 0.0
    %5265 = vmatpush1.msra.mxu0 0.0
    %5266 = vmatprep.subr.mxu0 0.0
    %5267 = vmatpush1.msra.mxu0 0.0
    %5268 = vmatprep.subr.mxu0 0.0
    %5269 = vmatpush1.msra.mxu0 0.0
    %5270 = vmatprep.subr.mxu0 0.0
    %5271 = vmatpush1.msra.mxu0 0.0
    %5272 = vmatprep.subr.mxu0 0.0
    %5273 = vmatpush1.msra.mxu0 0.0
    %5274 = vmatprep.subr.mxu0 0.0
    %5275 = vmatpush1.msra.mxu0 0.0
    %5276 = vmatprep.subr.mxu0 0.0
    %5277 = vmatpush1.msra.mxu0 0.0
    %5278 = vmatprep.subr.mxu0 0.0
    %5279 = vmatpush1.msra.mxu0 0.0
    %5280 = vmatprep.subr.mxu0 0.0
    %5281 = vmatpush1.msra.mxu0 0.0
    %5282 = vmatprep.subr.mxu0 0.0
    %5283 = vmatpush1.msra.mxu0 0.0
    %5284 = vmatprep.mubr.f32.mxu0 0.0
    %5285 = vmatmul.mubr.f32.gmra.mrb[0].mxu0 %v5218
    %v5286 = vpop.f32.mrb[0].mxu0
    %v5287 = vadd.f32 %v5215, %v5286
    %v5288 = vpop.f32.mrb[0].mxu0
    %5289 = vdwg.mxu0
    %v5290 = vxor.u32 %v5287, 2147483648
    %v5291 = vmul.f32 %v5290, 1.442695
    %v5292 = vpow.pop %v5291
    %v5293 = vadd.f32 %v5292, 1.0
    %v5294 = vrcp.pop %v5293
    %v5295 = vmul.f32 1.0, %v5294
    %v5296 = vtanh.pop %v5287
    %v5297 = vmul.f32 %v5295, %v5075
    %5299 = vrot.lane.b32.xlu0 %v5296, 64
    %v5300 = vpop.permute.xlu0 %5299
    %v5302 = vmul.f32 %v5295, %v5300
    %5304 = vrot.lane.b32.xlu0 %v5302, 32
    %v5305 = vpop.permute.xlu0 %5304
    %v5307 = vadd.f32 %v5297, %v5305
    %v5308 = vtanh.pop %v5307
    %5310 = vrot.lane.b32.xlu0 %v5308, 64
    %v5311 = vpop.permute.xlu0 %5310
    %v5313 = vmul.f32 %v5295, %v5311
    %v5315 = vcombine.high %v5313, %v5313
    %v5317 = vunpack.c.l.s4 1966171168
    %v5318 = vunpack.c.0.s8 %v5317
    %v5319 = vlaneseq
    %v5320 = vshrl.u32 %v5319, 7
    %v5321 = vsub.s32 %v5318, %v5320
    %v5322 = vrot.slane %v5313, %v5321
    %v5324 = vunpack.c.l.s4 1966171168
    %v5325 = vunpack.c.0.s8 %v5324
    %v5326 = vlaneseq
    %v5327 = vshrl.u32 %v5326, 7
    %v5328 = vsub.s32 %v5325, %v5327
    %v5329 = vrot.slane %v5315, %v5328
    %v5330 = vcombine.high %v5322, %v5322
    %v5331 = vcombine.high %v5329, %v5329
    %v5333 = vunpack.c.l.s4 1966171168
    %v5334 = vunpack.c.0.s8 %v5333
    %v5335 = vlaneseq
    %v5336 = vshrl.u32 %v5335, 7
    %v5337 = vsub.s32 %v5334, %v5336
    %v5338 = vrot.slane %v5322, %v5337
    %v5340 = vunpack.c.l.s4 1966171168
    %v5341 = vunpack.c.0.s8 %v5340
    %v5342 = vlaneseq
    %v5343 = vshrl.u32 %v5342, 7
    %v5344 = vsub.s32 %v5341, %v5343
    %v5345 = vrot.slane %v5329, %v5344
    %v5347 = vunpack.c.l.s4 1966171168
    %v5348 = vunpack.c.0.s8 %v5347
    %v5349 = vlaneseq
    %v5350 = vshrl.u32 %v5349, 7
    %v5351 = vsub.s32 %v5348, %v5350
    %v5352 = vrot.slane %v5330, %v5351
    %v5354 = vunpack.c.l.s4 1966171168
    %v5355 = vunpack.c.0.s8 %v5354
    %v5356 = vlaneseq
    %v5357 = vshrl.u32 %v5356, 7
    %v5358 = vsub.s32 %v5355, %v5357
    %v5359 = vrot.slane %v5331, %v5358
    %v5360 = vcombine.high %v5338, %v5338
    %v5361 = vcombine.high %v5345, %v5345
    %v5362 = vcombine.high %v5352, %v5352
    %v5363 = vcombine.high %v5359, %v5359
    %v5364 = vlaneseq
    %v5365 = vshrl.u32 %v5364, 7
    %v5366 = vsub.s32 0, %v5365
    %v5367 = vrot.slane %v5338, %v5366
    %v5368 = vlaneseq
    %v5369 = vshrl.u32 %v5368, 7
    %v5370 = vsub.s32 0, %v5369
    %v5371 = vrot.slane %v5352, %v5370
    %v5372 = vlaneseq
    %v5373 = vshrl.u32 %v5372, 7
    %v5374 = vsub.s32 0, %v5373
    %v5375 = vrot.slane %v5360, %v5374
    %v5376 = vlaneseq
    %v5377 = vshrl.u32 %v5376, 7
    %v5378 = vsub.s32 0, %v5377
    %v5379 = vrot.slane %v5362, %v5378
    %v5380 = vlaneseq
    %v5381 = vshrl.u32 %v5380, 7
    %v5382 = vsub.s32 0, %v5381
    %v5383 = vrot.slane %v5345, %v5382
    %v5384 = vlaneseq
    %v5385 = vshrl.u32 %v5384, 7
    %v5386 = vsub.s32 0, %v5385
    %v5387 = vrot.slane %v5359, %v5386
    %v5388 = vlaneseq
    %v5389 = vshrl.u32 %v5388, 7
    %v5390 = vsub.s32 0, %v5389
    %v5391 = vrot.slane %v5361, %v5390
    %v5392 = vlaneseq
    %v5393 = vshrl.u32 %v5392, 7
    %v5394 = vsub.s32 0, %v5393
    %v5395 = vrot.slane %v5363, %v5394
    %5396 = vrot.lane.b32.xlu0 %v5367, 32
    %v5397 = vpop.permute.xlu0 %5396
    %5398 = vrot.lane.b32.xlu0 %v5371, 32
    %v5399 = vpop.permute.xlu0 %5398
    %5400 = vrot.lane.b32.xlu0 %v5375, 32
    %v5401 = vpop.permute.xlu0 %5400
    %5402 = vrot.lane.b32.xlu0 %v5379, 32
    %v5403 = vpop.permute.xlu0 %5402
    %5404 = vrot.lane.b32.xlu0 %v5383, 32
    %v5405 = vpop.permute.xlu0 %5404
    %5406 = vrot.lane.b32.xlu0 %v5387, 32
    %v5407 = vpop.permute.xlu0 %5406
    %5408 = vrot.lane.b32.xlu0 %v5391, 32
    %v5409 = vpop.permute.xlu0 %5408
    %5410 = vrot.lane.b32.xlu0 %v5395, 32
    %v5411 = vpop.permute.xlu0 %5410
    %5420 = vst.msk [vmem:[#allocation3 + $0x6] sm:$0x1] %vm509, %v5397
    %5421 = vst.msk [vmem:[#allocation3 + $0xe] sm:$0x1] %vm509, %v5399
    %5422 = vst.msk [vmem:[#allocation3 + $0x16] sm:$0x1] %vm509, %v5401
    %5423 = vst.msk [vmem:[#allocation3 + $0x1e] sm:$0x1] %vm509, %v5403
    %5424 = vst.msk [vmem:[#allocation3 + $0x26] sm:$0x1] %vm509, %v5405
    %5425 = vst.msk [vmem:[#allocation3 + $0x2e] sm:$0x1] %vm509, %v5407
    %5426 = vst.msk [vmem:[#allocation3 + $0x36] sm:$0x1] %vm509, %v5409
    %5427 = vst.msk [vmem:[#allocation3 + $0x3e] sm:$0x1] %vm509, %v5411
    %s5428 = scalar_lea.vmem %s1, 56
    %v5429 = vld [vmem:[%s5428] sm:$0xff]
    %5430 = vrot.lane.b32.xlu0 %v5313, 64
    %v5431 = vpop.permute.xlu0 %5430
    %v5433 = vsel %vm61, %v5429, %v5431
    %v5434 = vld [vmem:[%s9] sm:$0xff]
    %v5435 = vld [vmem:[%s9 + $0x8] sm:$0xff]
    %v5436 = vld [vmem:[%s9 + $0x10] sm:$0xff]
    %v5437 = vld [vmem:[%s9 + $0x18] sm:$0xff]
    %v5438 = vld [vmem:[%s9 + $0x20] sm:$0xff]
    %v5439 = vld [vmem:[%s9 + $0x28] sm:$0xff]
    %v5440 = vld [vmem:[%s9 + $0x30] sm:$0xff]
    %v5441 = vld [vmem:[%s9 + $0x38] sm:$0xff]
    %v5442 = vld [vmem:[%s10] sm:$0x1]
    %v5444 = vlaneseq
    %v5445 = vshrl.u32 %v5444, 7
    %v5446 = vsub.s32 0, %v5445
    %v5447 = vrot.slane %v5442, %v5446
    %v5450 = vsel %vm78, %v5433, 0
    %5452 = vmatprep.subr.mxu0 0.0
    %5453 = vmatpush1.msra.mxu0 %v5434
    %5454 = vmatprep.subr.mxu0 0.0
    %5455 = vmatpush1.msra.mxu0 %v5435
    %5456 = vmatprep.subr.mxu0 0.0
    %5457 = vmatpush1.msra.mxu0 %v5436
    %5458 = vmatprep.subr.mxu0 0.0
    %5459 = vmatpush1.msra.mxu0 %v5437
    %5460 = vmatprep.subr.mxu0 0.0
    %5461 = vmatpush1.msra.mxu0 %v5438
    %5462 = vmatprep.subr.mxu0 0.0
    %5463 = vmatpush1.msra.mxu0 %v5439
    %5464 = vmatprep.subr.mxu0 0.0
    %5465 = vmatpush1.msra.mxu0 %v5440
    %5466 = vmatprep.subr.mxu0 0.0
    %5467 = vmatpush1.msra.mxu0 %v5441
    %5468 = vmatprep.subr.mxu0 0.0
    %5469 = vmatpush1.msra.mxu0 0.0
    %5470 = vmatprep.subr.mxu0 0.0
    %5471 = vmatpush1.msra.mxu0 0.0
    %5472 = vmatprep.subr.mxu0 0.0
    %5473 = vmatpush1.msra.mxu0 0.0
    %5474 = vmatprep.subr.mxu0 0.0
    %5475 = vmatpush1.msra.mxu0 0.0
    %5476 = vmatprep.subr.mxu0 0.0
    %5477 = vmatpush1.msra.mxu0 0.0
    %5478 = vmatprep.subr.mxu0 0.0
    %5479 = vmatpush1.msra.mxu0 0.0
    %5480 = vmatprep.subr.mxu0 0.0
    %5481 = vmatpush1.msra.mxu0 0.0
    %5482 = vmatprep.subr.mxu0 0.0
    %5483 = vmatpush1.msra.mxu0 0.0
    %5484 = vmatprep.subr.mxu0 0.0
    %5485 = vmatpush1.msra.mxu0 0.0
    %5486 = vmatprep.subr.mxu0 0.0
    %5487 = vmatpush1.msra.mxu0 0.0
    %5488 = vmatprep.subr.mxu0 0.0
    %5489 = vmatpush1.msra.mxu0 0.0
    %5490 = vmatprep.subr.mxu0 0.0
    %5491 = vmatpush1.msra.mxu0 0.0
    %5492 = vmatprep.subr.mxu0 0.0
    %5493 = vmatpush1.msra.mxu0 0.0
    %5494 = vmatprep.subr.mxu0 0.0
    %5495 = vmatpush1.msra.mxu0 0.0
    %5496 = vmatprep.subr.mxu0 0.0
    %5497 = vmatpush1.msra.mxu0 0.0
    %5498 = vmatprep.subr.mxu0 0.0
    %5499 = vmatpush1.msra.mxu0 0.0
    %5500 = vmatprep.subr.mxu0 0.0
    %5501 = vmatpush1.msra.mxu0 0.0
    %5502 = vmatprep.subr.mxu0 0.0
    %5503 = vmatpush1.msra.mxu0 0.0
    %5504 = vmatprep.subr.mxu0 0.0
    %5505 = vmatpush1.msra.mxu0 0.0
    %5506 = vmatprep.subr.mxu0 0.0
    %5507 = vmatpush1.msra.mxu0 0.0
    %5508 = vmatprep.subr.mxu0 0.0
    %5509 = vmatpush1.msra.mxu0 0.0
    %5510 = vmatprep.subr.mxu0 0.0
    %5511 = vmatpush1.msra.mxu0 0.0
    %5512 = vmatprep.subr.mxu0 0.0
    %5513 = vmatpush1.msra.mxu0 0.0
    %5514 = vmatprep.subr.mxu0 0.0
    %5515 = vmatpush1.msra.mxu0 0.0
    %5516 = vmatprep.mubr.f32.mxu0 0.0
    %5517 = vmatmul.mubr.f32.gmra.mrb[0].mxu0 %v5450
    %v5518 = vpop.f32.mrb[0].mxu0
    %v5519 = vadd.f32 %v5447, %v5518
    %v5520 = vpop.f32.mrb[0].mxu0
    %5521 = vdwg.mxu0
    %v5522 = vxor.u32 %v5519, 2147483648
    %v5523 = vmul.f32 %v5522, 1.442695
    %v5524 = vpow.pop %v5523
    %v5525 = vadd.f32 %v5524, 1.0
    %v5526 = vrcp.pop %v5525
    %v5527 = vmul.f32 1.0, %v5526
    %v5528 = vtanh.pop %v5519
    %v5529 = vmul.f32 %v5527, %v5307
    %5531 = vrot.lane.b32.xlu0 %v5528, 64
    %v5532 = vpop.permute.xlu0 %5531
    %v5534 = vmul.f32 %v5527, %v5532
    %5536 = vrot.lane.b32.xlu0 %v5534, 32
    %v5537 = vpop.permute.xlu0 %5536
    %v5539 = vadd.f32 %v5529, %v5537
    %v5540 = vtanh.pop %v5539
    %5542 = vrot.lane.b32.xlu0 %v5540, 64
    %v5543 = vpop.permute.xlu0 %5542
    %v5545 = vmul.f32 %v5527, %v5543
    %v5547 = vcombine.high %v5545, %v5545
    %v5549 = vunpack.c.l.s4 1966171168
    %v5550 = vunpack.c.0.s8 %v5549
    %v5551 = vlaneseq
    %v5552 = vshrl.u32 %v5551, 7
    %v5553 = vsub.s32 %v5550, %v5552
    %v5554 = vrot.slane %v5545, %v5553
    %v5556 = vunpack.c.l.s4 1966171168
    %v5557 = vunpack.c.0.s8 %v5556
    %v5558 = vlaneseq
    %v5559 = vshrl.u32 %v5558, 7
    %v5560 = vsub.s32 %v5557, %v5559
    %v5561 = vrot.slane %v5547, %v5560
    %v5562 = vcombine.high %v5554, %v5554
    %v5563 = vcombine.high %v5561, %v5561
    %v5565 = vunpack.c.l.s4 1966171168
    %v5566 = vunpack.c.0.s8 %v5565
    %v5567 = vlaneseq
    %v5568 = vshrl.u32 %v5567, 7
    %v5569 = vsub.s32 %v5566, %v5568
    %v5570 = vrot.slane %v5554, %v5569
    %v5572 = vunpack.c.l.s4 1966171168
    %v5573 = vunpack.c.0.s8 %v5572
    %v5574 = vlaneseq
    %v5575 = vshrl.u32 %v5574, 7
    %v5576 = vsub.s32 %v5573, %v5575
    %v5577 = vrot.slane %v5561, %v5576
    %v5579 = vunpack.c.l.s4 1966171168
    %v5580 = vunpack.c.0.s8 %v5579
    %v5581 = vlaneseq
    %v5582 = vshrl.u32 %v5581, 7
    %v5583 = vsub.s32 %v5580, %v5582
    %v5584 = vrot.slane %v5562, %v5583
    %v5586 = vunpack.c.l.s4 1966171168
    %v5587 = vunpack.c.0.s8 %v5586
    %v5588 = vlaneseq
    %v5589 = vshrl.u32 %v5588, 7
    %v5590 = vsub.s32 %v5587, %v5589
    %v5591 = vrot.slane %v5563, %v5590
    %v5592 = vcombine.high %v5570, %v5570
    %v5593 = vcombine.high %v5577, %v5577
    %v5594 = vcombine.high %v5584, %v5584
    %v5595 = vcombine.high %v5591, %v5591
    %v5596 = vlaneseq
    %v5597 = vshrl.u32 %v5596, 7
    %v5598 = vsub.s32 0, %v5597
    %v5599 = vrot.slane %v5570, %v5598
    %v5600 = vlaneseq
    %v5601 = vshrl.u32 %v5600, 7
    %v5602 = vsub.s32 0, %v5601
    %v5603 = vrot.slane %v5584, %v5602
    %v5604 = vlaneseq
    %v5605 = vshrl.u32 %v5604, 7
    %v5606 = vsub.s32 0, %v5605
    %v5607 = vrot.slane %v5592, %v5606
    %v5608 = vlaneseq
    %v5609 = vshrl.u32 %v5608, 7
    %v5610 = vsub.s32 0, %v5609
    %v5611 = vrot.slane %v5594, %v5610
    %v5612 = vlaneseq
    %v5613 = vshrl.u32 %v5612, 7
    %v5614 = vsub.s32 0, %v5613
    %v5615 = vrot.slane %v5577, %v5614
    %v5616 = vlaneseq
    %v5617 = vshrl.u32 %v5616, 7
    %v5618 = vsub.s32 0, %v5617
    %v5619 = vrot.slane %v5591, %v5618
    %v5620 = vlaneseq
    %v5621 = vshrl.u32 %v5620, 7
    %v5622 = vsub.s32 0, %v5621
    %v5623 = vrot.slane %v5593, %v5622
    %v5624 = vlaneseq
    %v5625 = vshrl.u32 %v5624, 7
    %v5626 = vsub.s32 0, %v5625
    %v5627 = vrot.slane %v5595, %v5626
    %5628 = vrot.lane.b32.xlu0 %v5599, 32
    %v5629 = vpop.permute.xlu0 %5628
    %5630 = vrot.lane.b32.xlu0 %v5603, 32
    %v5631 = vpop.permute.xlu0 %5630
    %5632 = vrot.lane.b32.xlu0 %v5607, 32
    %v5633 = vpop.permute.xlu0 %5632
    %5634 = vrot.lane.b32.xlu0 %v5611, 32
    %v5635 = vpop.permute.xlu0 %5634
    %5636 = vrot.lane.b32.xlu0 %v5615, 32
    %v5637 = vpop.permute.xlu0 %5636
    %5638 = vrot.lane.b32.xlu0 %v5619, 32
    %v5639 = vpop.permute.xlu0 %5638
    %5640 = vrot.lane.b32.xlu0 %v5623, 32
    %v5641 = vpop.permute.xlu0 %5640
    %5642 = vrot.lane.b32.xlu0 %v5627, 32
    %v5643 = vpop.permute.xlu0 %5642
    %5652 = vst.msk [vmem:[#allocation3 + $0x7] sm:$0x1] %vm509, %v5629
    %5653 = vst.msk [vmem:[#allocation3 + $0xf] sm:$0x1] %vm509, %v5631
    %5654 = vst.msk [vmem:[#allocation3 + $0x17] sm:$0x1] %vm509, %v5633
    %5655 = vst.msk [vmem:[#allocation3 + $0x1f] sm:$0x1] %vm509, %v5635
    %5656 = vst.msk [vmem:[#allocation3 + $0x27] sm:$0x1] %vm509, %v5637
    %5657 = vst.msk [vmem:[#allocation3 + $0x2f] sm:$0x1] %vm509, %v5639
    %5658 = vst.msk [vmem:[#allocation3 + $0x37] sm:$0x1] %vm509, %v5641
    %5659 = vst.msk [vmem:[#allocation3 + $0x3f] sm:$0x1] %vm509, %v5643
    %5660 = vrot.lane.b32.xlu0 %v5545, 32
    %v5661 = vpop.permute.xlu0 %5660
    %5663 = vst.msk [vmem:[%s18] sm:$0xff] %vm61, %v5661
    %5665 = vrot.lane.b32.xlu0 %v5539, 96
    %v5666 = vpop.permute.xlu0 %5665
    %5668 = vst.msk [vmem:[%s19] sm:$0xff] %vm61, %v5666
    %v5669 = vld [vmem:[#allocation3] sm:$0xff]
    %v5670 = vld [vmem:[#allocation3 + $0x8] sm:$0xff]
    %v5671 = vld [vmem:[#allocation3 + $0x10] sm:$0xff]
    %v5672 = vld [vmem:[#allocation3 + $0x18] sm:$0xff]
    %v5673 = vld [vmem:[#allocation3 + $0x20] sm:$0xff]
    %v5674 = vld [vmem:[#allocation3 + $0x28] sm:$0xff]
    %v5675 = vld [vmem:[#allocation3 + $0x30] sm:$0xff]
    %v5676 = vld [vmem:[#allocation3 + $0x38] sm:$0xff]
    %v5677 = vld [vmem:[#allocation2] sm:$0xff]
    %v5678 = vld [vmem:[#allocation2 + $0x8] sm:$0xff]
    %v5679 = vld [vmem:[#allocation2 + $0x10] sm:$0xff]
    %v5680 = vld [vmem:[#allocation2 + $0x18] sm:$0xff]
    %v5681 = vld [vmem:[#allocation2 + $0x20] sm:$0xff]
    %v5682 = vld [vmem:[#allocation2 + $0x28] sm:$0xff]
    %v5683 = vld [vmem:[#allocation2 + $0x30] sm:$0xff]
    %v5684 = vld [vmem:[#allocation2 + $0x38] sm:$0xff]
    %v5685 = vsub.f32 %v3801, 1.0
    %v5686 = vmul.f32 %v5685, 1e+30
    %v5687 = vlaneseq
    %v5688 = vshrl.u32 %v5687, 7
    %v5689 = vsub.s32 0, %v5688
    %v5690 = vrot.slane %v5686, %v5689
    %v5692 = vsel %vm61, %v5669, 0
    %v5695 = vsel %vm61, %v5677, 0
    %5697 = vmatprep.subr.mxu0 0.0
    %5698 = vmatpush1.xpose.msra.mxu0 %v5695
    %5699 = vmatprep.subr.mxu0 0.0
    %5700 = vmatpush1.xpose.msra.mxu0 0.0
    %5701 = vmatprep.subr.mxu0 0.0
    %5702 = vmatpush1.xpose.msra.mxu0 0.0
    %5703 = vmatprep.subr.mxu0 0.0
    %5704 = vmatpush1.xpose.msra.mxu0 0.0
    %5705 = vmatprep.subr.mxu0 0.0
    %5706 = vmatpush1.xpose.msra.mxu0 0.0
    %5707 = vmatprep.subr.mxu0 0.0
    %5708 = vmatpush1.xpose.msra.mxu0 0.0
    %5709 = vmatprep.subr.mxu0 0.0
    %5710 = vmatpush1.xpose.msra.mxu0 0.0
    %5711 = vmatprep.subr.mxu0 0.0
    %5712 = vmatpush1.xpose.msra.mxu0 0.0
    %5713 = vmatprep.subr.mxu0 0.0
    %5714 = vmatpush1.xpose.msra.mxu0 0.0
    %5715 = vmatprep.subr.mxu0 0.0
    %5716 = vmatpush1.xpose.msra.mxu0 0.0
    %5717 = vmatprep.subr.mxu0 0.0
    %5718 = vmatpush1.xpose.msra.mxu0 0.0
    %5719 = vmatprep.subr.mxu0 0.0
    %5720 = vmatpush1.xpose.msra.mxu0 0.0
    %5721 = vmatprep.subr.mxu0 0.0
    %5722 = vmatpush1.xpose.msra.mxu0 0.0
    %5723 = vmatprep.subr.mxu0 0.0
    %5724 = vmatpush1.xpose.msra.mxu0 0.0
    %5725 = vmatprep.subr.mxu0 0.0
    %5726 = vmatpush1.xpose.msra.mxu0 0.0
    %5727 = vmatprep.subr.mxu0 0.0
    %5728 = vmatpush1.xpose.msra.mxu0 0.0
    %5729 = vmatprep.subr.mxu0 0.0
    %5730 = vmatpush1.xpose.msra.mxu0 0.0
    %5731 = vmatprep.subr.mxu0 0.0
    %5732 = vmatpush1.xpose.msra.mxu0 0.0
    %5733 = vmatprep.subr.mxu0 0.0
    %5734 = vmatpush1.xpose.msra.mxu0 0.0
    %5735 = vmatprep.subr.mxu0 0.0
    %5736 = vmatpush1.xpose.msra.mxu0 0.0
    %5737 = vmatprep.subr.mxu0 0.0
    %5738 = vmatpush1.xpose.msra.mxu0 0.0
    %5739 = vmatprep.subr.mxu0 0.0
    %5740 = vmatpush1.xpose.msra.mxu0 0.0
    %5741 = vmatprep.subr.mxu0 0.0
    %5742 = vmatpush1.xpose.msra.mxu0 0.0
    %5743 = vmatprep.subr.mxu0 0.0
    %5744 = vmatpush1.xpose.msra.mxu0 0.0
    %5745 = vmatprep.subr.mxu0 0.0
    %5746 = vmatpush1.xpose.msra.mxu0 0.0
    %5747 = vmatprep.subr.mxu0 0.0
    %5748 = vmatpush1.xpose.msra.mxu0 0.0
    %5749 = vmatprep.subr.mxu0 0.0
    %5750 = vmatpush1.xpose.msra.mxu0 0.0
    %5751 = vmatprep.subr.mxu0 0.0
    %5752 = vmatpush1.xpose.msra.mxu0 0.0
    %5753 = vmatprep.subr.mxu0 0.0
    %5754 = vmatpush1.xpose.msra.mxu0 0.0
    %5755 = vmatprep.subr.mxu0 0.0
    %5756 = vmatpush1.xpose.msra.mxu0 0.0
    %5757 = vmatprep.subr.mxu0 0.0
    %5758 = vmatpush1.xpose.msra.mxu0 0.0
    %5759 = vmatprep.subr.mxu0 0.0
    %5760 = vmatpush1.xpose.msra.mxu0 0.0
    %5761 = vmatprep.mubr.f32.mxu0 0.0
    %5762 = vmatmul.mubr.f32.gmra.mrb[0].mxu0 %v5692
    %v5763 = vpop.f32.mrb[0].mxu0
    %v5764 = vadd.f32 %v5690, %v5763
    %v5765 = vpop.f32.mrb[0].mxu0
    %5766 = vdwg.mxu0
    %v5768 = vsel %vm61, %v5670, 0
    %v5771 = vsel %vm61, %v5678, 0
    %5773 = vmatprep.subr.mxu0 0.0
    %5774 = vmatpush1.xpose.msra.mxu0 %v5771
    %5775 = vmatprep.subr.mxu0 0.0
    %5776 = vmatpush1.xpose.msra.mxu0 0.0
    %5777 = vmatprep.subr.mxu0 0.0
    %5778 = vmatpush1.xpose.msra.mxu0 0.0
    %5779 = vmatprep.subr.mxu0 0.0
    %5780 = vmatpush1.xpose.msra.mxu0 0.0
    %5781 = vmatprep.subr.mxu0 0.0
    %5782 = vmatpush1.xpose.msra.mxu0 0.0
    %5783 = vmatprep.subr.mxu0 0.0
    %5784 = vmatpush1.xpose.msra.mxu0 0.0
    %5785 = vmatprep.subr.mxu0 0.0
    %5786 = vmatpush1.xpose.msra.mxu0 0.0
    %5787 = vmatprep.subr.mxu0 0.0
    %5788 = vmatpush1.xpose.msra.mxu0 0.0
    %5789 = vmatprep.subr.mxu0 0.0
    %5790 = vmatpush1.xpose.msra.mxu0 0.0
    %5791 = vmatprep.subr.mxu0 0.0
    %5792 = vmatpush1.xpose.msra.mxu0 0.0
    %5793 = vmatprep.subr.mxu0 0.0
    %5794 = vmatpush1.xpose.msra.mxu0 0.0
    %5795 = vmatprep.subr.mxu0 0.0
    %5796 = vmatpush1.xpose.msra.mxu0 0.0
    %5797 = vmatprep.subr.mxu0 0.0
    %5798 = vmatpush1.xpose.msra.mxu0 0.0
    %5799 = vmatprep.subr.mxu0 0.0
    %5800 = vmatpush1.xpose.msra.mxu0 0.0
    %5801 = vmatprep.subr.mxu0 0.0
    %5802 = vmatpush1.xpose.msra.mxu0 0.0
    %5803 = vmatprep.subr.mxu0 0.0
    %5804 = vmatpush1.xpose.msra.mxu0 0.0
    %5805 = vmatprep.subr.mxu0 0.0
    %5806 = vmatpush1.xpose.msra.mxu0 0.0
    %5807 = vmatprep.subr.mxu0 0.0
    %5808 = vmatpush1.xpose.msra.mxu0 0.0
    %5809 = vmatprep.subr.mxu0 0.0
    %5810 = vmatpush1.xpose.msra.mxu0 0.0
    %5811 = vmatprep.subr.mxu0 0.0
    %5812 = vmatpush1.xpose.msra.mxu0 0.0
    %5813 = vmatprep.subr.mxu0 0.0
    %5814 = vmatpush1.xpose.msra.mxu0 0.0
    %5815 = vmatprep.subr.mxu0 0.0
    %5816 = vmatpush1.xpose.msra.mxu0 0.0
    %5817 = vmatprep.subr.mxu0 0.0
    %5818 = vmatpush1.xpose.msra.mxu0 0.0
    %5819 = vmatprep.subr.mxu0 0.0
    %5820 = vmatpush1.xpose.msra.mxu0 0.0
    %5821 = vmatprep.subr.mxu0 0.0
    %5822 = vmatpush1.xpose.msra.mxu0 0.0
    %5823 = vmatprep.subr.mxu0 0.0
    %5824 = vmatpush1.xpose.msra.mxu0 0.0
    %5825 = vmatprep.subr.mxu0 0.0
    %5826 = vmatpush1.xpose.msra.mxu0 0.0
    %5827 = vmatprep.subr.mxu0 0.0
    %5828 = vmatpush1.xpose.msra.mxu0 0.0
    %5829 = vmatprep.subr.mxu0 0.0
    %5830 = vmatpush1.xpose.msra.mxu0 0.0
    %5831 = vmatprep.subr.mxu0 0.0
    %5832 = vmatpush1.xpose.msra.mxu0 0.0
    %5833 = vmatprep.subr.mxu0 0.0
    %5834 = vmatpush1.xpose.msra.mxu0 0.0
    %5835 = vmatprep.subr.mxu0 0.0
    %5836 = vmatpush1.xpose.msra.mxu0 0.0
    %5837 = vmatprep.mubr.f32.mxu0 0.0
    %5838 = vmatmul.mubr.f32.gmra.mrb[0].mxu0 %v5768
    %v5839 = vpop.f32.mrb[0].mxu0
    %v5840 = vadd.f32 %v5690, %v5839
    %v5841 = vpop.f32.mrb[0].mxu0
    %5842 = vdwg.mxu0
    %v5844 = vsel %vm61, %v5671, 0
    %v5847 = vsel %vm61, %v5679, 0
    %5849 = vmatprep.subr.mxu0 0.0
    %5850 = vmatpush1.xpose.msra.mxu0 %v5847
    %5851 = vmatprep.subr.mxu0 0.0
    %5852 = vmatpush1.xpose.msra.mxu0 0.0
    %5853 = vmatprep.subr.mxu0 0.0
    %5854 = vmatpush1.xpose.msra.mxu0 0.0
    %5855 = vmatprep.subr.mxu0 0.0
    %5856 = vmatpush1.xpose.msra.mxu0 0.0
    %5857 = vmatprep.subr.mxu0 0.0
    %5858 = vmatpush1.xpose.msra.mxu0 0.0
    %5859 = vmatprep.subr.mxu0 0.0
    %5860 = vmatpush1.xpose.msra.mxu0 0.0
    %5861 = vmatprep.subr.mxu0 0.0
    %5862 = vmatpush1.xpose.msra.mxu0 0.0
    %5863 = vmatprep.subr.mxu0 0.0
    %5864 = vmatpush1.xpose.msra.mxu0 0.0
    %5865 = vmatprep.subr.mxu0 0.0
    %5866 = vmatpush1.xpose.msra.mxu0 0.0
    %5867 = vmatprep.subr.mxu0 0.0
    %5868 = vmatpush1.xpose.msra.mxu0 0.0
    %5869 = vmatprep.subr.mxu0 0.0
    %5870 = vmatpush1.xpose.msra.mxu0 0.0
    %5871 = vmatprep.subr.mxu0 0.0
    %5872 = vmatpush1.xpose.msra.mxu0 0.0
    %5873 = vmatprep.subr.mxu0 0.0
    %5874 = vmatpush1.xpose.msra.mxu0 0.0
    %5875 = vmatprep.subr.mxu0 0.0
    %5876 = vmatpush1.xpose.msra.mxu0 0.0
    %5877 = vmatprep.subr.mxu0 0.0
    %5878 = vmatpush1.xpose.msra.mxu0 0.0
    %5879 = vmatprep.subr.mxu0 0.0
    %5880 = vmatpush1.xpose.msra.mxu0 0.0
    %5881 = vmatprep.subr.mxu0 0.0
    %5882 = vmatpush1.xpose.msra.mxu0 0.0
    %5883 = vmatprep.subr.mxu0 0.0
    %5884 = vmatpush1.xpose.msra.mxu0 0.0
    %5885 = vmatprep.subr.mxu0 0.0
    %5886 = vmatpush1.xpose.msra.mxu0 0.0
    %5887 = vmatprep.subr.mxu0 0.0
    %5888 = vmatpush1.xpose.msra.mxu0 0.0
    %5889 = vmatprep.subr.mxu0 0.0
    %5890 = vmatpush1.xpose.msra.mxu0 0.0
    %5891 = vmatprep.subr.mxu0 0.0
    %5892 = vmatpush1.xpose.msra.mxu0 0.0
    %5893 = vmatprep.subr.mxu0 0.0
    %5894 = vmatpush1.xpose.msra.mxu0 0.0
    %5895 = vmatprep.subr.mxu0 0.0
    %5896 = vmatpush1.xpose.msra.mxu0 0.0
    %5897 = vmatprep.subr.mxu0 0.0
    %5898 = vmatpush1.xpose.msra.mxu0 0.0
    %5899 = vmatprep.subr.mxu0 0.0
    %5900 = vmatpush1.xpose.msra.mxu0 0.0
    %5901 = vmatprep.subr.mxu0 0.0
    %5902 = vmatpush1.xpose.msra.mxu0 0.0
    %5903 = vmatprep.subr.mxu0 0.0
    %5904 = vmatpush1.xpose.msra.mxu0 0.0
    %5905 = vmatprep.subr.mxu0 0.0
    %5906 = vmatpush1.xpose.msra.mxu0 0.0
    %5907 = vmatprep.subr.mxu0 0.0
    %5908 = vmatpush1.xpose.msra.mxu0 0.0
    %5909 = vmatprep.subr.mxu0 0.0
    %5910 = vmatpush1.xpose.msra.mxu0 0.0
    %5911 = vmatprep.subr.mxu0 0.0
    %5912 = vmatpush1.xpose.msra.mxu0 0.0
    %5913 = vmatprep.mubr.f32.mxu0 0.0
    %5914 = vmatmul.mubr.f32.gmra.mrb[0].mxu0 %v5844
    %v5915 = vpop.f32.mrb[0].mxu0
    %v5916 = vadd.f32 %v5690, %v5915
    %v5917 = vpop.f32.mrb[0].mxu0
    %5918 = vdwg.mxu0
    %v5920 = vsel %vm61, %v5672, 0
    %v5923 = vsel %vm61, %v5680, 0
    %5925 = vmatprep.subr.mxu0 0.0
    %5926 = vmatpush1.xpose.msra.mxu0 %v5923
    %5927 = vmatprep.subr.mxu0 0.0
    %5928 = vmatpush1.xpose.msra.mxu0 0.0
    %5929 = vmatprep.subr.mxu0 0.0
    %5930 = vmatpush1.xpose.msra.mxu0 0.0
    %5931 = vmatprep.subr.mxu0 0.0
    %5932 = vmatpush1.xpose.msra.mxu0 0.0
    %5933 = vmatprep.subr.mxu0 0.0
    %5934 = vmatpush1.xpose.msra.mxu0 0.0
    %5935 = vmatprep.subr.mxu0 0.0
    %5936 = vmatpush1.xpose.msra.mxu0 0.0
    %5937 = vmatprep.subr.mxu0 0.0
    %5938 = vmatpush1.xpose.msra.mxu0 0.0
    %5939 = vmatprep.subr.mxu0 0.0
    %5940 = vmatpush1.xpose.msra.mxu0 0.0
    %5941 = vmatprep.subr.mxu0 0.0
    %5942 = vmatpush1.xpose.msra.mxu0 0.0
    %5943 = vmatprep.subr.mxu0 0.0
    %5944 = vmatpush1.xpose.msra.mxu0 0.0
    %5945 = vmatprep.subr.mxu0 0.0
    %5946 = vmatpush1.xpose.msra.mxu0 0.0
    %5947 = vmatprep.subr.mxu0 0.0
    %5948 = vmatpush1.xpose.msra.mxu0 0.0
    %5949 = vmatprep.subr.mxu0 0.0
    %5950 = vmatpush1.xpose.msra.mxu0 0.0
    %5951 = vmatprep.subr.mxu0 0.0
    %5952 = vmatpush1.xpose.msra.mxu0 0.0
    %5953 = vmatprep.subr.mxu0 0.0
    %5954 = vmatpush1.xpose.msra.mxu0 0.0
    %5955 = vmatprep.subr.mxu0 0.0
    %5956 = vmatpush1.xpose.msra.mxu0 0.0
    %5957 = vmatprep.subr.mxu0 0.0
    %5958 = vmatpush1.xpose.msra.mxu0 0.0
    %5959 = vmatprep.subr.mxu0 0.0
    %5960 = vmatpush1.xpose.msra.mxu0 0.0
    %5961 = vmatprep.subr.mxu0 0.0
    %5962 = vmatpush1.xpose.msra.mxu0 0.0
    %5963 = vmatprep.subr.mxu0 0.0
    %5964 = vmatpush1.xpose.msra.mxu0 0.0
    %5965 = vmatprep.subr.mxu0 0.0
    %5966 = vmatpush1.xpose.msra.mxu0 0.0
    %5967 = vmatprep.subr.mxu0 0.0
    %5968 = vmatpush1.xpose.msra.mxu0 0.0
    %5969 = vmatprep.subr.mxu0 0.0
    %5970 = vmatpush1.xpose.msra.mxu0 0.0
    %5971 = vmatprep.subr.mxu0 0.0
    %5972 = vmatpush1.xpose.msra.mxu0 0.0
    %5973 = vmatprep.subr.mxu0 0.0
    %5974 = vmatpush1.xpose.msra.mxu0 0.0
    %5975 = vmatprep.subr.mxu0 0.0
    %5976 = vmatpush1.xpose.msra.mxu0 0.0
    %5977 = vmatprep.subr.mxu0 0.0
    %5978 = vmatpush1.xpose.msra.mxu0 0.0
    %5979 = vmatprep.subr.mxu0 0.0
    %5980 = vmatpush1.xpose.msra.mxu0 0.0
    %5981 = vmatprep.subr.mxu0 0.0
    %5982 = vmatpush1.xpose.msra.mxu0 0.0
    %5983 = vmatprep.subr.mxu0 0.0
    %5984 = vmatpush1.xpose.msra.mxu0 0.0
    %5985 = vmatprep.subr.mxu0 0.0
    %5986 = vmatpush1.xpose.msra.mxu0 0.0
    %5987 = vmatprep.subr.mxu0 0.0
    %5988 = vmatpush1.xpose.msra.mxu0 0.0
    %5989 = vmatprep.mubr.f32.mxu0 0.0
    %5990 = vmatmul.mubr.f32.gmra.mrb[0].mxu0 %v5920
    %v5991 = vpop.f32.mrb[0].mxu0
    %v5992 = vadd.f32 %v5690, %v5991
    %v5993 = vpop.f32.mrb[0].mxu0
    %5994 = vdwg.mxu0
    %v5996 = vsel %vm61, %v5673, 0
    %v5999 = vsel %vm61, %v5681, 0
    %6001 = vmatprep.subr.mxu0 0.0
    %6002 = vmatpush1.xpose.msra.mxu0 %v5999
    %6003 = vmatprep.subr.mxu0 0.0
    %6004 = vmatpush1.xpose.msra.mxu0 0.0
    %6005 = vmatprep.subr.mxu0 0.0
    %6006 = vmatpush1.xpose.msra.mxu0 0.0
    %6007 = vmatprep.subr.mxu0 0.0
    %6008 = vmatpush1.xpose.msra.mxu0 0.0
    %6009 = vmatprep.subr.mxu0 0.0
    %6010 = vmatpush1.xpose.msra.mxu0 0.0
    %6011 = vmatprep.subr.mxu0 0.0
    %6012 = vmatpush1.xpose.msra.mxu0 0.0
    %6013 = vmatprep.subr.mxu0 0.0
    %6014 = vmatpush1.xpose.msra.mxu0 0.0
    %6015 = vmatprep.subr.mxu0 0.0
    %6016 = vmatpush1.xpose.msra.mxu0 0.0
    %6017 = vmatprep.subr.mxu0 0.0
    %6018 = vmatpush1.xpose.msra.mxu0 0.0
    %6019 = vmatprep.subr.mxu0 0.0
    %6020 = vmatpush1.xpose.msra.mxu0 0.0
    %6021 = vmatprep.subr.mxu0 0.0
    %6022 = vmatpush1.xpose.msra.mxu0 0.0
    %6023 = vmatprep.subr.mxu0 0.0
    %6024 = vmatpush1.xpose.msra.mxu0 0.0
    %6025 = vmatprep.subr.mxu0 0.0
    %6026 = vmatpush1.xpose.msra.mxu0 0.0
    %6027 = vmatprep.subr.mxu0 0.0
    %6028 = vmatpush1.xpose.msra.mxu0 0.0
    %6029 = vmatprep.subr.mxu0 0.0
    %6030 = vmatpush1.xpose.msra.mxu0 0.0
    %6031 = vmatprep.subr.mxu0 0.0
    %6032 = vmatpush1.xpose.msra.mxu0 0.0
    %6033 = vmatprep.subr.mxu0 0.0
    %6034 = vmatpush1.xpose.msra.mxu0 0.0
    %6035 = vmatprep.subr.mxu0 0.0
    %6036 = vmatpush1.xpose.msra.mxu0 0.0
    %6037 = vmatprep.subr.mxu0 0.0
    %6038 = vmatpush1.xpose.msra.mxu0 0.0
    %6039 = vmatprep.subr.mxu0 0.0
    %6040 = vmatpush1.xpose.msra.mxu0 0.0
    %6041 = vmatprep.subr.mxu0 0.0
    %6042 = vmatpush1.xpose.msra.mxu0 0.0
    %6043 = vmatprep.subr.mxu0 0.0
    %6044 = vmatpush1.xpose.msra.mxu0 0.0
    %6045 = vmatprep.subr.mxu0 0.0
    %6046 = vmatpush1.xpose.msra.mxu0 0.0
    %6047 = vmatprep.subr.mxu0 0.0
    %6048 = vmatpush1.xpose.msra.mxu0 0.0
    %6049 = vmatprep.subr.mxu0 0.0
    %6050 = vmatpush1.xpose.msra.mxu0 0.0
    %6051 = vmatprep.subr.mxu0 0.0
    %6052 = vmatpush1.xpose.msra.mxu0 0.0
    %6053 = vmatprep.subr.mxu0 0.0
    %6054 = vmatpush1.xpose.msra.mxu0 0.0
    %6055 = vmatprep.subr.mxu0 0.0
    %6056 = vmatpush1.xpose.msra.mxu0 0.0
    %6057 = vmatprep.subr.mxu0 0.0
    %6058 = vmatpush1.xpose.msra.mxu0 0.0
    %6059 = vmatprep.subr.mxu0 0.0
    %6060 = vmatpush1.xpose.msra.mxu0 0.0
    %6061 = vmatprep.subr.mxu0 0.0
    %6062 = vmatpush1.xpose.msra.mxu0 0.0
    %6063 = vmatprep.subr.mxu0 0.0
    %6064 = vmatpush1.xpose.msra.mxu0 0.0
    %6065 = vmatprep.mubr.f32.mxu0 0.0
    %6066 = vmatmul.mubr.f32.gmra.mrb[0].mxu0 %v5996
    %v6067 = vpop.f32.mrb[0].mxu0
    %v6068 = vadd.f32 %v5690, %v6067
    %v6069 = vpop.f32.mrb[0].mxu0
    %6070 = vdwg.mxu0
    %v6072 = vsel %vm61, %v5674, 0
    %v6075 = vsel %vm61, %v5682, 0
    %6077 = vmatprep.subr.mxu0 0.0
    %6078 = vmatpush1.xpose.msra.mxu0 %v6075
    %6079 = vmatprep.subr.mxu0 0.0
    %6080 = vmatpush1.xpose.msra.mxu0 0.0
    %6081 = vmatprep.subr.mxu0 0.0
    %6082 = vmatpush1.xpose.msra.mxu0 0.0
    %6083 = vmatprep.subr.mxu0 0.0
    %6084 = vmatpush1.xpose.msra.mxu0 0.0
    %6085 = vmatprep.subr.mxu0 0.0
    %6086 = vmatpush1.xpose.msra.mxu0 0.0
    %6087 = vmatprep.subr.mxu0 0.0
    %6088 = vmatpush1.xpose.msra.mxu0 0.0
    %6089 = vmatprep.subr.mxu0 0.0
    %6090 = vmatpush1.xpose.msra.mxu0 0.0
    %6091 = vmatprep.subr.mxu0 0.0
    %6092 = vmatpush1.xpose.msra.mxu0 0.0
    %6093 = vmatprep.subr.mxu0 0.0
    %6094 = vmatpush1.xpose.msra.mxu0 0.0
    %6095 = vmatprep.subr.mxu0 0.0
    %6096 = vmatpush1.xpose.msra.mxu0 0.0
    %6097 = vmatprep.subr.mxu0 0.0
    %6098 = vmatpush1.xpose.msra.mxu0 0.0
    %6099 = vmatprep.subr.mxu0 0.0
    %6100 = vmatpush1.xpose.msra.mxu0 0.0
    %6101 = vmatprep.subr.mxu0 0.0
    %6102 = vmatpush1.xpose.msra.mxu0 0.0
    %6103 = vmatprep.subr.mxu0 0.0
    %6104 = vmatpush1.xpose.msra.mxu0 0.0
    %6105 = vmatprep.subr.mxu0 0.0
    %6106 = vmatpush1.xpose.msra.mxu0 0.0
    %6107 = vmatprep.subr.mxu0 0.0
    %6108 = vmatpush1.xpose.msra.mxu0 0.0
    %6109 = vmatprep.subr.mxu0 0.0
    %6110 = vmatpush1.xpose.msra.mxu0 0.0
    %6111 = vmatprep.subr.mxu0 0.0
    %6112 = vmatpush1.xpose.msra.mxu0 0.0
    %6113 = vmatprep.subr.mxu0 0.0
    %6114 = vmatpush1.xpose.msra.mxu0 0.0
    %6115 = vmatprep.subr.mxu0 0.0
    %6116 = vmatpush1.xpose.msra.mxu0 0.0
    %6117 = vmatprep.subr.mxu0 0.0
    %6118 = vmatpush1.xpose.msra.mxu0 0.0
    %6119 = vmatprep.subr.mxu0 0.0
    %6120 = vmatpush1.xpose.msra.mxu0 0.0
    %6121 = vmatprep.subr.mxu0 0.0
    %6122 = vmatpush1.xpose.msra.mxu0 0.0
    %6123 = vmatprep.subr.mxu0 0.0
    %6124 = vmatpush1.xpose.msra.mxu0 0.0
    %6125 = vmatprep.subr.mxu0 0.0
    %6126 = vmatpush1.xpose.msra.mxu0 0.0
    %6127 = vmatprep.subr.mxu0 0.0
    %6128 = vmatpush1.xpose.msra.mxu0 0.0
    %6129 = vmatprep.subr.mxu0 0.0
    %6130 = vmatpush1.xpose.msra.mxu0 0.0
    %6131 = vmatprep.subr.mxu0 0.0
    %6132 = vmatpush1.xpose.msra.mxu0 0.0
    %6133 = vmatprep.subr.mxu0 0.0
    %6134 = vmatpush1.xpose.msra.mxu0 0.0
    %6135 = vmatprep.subr.mxu0 0.0
    %6136 = vmatpush1.xpose.msra.mxu0 0.0
    %6137 = vmatprep.subr.mxu0 0.0
    %6138 = vmatpush1.xpose.msra.mxu0 0.0
    %6139 = vmatprep.subr.mxu0 0.0
    %6140 = vmatpush1.xpose.msra.mxu0 0.0
    %6141 = vmatprep.mubr.f32.mxu0 0.0
    %6142 = vmatmul.mubr.f32.gmra.mrb[0].mxu0 %v6072
    %v6143 = vpop.f32.mrb[0].mxu0
    %v6144 = vadd.f32 %v5690, %v6143
    %v6145 = vpop.f32.mrb[0].mxu0
    %6146 = vdwg.mxu0
    %v6148 = vsel %vm61, %v5675, 0
    %v6151 = vsel %vm61, %v5683, 0
    %6153 = vmatprep.subr.mxu0 0.0
    %6154 = vmatpush1.xpose.msra.mxu0 %v6151
    %6155 = vmatprep.subr.mxu0 0.0
    %6156 = vmatpush1.xpose.msra.mxu0 0.0
    %6157 = vmatprep.subr.mxu0 0.0
    %6158 = vmatpush1.xpose.msra.mxu0 0.0
    %6159 = vmatprep.subr.mxu0 0.0
    %6160 = vmatpush1.xpose.msra.mxu0 0.0
    %6161 = vmatprep.subr.mxu0 0.0
    %6162 = vmatpush1.xpose.msra.mxu0 0.0
    %6163 = vmatprep.subr.mxu0 0.0
    %6164 = vmatpush1.xpose.msra.mxu0 0.0
    %6165 = vmatprep.subr.mxu0 0.0
    %6166 = vmatpush1.xpose.msra.mxu0 0.0
    %6167 = vmatprep.subr.mxu0 0.0
    %6168 = vmatpush1.xpose.msra.mxu0 0.0
    %6169 = vmatprep.subr.mxu0 0.0
    %6170 = vmatpush1.xpose.msra.mxu0 0.0
    %6171 = vmatprep.subr.mxu0 0.0
    %6172 = vmatpush1.xpose.msra.mxu0 0.0
    %6173 = vmatprep.subr.mxu0 0.0
    %6174 = vmatpush1.xpose.msra.mxu0 0.0
    %6175 = vmatprep.subr.mxu0 0.0
    %6176 = vmatpush1.xpose.msra.mxu0 0.0
    %6177 = vmatprep.subr.mxu0 0.0
    %6178 = vmatpush1.xpose.msra.mxu0 0.0
    %6179 = vmatprep.subr.mxu0 0.0
    %6180 = vmatpush1.xpose.msra.mxu0 0.0
    %6181 = vmatprep.subr.mxu0 0.0
    %6182 = vmatpush1.xpose.msra.mxu0 0.0
    %6183 = vmatprep.subr.mxu0 0.0
    %6184 = vmatpush1.xpose.msra.mxu0 0.0
    %6185 = vmatprep.subr.mxu0 0.0
    %6186 = vmatpush1.xpose.msra.mxu0 0.0
    %6187 = vmatprep.subr.mxu0 0.0
    %6188 = vmatpush1.xpose.msra.mxu0 0.0
    %6189 = vmatprep.subr.mxu0 0.0
    %6190 = vmatpush1.xpose.msra.mxu0 0.0
    %6191 = vmatprep.subr.mxu0 0.0
    %6192 = vmatpush1.xpose.msra.mxu0 0.0
    %6193 = vmatprep.subr.mxu0 0.0
    %6194 = vmatpush1.xpose.msra.mxu0 0.0
    %6195 = vmatprep.subr.mxu0 0.0
    %6196 = vmatpush1.xpose.msra.mxu0 0.0
    %6197 = vmatprep.subr.mxu0 0.0
    %6198 = vmatpush1.xpose.msra.mxu0 0.0
    %6199 = vmatprep.subr.mxu0 0.0
    %6200 = vmatpush1.xpose.msra.mxu0 0.0
    %6201 = vmatprep.subr.mxu0 0.0
    %6202 = vmatpush1.xpose.msra.mxu0 0.0
    %6203 = vmatprep.subr.mxu0 0.0
    %6204 = vmatpush1.xpose.msra.mxu0 0.0
    %6205 = vmatprep.subr.mxu0 0.0
    %6206 = vmatpush1.xpose.msra.mxu0 0.0
    %6207 = vmatprep.subr.mxu0 0.0
    %6208 = vmatpush1.xpose.msra.mxu0 0.0
    %6209 = vmatprep.subr.mxu0 0.0
    %6210 = vmatpush1.xpose.msra.mxu0 0.0
    %6211 = vmatprep.subr.mxu0 0.0
    %6212 = vmatpush1.xpose.msra.mxu0 0.0
    %6213 = vmatprep.subr.mxu0 0.0
    %6214 = vmatpush1.xpose.msra.mxu0 0.0
    %6215 = vmatprep.subr.mxu0 0.0
    %6216 = vmatpush1.xpose.msra.mxu0 0.0
    %6217 = vmatprep.mubr.f32.mxu0 0.0
    %6218 = vmatmul.mubr.f32.gmra.mrb[0].mxu0 %v6148
    %v6219 = vpop.f32.mrb[0].mxu0
    %v6220 = vadd.f32 %v5690, %v6219
    %v6221 = vpop.f32.mrb[0].mxu0
    %6222 = vdwg.mxu0
    %v6224 = vsel %vm61, %v5676, 0
    %v6227 = vsel %vm61, %v5684, 0
    %6229 = vmatprep.subr.mxu0 0.0
    %6230 = vmatpush1.xpose.msra.mxu0 %v6227
    %6231 = vmatprep.subr.mxu0 0.0
    %6232 = vmatpush1.xpose.msra.mxu0 0.0
    %6233 = vmatprep.subr.mxu0 0.0
    %6234 = vmatpush1.xpose.msra.mxu0 0.0
    %6235 = vmatprep.subr.mxu0 0.0
    %6236 = vmatpush1.xpose.msra.mxu0 0.0
    %6237 = vmatprep.subr.mxu0 0.0
    %6238 = vmatpush1.xpose.msra.mxu0 0.0
    %6239 = vmatprep.subr.mxu0 0.0
    %6240 = vmatpush1.xpose.msra.mxu0 0.0
    %6241 = vmatprep.subr.mxu0 0.0
    %6242 = vmatpush1.xpose.msra.mxu0 0.0
    %6243 = vmatprep.subr.mxu0 0.0
    %6244 = vmatpush1.xpose.msra.mxu0 0.0
    %6245 = vmatprep.subr.mxu0 0.0
    %6246 = vmatpush1.xpose.msra.mxu0 0.0
    %6247 = vmatprep.subr.mxu0 0.0
    %6248 = vmatpush1.xpose.msra.mxu0 0.0
    %6249 = vmatprep.subr.mxu0 0.0
    %6250 = vmatpush1.xpose.msra.mxu0 0.0
    %6251 = vmatprep.subr.mxu0 0.0
    %6252 = vmatpush1.xpose.msra.mxu0 0.0
    %6253 = vmatprep.subr.mxu0 0.0
    %6254 = vmatpush1.xpose.msra.mxu0 0.0
    %6255 = vmatprep.subr.mxu0 0.0
    %6256 = vmatpush1.xpose.msra.mxu0 0.0
    %6257 = vmatprep.subr.mxu0 0.0
    %6258 = vmatpush1.xpose.msra.mxu0 0.0
    %6259 = vmatprep.subr.mxu0 0.0
    %6260 = vmatpush1.xpose.msra.mxu0 0.0
    %6261 = vmatprep.subr.mxu0 0.0
    %6262 = vmatpush1.xpose.msra.mxu0 0.0
    %6263 = vmatprep.subr.mxu0 0.0
    %6264 = vmatpush1.xpose.msra.mxu0 0.0
    %6265 = vmatprep.subr.mxu0 0.0
    %6266 = vmatpush1.xpose.msra.mxu0 0.0
    %6267 = vmatprep.subr.mxu0 0.0
    %6268 = vmatpush1.xpose.msra.mxu0 0.0
    %6269 = vmatprep.subr.mxu0 0.0
    %6270 = vmatpush1.xpose.msra.mxu0 0.0
    %6271 = vmatprep.subr.mxu0 0.0
    %6272 = vmatpush1.xpose.msra.mxu0 0.0
    %6273 = vmatprep.subr.mxu0 0.0
    %6274 = vmatpush1.xpose.msra.mxu0 0.0
    %6275 = vmatprep.subr.mxu0 0.0
    %6276 = vmatpush1.xpose.msra.mxu0 0.0
    %6277 = vmatprep.subr.mxu0 0.0
    %6278 = vmatpush1.xpose.msra.mxu0 0.0
    %6279 = vmatprep.subr.mxu0 0.0
    %6280 = vmatpush1.xpose.msra.mxu0 0.0
    %6281 = vmatprep.subr.mxu0 0.0
    %6282 = vmatpush1.xpose.msra.mxu0 0.0
    %6283 = vmatprep.subr.mxu0 0.0
    %6284 = vmatpush1.xpose.msra.mxu0 0.0
    %6285 = vmatprep.subr.mxu0 0.0
    %6286 = vmatpush1.xpose.msra.mxu0 0.0
    %6287 = vmatprep.subr.mxu0 0.0
    %6288 = vmatpush1.xpose.msra.mxu0 0.0
    %6289 = vmatprep.subr.mxu0 0.0
    %6290 = vmatpush1.xpose.msra.mxu0 0.0
    %6291 = vmatprep.subr.mxu0 0.0
    %6292 = vmatpush1.xpose.msra.mxu0 0.0
    %6293 = vmatprep.mubr.f32.mxu0 0.0
    %6294 = vmatmul.mubr.f32.gmra.mrb[0].mxu0 %v6224
    %v6295 = vpop.f32.mrb[0].mxu0
    %v6296 = vadd.f32 %v5690, %v6295
    %v6297 = vpop.f32.mrb[0].mxu0
    %6298 = vdwg.mxu0
    %vm6299 = vcmask 64512
    %v6300 = vsel %vm6299, %v5764, -inf
    %6301 = vmax.xlane.f32.xlu0 %v6300
    %v6302 = vpop.xlane.xlu0 %6301
    %v6303 = vsel %vm6299, %v5840, -inf
    %6304 = vmax.xlane.f32.xlu0 %v6303
    %v6305 = vpop.xlane.xlu0 %6304
    %v6306 = vsel %vm6299, %v5916, -inf
    %6307 = vmax.xlane.f32.xlu0 %v6306
    %v6308 = vpop.xlane.xlu0 %6307
    %v6309 = vsel %vm6299, %v5992, -inf
    %6310 = vmax.xlane.f32.xlu0 %v6309
    %v6311 = vpop.xlane.xlu0 %6310
    %v6312 = vsel %vm6299, %v6068, -inf
    %6313 = vmax.xlane.f32.xlu0 %v6312
    %v6314 = vpop.xlane.xlu0 %6313
    %v6315 = vsel %vm6299, %v6144, -inf
    %6316 = vmax.xlane.f32.xlu0 %v6315
    %v6317 = vpop.xlane.xlu0 %6316
    %v6318 = vsel %vm6299, %v6220, -inf
    %6319 = vmax.xlane.f32.xlu0 %v6318
    %v6320 = vpop.xlane.xlu0 %6319
    %v6321 = vsel %vm6299, %v6296, -inf
    %6322 = vmax.xlane.f32.xlu0 %v6321
    %v6323 = vpop.xlane.xlu0 %6322
    %v6324 = vsub.f32 %v5764, %v6302
    %v6325 = vsub.f32 %v5840, %v6305
    %v6326 = vsub.f32 %v5916, %v6308
    %v6327 = vsub.f32 %v5992, %v6311
    %v6328 = vsub.f32 %v6068, %v6314
    %v6329 = vsub.f32 %v6144, %v6317
    %v6330 = vsub.f32 %v6220, %v6320
    %v6331 = vsub.f32 %v6296, %v6323
    %v6332 = vmul.f32 %v6324, 1.442695
    %v6333 = vpow.pop %v6332
    %v6334 = vmul.f32 %v6325, 1.442695
    %v6335 = vpow.pop %v6334
    %v6336 = vmul.f32 %v6326, 1.442695
    %v6337 = vpow.pop %v6336
    %v6338 = vmul.f32 %v6327, 1.442695
    %v6339 = vpow.pop %v6338
    %v6340 = vmul.f32 %v6328, 1.442695
    %v6341 = vpow.pop %v6340
    %v6342 = vmul.f32 %v6329, 1.442695
    %v6343 = vpow.pop %v6342
    %v6344 = vmul.f32 %v6330, 1.442695
    %v6345 = vpow.pop %v6344
    %v6346 = vmul.f32 %v6331, 1.442695
    %v6347 = vpow.pop %v6346
    %v6348 = vsel %vm6299, %v6333, 0.0
    %6349 = vadd.xlane.f32.xlu0 %v6348
    %v6350 = vpop.xlane.xlu0 %6349
    %v6351 = vsel %vm6299, %v6335, 0.0
    %6352 = vadd.xlane.f32.xlu0 %v6351
    %v6353 = vpop.xlane.xlu0 %6352
    %v6354 = vsel %vm6299, %v6337, 0.0
    %6355 = vadd.xlane.f32.xlu0 %v6354
    %v6356 = vpop.xlane.xlu0 %6355
    %v6357 = vsel %vm6299, %v6339, 0.0
    %6358 = vadd.xlane.f32.xlu0 %v6357
    %v6359 = vpop.xlane.xlu0 %6358
    %v6360 = vsel %vm6299, %v6341, 0.0
    %6361 = vadd.xlane.f32.xlu0 %v6360
    %v6362 = vpop.xlane.xlu0 %6361
    %v6363 = vsel %vm6299, %v6343, 0.0
    %6364 = vadd.xlane.f32.xlu0 %v6363
    %v6365 = vpop.xlane.xlu0 %6364
    %v6366 = vsel %vm6299, %v6345, 0.0
    %6367 = vadd.xlane.f32.xlu0 %v6366
    %v6368 = vpop.xlane.xlu0 %6367
    %v6369 = vsel %vm6299, %v6347, 0.0
    %6370 = vadd.xlane.f32.xlu0 %v6369
    %v6371 = vpop.xlane.xlu0 %6370
    %v6372 = vrcp.pop %v6350
    %v6373 = vrcp.pop %v6353
    %v6374 = vrcp.pop %v6356
    %v6375 = vrcp.pop %v6359
    %v6376 = vrcp.pop %v6362
    %v6377 = vrcp.pop %v6365
    %v6378 = vrcp.pop %v6368
    %v6379 = vrcp.pop %v6371
    %v6380 = vmul.f32 %v6333, %v6372
    %v6381 = vmul.f32 %v6335, %v6373
    %v6382 = vmul.f32 %v6337, %v6374
    %v6383 = vmul.f32 %v6339, %v6375
    %v6384 = vmul.f32 %v6341, %v6376
    %v6385 = vmul.f32 %v6343, %v6377
    %v6386 = vmul.f32 %v6345, %v6378
    %v6387 = vmul.f32 %v6347, %v6379
    %v6389 = vsel %vm6299, %v6380, 0
    %6391 = vmatprep.subr.mxu0 0.0
    %6392 = vmatpush1.msra.mxu0 %v5677
    %6393 = vmatprep.subr.mxu0 0.0
    %6394 = vmatpush1.msra.mxu0 0.0
    %6395 = vmatprep.subr.mxu0 0.0
    %6396 = vmatpush1.msra.mxu0 0.0
    %6397 = vmatprep.subr.mxu0 0.0
    %6398 = vmatpush1.msra.mxu0 0.0
    %6399 = vmatprep.subr.mxu0 0.0
    %6400 = vmatpush1.msra.mxu0 0.0
    %6401 = vmatprep.subr.mxu0 0.0
    %6402 = vmatpush1.msra.mxu0 0.0
    %6403 = vmatprep.subr.mxu0 0.0
    %6404 = vmatpush1.msra.mxu0 0.0
    %6405 = vmatprep.subr.mxu0 0.0
    %6406 = vmatpush1.msra.mxu0 0.0
    %6407 = vmatprep.subr.mxu0 0.0
    %6408 = vmatpush1.msra.mxu0 0.0
    %6409 = vmatprep.subr.mxu0 0.0
    %6410 = vmatpush1.msra.mxu0 0.0
    %6411 = vmatprep.subr.mxu0 0.0
    %6412 = vmatpush1.msra.mxu0 0.0
    %6413 = vmatprep.subr.mxu0 0.0
    %6414 = vmatpush1.msra.mxu0 0.0
    %6415 = vmatprep.subr.mxu0 0.0
    %6416 = vmatpush1.msra.mxu0 0.0
    %6417 = vmatprep.subr.mxu0 0.0
    %6418 = vmatpush1.msra.mxu0 0.0
    %6419 = vmatprep.subr.mxu0 0.0
    %6420 = vmatpush1.msra.mxu0 0.0
    %6421 = vmatprep.subr.mxu0 0.0
    %6422 = vmatpush1.msra.mxu0 0.0
    %6423 = vmatprep.subr.mxu0 0.0
    %6424 = vmatpush1.msra.mxu0 0.0
    %6425 = vmatprep.subr.mxu0 0.0
    %6426 = vmatpush1.msra.mxu0 0.0
    %6427 = vmatprep.subr.mxu0 0.0
    %6428 = vmatpush1.msra.mxu0 0.0
    %6429 = vmatprep.subr.mxu0 0.0
    %6430 = vmatpush1.msra.mxu0 0.0
    %6431 = vmatprep.subr.mxu0 0.0
    %6432 = vmatpush1.msra.mxu0 0.0
    %6433 = vmatprep.subr.mxu0 0.0
    %6434 = vmatpush1.msra.mxu0 0.0
    %6435 = vmatprep.subr.mxu0 0.0
    %6436 = vmatpush1.msra.mxu0 0.0
    %6437 = vmatprep.subr.mxu0 0.0
    %6438 = vmatpush1.msra.mxu0 0.0
    %6439 = vmatprep.subr.mxu0 0.0
    %6440 = vmatpush1.msra.mxu0 0.0
    %6441 = vmatprep.subr.mxu0 0.0
    %6442 = vmatpush1.msra.mxu0 0.0
    %6443 = vmatprep.subr.mxu0 0.0
    %6444 = vmatpush1.msra.mxu0 0.0
    %6445 = vmatprep.subr.mxu0 0.0
    %6446 = vmatpush1.msra.mxu0 0.0
    %6447 = vmatprep.subr.mxu0 0.0
    %6448 = vmatpush1.msra.mxu0 0.0
    %6449 = vmatprep.subr.mxu0 0.0
    %6450 = vmatpush1.msra.mxu0 0.0
    %6451 = vmatprep.subr.mxu0 0.0
    %6452 = vmatpush1.msra.mxu0 0.0
    %6453 = vmatprep.subr.mxu0 0.0
    %6454 = vmatpush1.msra.mxu0 0.0
    %6455 = vmatprep.mubr.f32.mxu0 0.0
    %6456 = vmatmul.mubr.f32.gmra.mrb[0].mxu0 %v6389
    %v6457 = vpop.f32.mrb[0].mxu0
    %v6458 = vadd.f32 0.0, %v6457
    %v6459 = vpop.f32.mrb[0].mxu0
    %6460 = vdwg.mxu0
    %v6462 = vsel %vm6299, %v6381, 0
    %6464 = vmatprep.subr.mxu0 0.0
    %6465 = vmatpush1.msra.mxu0 %v5678
    %6466 = vmatprep.subr.mxu0 0.0
    %6467 = vmatpush1.msra.mxu0 0.0
    %6468 = vmatprep.subr.mxu0 0.0
    %6469 = vmatpush1.msra.mxu0 0.0
    %6470 = vmatprep.subr.mxu0 0.0
    %6471 = vmatpush1.msra.mxu0 0.0
    %6472 = vmatprep.subr.mxu0 0.0
    %6473 = vmatpush1.msra.mxu0 0.0
    %6474 = vmatprep.subr.mxu0 0.0
    %6475 = vmatpush1.msra.mxu0 0.0
    %6476 = vmatprep.subr.mxu0 0.0
    %6477 = vmatpush1.msra.mxu0 0.0
    %6478 = vmatprep.subr.mxu0 0.0
    %6479 = vmatpush1.msra.mxu0 0.0
    %6480 = vmatprep.subr.mxu0 0.0
    %6481 = vmatpush1.msra.mxu0 0.0
    %6482 = vmatprep.subr.mxu0 0.0
    %6483 = vmatpush1.msra.mxu0 0.0
    %6484 = vmatprep.subr.mxu0 0.0
    %6485 = vmatpush1.msra.mxu0 0.0
    %6486 = vmatprep.subr.mxu0 0.0
    %6487 = vmatpush1.msra.mxu0 0.0
    %6488 = vmatprep.subr.mxu0 0.0
    %6489 = vmatpush1.msra.mxu0 0.0
    %6490 = vmatprep.subr.mxu0 0.0
    %6491 = vmatpush1.msra.mxu0 0.0
    %6492 = vmatprep.subr.mxu0 0.0
    %6493 = vmatpush1.msra.mxu0 0.0
    %6494 = vmatprep.subr.mxu0 0.0
    %6495 = vmatpush1.msra.mxu0 0.0
    %6496 = vmatprep.subr.mxu0 0.0
    %6497 = vmatpush1.msra.mxu0 0.0
    %6498 = vmatprep.subr.mxu0 0.0
    %6499 = vmatpush1.msra.mxu0 0.0
    %6500 = vmatprep.subr.mxu0 0.0
    %6501 = vmatpush1.msra.mxu0 0.0
    %6502 = vmatprep.subr.mxu0 0.0
    %6503 = vmatpush1.msra.mxu0 0.0
    %6504 = vmatprep.subr.mxu0 0.0
    %6505 = vmatpush1.msra.mxu0 0.0
    %6506 = vmatprep.subr.mxu0 0.0
    %6507 = vmatpush1.msra.mxu0 0.0
    %6508 = vmatprep.subr.mxu0 0.0
    %6509 = vmatpush1.msra.mxu0 0.0
    %6510 = vmatprep.subr.mxu0 0.0
    %6511 = vmatpush1.msra.mxu0 0.0
    %6512 = vmatprep.subr.mxu0 0.0
    %6513 = vmatpush1.msra.mxu0 0.0
    %6514 = vmatprep.subr.mxu0 0.0
    %6515 = vmatpush1.msra.mxu0 0.0
    %6516 = vmatprep.subr.mxu0 0.0
    %6517 = vmatpush1.msra.mxu0 0.0
    %6518 = vmatprep.subr.mxu0 0.0
    %6519 = vmatpush1.msra.mxu0 0.0
    %6520 = vmatprep.subr.mxu0 0.0
    %6521 = vmatpush1.msra.mxu0 0.0
    %6522 = vmatprep.subr.mxu0 0.0
    %6523 = vmatpush1.msra.mxu0 0.0
    %6524 = vmatprep.subr.mxu0 0.0
    %6525 = vmatpush1.msra.mxu0 0.0
    %6526 = vmatprep.subr.mxu0 0.0
    %6527 = vmatpush1.msra.mxu0 0.0
    %6528 = vmatprep.mubr.f32.mxu0 0.0
    %6529 = vmatmul.mubr.f32.gmra.mrb[0].mxu0 %v6462
    %v6530 = vpop.f32.mrb[0].mxu0
    %v6531 = vadd.f32 0.0, %v6530
    %v6532 = vpop.f32.mrb[0].mxu0
    %6533 = vdwg.mxu0
    %v6535 = vsel %vm6299, %v6382, 0
    %6537 = vmatprep.subr.mxu0 0.0
    %6538 = vmatpush1.msra.mxu0 %v5679
    %6539 = vmatprep.subr.mxu0 0.0
    %6540 = vmatpush1.msra.mxu0 0.0
    %6541 = vmatprep.subr.mxu0 0.0
    %6542 = vmatpush1.msra.mxu0 0.0
    %6543 = vmatprep.subr.mxu0 0.0
    %6544 = vmatpush1.msra.mxu0 0.0
    %6545 = vmatprep.subr.mxu0 0.0
    %6546 = vmatpush1.msra.mxu0 0.0
    %6547 = vmatprep.subr.mxu0 0.0
    %6548 = vmatpush1.msra.mxu0 0.0
    %6549 = vmatprep.subr.mxu0 0.0
    %6550 = vmatpush1.msra.mxu0 0.0
    %6551 = vmatprep.subr.mxu0 0.0
    %6552 = vmatpush1.msra.mxu0 0.0
    %6553 = vmatprep.subr.mxu0 0.0
    %6554 = vmatpush1.msra.mxu0 0.0
    %6555 = vmatprep.subr.mxu0 0.0
    %6556 = vmatpush1.msra.mxu0 0.0
    %6557 = vmatprep.subr.mxu0 0.0
    %6558 = vmatpush1.msra.mxu0 0.0
    %6559 = vmatprep.subr.mxu0 0.0
    %6560 = vmatpush1.msra.mxu0 0.0
    %6561 = vmatprep.subr.mxu0 0.0
    %6562 = vmatpush1.msra.mxu0 0.0
    %6563 = vmatprep.subr.mxu0 0.0
    %6564 = vmatpush1.msra.mxu0 0.0
    %6565 = vmatprep.subr.mxu0 0.0
    %6566 = vmatpush1.msra.mxu0 0.0
    %6567 = vmatprep.subr.mxu0 0.0
    %6568 = vmatpush1.msra.mxu0 0.0
    %6569 = vmatprep.subr.mxu0 0.0
    %6570 = vmatpush1.msra.mxu0 0.0
    %6571 = vmatprep.subr.mxu0 0.0
    %6572 = vmatpush1.msra.mxu0 0.0
    %6573 = vmatprep.subr.mxu0 0.0
    %6574 = vmatpush1.msra.mxu0 0.0
    %6575 = vmatprep.subr.mxu0 0.0
    %6576 = vmatpush1.msra.mxu0 0.0
    %6577 = vmatprep.subr.mxu0 0.0
    %6578 = vmatpush1.msra.mxu0 0.0
    %6579 = vmatprep.subr.mxu0 0.0
    %6580 = vmatpush1.msra.mxu0 0.0
    %6581 = vmatprep.subr.mxu0 0.0
    %6582 = vmatpush1.msra.mxu0 0.0
    %6583 = vmatprep.subr.mxu0 0.0
    %6584 = vmatpush1.msra.mxu0 0.0
    %6585 = vmatprep.subr.mxu0 0.0
    %6586 = vmatpush1.msra.mxu0 0.0
    %6587 = vmatprep.subr.mxu0 0.0
    %6588 = vmatpush1.msra.mxu0 0.0
    %6589 = vmatprep.subr.mxu0 0.0
    %6590 = vmatpush1.msra.mxu0 0.0
    %6591 = vmatprep.subr.mxu0 0.0
    %6592 = vmatpush1.msra.mxu0 0.0
    %6593 = vmatprep.subr.mxu0 0.0
    %6594 = vmatpush1.msra.mxu0 0.0
    %6595 = vmatprep.subr.mxu0 0.0
    %6596 = vmatpush1.msra.mxu0 0.0
    %6597 = vmatprep.subr.mxu0 0.0
    %6598 = vmatpush1.msra.mxu0 0.0
    %6599 = vmatprep.subr.mxu0 0.0
    %6600 = vmatpush1.msra.mxu0 0.0
    %6601 = vmatprep.mubr.f32.mxu0 0.0
    %6602 = vmatmul.mubr.f32.gmra.mrb[0].mxu0 %v6535
    %v6603 = vpop.f32.mrb[0].mxu0
    %v6604 = vadd.f32 0.0, %v6603
    %v6605 = vpop.f32.mrb[0].mxu0
    %6606 = vdwg.mxu0
    %v6608 = vsel %vm6299, %v6383, 0
    %6610 = vmatprep.subr.mxu0 0.0
    %6611 = vmatpush1.msra.mxu0 %v5680
    %6612 = vmatprep.subr.mxu0 0.0
    %6613 = vmatpush1.msra.mxu0 0.0
    %6614 = vmatprep.subr.mxu0 0.0
    %6615 = vmatpush1.msra.mxu0 0.0
    %6616 = vmatprep.subr.mxu0 0.0
    %6617 = vmatpush1.msra.mxu0 0.0
    %6618 = vmatprep.subr.mxu0 0.0
    %6619 = vmatpush1.msra.mxu0 0.0
    %6620 = vmatprep.subr.mxu0 0.0
    %6621 = vmatpush1.msra.mxu0 0.0
    %6622 = vmatprep.subr.mxu0 0.0
    %6623 = vmatpush1.msra.mxu0 0.0
    %6624 = vmatprep.subr.mxu0 0.0
    %6625 = vmatpush1.msra.mxu0 0.0
    %6626 = vmatprep.subr.mxu0 0.0
    %6627 = vmatpush1.msra.mxu0 0.0
    %6628 = vmatprep.subr.mxu0 0.0
    %6629 = vmatpush1.msra.mxu0 0.0
    %6630 = vmatprep.subr.mxu0 0.0
    %6631 = vmatpush1.msra.mxu0 0.0
    %6632 = vmatprep.subr.mxu0 0.0
    %6633 = vmatpush1.msra.mxu0 0.0
    %6634 = vmatprep.subr.mxu0 0.0
    %6635 = vmatpush1.msra.mxu0 0.0
    %6636 = vmatprep.subr.mxu0 0.0
    %6637 = vmatpush1.msra.mxu0 0.0
    %6638 = vmatprep.subr.mxu0 0.0
    %6639 = vmatpush1.msra.mxu0 0.0
    %6640 = vmatprep.subr.mxu0 0.0
    %6641 = vmatpush1.msra.mxu0 0.0
    %6642 = vmatprep.subr.mxu0 0.0
    %6643 = vmatpush1.msra.mxu0 0.0
    %6644 = vmatprep.subr.mxu0 0.0
    %6645 = vmatpush1.msra.mxu0 0.0
    %6646 = vmatprep.subr.mxu0 0.0
    %6647 = vmatpush1.msra.mxu0 0.0
    %6648 = vmatprep.subr.mxu0 0.0
    %6649 = vmatpush1.msra.mxu0 0.0
    %6650 = vmatprep.subr.mxu0 0.0
    %6651 = vmatpush1.msra.mxu0 0.0
    %6652 = vmatprep.subr.mxu0 0.0
    %6653 = vmatpush1.msra.mxu0 0.0
    %6654 = vmatprep.subr.mxu0 0.0
    %6655 = vmatpush1.msra.mxu0 0.0
    %6656 = vmatprep.subr.mxu0 0.0
    %6657 = vmatpush1.msra.mxu0 0.0
    %6658 = vmatprep.subr.mxu0 0.0
    %6659 = vmatpush1.msra.mxu0 0.0
    %6660 = vmatprep.subr.mxu0 0.0
    %6661 = vmatpush1.msra.mxu0 0.0
    %6662 = vmatprep.subr.mxu0 0.0
    %6663 = vmatpush1.msra.mxu0 0.0
    %6664 = vmatprep.subr.mxu0 0.0
    %6665 = vmatpush1.msra.mxu0 0.0
    %6666 = vmatprep.subr.mxu0 0.0
    %6667 = vmatpush1.msra.mxu0 0.0
    %6668 = vmatprep.subr.mxu0 0.0
    %6669 = vmatpush1.msra.mxu0 0.0
    %6670 = vmatprep.subr.mxu0 0.0
    %6671 = vmatpush1.msra.mxu0 0.0
    %6672 = vmatprep.subr.mxu0 0.0
    %6673 = vmatpush1.msra.mxu0 0.0
    %6674 = vmatprep.mubr.f32.mxu0 0.0
    %6675 = vmatmul.mubr.f32.gmra.mrb[0].mxu0 %v6608
    %v6676 = vpop.f32.mrb[0].mxu0
    %v6677 = vadd.f32 0.0, %v6676
    %v6678 = vpop.f32.mrb[0].mxu0
    %6679 = vdwg.mxu0
    %v6681 = vsel %vm6299, %v6384, 0
    %6683 = vmatprep.subr.mxu0 0.0
    %6684 = vmatpush1.msra.mxu0 %v5681
    %6685 = vmatprep.subr.mxu0 0.0
    %6686 = vmatpush1.msra.mxu0 0.0
    %6687 = vmatprep.subr.mxu0 0.0
    %6688 = vmatpush1.msra.mxu0 0.0
    %6689 = vmatprep.subr.mxu0 0.0
    %6690 = vmatpush1.msra.mxu0 0.0
    %6691 = vmatprep.subr.mxu0 0.0
    %6692 = vmatpush1.msra.mxu0 0.0
    %6693 = vmatprep.subr.mxu0 0.0
    %6694 = vmatpush1.msra.mxu0 0.0
    %6695 = vmatprep.subr.mxu0 0.0
    %6696 = vmatpush1.msra.mxu0 0.0
    %6697 = vmatprep.subr.mxu0 0.0
    %6698 = vmatpush1.msra.mxu0 0.0
    %6699 = vmatprep.subr.mxu0 0.0
    %6700 = vmatpush1.msra.mxu0 0.0
    %6701 = vmatprep.subr.mxu0 0.0
    %6702 = vmatpush1.msra.mxu0 0.0
    %6703 = vmatprep.subr.mxu0 0.0
    %6704 = vmatpush1.msra.mxu0 0.0
    %6705 = vmatprep.subr.mxu0 0.0
    %6706 = vmatpush1.msra.mxu0 0.0
    %6707 = vmatprep.subr.mxu0 0.0
    %6708 = vmatpush1.msra.mxu0 0.0
    %6709 = vmatprep.subr.mxu0 0.0
    %6710 = vmatpush1.msra.mxu0 0.0
    %6711 = vmatprep.subr.mxu0 0.0
    %6712 = vmatpush1.msra.mxu0 0.0
    %6713 = vmatprep.subr.mxu0 0.0
    %6714 = vmatpush1.msra.mxu0 0.0
    %6715 = vmatprep.subr.mxu0 0.0
    %6716 = vmatpush1.msra.mxu0 0.0
    %6717 = vmatprep.subr.mxu0 0.0
    %6718 = vmatpush1.msra.mxu0 0.0
    %6719 = vmatprep.subr.mxu0 0.0
    %6720 = vmatpush1.msra.mxu0 0.0
    %6721 = vmatprep.subr.mxu0 0.0
    %6722 = vmatpush1.msra.mxu0 0.0
    %6723 = vmatprep.subr.mxu0 0.0
    %6724 = vmatpush1.msra.mxu0 0.0
    %6725 = vmatprep.subr.mxu0 0.0
    %6726 = vmatpush1.msra.mxu0 0.0
    %6727 = vmatprep.subr.mxu0 0.0
    %6728 = vmatpush1.msra.mxu0 0.0
    %6729 = vmatprep.subr.mxu0 0.0
    %6730 = vmatpush1.msra.mxu0 0.0
    %6731 = vmatprep.subr.mxu0 0.0
    %6732 = vmatpush1.msra.mxu0 0.0
    %6733 = vmatprep.subr.mxu0 0.0
    %6734 = vmatpush1.msra.mxu0 0.0
    %6735 = vmatprep.subr.mxu0 0.0
    %6736 = vmatpush1.msra.mxu0 0.0
    %6737 = vmatprep.subr.mxu0 0.0
    %6738 = vmatpush1.msra.mxu0 0.0
    %6739 = vmatprep.subr.mxu0 0.0
    %6740 = vmatpush1.msra.mxu0 0.0
    %6741 = vmatprep.subr.mxu0 0.0
    %6742 = vmatpush1.msra.mxu0 0.0
    %6743 = vmatprep.subr.mxu0 0.0
    %6744 = vmatpush1.msra.mxu0 0.0
    %6745 = vmatprep.subr.mxu0 0.0
    %6746 = vmatpush1.msra.mxu0 0.0
    %6747 = vmatprep.mubr.f32.mxu0 0.0
    %6748 = vmatmul.mubr.f32.gmra.mrb[0].mxu0 %v6681
    %v6749 = vpop.f32.mrb[0].mxu0
    %v6750 = vadd.f32 0.0, %v6749
    %v6751 = vpop.f32.mrb[0].mxu0
    %6752 = vdwg.mxu0
    %v6754 = vsel %vm6299, %v6385, 0
    %6756 = vmatprep.subr.mxu0 0.0
    %6757 = vmatpush1.msra.mxu0 %v5682
    %6758 = vmatprep.subr.mxu0 0.0
    %6759 = vmatpush1.msra.mxu0 0.0
    %6760 = vmatprep.subr.mxu0 0.0
    %6761 = vmatpush1.msra.mxu0 0.0
    %6762 = vmatprep.subr.mxu0 0.0
    %6763 = vmatpush1.msra.mxu0 0.0
    %6764 = vmatprep.subr.mxu0 0.0
    %6765 = vmatpush1.msra.mxu0 0.0
    %6766 = vmatprep.subr.mxu0 0.0
    %6767 = vmatpush1.msra.mxu0 0.0
    %6768 = vmatprep.subr.mxu0 0.0
    %6769 = vmatpush1.msra.mxu0 0.0
    %6770 = vmatprep.subr.mxu0 0.0
    %6771 = vmatpush1.msra.mxu0 0.0
    %6772 = vmatprep.subr.mxu0 0.0
    %6773 = vmatpush1.msra.mxu0 0.0
    %6774 = vmatprep.subr.mxu0 0.0
    %6775 = vmatpush1.msra.mxu0 0.0
    %6776 = vmatprep.subr.mxu0 0.0
    %6777 = vmatpush1.msra.mxu0 0.0
    %6778 = vmatprep.subr.mxu0 0.0
    %6779 = vmatpush1.msra.mxu0 0.0
    %6780 = vmatprep.subr.mxu0 0.0
    %6781 = vmatpush1.msra.mxu0 0.0
    %6782 = vmatprep.subr.mxu0 0.0
    %6783 = vmatpush1.msra.mxu0 0.0
    %6784 = vmatprep.subr.mxu0 0.0
    %6785 = vmatpush1.msra.mxu0 0.0
    %6786 = vmatprep.subr.mxu0 0.0
    %6787 = vmatpush1.msra.mxu0 0.0
    %6788 = vmatprep.subr.mxu0 0.0
    %6789 = vmatpush1.msra.mxu0 0.0
    %6790 = vmatprep.subr.mxu0 0.0
    %6791 = vmatpush1.msra.mxu0 0.0
    %6792 = vmatprep.subr.mxu0 0.0
    %6793 = vmatpush1.msra.mxu0 0.0
    %6794 = vmatprep.subr.mxu0 0.0
    %6795 = vmatpush1.msra.mxu0 0.0
    %6796 = vmatprep.subr.mxu0 0.0
    %6797 = vmatpush1.msra.mxu0 0.0
    %6798 = vmatprep.subr.mxu0 0.0
    %6799 = vmatpush1.msra.mxu0 0.0
    %6800 = vmatprep.subr.mxu0 0.0
    %6801 = vmatpush1.msra.mxu0 0.0
    %6802 = vmatprep.subr.mxu0 0.0
    %6803 = vmatpush1.msra.mxu0 0.0
    %6804 = vmatprep.subr.mxu0 0.0
    %6805 = vmatpush1.msra.mxu0 0.0
    %6806 = vmatprep.subr.mxu0 0.0
    %6807 = vmatpush1.msra.mxu0 0.0
    %6808 = vmatprep.subr.mxu0 0.0
    %6809 = vmatpush1.msra.mxu0 0.0
    %6810 = vmatprep.subr.mxu0 0.0
    %6811 = vmatpush1.msra.mxu0 0.0
    %6812 = vmatprep.subr.mxu0 0.0
    %6813 = vmatpush1.msra.mxu0 0.0
    %6814 = vmatprep.subr.mxu0 0.0
    %6815 = vmatpush1.msra.mxu0 0.0
    %6816 = vmatprep.subr.mxu0 0.0
    %6817 = vmatpush1.msra.mxu0 0.0
    %6818 = vmatprep.subr.mxu0 0.0
    %6819 = vmatpush1.msra.mxu0 0.0
    %6820 = vmatprep.mubr.f32.mxu0 0.0
    %6821 = vmatmul.mubr.f32.gmra.mrb[0].mxu0 %v6754
    %v6822 = vpop.f32.mrb[0].mxu0
    %v6823 = vadd.f32 0.0, %v6822
    %v6824 = vpop.f32.mrb[0].mxu0
    %6825 = vdwg.mxu0
    %v6827 = vsel %vm6299, %v6386, 0
    %6829 = vmatprep.subr.mxu0 0.0
    %6830 = vmatpush1.msra.mxu0 %v5683
    %6831 = vmatprep.subr.mxu0 0.0
    %6832 = vmatpush1.msra.mxu0 0.0
    %6833 = vmatprep.subr.mxu0 0.0
    %6834 = vmatpush1.msra.mxu0 0.0
    %6835 = vmatprep.subr.mxu0 0.0
    %6836 = vmatpush1.msra.mxu0 0.0
    %6837 = vmatprep.subr.mxu0 0.0
    %6838 = vmatpush1.msra.mxu0 0.0
    %6839 = vmatprep.subr.mxu0 0.0
    %6840 = vmatpush1.msra.mxu0 0.0
    %6841 = vmatprep.subr.mxu0 0.0
    %6842 = vmatpush1.msra.mxu0 0.0
    %6843 = vmatprep.subr.mxu0 0.0
    %6844 = vmatpush1.msra.mxu0 0.0
    %6845 = vmatprep.subr.mxu0 0.0
    %6846 = vmatpush1.msra.mxu0 0.0
    %6847 = vmatprep.subr.mxu0 0.0
    %6848 = vmatpush1.msra.mxu0 0.0
    %6849 = vmatprep.subr.mxu0 0.0
    %6850 = vmatpush1.msra.mxu0 0.0
    %6851 = vmatprep.subr.mxu0 0.0
    %6852 = vmatpush1.msra.mxu0 0.0
    %6853 = vmatprep.subr.mxu0 0.0
    %6854 = vmatpush1.msra.mxu0 0.0
    %6855 = vmatprep.subr.mxu0 0.0
    %6856 = vmatpush1.msra.mxu0 0.0
    %6857 = vmatprep.subr.mxu0 0.0
    %6858 = vmatpush1.msra.mxu0 0.0
    %6859 = vmatprep.subr.mxu0 0.0
    %6860 = vmatpush1.msra.mxu0 0.0
    %6861 = vmatprep.subr.mxu0 0.0
    %6862 = vmatpush1.msra.mxu0 0.0
    %6863 = vmatprep.subr.mxu0 0.0
    %6864 = vmatpush1.msra.mxu0 0.0
    %6865 = vmatprep.subr.mxu0 0.0
    %6866 = vmatpush1.msra.mxu0 0.0
    %6867 = vmatprep.subr.mxu0 0.0
    %6868 = vmatpush1.msra.mxu0 0.0
    %6869 = vmatprep.subr.mxu0 0.0
    %6870 = vmatpush1.msra.mxu0 0.0
    %6871 = vmatprep.subr.mxu0 0.0
    %6872 = vmatpush1.msra.mxu0 0.0
    %6873 = vmatprep.subr.mxu0 0.0
    %6874 = vmatpush1.msra.mxu0 0.0
    %6875 = vmatprep.subr.mxu0 0.0
    %6876 = vmatpush1.msra.mxu0 0.0
    %6877 = vmatprep.subr.mxu0 0.0
    %6878 = vmatpush1.msra.mxu0 0.0
    %6879 = vmatprep.subr.mxu0 0.0
    %6880 = vmatpush1.msra.mxu0 0.0
    %6881 = vmatprep.subr.mxu0 0.0
    %6882 = vmatpush1.msra.mxu0 0.0
    %6883 = vmatprep.subr.mxu0 0.0
    %6884 = vmatpush1.msra.mxu0 0.0
    %6885 = vmatprep.subr.mxu0 0.0
    %6886 = vmatpush1.msra.mxu0 0.0
    %6887 = vmatprep.subr.mxu0 0.0
    %6888 = vmatpush1.msra.mxu0 0.0
    %6889 = vmatprep.subr.mxu0 0.0
    %6890 = vmatpush1.msra.mxu0 0.0
    %6891 = vmatprep.subr.mxu0 0.0
    %6892 = vmatpush1.msra.mxu0 0.0
    %6893 = vmatprep.mubr.f32.mxu0 0.0
    %6894 = vmatmul.mubr.f32.gmra.mrb[0].mxu0 %v6827
    %v6895 = vpop.f32.mrb[0].mxu0
    %v6896 = vadd.f32 0.0, %v6895
    %v6897 = vpop.f32.mrb[0].mxu0
    %6898 = vdwg.mxu0
    %v6900 = vsel %vm6299, %v6387, 0
    %6902 = vmatprep.subr.mxu0 0.0
    %6903 = vmatpush1.msra.mxu0 %v5684
    %6904 = vmatprep.subr.mxu0 0.0
    %6905 = vmatpush1.msra.mxu0 0.0
    %6906 = vmatprep.subr.mxu0 0.0
    %6907 = vmatpush1.msra.mxu0 0.0
    %6908 = vmatprep.subr.mxu0 0.0
    %6909 = vmatpush1.msra.mxu0 0.0
    %6910 = vmatprep.subr.mxu0 0.0
    %6911 = vmatpush1.msra.mxu0 0.0
    %6912 = vmatprep.subr.mxu0 0.0
    %6913 = vmatpush1.msra.mxu0 0.0
    %6914 = vmatprep.subr.mxu0 0.0
    %6915 = vmatpush1.msra.mxu0 0.0
    %6916 = vmatprep.subr.mxu0 0.0
    %6917 = vmatpush1.msra.mxu0 0.0
    %6918 = vmatprep.subr.mxu0 0.0
    %6919 = vmatpush1.msra.mxu0 0.0
    %6920 = vmatprep.subr.mxu0 0.0
    %6921 = vmatpush1.msra.mxu0 0.0
    %6922 = vmatprep.subr.mxu0 0.0
    %6923 = vmatpush1.msra.mxu0 0.0
    %6924 = vmatprep.subr.mxu0 0.0
    %6925 = vmatpush1.msra.mxu0 0.0
    %6926 = vmatprep.subr.mxu0 0.0
    %6927 = vmatpush1.msra.mxu0 0.0
    %6928 = vmatprep.subr.mxu0 0.0
    %6929 = vmatpush1.msra.mxu0 0.0
    %6930 = vmatprep.subr.mxu0 0.0
    %6931 = vmatpush1.msra.mxu0 0.0
    %6932 = vmatprep.subr.mxu0 0.0
    %6933 = vmatpush1.msra.mxu0 0.0
    %6934 = vmatprep.subr.mxu0 0.0
    %6935 = vmatpush1.msra.mxu0 0.0
    %6936 = vmatprep.subr.mxu0 0.0
    %6937 = vmatpush1.msra.mxu0 0.0
    %6938 = vmatprep.subr.mxu0 0.0
    %6939 = vmatpush1.msra.mxu0 0.0
    %6940 = vmatprep.subr.mxu0 0.0
    %6941 = vmatpush1.msra.mxu0 0.0
    %6942 = vmatprep.subr.mxu0 0.0
    %6943 = vmatpush1.msra.mxu0 0.0
    %6944 = vmatprep.subr.mxu0 0.0
    %6945 = vmatpush1.msra.mxu0 0.0
    %6946 = vmatprep.subr.mxu0 0.0
    %6947 = vmatpush1.msra.mxu0 0.0
    %6948 = vmatprep.subr.mxu0 0.0
    %6949 = vmatpush1.msra.mxu0 0.0
    %6950 = vmatprep.subr.mxu0 0.0
    %6951 = vmatpush1.msra.mxu0 0.0
    %6952 = vmatprep.subr.mxu0 0.0
    %6953 = vmatpush1.msra.mxu0 0.0
    %6954 = vmatprep.subr.mxu0 0.0
    %6955 = vmatpush1.msra.mxu0 0.0
    %6956 = vmatprep.subr.mxu0 0.0
    %6957 = vmatpush1.msra.mxu0 0.0
    %6958 = vmatprep.subr.mxu0 0.0
    %6959 = vmatpush1.msra.mxu0 0.0
    %6960 = vmatprep.subr.mxu0 0.0
    %6961 = vmatpush1.msra.mxu0 0.0
    %6962 = vmatprep.subr.mxu0 0.0
    %6963 = vmatpush1.msra.mxu0 0.0
    %6964 = vmatprep.subr.mxu0 0.0
    %6965 = vmatpush1.msra.mxu0 0.0
    %6966 = vmatprep.mubr.f32.mxu0 0.0
    %6967 = vmatmul.mubr.f32.gmra.mrb[0].mxu0 %v6900
    %v6968 = vpop.f32.mrb[0].mxu0
    %v6969 = vadd.f32 0.0, %v6968
    %v6970 = vpop.f32.mrb[0].mxu0
    %6971 = vdwg.mxu0
    %v6972 = vld [vmem:[%s11] sm:$0xff]
    %v6973 = vld [vmem:[%s11 + $0x8] sm:$0xff]
    %v6974 = vld [vmem:[%s11 + $0x10] sm:$0xff]
    %v6975 = vld [vmem:[%s11 + $0x18] sm:$0xff]
    %v6976 = vld [vmem:[%s12] sm:$0xff]
    %v6977 = vld [vmem:[%s12 + $0x8] sm:$0xff]
    %v6978 = vld [vmem:[%s12 + $0x10] sm:$0xff]
    %v6979 = vld [vmem:[%s12 + $0x18] sm:$0xff]
    %v6981 = vsel %vm61, %v6458, 0
    %v6984 = vsel %vm61, %v6531, 0
    %v6987 = vsel %vm61, %v6604, 0
    %v6990 = vsel %vm61, %v6677, 0
    %v6993 = vsel %vm61, %v6750, 0
    %v6996 = vsel %vm61, %v6823, 0
    %v6999 = vsel %vm61, %v6896, 0
    %v7002 = vsel %vm61, %v6969, 0
    %7004 = vmatprep.subr.mxu0 0.0
    %7005 = vmatpush1.msra.mxu0 %v6976
    %7006 = vmatprep.subr.mxu0 0.0
    %7007 = vmatpush1.msra.mxu0 %v6977
    %7008 = vmatprep.subr.mxu0 0.0
    %7009 = vmatpush1.msra.mxu0 %v6978
    %7010 = vmatprep.subr.mxu0 0.0
    %7011 = vmatpush1.msra.mxu0 %v6979
    %7012 = vmatprep.subr.mxu0 0.0
    %7013 = vmatpush1.msra.mxu0 0.0
    %7014 = vmatprep.subr.mxu0 0.0
    %7015 = vmatpush1.msra.mxu0 0.0
    %7016 = vmatprep.subr.mxu0 0.0
    %7017 = vmatpush1.msra.mxu0 0.0
    %7018 = vmatprep.subr.mxu0 0.0
    %7019 = vmatpush1.msra.mxu0 0.0
    %7020 = vmatprep.subr.mxu0 0.0
    %7021 = vmatpush1.msra.mxu0 0.0
    %7022 = vmatprep.subr.mxu0 0.0
    %7023 = vmatpush1.msra.mxu0 0.0
    %7024 = vmatprep.subr.mxu0 0.0
    %7025 = vmatpush1.msra.mxu0 0.0
    %7026 = vmatprep.subr.mxu0 0.0
    %7027 = vmatpush1.msra.mxu0 0.0
    %7028 = vmatprep.subr.mxu0 0.0
    %7029 = vmatpush1.msra.mxu0 0.0
    %7030 = vmatprep.subr.mxu0 0.0
    %7031 = vmatpush1.msra.mxu0 0.0
    %7032 = vmatprep.subr.mxu0 0.0
    %7033 = vmatpush1.msra.mxu0 0.0
    %7034 = vmatprep.subr.mxu0 0.0
    %7035 = vmatpush1.msra.mxu0 0.0
    %7036 = vmatprep.subr.mxu0 0.0
    %7037 = vmatpush1.msra.mxu0 0.0
    %7038 = vmatprep.subr.mxu0 0.0
    %7039 = vmatpush1.msra.mxu0 0.0
    %7040 = vmatprep.subr.mxu0 0.0
    %7041 = vmatpush1.msra.mxu0 0.0
    %7042 = vmatprep.subr.mxu0 0.0
    %7043 = vmatpush1.msra.mxu0 0.0
    %7044 = vmatprep.subr.mxu0 0.0
    %7045 = vmatpush1.msra.mxu0 0.0
    %7046 = vmatprep.subr.mxu0 0.0
    %7047 = vmatpush1.msra.mxu0 0.0
    %7048 = vmatprep.subr.mxu0 0.0
    %7049 = vmatpush1.msra.mxu0 0.0
    %7050 = vmatprep.subr.mxu0 0.0
    %7051 = vmatpush1.msra.mxu0 0.0
    %7052 = vmatprep.subr.mxu0 0.0
    %7053 = vmatpush1.msra.mxu0 0.0
    %7054 = vmatprep.subr.mxu0 0.0
    %7055 = vmatpush1.msra.mxu0 0.0
    %7056 = vmatprep.subr.mxu0 0.0
    %7057 = vmatpush1.msra.mxu0 0.0
    %7058 = vmatprep.subr.mxu0 0.0
    %7059 = vmatpush1.msra.mxu0 0.0
    %7060 = vmatprep.subr.mxu0 0.0
    %7061 = vmatpush1.msra.mxu0 0.0
    %7062 = vmatprep.subr.mxu0 0.0
    %7063 = vmatpush1.msra.mxu0 0.0
    %7064 = vmatprep.subr.mxu0 0.0
    %7065 = vmatpush1.msra.mxu0 0.0
    %7066 = vmatprep.subr.mxu0 0.0
    %7067 = vmatpush1.msra.mxu0 0.0
    %7068 = vmatprep.mubr.f32.mxu0 0.0
    %7069 = vmatmul.mubr.f32.gmra.mrb[0].mxu0 %v6981
    %v7070 = vpop.f32.mrb[0].mxu0
    %v7071 = vadd.f32 0.0, %v7070
    %v7072 = vpop.f32.mrb[0].mxu0
    %7073 = vmatprep.mubr.f32.mxu0 0.0
    %7074 = vmatmul.mubr.f32.gmra.mrb[0].mxu0 %v6984
    %v7075 = vpop.f32.mrb[0].mxu0
    %v7076 = vadd.f32 0.0, %v7075
    %v7077 = vpop.f32.mrb[0].mxu0
    %7078 = vmatprep.mubr.f32.mxu0 0.0
    %7079 = vmatmul.mubr.f32.gmra.mrb[0].mxu0 %v6987
    %v7080 = vpop.f32.mrb[0].mxu0
    %v7081 = vadd.f32 0.0, %v7080
    %v7082 = vpop.f32.mrb[0].mxu0
    %7083 = vmatprep.mubr.f32.mxu0 0.0
    %7084 = vmatmul.mubr.f32.gmra.mrb[0].mxu0 %v6990
    %v7085 = vpop.f32.mrb[0].mxu0
    %v7086 = vadd.f32 0.0, %v7085
    %v7087 = vpop.f32.mrb[0].mxu0
    %7088 = vmatprep.mubr.f32.mxu0 0.0
    %7089 = vmatmul.mubr.f32.gmra.mrb[0].mxu0 %v6993
    %v7090 = vpop.f32.mrb[0].mxu0
    %v7091 = vadd.f32 0.0, %v7090
    %v7092 = vpop.f32.mrb[0].mxu0
    %7093 = vmatprep.mubr.f32.mxu0 0.0
    %7094 = vmatmul.mubr.f32.gmra.mrb[0].mxu0 %v6996
    %v7095 = vpop.f32.mrb[0].mxu0
    %v7096 = vadd.f32 0.0, %v7095
    %v7097 = vpop.f32.mrb[0].mxu0
    %7098 = vmatprep.mubr.f32.mxu0 0.0
    %7099 = vmatmul.mubr.f32.gmra.mrb[0].mxu0 %v6999
    %v7100 = vpop.f32.mrb[0].mxu0
    %v7101 = vadd.f32 0.0, %v7100
    %v7102 = vpop.f32.mrb[0].mxu0
    %7103 = vmatprep.mubr.f32.mxu0 0.0
    %7104 = vmatmul.mubr.f32.gmra.mrb[0].mxu0 %v7002
    %v7105 = vpop.f32.mrb[0].mxu0
    %v7106 = vadd.f32 0.0, %v7105
    %v7107 = vpop.f32.mrb[0].mxu0
    %7108 = vdwg.mxu0
    %7109 = vmatprep.subr.mxu0 0.0
    %7110 = vmatpush1.msra.mxu0 %v6972
    %7111 = vmatprep.subr.mxu0 0.0
    %7112 = vmatpush1.msra.mxu0 %v6973
    %7113 = vmatprep.subr.mxu0 0.0
    %7114 = vmatpush1.msra.mxu0 %v6974
    %7115 = vmatprep.subr.mxu0 0.0
    %7116 = vmatpush1.msra.mxu0 %v6975
    %7117 = vmatprep.subr.mxu0 0.0
    %7118 = vmatpush1.msra.mxu0 0.0
    %7119 = vmatprep.subr.mxu0 0.0
    %7120 = vmatpush1.msra.mxu0 0.0
    %7121 = vmatprep.subr.mxu0 0.0
    %7122 = vmatpush1.msra.mxu0 0.0
    %7123 = vmatprep.subr.mxu0 0.0
    %7124 = vmatpush1.msra.mxu0 0.0
    %7125 = vmatprep.subr.mxu0 0.0
    %7126 = vmatpush1.msra.mxu0 0.0
    %7127 = vmatprep.subr.mxu0 0.0
    %7128 = vmatpush1.msra.mxu0 0.0
    %7129 = vmatprep.subr.mxu0 0.0
    %7130 = vmatpush1.msra.mxu0 0.0
    %7131 = vmatprep.subr.mxu0 0.0
    %7132 = vmatpush1.msra.mxu0 0.0
    %7133 = vmatprep.subr.mxu0 0.0
    %7134 = vmatpush1.msra.mxu0 0.0
    %7135 = vmatprep.subr.mxu0 0.0
    %7136 = vmatpush1.msra.mxu0 0.0
    %7137 = vmatprep.subr.mxu0 0.0
    %7138 = vmatpush1.msra.mxu0 0.0
    %7139 = vmatprep.subr.mxu0 0.0
    %7140 = vmatpush1.msra.mxu0 0.0
    %7141 = vmatprep.subr.mxu0 0.0
    %7142 = vmatpush1.msra.mxu0 0.0
    %7143 = vmatprep.subr.mxu0 0.0
    %7144 = vmatpush1.msra.mxu0 0.0
    %7145 = vmatprep.subr.mxu0 0.0
    %7146 = vmatpush1.msra.mxu0 0.0
    %7147 = vmatprep.subr.mxu0 0.0
    %7148 = vmatpush1.msra.mxu0 0.0
    %7149 = vmatprep.subr.mxu0 0.0
    %7150 = vmatpush1.msra.mxu0 0.0
    %7151 = vmatprep.subr.mxu0 0.0
    %7152 = vmatpush1.msra.mxu0 0.0
    %7153 = vmatprep.subr.mxu0 0.0
    %7154 = vmatpush1.msra.mxu0 0.0
    %7155 = vmatprep.subr.mxu0 0.0
    %7156 = vmatpush1.msra.mxu0 0.0
    %7157 = vmatprep.subr.mxu0 0.0
    %7158 = vmatpush1.msra.mxu0 0.0
    %7159 = vmatprep.subr.mxu0 0.0
    %7160 = vmatpush1.msra.mxu0 0.0
    %7161 = vmatprep.subr.mxu0 0.0
    %7162 = vmatpush1.msra.mxu0 0.0
    %7163 = vmatprep.subr.mxu0 0.0
    %7164 = vmatpush1.msra.mxu0 0.0
    %7165 = vmatprep.subr.mxu0 0.0
    %7166 = vmatpush1.msra.mxu0 0.0
    %7167 = vmatprep.subr.mxu0 0.0
    %7168 = vmatpush1.msra.mxu0 0.0
    %7169 = vmatprep.subr.mxu0 0.0
    %7170 = vmatpush1.msra.mxu0 0.0
    %7171 = vmatprep.subr.mxu0 0.0
    %7172 = vmatpush1.msra.mxu0 0.0
    %7173 = vmatprep.mubr.f32.mxu0 0.0
    %7174 = vmatmul.mubr.f32.gmra.mrb[0].mxu0 %v5692
    %v7175 = vpop.f32.mrb[0].mxu0
    %v7176 = vadd.f32 %v7071, %v7175
    %v7177 = vpop.f32.mrb[0].mxu0
    %7178 = vmatprep.mubr.f32.mxu0 0.0
    %7179 = vmatmul.mubr.f32.gmra.mrb[0].mxu0 %v5768
    %v7180 = vpop.f32.mrb[0].mxu0
    %v7181 = vadd.f32 %v7076, %v7180
    %v7182 = vpop.f32.mrb[0].mxu0
    %7183 = vmatprep.mubr.f32.mxu0 0.0
    %7184 = vmatmul.mubr.f32.gmra.mrb[0].mxu0 %v5844
    %v7185 = vpop.f32.mrb[0].mxu0
    %v7186 = vadd.f32 %v7081, %v7185
    %v7187 = vpop.f32.mrb[0].mxu0
    %7188 = vmatprep.mubr.f32.mxu0 0.0
    %7189 = vmatmul.mubr.f32.gmra.mrb[0].mxu0 %v5920
    %v7190 = vpop.f32.mrb[0].mxu0
    %v7191 = vadd.f32 %v7086, %v7190
    %v7192 = vpop.f32.mrb[0].mxu0
    %7193 = vmatprep.mubr.f32.mxu0 0.0
    %7194 = vmatmul.mubr.f32.gmra.mrb[0].mxu0 %v5996
    %v7195 = vpop.f32.mrb[0].mxu0
    %v7196 = vadd.f32 %v7091, %v7195
    %v7197 = vpop.f32.mrb[0].mxu0
    %7198 = vmatprep.mubr.f32.mxu0 0.0
    %7199 = vmatmul.mubr.f32.gmra.mrb[0].mxu0 %v6072
    %v7200 = vpop.f32.mrb[0].mxu0
    %v7201 = vadd.f32 %v7096, %v7200
    %v7202 = vpop.f32.mrb[0].mxu0
    %7203 = vmatprep.mubr.f32.mxu0 0.0
    %7204 = vmatmul.mubr.f32.gmra.mrb[0].mxu0 %v6148
    %v7205 = vpop.f32.mrb[0].mxu0
    %v7206 = vadd.f32 %v7101, %v7205
    %v7207 = vpop.f32.mrb[0].mxu0
    %7208 = vmatprep.mubr.f32.mxu0 0.0
    %7209 = vmatmul.mubr.f32.gmra.mrb[0].mxu0 %v6224
    %v7210 = vpop.f32.mrb[0].mxu0
    %v7211 = vadd.f32 %v7106, %v7210
    %v7212 = vpop.f32.mrb[0].mxu0
    %7213 = vdwg.mxu0
    %v7214 = vld [vmem:[%s13] sm:$0x1]
    %v7216 = vlaneseq
    %v7217 = vshrl.u32 %v7216, 7
    %v7218 = vsub.s32 0, %v7217
    %v7219 = vrot.slane %v7214, %v7218
    %v7221 = vadd.f32 %v7176, %v7219
    %v7222 = vadd.f32 %v7181, %v7219
    %v7223 = vadd.f32 %v7186, %v7219
    %v7224 = vadd.f32 %v7191, %v7219
    %v7225 = vadd.f32 %v7196, %v7219
    %v7226 = vadd.f32 %v7201, %v7219
    %v7227 = vadd.f32 %v7206, %v7219
    %v7228 = vadd.f32 %v7211, %v7219
    %v7229 = vtanh.pop %v7221
    %v7230 = vtanh.pop %v7222
    %v7231 = vtanh.pop %v7223
    %v7232 = vtanh.pop %v7224
    %v7233 = vtanh.pop %v7225
    %v7234 = vtanh.pop %v7226
    %v7235 = vtanh.pop %v7227
    %v7236 = vtanh.pop %v7228
    %v7237 = vld [vmem:[%s14] sm:$0xff]
    %v7238 = vld [vmem:[%s14 + $0x8] sm:$0xff]
    %v7239 = vld [vmem:[%s14 + $0x10] sm:$0xff]
    %v7240 = vld [vmem:[%s14 + $0x18] sm:$0xff]
    %v7241 = vld [vmem:[%s15] sm:$0x1]
    %v7243 = vlaneseq
    %v7244 = vshrl.u32 %v7243, 7
    %v7245 = vsub.s32 0, %v7244
    %v7246 = vrot.slane %v7241, %v7245
    %v7249 = vsel %vm61, %v7229, 0
    %v7252 = vsel %vm61, %v7230, 0
    %v7255 = vsel %vm61, %v7231, 0
    %v7258 = vsel %vm61, %v7232, 0
    %v7261 = vsel %vm61, %v7233, 0
    %v7264 = vsel %vm61, %v7234, 0
    %v7267 = vsel %vm61, %v7235, 0
    %v7270 = vsel %vm61, %v7236, 0
    %7272 = vmatprep.subr.mxu0 0.0
    %7273 = vmatpush1.msra.mxu0 %v7237
    %7274 = vmatprep.subr.mxu0 0.0
    %7275 = vmatpush1.msra.mxu0 %v7238
    %7276 = vmatprep.subr.mxu0 0.0
    %7277 = vmatpush1.msra.mxu0 %v7239
    %7278 = vmatprep.subr.mxu0 0.0
    %7279 = vmatpush1.msra.mxu0 %v7240
    %7280 = vmatprep.subr.mxu0 0.0
    %7281 = vmatpush1.msra.mxu0 0.0
    %7282 = vmatprep.subr.mxu0 0.0
    %7283 = vmatpush1.msra.mxu0 0.0
    %7284 = vmatprep.subr.mxu0 0.0
    %7285 = vmatpush1.msra.mxu0 0.0
    %7286 = vmatprep.subr.mxu0 0.0
    %7287 = vmatpush1.msra.mxu0 0.0
    %7288 = vmatprep.subr.mxu0 0.0
    %7289 = vmatpush1.msra.mxu0 0.0
    %7290 = vmatprep.subr.mxu0 0.0
    %7291 = vmatpush1.msra.mxu0 0.0
    %7292 = vmatprep.subr.mxu0 0.0
    %7293 = vmatpush1.msra.mxu0 0.0
    %7294 = vmatprep.subr.mxu0 0.0
    %7295 = vmatpush1.msra.mxu0 0.0
    %7296 = vmatprep.subr.mxu0 0.0
    %7297 = vmatpush1.msra.mxu0 0.0
    %7298 = vmatprep.subr.mxu0 0.0
    %7299 = vmatpush1.msra.mxu0 0.0
    %7300 = vmatprep.subr.mxu0 0.0
    %7301 = vmatpush1.msra.mxu0 0.0
    %7302 = vmatprep.subr.mxu0 0.0
    %7303 = vmatpush1.msra.mxu0 0.0
    %7304 = vmatprep.subr.mxu0 0.0
    %7305 = vmatpush1.msra.mxu0 0.0
    %7306 = vmatprep.subr.mxu0 0.0
    %7307 = vmatpush1.msra.mxu0 0.0
    %7308 = vmatprep.subr.mxu0 0.0
    %7309 = vmatpush1.msra.mxu0 0.0
    %7310 = vmatprep.subr.mxu0 0.0
    %7311 = vmatpush1.msra.mxu0 0.0
    %7312 = vmatprep.subr.mxu0 0.0
    %7313 = vmatpush1.msra.mxu0 0.0
    %7314 = vmatprep.subr.mxu0 0.0
    %7315 = vmatpush1.msra.mxu0 0.0
    %7316 = vmatprep.subr.mxu0 0.0
    %7317 = vmatpush1.msra.mxu0 0.0
    %7318 = vmatprep.subr.mxu0 0.0
    %7319 = vmatpush1.msra.mxu0 0.0
    %7320 = vmatprep.subr.mxu0 0.0
    %7321 = vmatpush1.msra.mxu0 0.0
    %7322 = vmatprep.subr.mxu0 0.0
    %7323 = vmatpush1.msra.mxu0 0.0
    %7324 = vmatprep.subr.mxu0 0.0
    %7325 = vmatpush1.msra.mxu0 0.0
    %7326 = vmatprep.subr.mxu0 0.0
    %7327 = vmatpush1.msra.mxu0 0.0
    %7328 = vmatprep.subr.mxu0 0.0
    %7329 = vmatpush1.msra.mxu0 0.0
    %7330 = vmatprep.subr.mxu0 0.0
    %7331 = vmatpush1.msra.mxu0 0.0
    %7332 = vmatprep.subr.mxu0 0.0
    %7333 = vmatpush1.msra.mxu0 0.0
    %7334 = vmatprep.subr.mxu0 0.0
    %7335 = vmatpush1.msra.mxu0 0.0
    %7336 = vmatprep.mubr.f32.mxu0 0.0
    %7337 = vmatmul.mubr.f32.gmra.mrb[0].mxu0 %v7249
    %v7338 = vpop.f32.mrb[0].mxu0
    %v7339 = vadd.f32 %v7246, %v7338
    %v7340 = vpop.f32.mrb[0].mxu0
    %7341 = vmatprep.mubr.f32.mxu0 0.0
    %7342 = vmatmul.mubr.f32.gmra.mrb[0].mxu0 %v7252
    %v7343 = vpop.f32.mrb[0].mxu0
    %v7344 = vadd.f32 %v7246, %v7343
    %v7345 = vpop.f32.mrb[0].mxu0
    %7346 = vmatprep.mubr.f32.mxu0 0.0
    %7347 = vmatmul.mubr.f32.gmra.mrb[0].mxu0 %v7255
    %v7348 = vpop.f32.mrb[0].mxu0
    %v7349 = vadd.f32 %v7246, %v7348
    %v7350 = vpop.f32.mrb[0].mxu0
    %7351 = vmatprep.mubr.f32.mxu0 0.0
    %7352 = vmatmul.mubr.f32.gmra.mrb[0].mxu0 %v7258
    %v7353 = vpop.f32.mrb[0].mxu0
    %v7354 = vadd.f32 %v7246, %v7353
    %v7355 = vpop.f32.mrb[0].mxu0
    %7356 = vmatprep.mubr.f32.mxu0 0.0
    %7357 = vmatmul.mubr.f32.gmra.mrb[0].mxu0 %v7261
    %v7358 = vpop.f32.mrb[0].mxu0
    %v7359 = vadd.f32 %v7246, %v7358
    %v7360 = vpop.f32.mrb[0].mxu0
    %7361 = vmatprep.mubr.f32.mxu0 0.0
    %7362 = vmatmul.mubr.f32.gmra.mrb[0].mxu0 %v7264
    %v7363 = vpop.f32.mrb[0].mxu0
    %v7364 = vadd.f32 %v7246, %v7363
    %v7365 = vpop.f32.mrb[0].mxu0
    %7366 = vmatprep.mubr.f32.mxu0 0.0
    %7367 = vmatmul.mubr.f32.gmra.mrb[0].mxu0 %v7267
    %v7368 = vpop.f32.mrb[0].mxu0
    %v7369 = vadd.f32 %v7246, %v7368
    %v7370 = vpop.f32.mrb[0].mxu0
    %7371 = vmatprep.mubr.f32.mxu0 0.0
    %7372 = vmatmul.mubr.f32.gmra.mrb[0].mxu0 %v7270
    %v7373 = vpop.f32.mrb[0].mxu0
    %v7374 = vadd.f32 %v7246, %v7373
    %v7375 = vpop.f32.mrb[0].mxu0
    %7376 = vdwg.mxu0
    %7377 = vmax.xlane.f32.xlu0 %v7339
    %v7378 = vpop.xlane.xlu0 %7377
    %7379 = vmax.xlane.f32.xlu0 %v7344
    %v7380 = vpop.xlane.xlu0 %7379
    %7381 = vmax.xlane.f32.xlu0 %v7349
    %v7382 = vpop.xlane.xlu0 %7381
    %7383 = vmax.xlane.f32.xlu0 %v7354
    %v7384 = vpop.xlane.xlu0 %7383
    %7385 = vmax.xlane.f32.xlu0 %v7359
    %v7386 = vpop.xlane.xlu0 %7385
    %7387 = vmax.xlane.f32.xlu0 %v7364
    %v7388 = vpop.xlane.xlu0 %7387
    %7389 = vmax.xlane.f32.xlu0 %v7369
    %v7390 = vpop.xlane.xlu0 %7389
    %7391 = vmax.xlane.f32.xlu0 %v7374
    %v7392 = vpop.xlane.xlu0 %7391
    %v7393 = vsub.f32 %v7339, %v7378
    %v7394 = vsub.f32 %v7344, %v7380
    %v7395 = vsub.f32 %v7349, %v7382
    %v7396 = vsub.f32 %v7354, %v7384
    %v7397 = vsub.f32 %v7359, %v7386
    %v7398 = vsub.f32 %v7364, %v7388
    %v7399 = vsub.f32 %v7369, %v7390
    %v7400 = vsub.f32 %v7374, %v7392
    %v7401 = vmul.f32 %v7393, 1.442695
    %v7402 = vpow.pop %v7401
    %v7403 = vmul.f32 %v7394, 1.442695
    %v7404 = vpow.pop %v7403
    %v7405 = vmul.f32 %v7395, 1.442695
    %v7406 = vpow.pop %v7405
    %v7407 = vmul.f32 %v7396, 1.442695
    %v7408 = vpow.pop %v7407
    %v7409 = vmul.f32 %v7397, 1.442695
    %v7410 = vpow.pop %v7409
    %v7411 = vmul.f32 %v7398, 1.442695
    %v7412 = vpow.pop %v7411
    %v7413 = vmul.f32 %v7399, 1.442695
    %v7414 = vpow.pop %v7413
    %v7415 = vmul.f32 %v7400, 1.442695
    %v7416 = vpow.pop %v7415
    %7417 = vadd.xlane.f32.xlu0 %v7402
    %v7418 = vpop.xlane.xlu0 %7417
    %7419 = vadd.xlane.f32.xlu0 %v7404
    %v7420 = vpop.xlane.xlu0 %7419
    %7421 = vadd.xlane.f32.xlu0 %v7406
    %v7422 = vpop.xlane.xlu0 %7421
    %7423 = vadd.xlane.f32.xlu0 %v7408
    %v7424 = vpop.xlane.xlu0 %7423
    %7425 = vadd.xlane.f32.xlu0 %v7410
    %v7426 = vpop.xlane.xlu0 %7425
    %7427 = vadd.xlane.f32.xlu0 %v7412
    %v7428 = vpop.xlane.xlu0 %7427
    %7429 = vadd.xlane.f32.xlu0 %v7414
    %v7430 = vpop.xlane.xlu0 %7429
    %7431 = vadd.xlane.f32.xlu0 %v7416
    %v7432 = vpop.xlane.xlu0 %7431
    %v7433 = vlog2.pop %v7418
    %v7434 = vmul.f32 %v7433, 0.6931472
    %v7435 = vlog2.pop %v7420
    %v7436 = vmul.f32 %v7435, 0.6931472
    %v7437 = vlog2.pop %v7422
    %v7438 = vmul.f32 %v7437, 0.6931472
    %v7439 = vlog2.pop %v7424
    %v7440 = vmul.f32 %v7439, 0.6931472
    %v7441 = vlog2.pop %v7426
    %v7442 = vmul.f32 %v7441, 0.6931472
    %v7443 = vlog2.pop %v7428
    %v7444 = vmul.f32 %v7443, 0.6931472
    %v7445 = vlog2.pop %v7430
    %v7446 = vmul.f32 %v7445, 0.6931472
    %v7447 = vlog2.pop %v7432
    %v7448 = vmul.f32 %v7447, 0.6931472
    %v7449 = vadd.f32 %v7378, %v7434
    %v7450 = vadd.f32 %v7380, %v7436
    %v7451 = vadd.f32 %v7382, %v7438
    %v7452 = vadd.f32 %v7384, %v7440
    %v7453 = vadd.f32 %v7386, %v7442
    %v7454 = vadd.f32 %v7388, %v7444
    %v7455 = vadd.f32 %v7390, %v7446
    %v7456 = vadd.f32 %v7392, %v7448
    %v7457 = vsub.f32 %v7339, %v7449
    %v7458 = vsub.f32 %v7344, %v7450
    %v7459 = vsub.f32 %v7349, %v7451
    %v7460 = vsub.f32 %v7354, %v7452
    %v7461 = vsub.f32 %v7359, %v7453
    %v7462 = vsub.f32 %v7364, %v7454
    %v7463 = vsub.f32 %v7369, %v7455
    %v7464 = vsub.f32 %v7374, %v7456
    %7465 = vst [vmem:[%s16] sm:$0xff] %v7457
    %7466 = vst [vmem:[%s16 + $0x8] sm:$0xff] %v7458
    %7467 = vst [vmem:[%s16 + $0x10] sm:$0xff] %v7459
    %7468 = vst [vmem:[%s16 + $0x18] sm:$0xff] %v7460
    %7469 = vst [vmem:[%s16 + $0x20] sm:$0xff] %v7461
    %7470 = vst [vmem:[%s16 + $0x28] sm:$0xff] %v7462
    %7471 = vst [vmem:[%s16 + $0x30] sm:$0xff] %v7463
    %7472 = vst [vmem:[%s16 + $0x38] sm:$0xff] %v7464
    // Predicated region
    $region66: #{boundary_encoder_decoder_forward.1} parent=1 // pred_check
      _
    $region67: #{boundary_encoder_decoder_forward.1} parent=1 // pred_check_branch
      %7474 = sbr.rel (0) target = $region69
    $region68: #{boundary_encoder_decoder_forward.1} parent=1 // pred_region
      _
    $region69: #{boundary_encoder_decoder_forward.1} parent=1 // pred_fallthru
      _
    // Predicated region
    $region70: #{boundary_encoder_decoder_forward.1} parent=1 // pred_check
      _
    $region71: #{boundary_encoder_decoder_forward.1} parent=1 // pred_check_branch
      %7476 = sbr.rel (0) target = $region73
    $region72: #{boundary_encoder_decoder_forward.1} parent=1 // pred_region
      %s7478 = ssub.s32 16, 16
      %7479 = vsyncadd [#allocation5], %s7478
      %s7481 = sshll.u32 [#allocation4], 4
      %s7482 = int_to_ptr.vmem [resolvable:$true] %s7481
      %7484 = dma.vmem_to_hbm [thread:$0]  %s7482, 16, %s17, [#allocation5]
    $region73: #{boundary_encoder_decoder_forward.1} parent=1 // pred_fallthru
      _
    // Predicated region
    $region74: #{boundary_encoder_decoder_forward.1} parent=1 // pred_check
      _
    $region75: #{boundary_encoder_decoder_forward.1} parent=1 // pred_check_branch
      %7486 = sbr.rel (0) target = $region77
    $region76: #{boundary_encoder_decoder_forward.1} parent=1 // pred_region
      _
    $region77: #{boundary_encoder_decoder_forward.1} parent=1 // pred_fallthru
      _
    // Predicated region
    $region78: #{boundary_encoder_decoder_forward.1} parent=1 // pred_check
      _
    $region79: #{boundary_encoder_decoder_forward.1} parent=1 // pred_check_branch
      %7488 = sbr.rel (0) target = $region81
    $region80: #{boundary_encoder_decoder_forward.1} parent=1 // pred_region
      _
    $region81: #{boundary_encoder_decoder_forward.1} parent=1 // pred_fallthru
      _
    // Predicated region
    $region82: #{boundary_encoder_decoder_forward.1} parent=1 // pred_check
      _
    $region83: #{boundary_encoder_decoder_forward.1} parent=1 // pred_check_branch
      %7490 = sbr.rel (0) target = $region85
    $region84: #{boundary_encoder_decoder_forward.1} parent=1 // pred_region
      _
    $region85: #{boundary_encoder_decoder_forward.1} parent=1 // pred_fallthru
      _
    // Predicated region
    $region86: #{boundary_encoder_decoder_forward.1} parent=1 // pred_check
      _
    $region87: #{boundary_encoder_decoder_forward.1} parent=1 // pred_check_branch
      %7492 = sbr.rel (0) target = $region89
    $region88: #{boundary_encoder_decoder_forward.1} parent=1 // pred_region
      %7493 = dma.done [#allocation5], 16
    $region89: #{boundary_encoder_decoder_forward.1} parent=1 // pred_fallthru
      _
    // Predicated region
    $region90: #{boundary_encoder_decoder_forward.1} parent=1 // pred_check
      _
    $region91: #{boundary_encoder_decoder_forward.1} parent=1 // pred_check_branch
      %7495 = sbr.rel (0) target = $region93
    $region92: #{boundary_encoder_decoder_forward.1} parent=1 // pred_region
      _
    $region93: #{boundary_encoder_decoder_forward.1} parent=1 // pred_fallthru
      _
    // Predicated region
    $region94: #{boundary_encoder_decoder_forward.1} parent=1 // pred_check
      _
    $region95: #{boundary_encoder_decoder_forward.1} parent=1 // pred_check_branch
      %7497 = sbr.rel (0) target = $region97
    $region96: #{boundary_encoder_decoder_forward.1} parent=1 // pred_region
      _
    $region97: #{boundary_encoder_decoder_forward.1} parent=1 // pred_fallthru
      _
    %7498 = vsyncpa [#allocation5], 1

</llo_original>
